<compile_context>
chip_gen: v5e
topology: v5e:2x2
jax: 0.10.0
libtpu: 0.0.40
codegen_flags: <defaults>
</compile_context>

<pallas_src>
import numpy as np
import jax
import jax.numpy as jnp
from jax.experimental import pallas as pl
from jax.experimental.pallas import tpu as pltpu

EPS = 1e-5
KSIZE = 5
PAD = KSIZE // 2
CP = 16          # conv channels padded 12 -> 16 (full bf16 sublane tile)
NCP = 16         # classes padded 10 -> 16

_VMEM = pl.BlockSpec(memory_space=pltpu.MemorySpace.VMEM)


def _conv_out(h, stride):
    return (h + 2 * PAD - KSIZE) // stride + 1


# ----------------------- host-side constant builders -------------------------

def _tap_masks(n, h, w):
    """(25, 1, n*h*w) f32 0/1 masks: 1 iff tap t of pixel m stays in-image."""
    hs, ws = np.arange(h), np.arange(w)
    out = np.zeros((KSIZE * KSIZE, 1, n * h * w), np.float32)
    t = 0
    for kh in range(KSIZE):
        for kw in range(KSIZE):
            dh, dw = kh - PAD, kw - PAD
            vh = (hs + dh >= 0) & (hs + dh < h)
            vw = (ws + dw >= 0) & (ws + dw < w)
            valid = (vh[:, None] & vw[None, :]).astype(np.float32).reshape(-1)
            out[t, 0, :] = np.tile(valid, n)
            t += 1
    return out


def _subsample_matrix(h, w, oh, ow, stride):
    """(h*w, oh*ow) per-image 0/1 matrix selecting the strided output pixels."""
    s = np.zeros((h * w, oh * ow), np.float32)
    for i in range(oh):
        for j in range(ow):
            s[stride * i * w + stride * j, i * ow + j] = 1.0
    return s


def _segment_matrix(n, hw, width):
    """(n*hw, width) 0/1 matrix: column b sums the lanes of image b."""
    s = np.zeros((n * hw, width), np.float32)
    for b in range(n):
        s[b * hw:(b + 1) * hw, b] = 1.0
    return s


def _im2col_T(x, stride):
    """x: (N, C, H, W) -> patches (C*25, N*OH*OW); row = c*25 + kh*5 + kw,
    column = n*OH*OW + oh*OW + ow (lane-dense, batch-major)."""
    n, c, h, w = x.shape
    oh, ow = _conv_out(h, stride), _conv_out(w, stride)
    xp = jnp.pad(x, ((0, 0), (0, 0), (PAD, PAD), (PAD, PAD)))
    cols = []
    for kh in range(KSIZE):
        for kw in range(KSIZE):
            cols.append(xp[:, :,
                           kh:kh + (oh - 1) * stride + 1:stride,
                           kw:kw + (ow - 1) * stride + 1:stride])
    p = jnp.stack(cols, axis=2)              # (N, C, 25, OH, OW)
    p = p.transpose(1, 2, 0, 3, 4)           # (C, 25, N, OH, OW)
    return p.reshape(c * KSIZE * KSIZE, n * oh * ow)


def _stack_conv_weight(w):
    """(Cout, Cin, 5, 5) -> (CP, 25*CP) tap-stacked weight; column = t*CP+cin."""
    cout, cin = w.shape[0], w.shape[1]
    wt = jnp.transpose(w, (0, 2, 3, 1)).reshape(cout, KSIZE * KSIZE, cin)
    wt = jnp.pad(wt, ((0, CP - cout), (0, 0), (0, CP - cin)))
    return wt.reshape(CP, KSIZE * KSIZE * CP)


# ------------------------------ fused forward --------------------------------

def lenet_forward(x, params):
    n, c_in, h, w = x.shape
    cout = params["w1"].shape[0]                       # 12
    ncls = params["fc_w"].shape[0]                     # 10
    assert cout <= CP and ncls <= NCP

    oh1, ow1 = _conv_out(h, 2), _conv_out(w, 2)        # 16, 16
    oh2, ow2 = _conv_out(oh1, 2), _conv_out(ow1, 2)    # 8, 8 (conv3 keeps 8x8)
    m1 = n * oh1 * ow1                                 # 512
    hw1 = oh1 * ow1                                    # 256
    hw2 = oh2 * ow2                                    # 64
    m3 = n * hw2                                       # 128
    nb = 128                                           # lane-dense logits width
    assert params["fc_w"].shape[1] == cout * hw2, "hidden size mismatch"
    assert n <= nb

    # --- layer-1 im2col on the network input only; K padded 75 -> 128 --------
    p1 = _im2col_T(x, stride=2)                        # (c_in*25, m1)
    k1, k1p = c_in * KSIZE * KSIZE, 128
    p1p = jnp.pad(p1, ((0, k1p - k1), (0, 0))).astype(jnp.bfloat16)
    w1p = jnp.pad(params["w1"].reshape(cout, k1),
                  ((0, CP - cout), (0, k1p - k1))).astype(jnp.bfloat16)

    # --- tap-stacked conv2/conv3 weights: one deep-K (400) matmul per layer ---
    wst = jnp.stack([_stack_conv_weight(params["w2"]),
                     _stack_conv_weight(params["w3"])]).astype(jnp.bfloat16)

    # --- constant tap masks / per-image subsample / batch-segment matrices ----
    mask2 = jnp.asarray(_tap_masks(n, oh1, ow1), jnp.float32)      # (25,1,m1)
    mask3 = jnp.asarray(_tap_masks(n, oh2, ow2), jnp.float32)      # (25,1,m3)
    sub = jnp.asarray(_subsample_matrix(oh1, ow1, oh2, ow2, 2),
                      jnp.bfloat16)                                # (256, 64)
    seg = jnp.asarray(_segment_matrix(n, hw2, nb), jnp.bfloat16)   # (m3, 128)

    # --- FC weight in the (C, class, lane) layout of a3; scalars packed -------
    fcw = params["fc_w"].reshape(ncls, cout, hw2).transpose(1, 0, 2)
    fcw = jnp.pad(fcw, ((0, CP - cout), (0, NCP - ncls), (0, 0)))
    fcw = jnp.tile(fcw, (1, 1, n)).astype(jnp.float32)             # (16,16,m3)

    def padc(v, rows=CP):
        return jnp.pad(v.astype(jnp.float32), (0, rows - v.shape[0]))
    scal = jnp.stack(
        [padc(params["b1"]), padc(params["g1"]), padc(params["be1"]),
         padc(params["b2"]), padc(params["g2"]), padc(params["be2"]),
         padc(params["b3"]), padc(params["g3"]), padc(params["be3"]),
         padc(params["fc_b"], NCP)], axis=1)                       # (16, 10)
    scal = jnp.pad(scal, ((0, 0), (0, 16 - scal.shape[1])))        # (16, 16)

    def kernel(p1_ref, w1_ref, wst_ref, m2_ref, sub_ref, m3_ref,
               fcw_ref, seg_ref, scal_ref, out_ref,
               stk2_ref, stk3_ref, y2_ref):

        def col(j):                                    # packed (CP, 1) scalar
            return scal_ref[:, j:j + 1]

        def bn_sig(y, gj, bej):
            # Train-mode BatchNorm2d: biased batch stats over the N*H*W lanes,
            # one pass (sum / sum-of-squares), clamped variance, affine, sigmoid.
            inv_m = 1.0 / y.shape[-1]
            mean = jnp.sum(y, axis=-1, keepdims=True) * inv_m
            msq = jnp.sum(y * y, axis=-1, keepdims=True) * inv_m
            var = jnp.maximum(msq - mean * mean, 0.0)
            yn = (y - mean) * jax.lax.rsqrt(var + EPS)
            return jax.nn.sigmoid(col(gj) * yn + col(bej))

        def stack_taps(a, m_ref, stk_ref, width):
            # 25 taps of a stride-1 5x5 conv from the VMEM-resident (CP, M)
            # activation: XLU lane roll + f32 0/1 validity mask, packed bf16
            # into the (25*CP, M) operand of ONE MXU matmul (K = 400).
            mm = a.shape[-1]
            t = 0
            for kh in range(KSIZE):
                for kw in range(KSIZE):
                    off = (kh - PAD) * width + (kw - PAD)
                    shift = (-off) % mm
                    tap = a if shift == 0 else pltpu.roll(a, shift=shift, axis=1)
                    stk_ref[t * CP:(t + 1) * CP, :] = (
                        tap * m_ref[t]).astype(jnp.bfloat16)
                    t += 1

        # ---- layer 1: one MXU matmul over the K-padded im2col patches --------
        y1 = jnp.dot(w1_ref[...], p1_ref[...],
                     preferred_element_type=jnp.float32)           # (CP, m1)
        a1 = bn_sig(y1 + col(0), 1, 2)

        # ---- layer 2 (stride 2): stacked-tap matmul at input resolution,
        #      then per-image bf16 subsample matmul (block-diag, linear in N) --
        stack_taps(a1, m2_ref, stk2_ref, ow1)
        u2 = jnp.dot(wst_ref[0], stk2_ref[...],
                     preferred_element_type=jnp.float32)           # (CP, m1)
        for b in range(n):
            y2_ref[:, b * hw2:(b + 1) * hw2] = jnp.dot(
                u2[:, b * hw1:(b + 1) * hw1].astype(jnp.bfloat16), sub_ref[...],
                preferred_element_type=jnp.float32)
        a2 = bn_sig(y2_ref[...] + col(3), 4, 5)

        # ---- layer 3 (stride 1): stacked-tap matmul at output resolution -----
        stack_taps(a2, m3_ref, stk3_ref, ow2)
        y3 = jnp.dot(wst_ref[1], stk3_ref[...],
                     preferred_element_type=jnp.float32)           # (CP, m3)
        a3 = bn_sig(y3 + col(6), 7, 8)

        # ---- FC: per-lane channel contraction, then one matmul against the
        #      batch-segment matrix; single lane-dense (16, 128) store ---------
        z = fcw_ref[0] * a3[0:1, :]
        for c in range(1, CP):
            z = z + fcw_ref[c] * a3[c:c + 1, :]                    # (NCP, m3)
        logits = jnp.dot(z.astype(jnp.bfloat16), seg_ref[...],
                         preferred_element_type=jnp.float32)       # (NCP, nb)
        out_ref[...] = logits + col(9)

    out = pl.pallas_call(
        kernel,
        out_shape=jax.ShapeDtypeStruct((NCP, nb), jnp.float32),
        in_specs=[_VMEM] * 9,
        out_specs=_VMEM,
        scratch_shapes=[
            pltpu.VMEM((KSIZE * KSIZE * CP, m1), jnp.bfloat16),   # layer-2 taps
            pltpu.VMEM((KSIZE * KSIZE * CP, m3), jnp.bfloat16),   # layer-3 taps
            pltpu.VMEM((CP, m3), jnp.float32),                    # layer-2 post-subsample
        ],
    )(p1p, w1p, wst, mask2, sub, mask3, fcw, seg, scal)
    return out[:ncls, :n].T                                        # (N, ncls)


# ------------------------- pure-JAX reference (f32) ---------------------------

def lenet_reference(x, params):
    def conv_bn_sig(hh, w_, b, g, be, stride):
        y = jax.lax.conv_general_dilated(
            hh, w_, window_strides=(stride, stride),
            padding=((PAD, PAD), (PAD, PAD)),
            dimension_numbers=("NCHW", "OIHW", "NCHW"))
        y = y + b.reshape(1, -1, 1, 1)
        mean = jnp.mean(y, axis=(0, 2, 3), keepdims=True)
        var = jnp.var(y, axis=(0, 2, 3), keepdims=True)     # biased, train mode
        yn = (y - mean) * jax.lax.rsqrt(var + EPS)
        return jax.nn.sigmoid(g.reshape(1, -1, 1, 1) * yn + be.reshape(1, -1, 1, 1))

    hh = conv_bn_sig(x, params["w1"], params["b1"], params["g1"], params["be1"], 2)
    hh = conv_bn_sig(hh, params["w2"], params["b2"], params["g2"], params["be2"], 2)
    hh = conv_bn_sig(hh, params["w3"], params["b3"], params["g3"], params["be3"], 1)
    hh = hh.reshape(hh.shape[0], -1)
    return hh @ params["fc_w"].T + params["fc_b"]


# --------------------------------- params -------------------------------------

def init_params(key, channel=3, hidden=768, num_classes=10):
    ks = jax.random.split(key, 8)
    f32 = jnp.float32
    return {
        "w1": jax.random.normal(ks[0], (12, channel, 5, 5), f32) * 0.1,
        "b1": jax.random.normal(ks[1], (12,), f32) * 0.1,
        "g1": jnp.ones((12,), f32), "be1": jnp.zeros((12,), f32),
        "w2": jax.random.normal(ks[2], (12, 12, 5, 5), f32) * 0.1,
        "b2": jax.random.normal(ks[3], (12,), f32) * 0.1,
        "g2": jnp.ones((12,), f32), "be2": jnp.zeros((12,), f32),
        "w3": jax.random.normal(ks[4], (12, 12, 5, 5), f32) * 0.1,
        "b3": jax.random.normal(ks[5], (12,), f32) * 0.1,
        "g3": jnp.ones((12,), f32), "be3": jnp.zeros((12,), f32),
        "fc_w": jax.random.normal(ks[6], (num_classes, hidden), f32) * 0.05,
        "fc_b": jax.random.normal(ks[7], (num_classes,), f32) * 0.05,
    }


if __name__ == "__main__":
    key = jax.random.PRNGKey(0)
    k_x, k_p = jax.random.split(key)

    # LeNet defaults: channel=3, hidden=768 -> 32x32 input (32 -> 16 -> 8 -> 8).
    N, C, H, W = 2, 3, 32, 32
    x = jax.random.normal(k_x, (N, C, H, W), jnp.float32)
    params = init_params(k_p, channel=C, hidden=768, num_classes=10)

    logits = jax.jit(lenet_forward)(x, params)
    logits = jax.block_until_ready(logits)
    assert logits.shape == (N, 10), logits.shape
    assert bool(jnp.all(jnp.isfinite(logits)))

    ref = jax.block_until_ready(jax.jit(lenet_reference)(x, params))
    np.testing.assert_allclose(np.asarray(logits), np.asarray(ref),
                               rtol=1e-1, atol=1e-1)
    print("KERNEL_OK")
</pallas_src>

<mosaic_0001>
module attributes {stable_mosaic.version = 11 : i64} {
  func.func @kernel(%arg0: memref<128x512xbf16, #tpu.memory_space<vmem>>, %arg1: memref<16x128xbf16, #tpu.memory_space<vmem>>, %arg2: memref<2x16x400xbf16, #tpu.memory_space<vmem>>, %arg3: memref<25x1x512xf32, #tpu.memory_space<vmem>>, %arg4: memref<256x64xbf16, #tpu.memory_space<vmem>>, %arg5: memref<25x1x128xf32, #tpu.memory_space<vmem>>, %arg6: memref<16x16x128xf32, #tpu.memory_space<vmem>>, %arg7: memref<128x128xbf16, #tpu.memory_space<vmem>>, %arg8: memref<16x16xf32, #tpu.memory_space<vmem>>, %arg9: memref<16x128xf32, #tpu.memory_space<vmem>>, %arg10: memref<400x512xbf16, #tpu.memory_space<vmem>>, %arg11: memref<400x128xbf16, #tpu.memory_space<vmem>>, %arg12: memref<16x128xf32, #tpu.memory_space<vmem>>) attributes {dimension_semantics = [], scalar_prefetch = 0 : i64, scratch_operands = 3 : i64, tpu.core_type = #tpu.core_type<tc>} {
    %c0 = arith.constant 0 : index
    %c0_0 = arith.constant 0 : index
    %0 = vector.load %arg1[%c0, %c0_0] : memref<16x128xbf16, #tpu.memory_space<vmem>>, vector<16x128xbf16>
    %c0_1 = arith.constant 0 : index
    %c0_2 = arith.constant 0 : index
    %1 = vector.load %arg0[%c0_1, %c0_2] : memref<128x512xbf16, #tpu.memory_space<vmem>>, vector<128x512xbf16>
    %cst = arith.constant dense<0.000000e+00> : vector<16x512xf32>
    %2 = tpu.matmul %0, %1, %cst {dimension_numbers = #tpu.dot_dimension_numbers<[1], [0], [0], [1], [0, 0, 1, 1], [], []>} : vector<16x128xbf16>, vector<128x512xbf16>, vector<16x512xf32> -> vector<16x512xf32>
    %c0_3 = arith.constant 0 : index
    %c0_4 = arith.constant 0 : index
    %3 = vector.load %arg8[%c0_3, %c0_4] : memref<16x16xf32, #tpu.memory_space<vmem>>, vector<16x1xf32>
    %4 = vector.broadcast %3 : vector<16x1xf32> to vector<16x512xf32>
    %5 = arith.addf %2, %4 : vector<16x512xf32>
    %cst_5 = arith.constant dense<0.000000e+00> : vector<16xf32>
    %6 = vector.multi_reduction <add>, %5, %cst_5 [1] : vector<16x512xf32> to vector<16xf32>
    %7 = vector.shape_cast %6 : vector<16xf32> to vector<16x1xf32>
    %cst_6 = arith.constant 0.001953125 : f32
    %8 = vector.broadcast %cst_6 : f32 to vector<16x1xf32>
    %9 = arith.mulf %7, %8 : vector<16x1xf32>
    %10 = arith.mulf %5, %5 : vector<16x512xf32>
    %cst_7 = arith.constant dense<0.000000e+00> : vector<16xf32>
    %11 = vector.multi_reduction <add>, %10, %cst_7 [1] : vector<16x512xf32> to vector<16xf32>
    %12 = vector.shape_cast %11 : vector<16xf32> to vector<16x1xf32>
    %cst_8 = arith.constant 0.001953125 : f32
    %13 = vector.broadcast %cst_8 : f32 to vector<16x1xf32>
    %14 = arith.mulf %12, %13 : vector<16x1xf32>
    %15 = arith.mulf %9, %9 : vector<16x1xf32>
    %16 = arith.subf %14, %15 : vector<16x1xf32>
    %cst_9 = arith.constant 0.000000e+00 : f32
    %17 = vector.broadcast %cst_9 : f32 to vector<16x1xf32>
    %18 = arith.maximumf %16, %17 : vector<16x1xf32>
    %19 = vector.broadcast %9 : vector<16x1xf32> to vector<16x512xf32>
    %20 = arith.subf %5, %19 : vector<16x512xf32>
    %cst_10 = arith.constant 9.99999974E-6 : f32
    %21 = vector.broadcast %cst_10 : f32 to vector<16x1xf32>
    %22 = arith.addf %18, %21 : vector<16x1xf32>
    %23 = math.rsqrt %22 : vector<16x1xf32>
    %24 = vector.broadcast %23 : vector<16x1xf32> to vector<16x512xf32>
    %25 = arith.mulf %20, %24 : vector<16x512xf32>
    %c0_11 = arith.constant 0 : index
    %c1 = arith.constant 1 : index
    %26 = vector.load %arg8[%c0_11, %c1] : memref<16x16xf32, #tpu.memory_space<vmem>>, vector<16x1xf32>
    %27 = vector.broadcast %26 : vector<16x1xf32> to vector<16x512xf32>
    %28 = arith.mulf %27, %25 : vector<16x512xf32>
    %c0_12 = arith.constant 0 : index
    %c2 = arith.constant 2 : index
    %29 = vector.load %arg8[%c0_12, %c2] : memref<16x16xf32, #tpu.memory_space<vmem>>, vector<16x1xf32>
    %30 = vector.broadcast %29 : vector<16x1xf32> to vector<16x512xf32>
    %31 = arith.addf %28, %30 : vector<16x512xf32>
    %32 = arith.negf %31 : vector<16x512xf32>
    %33 = math.exp %32 : vector<16x512xf32>
    %cst_13 = arith.constant 1.000000e+00 : f32
    %34 = vector.broadcast %cst_13 : f32 to vector<16x512xf32>
    %35 = arith.addf %34, %33 : vector<16x512xf32>
    %36 = arith.divf %34, %35 : vector<16x512xf32>
    %c34_i32 = arith.constant 34 : i32
    %37 = tpu.dynamic_rotate %36 by %c34_i32 dim 1 : vector<16x512xf32>, i32 -> vector<16x512xf32>
    %c0_14 = arith.constant 0 : index
    %c0_15 = arith.constant 0 : index
    %c0_16 = arith.constant 0 : index
    %38 = vector.load %arg3[%c0_14, %c0_15, %c0_16] : memref<25x1x512xf32, #tpu.memory_space<vmem>>, vector<1x1x512xf32>
    %39 = vector.shape_cast %38 : vector<1x1x512xf32> to vector<1x512xf32>
    %40 = vector.broadcast %39 : vector<1x512xf32> to vector<16x512xf32>
    %41 = arith.mulf %37, %40 : vector<16x512xf32>
    %42 = arith.truncf %41 : vector<16x512xf32> to vector<16x512xbf16>
    %c0_17 = arith.constant 0 : index
    %c0_18 = arith.constant 0 : index
    %43 = vector.load %arg10[%c0_17, %c0_18] : memref<400x512xbf16, #tpu.memory_space<vmem>>, vector<16x512xbf16>
    tpu.vector_store %arg10[%c0_17, %c0_18], %42 {strides = array<i32>} : memref<400x512xbf16, #tpu.memory_space<vmem>>, vector<16x512xbf16>,
    %c33_i32 = arith.constant 33 : i32
    %44 = tpu.dynamic_rotate %36 by %c33_i32 dim 1 : vector<16x512xf32>, i32 -> vector<16x512xf32>
    %c1_19 = arith.constant 1 : index
    %c0_20 = arith.constant 0 : index
    %c0_21 = arith.constant 0 : index
    %45 = vector.load %arg3[%c1_19, %c0_20, %c0_21] : memref<25x1x512xf32, #tpu.memory_space<vmem>>, vector<1x1x512xf32>
    %46 = vector.shape_cast %45 : vector<1x1x512xf32> to vector<1x512xf32>
    %47 = vector.broadcast %46 : vector<1x512xf32> to vector<16x512xf32>
    %48 = arith.mulf %44, %47 : vector<16x512xf32>
    %49 = arith.truncf %48 : vector<16x512xf32> to vector<16x512xbf16>
    %c16 = arith.constant 16 : index
    %c0_22 = arith.constant 0 : index
    %50 = vector.load %arg10[%c16, %c0_22] : memref<400x512xbf16, #tpu.memory_space<vmem>>, vector<16x512xbf16>
    tpu.vector_store %arg10[%c16, %c0_22], %49 {strides = array<i32>} : memref<400x512xbf16, #tpu.memory_space<vmem>>, vector<16x512xbf16>,
    %c32_i32 = arith.constant 32 : i32
    %51 = tpu.dynamic_rotate %36 by %c32_i32 dim 1 : vector<16x512xf32>, i32 -> vector<16x512xf32>
    %c2_23 = arith.constant 2 : index
    %c0_24 = arith.constant 0 : index
    %c0_25 = arith.constant 0 : index
    %52 = vector.load %arg3[%c2_23, %c0_24, %c0_25] : memref<25x1x512xf32, #tpu.memory_space<vmem>>, vector<1x1x512xf32>
    %53 = vector.shape_cast %52 : vector<1x1x512xf32> to vector<1x512xf32>
    %54 = vector.broadcast %53 : vector<1x512xf32> to vector<16x512xf32>
    %55 = arith.mulf %51, %54 : vector<16x512xf32>
    %56 = arith.truncf %55 : vector<16x512xf32> to vector<16x512xbf16>
    %c32 = arith.constant 32 : index
    %c0_26 = arith.constant 0 : index
    %57 = vector.load %arg10[%c32, %c0_26] : memref<400x512xbf16, #tpu.memory_space<vmem>>, vector<16x512xbf16>
    tpu.vector_store %arg10[%c32, %c0_26], %56 {strides = array<i32>} : memref<400x512xbf16, #tpu.memory_space<vmem>>, vector<16x512xbf16>,
    %c31_i32 = arith.constant 31 : i32
    %58 = tpu.dynamic_rotate %36 by %c31_i32 dim 1 : vector<16x512xf32>, i32 -> vector<16x512xf32>
    %c3 = arith.constant 3 : index
    %c0_27 = arith.constant 0 : index
    %c0_28 = arith.constant 0 : index
    %59 = vector.load %arg3[%c3, %c0_27, %c0_28] : memref<25x1x512xf32, #tpu.memory_space<vmem>>, vector<1x1x512xf32>
    %60 = vector.shape_cast %59 : vector<1x1x512xf32> to vector<1x512xf32>
    %61 = vector.broadcast %60 : vector<1x512xf32> to vector<16x512xf32>
    %62 = arith.mulf %58, %61 : vector<16x512xf32>
    %63 = arith.truncf %62 : vector<16x512xf32> to vector<16x512xbf16>
    %c48 = arith.constant 48 : index
    %c0_29 = arith.constant 0 : index
    %64 = vector.load %arg10[%c48, %c0_29] : memref<400x512xbf16, #tpu.memory_space<vmem>>, vector<16x512xbf16>
    tpu.vector_store %arg10[%c48, %c0_29], %63 {strides = array<i32>} : memref<400x512xbf16, #tpu.memory_space<vmem>>, vector<16x512xbf16>,
    %c30_i32 = arith.constant 30 : i32
    %65 = tpu.dynamic_rotate %36 by %c30_i32 dim 1 : vector<16x512xf32>, i32 -> vector<16x512xf32>
    %c4 = arith.constant 4 : index
    %c0_30 = arith.constant 0 : index
    %c0_31 = arith.constant 0 : index
    %66 = vector.load %arg3[%c4, %c0_30, %c0_31] : memref<25x1x512xf32, #tpu.memory_space<vmem>>, vector<1x1x512xf32>
    %67 = vector.shape_cast %66 : vector<1x1x512xf32> to vector<1x512xf32>
    %68 = vector.broadcast %67 : vector<1x512xf32> to vector<16x512xf32>
    %69 = arith.mulf %65, %68 : vector<16x512xf32>
    %70 = arith.truncf %69 : vector<16x512xf32> to vector<16x512xbf16>
    %c64 = arith.constant 64 : index
    %c0_32 = arith.constant 0 : index
    %71 = vector.load %arg10[%c64, %c0_32] : memref<400x512xbf16, #tpu.memory_space<vmem>>, vector<16x512xbf16>
    tpu.vector_store %arg10[%c64, %c0_32], %70 {strides = array<i32>} : memref<400x512xbf16, #tpu.memory_space<vmem>>, vector<16x512xbf16>,
    %c18_i32 = arith.constant 18 : i32
    %72 = tpu.dynamic_rotate %36 by %c18_i32 dim 1 : vector<16x512xf32>, i32 -> vector<16x512xf32>
    %c5 = arith.constant 5 : index
    %c0_33 = arith.constant 0 : index
    %c0_34 = arith.constant 0 : index
    %73 = vector.load %arg3[%c5, %c0_33, %c0_34] : memref<25x1x512xf32, #tpu.memory_space<vmem>>, vector<1x1x512xf32>
    %74 = vector.shape_cast %73 : vector<1x1x512xf32> to vector<1x512xf32>
    %75 = vector.broadcast %74 : vector<1x512xf32> to vector<16x512xf32>
    %76 = arith.mulf %72, %75 : vector<16x512xf32>
    %77 = arith.truncf %76 : vector<16x512xf32> to vector<16x512xbf16>
    %c80 = arith.constant 80 : index
    %c0_35 = arith.constant 0 : index
    %78 = vector.load %arg10[%c80, %c0_35] : memref<400x512xbf16, #tpu.memory_space<vmem>>, vector<16x512xbf16>
    tpu.vector_store %arg10[%c80, %c0_35], %77 {strides = array<i32>} : memref<400x512xbf16, #tpu.memory_space<vmem>>, vector<16x512xbf16>,
    %c17_i32 = arith.constant 17 : i32
    %79 = tpu.dynamic_rotate %36 by %c17_i32 dim 1 : vector<16x512xf32>, i32 -> vector<16x512xf32>
    %c6 = arith.constant 6 : index
    %c0_36 = arith.constant 0 : index
    %c0_37 = arith.constant 0 : index
    %80 = vector.load %arg3[%c6, %c0_36, %c0_37] : memref<25x1x512xf32, #tpu.memory_space<vmem>>, vector<1x1x512xf32>
    %81 = vector.shape_cast %80 : vector<1x1x512xf32> to vector<1x512xf32>
    %82 = vector.broadcast %81 : vector<1x512xf32> to vector<16x512xf32>
    %83 = arith.mulf %79, %82 : vector<16x512xf32>
    %84 = arith.truncf %83 : vector<16x512xf32> to vector<16x512xbf16>
    %c96 = arith.constant 96 : index
    %c0_38 = arith.constant 0 : index
    %85 = vector.load %arg10[%c96, %c0_38] : memref<400x512xbf16, #tpu.memory_space<vmem>>, vector<16x512xbf16>
    tpu.vector_store %arg10[%c96, %c0_38], %84 {strides = array<i32>} : memref<400x512xbf16, #tpu.memory_space<vmem>>, vector<16x512xbf16>,
    %c16_i32 = arith.constant 16 : i32
    %86 = tpu.dynamic_rotate %36 by %c16_i32 dim 1 : vector<16x512xf32>, i32 -> vector<16x512xf32>
    %c7 = arith.constant 7 : index
    %c0_39 = arith.constant 0 : index
    %c0_40 = arith.constant 0 : index
    %87 = vector.load %arg3[%c7, %c0_39, %c0_40] : memref<25x1x512xf32, #tpu.memory_space<vmem>>, vector<1x1x512xf32>
    %88 = vector.shape_cast %87 : vector<1x1x512xf32> to vector<1x512xf32>
    %89 = vector.broadcast %88 : vector<1x512xf32> to vector<16x512xf32>
    %90 = arith.mulf %86, %89 : vector<16x512xf32>
    %91 = arith.truncf %90 : vector<16x512xf32> to vector<16x512xbf16>
    %c112 = arith.constant 112 : index
    %c0_41 = arith.constant 0 : index
    %92 = vector.load %arg10[%c112, %c0_41] : memref<400x512xbf16, #tpu.memory_space<vmem>>, vector<16x512xbf16>
    tpu.vector_store %arg10[%c112, %c0_41], %91 {strides = array<i32>} : memref<400x512xbf16, #tpu.memory_space<vmem>>, vector<16x512xbf16>,
    %c15_i32 = arith.constant 15 : i32
    %93 = tpu.dynamic_rotate %36 by %c15_i32 dim 1 : vector<16x512xf32>, i32 -> vector<16x512xf32>
    %c8 = arith.constant 8 : index
    %c0_42 = arith.constant 0 : index
    %c0_43 = arith.constant 0 : index
    %94 = vector.load %arg3[%c8, %c0_42, %c0_43] : memref<25x1x512xf32, #tpu.memory_space<vmem>>, vector<1x1x512xf32>
    %95 = vector.shape_cast %94 : vector<1x1x512xf32> to vector<1x512xf32>
    %96 = vector.broadcast %95 : vector<1x512xf32> to vector<16x512xf32>
    %97 = arith.mulf %93, %96 : vector<16x512xf32>
    %98 = arith.truncf %97 : vector<16x512xf32> to vector<16x512xbf16>
    %c128 = arith.constant 128 : index
    %c0_44 = arith.constant 0 : index
    %99 = vector.load %arg10[%c128, %c0_44] : memref<400x512xbf16, #tpu.memory_space<vmem>>, vector<16x512xbf16>
    tpu.vector_store %arg10[%c128, %c0_44], %98 {strides = array<i32>} : memref<400x512xbf16, #tpu.memory_space<vmem>>, vector<16x512xbf16>,
    %c14_i32 = arith.constant 14 : i32
    %100 = tpu.dynamic_rotate %36 by %c14_i32 dim 1 : vector<16x512xf32>, i32 -> vector<16x512xf32>
    %c9 = arith.constant 9 : index
    %c0_45 = arith.constant 0 : index
    %c0_46 = arith.constant 0 : index
    %101 = vector.load %arg3[%c9, %c0_45, %c0_46] : memref<25x1x512xf32, #tpu.memory_space<vmem>>, vector<1x1x512xf32>
    %102 = vector.shape_cast %101 : vector<1x1x512xf32> to vector<1x512xf32>
    %103 = vector.broadcast %102 : vector<1x512xf32> to vector<16x512xf32>
    %104 = arith.mulf %100, %103 : vector<16x512xf32>
    %105 = arith.truncf %104 : vector<16x512xf32> to vector<16x512xbf16>
    %c144 = arith.constant 144 : index
    %c0_47 = arith.constant 0 : index
    %106 = vector.load %arg10[%c144, %c0_47] : memref<400x512xbf16, #tpu.memory_space<vmem>>, vector<16x512xbf16>
    tpu.vector_store %arg10[%c144, %c0_47], %105 {strides = array<i32>} : memref<400x512xbf16, #tpu.memory_space<vmem>>, vector<16x512xbf16>,
    %c2_i32 = arith.constant 2 : i32
    %107 = tpu.dynamic_rotate %36 by %c2_i32 dim 1 : vector<16x512xf32>, i32 -> vector<16x512xf32>
    %c10 = arith.constant 10 : index
    %c0_48 = arith.constant 0 : index
    %c0_49 = arith.constant 0 : index
    %108 = vector.load %arg3[%c10, %c0_48, %c0_49] : memref<25x1x512xf32, #tpu.memory_space<vmem>>, vector<1x1x512xf32>
    %109 = vector.shape_cast %108 : vector<1x1x512xf32> to vector<1x512xf32>
    %110 = vector.broadcast %109 : vector<1x512xf32> to vector<16x512xf32>
    %111 = arith.mulf %107, %110 : vector<16x512xf32>
    %112 = arith.truncf %111 : vector<16x512xf32> to vector<16x512xbf16>
    %c160 = arith.constant 160 : index
    %c0_50 = arith.constant 0 : index
    %113 = vector.load %arg10[%c160, %c0_50] : memref<400x512xbf16, #tpu.memory_space<vmem>>, vector<16x512xbf16>
    tpu.vector_store %arg10[%c160, %c0_50], %112 {strides = array<i32>} : memref<400x512xbf16, #tpu.memory_space<vmem>>, vector<16x512xbf16>,
    %c1_i32 = arith.constant 1 : i32
    %114 = tpu.dynamic_rotate %36 by %c1_i32 dim 1 : vector<16x512xf32>, i32 -> vector<16x512xf32>
    %c11 = arith.constant 11 : index
    %c0_51 = arith.constant 0 : index
    %c0_52 = arith.constant 0 : index
    %115 = vector.load %arg3[%c11, %c0_51, %c0_52] : memref<25x1x512xf32, #tpu.memory_space<vmem>>, vector<1x1x512xf32>
    %116 = vector.shape_cast %115 : vector<1x1x512xf32> to vector<1x512xf32>
    %117 = vector.broadcast %116 : vector<1x512xf32> to vector<16x512xf32>
    %118 = arith.mulf %114, %117 : vector<16x512xf32>
    %119 = arith.truncf %118 : vector<16x512xf32> to vector<16x512xbf16>
    %c176 = arith.constant 176 : index
    %c0_53 = arith.constant 0 : index
    %120 = vector.load %arg10[%c176, %c0_53] : memref<400x512xbf16, #tpu.memory_space<vmem>>, vector<16x512xbf16>
    tpu.vector_store %arg10[%c176, %c0_53], %119 {strides = array<i32>} : memref<400x512xbf16, #tpu.memory_space<vmem>>, vector<16x512xbf16>,
    %c12 = arith.constant 12 : index
    %c0_54 = arith.constant 0 : index
    %c0_55 = arith.constant 0 : index
    %121 = vector.load %arg3[%c12, %c0_54, %c0_55] : memref<25x1x512xf32, #tpu.memory_space<vmem>>, vector<1x1x512xf32>
    %122 = vector.shape_cast %121 : vector<1x1x512xf32> to vector<1x512xf32>
    %123 = vector.broadcast %122 : vector<1x512xf32> to vector<16x512xf32>
    %124 = arith.mulf %36, %123 : vector<16x512xf32>
    %125 = arith.truncf %124 : vector<16x512xf32> to vector<16x512xbf16>
    %c192 = arith.constant 192 : index
    %c0_56 = arith.constant 0 : index
    %126 = vector.load %arg10[%c192, %c0_56] : memref<400x512xbf16, #tpu.memory_space<vmem>>, vector<16x512xbf16>
    tpu.vector_store %arg10[%c192, %c0_56], %125 {strides = array<i32>} : memref<400x512xbf16, #tpu.memory_space<vmem>>, vector<16x512xbf16>,
    %c511_i32 = arith.constant 511 : i32
    %127 = tpu.dynamic_rotate %36 by %c511_i32 dim 1 : vector<16x512xf32>, i32 -> vector<16x512xf32>
    %c13 = arith.constant 13 : index
    %c0_57 = arith.constant 0 : index
    %c0_58 = arith.constant 0 : index
    %128 = vector.load %arg3[%c13, %c0_57, %c0_58] : memref<25x1x512xf32, #tpu.memory_space<vmem>>, vector<1x1x512xf32>
    %129 = vector.shape_cast %128 : vector<1x1x512xf32> to vector<1x512xf32>
    %130 = vector.broadcast %129 : vector<1x512xf32> to vector<16x512xf32>
    %131 = arith.mulf %127, %130 : vector<16x512xf32>
    %132 = arith.truncf %131 : vector<16x512xf32> to vector<16x512xbf16>
    %c208 = arith.constant 208 : index
    %c0_59 = arith.constant 0 : index
    %133 = vector.load %arg10[%c208, %c0_59] : memref<400x512xbf16, #tpu.memory_space<vmem>>, vector<16x512xbf16>
    tpu.vector_store %arg10[%c208, %c0_59], %132 {strides = array<i32>} : memref<400x512xbf16, #tpu.memory_space<vmem>>, vector<16x512xbf16>,
    %c510_i32 = arith.constant 510 : i32
    %134 = tpu.dynamic_rotate %36 by %c510_i32 dim 1 : vector<16x512xf32>, i32 -> vector<16x512xf32>
    %c14 = arith.constant 14 : index
    %c0_60 = arith.constant 0 : index
    %c0_61 = arith.constant 0 : index
    %135 = vector.load %arg3[%c14, %c0_60, %c0_61] : memref<25x1x512xf32, #tpu.memory_space<vmem>>, vector<1x1x512xf32>
    %136 = vector.shape_cast %135 : vector<1x1x512xf32> to vector<1x512xf32>
    %137 = vector.broadcast %136 : vector<1x512xf32> to vector<16x512xf32>
    %138 = arith.mulf %134, %137 : vector<16x512xf32>
    %139 = arith.truncf %138 : vector<16x512xf32> to vector<16x512xbf16>
    %c224 = arith.constant 224 : index
    %c0_62 = arith.constant 0 : index
    %140 = vector.load %arg10[%c224, %c0_62] : memref<400x512xbf16, #tpu.memory_space<vmem>>, vector<16x512xbf16>
    tpu.vector_store %arg10[%c224, %c0_62], %139 {strides = array<i32>} : memref<400x512xbf16, #tpu.memory_space<vmem>>, vector<16x512xbf16>,
    %c498_i32 = arith.constant 498 : i32
    %141 = tpu.dynamic_rotate %36 by %c498_i32 dim 1 : vector<16x512xf32>, i32 -> vector<16x512xf32>
    %c15 = arith.constant 15 : index
    %c0_63 = arith.constant 0 : index
    %c0_64 = arith.constant 0 : index
    %142 = vector.load %arg3[%c15, %c0_63, %c0_64] : memref<25x1x512xf32, #tpu.memory_space<vmem>>, vector<1x1x512xf32>
    %143 = vector.shape_cast %142 : vector<1x1x512xf32> to vector<1x512xf32>
    %144 = vector.broadcast %143 : vector<1x512xf32> to vector<16x512xf32>
    %145 = arith.mulf %141, %144 : vector<16x512xf32>
    %146 = arith.truncf %145 : vector<16x512xf32> to vector<16x512xbf16>
    %c240 = arith.constant 240 : index
    %c0_65 = arith.constant 0 : index
    %147 = vector.load %arg10[%c240, %c0_65] : memref<400x512xbf16, #tpu.memory_space<vmem>>, vector<16x512xbf16>
    tpu.vector_store %arg10[%c240, %c0_65], %146 {strides = array<i32>} : memref<400x512xbf16, #tpu.memory_space<vmem>>, vector<16x512xbf16>,
    %c497_i32 = arith.constant 497 : i32
    %148 = tpu.dynamic_rotate %36 by %c497_i32 dim 1 : vector<16x512xf32>, i32 -> vector<16x512xf32>
    %c16_66 = arith.constant 16 : index
    %c0_67 = arith.constant 0 : index
    %c0_68 = arith.constant 0 : index
    %149 = vector.load %arg3[%c16_66, %c0_67, %c0_68] : memref<25x1x512xf32, #tpu.memory_space<vmem>>, vector<1x1x512xf32>
    %150 = vector.shape_cast %149 : vector<1x1x512xf32> to vector<1x512xf32>
    %151 = vector.broadcast %150 : vector<1x512xf32> to vector<16x512xf32>
    %152 = arith.mulf %148, %151 : vector<16x512xf32>
    %153 = arith.truncf %152 : vector<16x512xf32> to vector<16x512xbf16>
    %c256 = arith.constant 256 : index
    %c0_69 = arith.constant 0 : index
    %154 = vector.load %arg10[%c256, %c0_69] : memref<400x512xbf16, #tpu.memory_space<vmem>>, vector<16x512xbf16>
    tpu.vector_store %arg10[%c256, %c0_69], %153 {strides = array<i32>} : memref<400x512xbf16, #tpu.memory_space<vmem>>, vector<16x512xbf16>,
    %c496_i32 = arith.constant 496 : i32
    %155 = tpu.dynamic_rotate %36 by %c496_i32 dim 1 : vector<16x512xf32>, i32 -> vector<16x512xf32>
    %c17 = arith.constant 17 : index
    %c0_70 = arith.constant 0 : index
    %c0_71 = arith.constant 0 : index
    %156 = vector.load %arg3[%c17, %c0_70, %c0_71] : memref<25x1x512xf32, #tpu.memory_space<vmem>>, vector<1x1x512xf32>
    %157 = vector.shape_cast %156 : vector<1x1x512xf32> to vector<1x512xf32>
    %158 = vector.broadcast %157 : vector<1x512xf32> to vector<16x512xf32>
    %159 = arith.mulf %155, %158 : vector<16x512xf32>
    %160 = arith.truncf %159 : vector<16x512xf32> to vector<16x512xbf16>
    %c272 = arith.constant 272 : index
    %c0_72 = arith.constant 0 : index
    %161 = vector.load %arg10[%c272, %c0_72] : memref<400x512xbf16, #tpu.memory_space<vmem>>, vector<16x512xbf16>
    tpu.vector_store %arg10[%c272, %c0_72], %160 {strides = array<i32>} : memref<400x512xbf16, #tpu.memory_space<vmem>>, vector<16x512xbf16>,
    %c495_i32 = arith.constant 495 : i32
    %162 = tpu.dynamic_rotate %36 by %c495_i32 dim 1 : vector<16x512xf32>, i32 -> vector<16x512xf32>
    %c18 = arith.constant 18 : index
    %c0_73 = arith.constant 0 : index
    %c0_74 = arith.constant 0 : index
    %163 = vector.load %arg3[%c18, %c0_73, %c0_74] : memref<25x1x512xf32, #tpu.memory_space<vmem>>, vector<1x1x512xf32>
    %164 = vector.shape_cast %163 : vector<1x1x512xf32> to vector<1x512xf32>
    %165 = vector.broadcast %164 : vector<1x512xf32> to vector<16x512xf32>
    %166 = arith.mulf %162, %165 : vector<16x512xf32>
    %167 = arith.truncf %166 : vector<16x512xf32> to vector<16x512xbf16>
    %c288 = arith.constant 288 : index
    %c0_75 = arith.constant 0 : index
    %168 = vector.load %arg10[%c288, %c0_75] : memref<400x512xbf16, #tpu.memory_space<vmem>>, vector<16x512xbf16>
    tpu.vector_store %arg10[%c288, %c0_75], %167 {strides = array<i32>} : memref<400x512xbf16, #tpu.memory_space<vmem>>, vector<16x512xbf16>,
    %c494_i32 = arith.constant 494 : i32
    %169 = tpu.dynamic_rotate %36 by %c494_i32 dim 1 : vector<16x512xf32>, i32 -> vector<16x512xf32>
    %c19 = arith.constant 19 : index
    %c0_76 = arith.constant 0 : index
    %c0_77 = arith.constant 0 : index
    %170 = vector.load %arg3[%c19, %c0_76, %c0_77] : memref<25x1x512xf32, #tpu.memory_space<vmem>>, vector<1x1x512xf32>
    %171 = vector.shape_cast %170 : vector<1x1x512xf32> to vector<1x512xf32>
    %172 = vector.broadcast %171 : vector<1x512xf32> to vector<16x512xf32>
    %173 = arith.mulf %169, %172 : vector<16x512xf32>
    %174 = arith.truncf %173 : vector<16x512xf32> to vector<16x512xbf16>
    %c304 = arith.constant 304 : index
    %c0_78 = arith.constant 0 : index
    %175 = vector.load %arg10[%c304, %c0_78] : memref<400x512xbf16, #tpu.memory_space<vmem>>, vector<16x512xbf16>
    tpu.vector_store %arg10[%c304, %c0_78], %174 {strides = array<i32>} : memref<400x512xbf16, #tpu.memory_space<vmem>>, vector<16x512xbf16>,
    %c482_i32 = arith.constant 482 : i32
    %176 = tpu.dynamic_rotate %36 by %c482_i32 dim 1 : vector<16x512xf32>, i32 -> vector<16x512xf32>
    %c20 = arith.constant 20 : index
    %c0_79 = arith.constant 0 : index
    %c0_80 = arith.constant 0 : index
    %177 = vector.load %arg3[%c20, %c0_79, %c0_80] : memref<25x1x512xf32, #tpu.memory_space<vmem>>, vector<1x1x512xf32>
    %178 = vector.shape_cast %177 : vector<1x1x512xf32> to vector<1x512xf32>
    %179 = vector.broadcast %178 : vector<1x512xf32> to vector<16x512xf32>
    %180 = arith.mulf %176, %179 : vector<16x512xf32>
    %181 = arith.truncf %180 : vector<16x512xf32> to vector<16x512xbf16>
    %c320 = arith.constant 320 : index
    %c0_81 = arith.constant 0 : index
    %182 = vector.load %arg10[%c320, %c0_81] : memref<400x512xbf16, #tpu.memory_space<vmem>>, vector<16x512xbf16>
    tpu.vector_store %arg10[%c320, %c0_81], %181 {strides = array<i32>} : memref<400x512xbf16, #tpu.memory_space<vmem>>, vector<16x512xbf16>,
    %c481_i32 = arith.constant 481 : i32
    %183 = tpu.dynamic_rotate %36 by %c481_i32 dim 1 : vector<16x512xf32>, i32 -> vector<16x512xf32>
    %c21 = arith.constant 21 : index
    %c0_82 = arith.constant 0 : index
    %c0_83 = arith.constant 0 : index
    %184 = vector.load %arg3[%c21, %c0_82, %c0_83] : memref<25x1x512xf32, #tpu.memory_space<vmem>>, vector<1x1x512xf32>
    %185 = vector.shape_cast %184 : vector<1x1x512xf32> to vector<1x512xf32>
    %186 = vector.broadcast %185 : vector<1x512xf32> to vector<16x512xf32>
    %187 = arith.mulf %183, %186 : vector<16x512xf32>
    %188 = arith.truncf %187 : vector<16x512xf32> to vector<16x512xbf16>
    %c336 = arith.constant 336 : index
    %c0_84 = arith.constant 0 : index
    %189 = vector.load %arg10[%c336, %c0_84] : memref<400x512xbf16, #tpu.memory_space<vmem>>, vector<16x512xbf16>
    tpu.vector_store %arg10[%c336, %c0_84], %188 {strides = array<i32>} : memref<400x512xbf16, #tpu.memory_space<vmem>>, vector<16x512xbf16>,
    %c480_i32 = arith.constant 480 : i32
    %190 = tpu.dynamic_rotate %36 by %c480_i32 dim 1 : vector<16x512xf32>, i32 -> vector<16x512xf32>
    %c22 = arith.constant 22 : index
    %c0_85 = arith.constant 0 : index
    %c0_86 = arith.constant 0 : index
    %191 = vector.load %arg3[%c22, %c0_85, %c0_86] : memref<25x1x512xf32, #tpu.memory_space<vmem>>, vector<1x1x512xf32>
    %192 = vector.shape_cast %191 : vector<1x1x512xf32> to vector<1x512xf32>
    %193 = vector.broadcast %192 : vector<1x512xf32> to vector<16x512xf32>
    %194 = arith.mulf %190, %193 : vector<16x512xf32>
    %195 = arith.truncf %194 : vector<16x512xf32> to vector<16x512xbf16>
    %c352 = arith.constant 352 : index
    %c0_87 = arith.constant 0 : index
    %196 = vector.load %arg10[%c352, %c0_87] : memref<400x512xbf16, #tpu.memory_space<vmem>>, vector<16x512xbf16>
    tpu.vector_store %arg10[%c352, %c0_87], %195 {strides = array<i32>} : memref<400x512xbf16, #tpu.memory_space<vmem>>, vector<16x512xbf16>,
    %c479_i32 = arith.constant 479 : i32
    %197 = tpu.dynamic_rotate %36 by %c479_i32 dim 1 : vector<16x512xf32>, i32 -> vector<16x512xf32>
    %c23 = arith.constant 23 : index
    %c0_88 = arith.constant 0 : index
    %c0_89 = arith.constant 0 : index
    %198 = vector.load %arg3[%c23, %c0_88, %c0_89] : memref<25x1x512xf32, #tpu.memory_space<vmem>>, vector<1x1x512xf32>
    %199 = vector.shape_cast %198 : vector<1x1x512xf32> to vector<1x512xf32>
    %200 = vector.broadcast %199 : vector<1x512xf32> to vector<16x512xf32>
    %201 = arith.mulf %197, %200 : vector<16x512xf32>
    %202 = arith.truncf %201 : vector<16x512xf32> to vector<16x512xbf16>
    %c368 = arith.constant 368 : index
    %c0_90 = arith.constant 0 : index
    %203 = vector.load %arg10[%c368, %c0_90] : memref<400x512xbf16, #tpu.memory_space<vmem>>, vector<16x512xbf16>
    tpu.vector_store %arg10[%c368, %c0_90], %202 {strides = array<i32>} : memref<400x512xbf16, #tpu.memory_space<vmem>>, vector<16x512xbf16>,
    %c478_i32 = arith.constant 478 : i32
    %204 = tpu.dynamic_rotate %36 by %c478_i32 dim 1 : vector<16x512xf32>, i32 -> vector<16x512xf32>
    %c24 = arith.constant 24 : index
    %c0_91 = arith.constant 0 : index
    %c0_92 = arith.constant 0 : index
    %205 = vector.load %arg3[%c24, %c0_91, %c0_92] : memref<25x1x512xf32, #tpu.memory_space<vmem>>, vector<1x1x512xf32>
    %206 = vector.shape_cast %205 : vector<1x1x512xf32> to vector<1x512xf32>
    %207 = vector.broadcast %206 : vector<1x512xf32> to vector<16x512xf32>
    %208 = arith.mulf %204, %207 : vector<16x512xf32>
    %209 = arith.truncf %208 : vector<16x512xf32> to vector<16x512xbf16>
    %c384 = arith.constant 384 : index
    %c0_93 = arith.constant 0 : index
    %210 = vector.load %arg10[%c384, %c0_93] : memref<400x512xbf16, #tpu.memory_space<vmem>>, vector<16x512xbf16>
    tpu.vector_store %arg10[%c384, %c0_93], %209 {strides = array<i32>} : memref<400x512xbf16, #tpu.memory_space<vmem>>, vector<16x512xbf16>,
    %c0_94 = arith.constant 0 : index
    %c0_95 = arith.constant 0 : index
    %c0_96 = arith.constant 0 : index
    %211 = vector.load %arg2[%c0_94, %c0_95, %c0_96] : memref<2x16x400xbf16, #tpu.memory_space<vmem>>, vector<1x16x400xbf16>
    %212 = vector.shape_cast %211 : vector<1x16x400xbf16> to vector<16x400xbf16>
    %c0_97 = arith.constant 0 : index
    %c0_98 = arith.constant 0 : index
    %213 = vector.load %arg10[%c0_97, %c0_98] : memref<400x512xbf16, #tpu.memory_space<vmem>>, vector<400x512xbf16>
    %cst_99 = arith.constant dense<0.000000e+00> : vector<16x512xf32>
    %214 = tpu.matmul %212, %213, %cst_99 {dimension_numbers = #tpu.dot_dimension_numbers<[1], [0], [0], [1], [0, 0, 1, 1], [], []>} : vector<16x400xbf16>, vector<400x512xbf16>, vector<16x512xf32> -> vector<16x512xf32>
    %215 = vector.extract_strided_slice %214 {offsets = [0, 0], sizes = [16, 256], strides = [1, 1]} : vector<16x512xf32> to vector<16x256xf32>
    %216 = arith.truncf %215 : vector<16x256xf32> to vector<16x256xbf16>
    %c0_100 = arith.constant 0 : index
    %c0_101 = arith.constant 0 : index
    %217 = vector.load %arg4[%c0_100, %c0_101] : memref<256x64xbf16, #tpu.memory_space<vmem>>, vector<256x64xbf16>
    %cst_102 = arith.constant dense<0.000000e+00> : vector<16x64xf32>
    %218 = tpu.matmul %216, %217, %cst_102 {dimension_numbers = #tpu.dot_dimension_numbers<[1], [0], [0], [1], [0, 0, 1, 1], [], []>} : vector<16x256xbf16>, vector<256x64xbf16>, vector<16x64xf32> -> vector<16x64xf32>
    %c0_103 = arith.constant 0 : index
    %c0_104 = arith.constant 0 : index
    %219 = vector.load %arg12[%c0_103, %c0_104] : memref<16x128xf32, #tpu.memory_space<vmem>>, vector<16x64xf32>
    tpu.vector_store %arg12[%c0_103, %c0_104], %218 {strides = array<i32>} : memref<16x128xf32, #tpu.memory_space<vmem>>, vector<16x64xf32>,
    %220 = vector.extract_strided_slice %214 {offsets = [0, 256], sizes = [16, 256], strides = [1, 1]} : vector<16x512xf32> to vector<16x256xf32>
    %221 = arith.truncf %220 : vector<16x256xf32> to vector<16x256xbf16>
    %c0_105 = arith.constant 0 : index
    %c0_106 = arith.constant 0 : index
    %222 = vector.load %arg4[%c0_105, %c0_106] : memref<256x64xbf16, #tpu.memory_space<vmem>>, vector<256x64xbf16>
    %cst_107 = arith.constant dense<0.000000e+00> : vector<16x64xf32>
    %223 = tpu.matmul %221, %222, %cst_107 {dimension_numbers = #tpu.dot_dimension_numbers<[1], [0], [0], [1], [0, 0, 1, 1], [], []>} : vector<16x256xbf16>, vector<256x64xbf16>, vector<16x64xf32> -> vector<16x64xf32>
    %c0_108 = arith.constant 0 : index
    %c64_109 = arith.constant 64 : index
    %224 = vector.load %arg12[%c0_108, %c64_109] : memref<16x128xf32, #tpu.memory_space<vmem>>, vector<16x64xf32>
    tpu.vector_store %arg12[%c0_108, %c64_109], %223 {strides = array<i32>} : memref<16x128xf32, #tpu.memory_space<vmem>>, vector<16x64xf32>,
    %c0_110 = arith.constant 0 : index
    %c0_111 = arith.constant 0 : index
    %225 = vector.load %arg12[%c0_110, %c0_111] : memref<16x128xf32, #tpu.memory_space<vmem>>, vector<16x128xf32>
    %c0_112 = arith.constant 0 : index
    %c3_113 = arith.constant 3 : index
    %226 = vector.load %arg8[%c0_112, %c3_113] : memref<16x16xf32, #tpu.memory_space<vmem>>, vector<16x1xf32>
    %227 = vector.broadcast %226 : vector<16x1xf32> to vector<16x128xf32>
    %228 = arith.addf %225, %227 : vector<16x128xf32>
    %cst_114 = arith.constant dense<0.000000e+00> : vector<16xf32>
    %229 = vector.multi_reduction <add>, %228, %cst_114 [1] : vector<16x128xf32> to vector<16xf32>
    %230 = vector.shape_cast %229 : vector<16xf32> to vector<16x1xf32>
    %cst_115 = arith.constant 7.812500e-03 : f32
    %231 = vector.broadcast %cst_115 : f32 to vector<16x1xf32>
    %232 = arith.mulf %230, %231 : vector<16x1xf32>
    %233 = arith.mulf %228, %228 : vector<16x128xf32>
    %cst_116 = arith.constant dense<0.000000e+00> : vector<16xf32>
    %234 = vector.multi_reduction <add>, %233, %cst_116 [1] : vector<16x128xf32> to vector<16xf32>
    %235 = vector.shape_cast %234 : vector<16xf32> to vector<16x1xf32>
    %cst_117 = arith.constant 7.812500e-03 : f32
    %236 = vector.broadcast %cst_117 : f32 to vector<16x1xf32>
    %237 = arith.mulf %235, %236 : vector<16x1xf32>
    %238 = arith.mulf %232, %232 : vector<16x1xf32>
    %239 = arith.subf %237, %238 : vector<16x1xf32>
    %cst_118 = arith.constant 0.000000e+00 : f32
    %240 = vector.broadcast %cst_118 : f32 to vector<16x1xf32>
    %241 = arith.maximumf %239, %240 : vector<16x1xf32>
    %242 = vector.broadcast %232 : vector<16x1xf32> to vector<16x128xf32>
    %243 = arith.subf %228, %242 : vector<16x128xf32>
    %cst_119 = arith.constant 9.99999974E-6 : f32
    %244 = vector.broadcast %cst_119 : f32 to vector<16x1xf32>
    %245 = arith.addf %241, %244 : vector<16x1xf32>
    %246 = math.rsqrt %245 : vector<16x1xf32>
    %247 = vector.broadcast %246 : vector<16x1xf32> to vector<16x128xf32>
    %248 = arith.mulf %243, %247 : vector<16x128xf32>
    %c0_120 = arith.constant 0 : index
    %c4_121 = arith.constant 4 : index
    %249 = vector.load %arg8[%c0_120, %c4_121] : memref<16x16xf32, #tpu.memory_space<vmem>>, vector<16x1xf32>
    %250 = vector.broadcast %249 : vector<16x1xf32> to vector<16x128xf32>
    %251 = arith.mulf %250, %248 : vector<16x128xf32>
    %c0_122 = arith.constant 0 : index
    %c5_123 = arith.constant 5 : index
    %252 = vector.load %arg8[%c0_122, %c5_123] : memref<16x16xf32, #tpu.memory_space<vmem>>, vector<16x1xf32>
    %253 = vector.broadcast %252 : vector<16x1xf32> to vector<16x128xf32>
    %254 = arith.addf %251, %253 : vector<16x128xf32>
    %255 = arith.negf %254 : vector<16x128xf32>
    %256 = math.exp %255 : vector<16x128xf32>
    %cst_124 = arith.constant 1.000000e+00 : f32
    %257 = vector.broadcast %cst_124 : f32 to vector<16x128xf32>
    %258 = arith.addf %257, %256 : vector<16x128xf32>
    %259 = arith.divf %257, %258 : vector<16x128xf32>
    %c18_i32_125 = arith.constant 18 : i32
    %260 = tpu.dynamic_rotate %259 by %c18_i32_125 dim 1 : vector<16x128xf32>, i32 -> vector<16x128xf32>
    %c0_126 = arith.constant 0 : index
    %c0_127 = arith.constant 0 : index
    %c0_128 = arith.constant 0 : index
    %261 = vector.load %arg5[%c0_126, %c0_127, %c0_128] : memref<25x1x128xf32, #tpu.memory_space<vmem>>, vector<1x1x128xf32>
    %262 = vector.shape_cast %261 : vector<1x1x128xf32> to vector<1x128xf32>
    %263 = vector.broadcast %262 : vector<1x128xf32> to vector<16x128xf32>
    %264 = arith.mulf %260, %263 : vector<16x128xf32>
    %265 = arith.truncf %264 : vector<16x128xf32> to vector<16x128xbf16>
    %c0_129 = arith.constant 0 : index
    %c0_130 = arith.constant 0 : index
    %266 = vector.load %arg11[%c0_129, %c0_130] : memref<400x128xbf16, #tpu.memory_space<vmem>>, vector<16x128xbf16>
    tpu.vector_store %arg11[%c0_129, %c0_130], %265 {strides = array<i32>} : memref<400x128xbf16, #tpu.memory_space<vmem>>, vector<16x128xbf16>,
    %c17_i32_131 = arith.constant 17 : i32
    %267 = tpu.dynamic_rotate %259 by %c17_i32_131 dim 1 : vector<16x128xf32>, i32 -> vector<16x128xf32>
    %c1_132 = arith.constant 1 : index
    %c0_133 = arith.constant 0 : index
    %c0_134 = arith.constant 0 : index
    %268 = vector.load %arg5[%c1_132, %c0_133, %c0_134] : memref<25x1x128xf32, #tpu.memory_space<vmem>>, vector<1x1x128xf32>
    %269 = vector.shape_cast %268 : vector<1x1x128xf32> to vector<1x128xf32>
    %270 = vector.broadcast %269 : vector<1x128xf32> to vector<16x128xf32>
    %271 = arith.mulf %267, %270 : vector<16x128xf32>
    %272 = arith.truncf %271 : vector<16x128xf32> to vector<16x128xbf16>
    %c16_135 = arith.constant 16 : index
    %c0_136 = arith.constant 0 : index
    %273 = vector.load %arg11[%c16_135, %c0_136] : memref<400x128xbf16, #tpu.memory_space<vmem>>, vector<16x128xbf16>
    tpu.vector_store %arg11[%c16_135, %c0_136], %272 {strides = array<i32>} : memref<400x128xbf16, #tpu.memory_space<vmem>>, vector<16x128xbf16>,
    %c16_i32_137 = arith.constant 16 : i32
    %274 = tpu.dynamic_rotate %259 by %c16_i32_137 dim 1 : vector<16x128xf32>, i32 -> vector<16x128xf32>
    %c2_138 = arith.constant 2 : index
    %c0_139 = arith.constant 0 : index
    %c0_140 = arith.constant 0 : index
    %275 = vector.load %arg5[%c2_138, %c0_139, %c0_140] : memref<25x1x128xf32, #tpu.memory_space<vmem>>, vector<1x1x128xf32>
    %276 = vector.shape_cast %275 : vector<1x1x128xf32> to vector<1x128xf32>
    %277 = vector.broadcast %276 : vector<1x128xf32> to vector<16x128xf32>
    %278 = arith.mulf %274, %277 : vector<16x128xf32>
    %279 = arith.truncf %278 : vector<16x128xf32> to vector<16x128xbf16>
    %c32_141 = arith.constant 32 : index
    %c0_142 = arith.constant 0 : index
    %280 = vector.load %arg11[%c32_141, %c0_142] : memref<400x128xbf16, #tpu.memory_space<vmem>>, vector<16x128xbf16>
    tpu.vector_store %arg11[%c32_141, %c0_142], %279 {strides = array<i32>} : memref<400x128xbf16, #tpu.memory_space<vmem>>, vector<16x128xbf16>,
    %c15_i32_143 = arith.constant 15 : i32
    %281 = tpu.dynamic_rotate %259 by %c15_i32_143 dim 1 : vector<16x128xf32>, i32 -> vector<16x128xf32>
    %c3_144 = arith.constant 3 : index
    %c0_145 = arith.constant 0 : index
    %c0_146 = arith.constant 0 : index
    %282 = vector.load %arg5[%c3_144, %c0_145, %c0_146] : memref<25x1x128xf32, #tpu.memory_space<vmem>>, vector<1x1x128xf32>
    %283 = vector.shape_cast %282 : vector<1x1x128xf32> to vector<1x128xf32>
    %284 = vector.broadcast %283 : vector<1x128xf32> to vector<16x128xf32>
    %285 = arith.mulf %281, %284 : vector<16x128xf32>
    %286 = arith.truncf %285 : vector<16x128xf32> to vector<16x128xbf16>
    %c48_147 = arith.constant 48 : index
    %c0_148 = arith.constant 0 : index
    %287 = vector.load %arg11[%c48_147, %c0_148] : memref<400x128xbf16, #tpu.memory_space<vmem>>, vector<16x128xbf16>
    tpu.vector_store %arg11[%c48_147, %c0_148], %286 {strides = array<i32>} : memref<400x128xbf16, #tpu.memory_space<vmem>>, vector<16x128xbf16>,
    %c14_i32_149 = arith.constant 14 : i32
    %288 = tpu.dynamic_rotate %259 by %c14_i32_149 dim 1 : vector<16x128xf32>, i32 -> vector<16x128xf32>
    %c4_150 = arith.constant 4 : index
    %c0_151 = arith.constant 0 : index
    %c0_152 = arith.constant 0 : index
    %289 = vector.load %arg5[%c4_150, %c0_151, %c0_152] : memref<25x1x128xf32, #tpu.memory_space<vmem>>, vector<1x1x128xf32>
    %290 = vector.shape_cast %289 : vector<1x1x128xf32> to vector<1x128xf32>
    %291 = vector.broadcast %290 : vector<1x128xf32> to vector<16x128xf32>
    %292 = arith.mulf %288, %291 : vector<16x128xf32>
    %293 = arith.truncf %292 : vector<16x128xf32> to vector<16x128xbf16>
    %c64_153 = arith.constant 64 : index
    %c0_154 = arith.constant 0 : index
    %294 = vector.load %arg11[%c64_153, %c0_154] : memref<400x128xbf16, #tpu.memory_space<vmem>>, vector<16x128xbf16>
    tpu.vector_store %arg11[%c64_153, %c0_154], %293 {strides = array<i32>} : memref<400x128xbf16, #tpu.memory_space<vmem>>, vector<16x128xbf16>,
    %c10_i32 = arith.constant 10 : i32
    %295 = tpu.dynamic_rotate %259 by %c10_i32 dim 1 : vector<16x128xf32>, i32 -> vector<16x128xf32>
    %c5_155 = arith.constant 5 : index
    %c0_156 = arith.constant 0 : index
    %c0_157 = arith.constant 0 : index
    %296 = vector.load %arg5[%c5_155, %c0_156, %c0_157] : memref<25x1x128xf32, #tpu.memory_space<vmem>>, vector<1x1x128xf32>
    %297 = vector.shape_cast %296 : vector<1x1x128xf32> to vector<1x128xf32>
    %298 = vector.broadcast %297 : vector<1x128xf32> to vector<16x128xf32>
    %299 = arith.mulf %295, %298 : vector<16x128xf32>
    %300 = arith.truncf %299 : vector<16x128xf32> to vector<16x128xbf16>
    %c80_158 = arith.constant 80 : index
    %c0_159 = arith.constant 0 : index
    %301 = vector.load %arg11[%c80_158, %c0_159] : memref<400x128xbf16, #tpu.memory_space<vmem>>, vector<16x128xbf16>
    tpu.vector_store %arg11[%c80_158, %c0_159], %300 {strides = array<i32>} : memref<400x128xbf16, #tpu.memory_space<vmem>>, vector<16x128xbf16>,
    %c9_i32 = arith.constant 9 : i32
    %302 = tpu.dynamic_rotate %259 by %c9_i32 dim 1 : vector<16x128xf32>, i32 -> vector<16x128xf32>
    %c6_160 = arith.constant 6 : index
    %c0_161 = arith.constant 0 : index
    %c0_162 = arith.constant 0 : index
    %303 = vector.load %arg5[%c6_160, %c0_161, %c0_162] : memref<25x1x128xf32, #tpu.memory_space<vmem>>, vector<1x1x128xf32>
    %304 = vector.shape_cast %303 : vector<1x1x128xf32> to vector<1x128xf32>
    %305 = vector.broadcast %304 : vector<1x128xf32> to vector<16x128xf32>
    %306 = arith.mulf %302, %305 : vector<16x128xf32>
    %307 = arith.truncf %306 : vector<16x128xf32> to vector<16x128xbf16>
    %c96_163 = arith.constant 96 : index
    %c0_164 = arith.constant 0 : index
    %308 = vector.load %arg11[%c96_163, %c0_164] : memref<400x128xbf16, #tpu.memory_space<vmem>>, vector<16x128xbf16>
    tpu.vector_store %arg11[%c96_163, %c0_164], %307 {strides = array<i32>} : memref<400x128xbf16, #tpu.memory_space<vmem>>, vector<16x128xbf16>,
    %c8_i32 = arith.constant 8 : i32
    %309 = tpu.dynamic_rotate %259 by %c8_i32 dim 1 : vector<16x128xf32>, i32 -> vector<16x128xf32>
    %c7_165 = arith.constant 7 : index
    %c0_166 = arith.constant 0 : index
    %c0_167 = arith.constant 0 : index
    %310 = vector.load %arg5[%c7_165, %c0_166, %c0_167] : memref<25x1x128xf32, #tpu.memory_space<vmem>>, vector<1x1x128xf32>
    %311 = vector.shape_cast %310 : vector<1x1x128xf32> to vector<1x128xf32>
    %312 = vector.broadcast %311 : vector<1x128xf32> to vector<16x128xf32>
    %313 = arith.mulf %309, %312 : vector<16x128xf32>
    %314 = arith.truncf %313 : vector<16x128xf32> to vector<16x128xbf16>
    %c112_168 = arith.constant 112 : index
    %c0_169 = arith.constant 0 : index
    %315 = vector.load %arg11[%c112_168, %c0_169] : memref<400x128xbf16, #tpu.memory_space<vmem>>, vector<16x128xbf16>
    tpu.vector_store %arg11[%c112_168, %c0_169], %314 {strides = array<i32>} : memref<400x128xbf16, #tpu.memory_space<vmem>>, vector<16x128xbf16>,
    %c7_i32 = arith.constant 7 : i32
    %316 = tpu.dynamic_rotate %259 by %c7_i32 dim 1 : vector<16x128xf32>, i32 -> vector<16x128xf32>
    %c8_170 = arith.constant 8 : index
    %c0_171 = arith.constant 0 : index
    %c0_172 = arith.constant 0 : index
    %317 = vector.load %arg5[%c8_170, %c0_171, %c0_172] : memref<25x1x128xf32, #tpu.memory_space<vmem>>, vector<1x1x128xf32>
    %318 = vector.shape_cast %317 : vector<1x1x128xf32> to vector<1x128xf32>
    %319 = vector.broadcast %318 : vector<1x128xf32> to vector<16x128xf32>
    %320 = arith.mulf %316, %319 : vector<16x128xf32>
    %321 = arith.truncf %320 : vector<16x128xf32> to vector<16x128xbf16>
    %c128_173 = arith.constant 128 : index
    %c0_174 = arith.constant 0 : index
    %322 = vector.load %arg11[%c128_173, %c0_174] : memref<400x128xbf16, #tpu.memory_space<vmem>>, vector<16x128xbf16>
    tpu.vector_store %arg11[%c128_173, %c0_174], %321 {strides = array<i32>} : memref<400x128xbf16, #tpu.memory_space<vmem>>, vector<16x128xbf16>,
    %c6_i32 = arith.constant 6 : i32
    %323 = tpu.dynamic_rotate %259 by %c6_i32 dim 1 : vector<16x128xf32>, i32 -> vector<16x128xf32>
    %c9_175 = arith.constant 9 : index
    %c0_176 = arith.constant 0 : index
    %c0_177 = arith.constant 0 : index
    %324 = vector.load %arg5[%c9_175, %c0_176, %c0_177] : memref<25x1x128xf32, #tpu.memory_space<vmem>>, vector<1x1x128xf32>
    %325 = vector.shape_cast %324 : vector<1x1x128xf32> to vector<1x128xf32>
    %326 = vector.broadcast %325 : vector<1x128xf32> to vector<16x128xf32>
    %327 = arith.mulf %323, %326 : vector<16x128xf32>
    %328 = arith.truncf %327 : vector<16x128xf32> to vector<16x128xbf16>
    %c144_178 = arith.constant 144 : index
    %c0_179 = arith.constant 0 : index
    %329 = vector.load %arg11[%c144_178, %c0_179] : memref<400x128xbf16, #tpu.memory_space<vmem>>, vector<16x128xbf16>
    tpu.vector_store %arg11[%c144_178, %c0_179], %328 {strides = array<i32>} : memref<400x128xbf16, #tpu.memory_space<vmem>>, vector<16x128xbf16>,
    %c2_i32_180 = arith.constant 2 : i32
    %330 = tpu.dynamic_rotate %259 by %c2_i32_180 dim 1 : vector<16x128xf32>, i32 -> vector<16x128xf32>
    %c10_181 = arith.constant 10 : index
    %c0_182 = arith.constant 0 : index
    %c0_183 = arith.constant 0 : index
    %331 = vector.load %arg5[%c10_181, %c0_182, %c0_183] : memref<25x1x128xf32, #tpu.memory_space<vmem>>, vector<1x1x128xf32>
    %332 = vector.shape_cast %331 : vector<1x1x128xf32> to vector<1x128xf32>
    %333 = vector.broadcast %332 : vector<1x128xf32> to vector<16x128xf32>
    %334 = arith.mulf %330, %333 : vector<16x128xf32>
    %335 = arith.truncf %334 : vector<16x128xf32> to vector<16x128xbf16>
    %c160_184 = arith.constant 160 : index
    %c0_185 = arith.constant 0 : index
    %336 = vector.load %arg11[%c160_184, %c0_185] : memref<400x128xbf16, #tpu.memory_space<vmem>>, vector<16x128xbf16>
    tpu.vector_store %arg11[%c160_184, %c0_185], %335 {strides = array<i32>} : memref<400x128xbf16, #tpu.memory_space<vmem>>, vector<16x128xbf16>,
    %c1_i32_186 = arith.constant 1 : i32
    %337 = tpu.dynamic_rotate %259 by %c1_i32_186 dim 1 : vector<16x128xf32>, i32 -> vector<16x128xf32>
    %c11_187 = arith.constant 11 : index
    %c0_188 = arith.constant 0 : index
    %c0_189 = arith.constant 0 : index
    %338 = vector.load %arg5[%c11_187, %c0_188, %c0_189] : memref<25x1x128xf32, #tpu.memory_space<vmem>>, vector<1x1x128xf32>
    %339 = vector.shape_cast %338 : vector<1x1x128xf32> to vector<1x128xf32>
    %340 = vector.broadcast %339 : vector<1x128xf32> to vector<16x128xf32>
    %341 = arith.mulf %337, %340 : vector<16x128xf32>
    %342 = arith.truncf %341 : vector<16x128xf32> to vector<16x128xbf16>
    %c176_190 = arith.constant 176 : index
    %c0_191 = arith.constant 0 : index
    %343 = vector.load %arg11[%c176_190, %c0_191] : memref<400x128xbf16, #tpu.memory_space<vmem>>, vector<16x128xbf16>
    tpu.vector_store %arg11[%c176_190, %c0_191], %342 {strides = array<i32>} : memref<400x128xbf16, #tpu.memory_space<vmem>>, vector<16x128xbf16>,
    %c12_192 = arith.constant 12 : index
    %c0_193 = arith.constant 0 : index
    %c0_194 = arith.constant 0 : index
    %344 = vector.load %arg5[%c12_192, %c0_193, %c0_194] : memref<25x1x128xf32, #tpu.memory_space<vmem>>, vector<1x1x128xf32>
    %345 = vector.shape_cast %344 : vector<1x1x128xf32> to vector<1x128xf32>
    %346 = vector.broadcast %345 : vector<1x128xf32> to vector<16x128xf32>
    %347 = arith.mulf %259, %346 : vector<16x128xf32>
    %348 = arith.truncf %347 : vector<16x128xf32> to vector<16x128xbf16>
    %c192_195 = arith.constant 192 : index
    %c0_196 = arith.constant 0 : index
    %349 = vector.load %arg11[%c192_195, %c0_196] : memref<400x128xbf16, #tpu.memory_space<vmem>>, vector<16x128xbf16>
    tpu.vector_store %arg11[%c192_195, %c0_196], %348 {strides = array<i32>} : memref<400x128xbf16, #tpu.memory_space<vmem>>, vector<16x128xbf16>,
    %c127_i32 = arith.constant 127 : i32
    %350 = tpu.dynamic_rotate %259 by %c127_i32 dim 1 : vector<16x128xf32>, i32 -> vector<16x128xf32>
    %c13_197 = arith.constant 13 : index
    %c0_198 = arith.constant 0 : index
    %c0_199 = arith.constant 0 : index
    %351 = vector.load %arg5[%c13_197, %c0_198, %c0_199] : memref<25x1x128xf32, #tpu.memory_space<vmem>>, vector<1x1x128xf32>
    %352 = vector.shape_cast %351 : vector<1x1x128xf32> to vector<1x128xf32>
    %353 = vector.broadcast %352 : vector<1x128xf32> to vector<16x128xf32>
    %354 = arith.mulf %350, %353 : vector<16x128xf32>
    %355 = arith.truncf %354 : vector<16x128xf32> to vector<16x128xbf16>
    %c208_200 = arith.constant 208 : index
    %c0_201 = arith.constant 0 : index
    %356 = vector.load %arg11[%c208_200, %c0_201] : memref<400x128xbf16, #tpu.memory_space<vmem>>, vector<16x128xbf16>
    tpu.vector_store %arg11[%c208_200, %c0_201], %355 {strides = array<i32>} : memref<400x128xbf16, #tpu.memory_space<vmem>>, vector<16x128xbf16>,
    %c126_i32 = arith.constant 126 : i32
    %357 = tpu.dynamic_rotate %259 by %c126_i32 dim 1 : vector<16x128xf32>, i32 -> vector<16x128xf32>
    %c14_202 = arith.constant 14 : index
    %c0_203 = arith.constant 0 : index
    %c0_204 = arith.constant 0 : index
    %358 = vector.load %arg5[%c14_202, %c0_203, %c0_204] : memref<25x1x128xf32, #tpu.memory_space<vmem>>, vector<1x1x128xf32>
    %359 = vector.shape_cast %358 : vector<1x1x128xf32> to vector<1x128xf32>
    %360 = vector.broadcast %359 : vector<1x128xf32> to vector<16x128xf32>
    %361 = arith.mulf %357, %360 : vector<16x128xf32>
    %362 = arith.truncf %361 : vector<16x128xf32> to vector<16x128xbf16>
    %c224_205 = arith.constant 224 : index
    %c0_206 = arith.constant 0 : index
    %363 = vector.load %arg11[%c224_205, %c0_206] : memref<400x128xbf16, #tpu.memory_space<vmem>>, vector<16x128xbf16>
    tpu.vector_store %arg11[%c224_205, %c0_206], %362 {strides = array<i32>} : memref<400x128xbf16, #tpu.memory_space<vmem>>, vector<16x128xbf16>,
    %c122_i32 = arith.constant 122 : i32
    %364 = tpu.dynamic_rotate %259 by %c122_i32 dim 1 : vector<16x128xf32>, i32 -> vector<16x128xf32>
    %c15_207 = arith.constant 15 : index
    %c0_208 = arith.constant 0 : index
    %c0_209 = arith.constant 0 : index
    %365 = vector.load %arg5[%c15_207, %c0_208, %c0_209] : memref<25x1x128xf32, #tpu.memory_space<vmem>>, vector<1x1x128xf32>
    %366 = vector.shape_cast %365 : vector<1x1x128xf32> to vector<1x128xf32>
    %367 = vector.broadcast %366 : vector<1x128xf32> to vector<16x128xf32>
    %368 = arith.mulf %364, %367 : vector<16x128xf32>
    %369 = arith.truncf %368 : vector<16x128xf32> to vector<16x128xbf16>
    %c240_210 = arith.constant 240 : index
    %c0_211 = arith.constant 0 : index
    %370 = vector.load %arg11[%c240_210, %c0_211] : memref<400x128xbf16, #tpu.memory_space<vmem>>, vector<16x128xbf16>
    tpu.vector_store %arg11[%c240_210, %c0_211], %369 {strides = array<i32>} : memref<400x128xbf16, #tpu.memory_space<vmem>>, vector<16x128xbf16>,
    %c121_i32 = arith.constant 121 : i32
    %371 = tpu.dynamic_rotate %259 by %c121_i32 dim 1 : vector<16x128xf32>, i32 -> vector<16x128xf32>
    %c16_212 = arith.constant 16 : index
    %c0_213 = arith.constant 0 : index
    %c0_214 = arith.constant 0 : index
    %372 = vector.load %arg5[%c16_212, %c0_213, %c0_214] : memref<25x1x128xf32, #tpu.memory_space<vmem>>, vector<1x1x128xf32>
    %373 = vector.shape_cast %372 : vector<1x1x128xf32> to vector<1x128xf32>
    %374 = vector.broadcast %373 : vector<1x128xf32> to vector<16x128xf32>
    %375 = arith.mulf %371, %374 : vector<16x128xf32>
    %376 = arith.truncf %375 : vector<16x128xf32> to vector<16x128xbf16>
    %c256_215 = arith.constant 256 : index
    %c0_216 = arith.constant 0 : index
    %377 = vector.load %arg11[%c256_215, %c0_216] : memref<400x128xbf16, #tpu.memory_space<vmem>>, vector<16x128xbf16>
    tpu.vector_store %arg11[%c256_215, %c0_216], %376 {strides = array<i32>} : memref<400x128xbf16, #tpu.memory_space<vmem>>, vector<16x128xbf16>,
    %c120_i32 = arith.constant 120 : i32
    %378 = tpu.dynamic_rotate %259 by %c120_i32 dim 1 : vector<16x128xf32>, i32 -> vector<16x128xf32>
    %c17_217 = arith.constant 17 : index
    %c0_218 = arith.constant 0 : index
    %c0_219 = arith.constant 0 : index
    %379 = vector.load %arg5[%c17_217, %c0_218, %c0_219] : memref<25x1x128xf32, #tpu.memory_space<vmem>>, vector<1x1x128xf32>
    %380 = vector.shape_cast %379 : vector<1x1x128xf32> to vector<1x128xf32>
    %381 = vector.broadcast %380 : vector<1x128xf32> to vector<16x128xf32>
    %382 = arith.mulf %378, %381 : vector<16x128xf32>
    %383 = arith.truncf %382 : vector<16x128xf32> to vector<16x128xbf16>
    %c272_220 = arith.constant 272 : index
    %c0_221 = arith.constant 0 : index
    %384 = vector.load %arg11[%c272_220, %c0_221] : memref<400x128xbf16, #tpu.memory_space<vmem>>, vector<16x128xbf16>
    tpu.vector_store %arg11[%c272_220, %c0_221], %383 {strides = array<i32>} : memref<400x128xbf16, #tpu.memory_space<vmem>>, vector<16x128xbf16>,
    %c119_i32 = arith.constant 119 : i32
    %385 = tpu.dynamic_rotate %259 by %c119_i32 dim 1 : vector<16x128xf32>, i32 -> vector<16x128xf32>
    %c18_222 = arith.constant 18 : index
    %c0_223 = arith.constant 0 : index
    %c0_224 = arith.constant 0 : index
    %386 = vector.load %arg5[%c18_222, %c0_223, %c0_224] : memref<25x1x128xf32, #tpu.memory_space<vmem>>, vector<1x1x128xf32>
    %387 = vector.shape_cast %386 : vector<1x1x128xf32> to vector<1x128xf32>
    %388 = vector.broadcast %387 : vector<1x128xf32> to vector<16x128xf32>
    %389 = arith.mulf %385, %388 : vector<16x128xf32>
    %390 = arith.truncf %389 : vector<16x128xf32> to vector<16x128xbf16>
    %c288_225 = arith.constant 288 : index
    %c0_226 = arith.constant 0 : index
    %391 = vector.load %arg11[%c288_225, %c0_226] : memref<400x128xbf16, #tpu.memory_space<vmem>>, vector<16x128xbf16>
    tpu.vector_store %arg11[%c288_225, %c0_226], %390 {strides = array<i32>} : memref<400x128xbf16, #tpu.memory_space<vmem>>, vector<16x128xbf16>,
    %c118_i32 = arith.constant 118 : i32
    %392 = tpu.dynamic_rotate %259 by %c118_i32 dim 1 : vector<16x128xf32>, i32 -> vector<16x128xf32>
    %c19_227 = arith.constant 19 : index
    %c0_228 = arith.constant 0 : index
    %c0_229 = arith.constant 0 : index
    %393 = vector.load %arg5[%c19_227, %c0_228, %c0_229] : memref<25x1x128xf32, #tpu.memory_space<vmem>>, vector<1x1x128xf32>
    %394 = vector.shape_cast %393 : vector<1x1x128xf32> to vector<1x128xf32>
    %395 = vector.broadcast %394 : vector<1x128xf32> to vector<16x128xf32>
    %396 = arith.mulf %392, %395 : vector<16x128xf32>
    %397 = arith.truncf %396 : vector<16x128xf32> to vector<16x128xbf16>
    %c304_230 = arith.constant 304 : index
    %c0_231 = arith.constant 0 : index
    %398 = vector.load %arg11[%c304_230, %c0_231] : memref<400x128xbf16, #tpu.memory_space<vmem>>, vector<16x128xbf16>
    tpu.vector_store %arg11[%c304_230, %c0_231], %397 {strides = array<i32>} : memref<400x128xbf16, #tpu.memory_space<vmem>>, vector<16x128xbf16>,
    %c114_i32 = arith.constant 114 : i32
    %399 = tpu.dynamic_rotate %259 by %c114_i32 dim 1 : vector<16x128xf32>, i32 -> vector<16x128xf32>
    %c20_232 = arith.constant 20 : index
    %c0_233 = arith.constant 0 : index
    %c0_234 = arith.constant 0 : index
    %400 = vector.load %arg5[%c20_232, %c0_233, %c0_234] : memref<25x1x128xf32, #tpu.memory_space<vmem>>, vector<1x1x128xf32>
    %401 = vector.shape_cast %400 : vector<1x1x128xf32> to vector<1x128xf32>
    %402 = vector.broadcast %401 : vector<1x128xf32> to vector<16x128xf32>
    %403 = arith.mulf %399, %402 : vector<16x128xf32>
    %404 = arith.truncf %403 : vector<16x128xf32> to vector<16x128xbf16>
    %c320_235 = arith.constant 320 : index
    %c0_236 = arith.constant 0 : index
    %405 = vector.load %arg11[%c320_235, %c0_236] : memref<400x128xbf16, #tpu.memory_space<vmem>>, vector<16x128xbf16>
    tpu.vector_store %arg11[%c320_235, %c0_236], %404 {strides = array<i32>} : memref<400x128xbf16, #tpu.memory_space<vmem>>, vector<16x128xbf16>,
    %c113_i32 = arith.constant 113 : i32
    %406 = tpu.dynamic_rotate %259 by %c113_i32 dim 1 : vector<16x128xf32>, i32 -> vector<16x128xf32>
    %c21_237 = arith.constant 21 : index
    %c0_238 = arith.constant 0 : index
    %c0_239 = arith.constant 0 : index
    %407 = vector.load %arg5[%c21_237, %c0_238, %c0_239] : memref<25x1x128xf32, #tpu.memory_space<vmem>>, vector<1x1x128xf32>
    %408 = vector.shape_cast %407 : vector<1x1x128xf32> to vector<1x128xf32>
    %409 = vector.broadcast %408 : vector<1x128xf32> to vector<16x128xf32>
    %410 = arith.mulf %406, %409 : vector<16x128xf32>
    %411 = arith.truncf %410 : vector<16x128xf32> to vector<16x128xbf16>
    %c336_240 = arith.constant 336 : index
    %c0_241 = arith.constant 0 : index
    %412 = vector.load %arg11[%c336_240, %c0_241] : memref<400x128xbf16, #tpu.memory_space<vmem>>, vector<16x128xbf16>
    tpu.vector_store %arg11[%c336_240, %c0_241], %411 {strides = array<i32>} : memref<400x128xbf16, #tpu.memory_space<vmem>>, vector<16x128xbf16>,
    %c112_i32 = arith.constant 112 : i32
    %413 = tpu.dynamic_rotate %259 by %c112_i32 dim 1 : vector<16x128xf32>, i32 -> vector<16x128xf32>
    %c22_242 = arith.constant 22 : index
    %c0_243 = arith.constant 0 : index
    %c0_244 = arith.constant 0 : index
    %414 = vector.load %arg5[%c22_242, %c0_243, %c0_244] : memref<25x1x128xf32, #tpu.memory_space<vmem>>, vector<1x1x128xf32>
    %415 = vector.shape_cast %414 : vector<1x1x128xf32> to vector<1x128xf32>
    %416 = vector.broadcast %415 : vector<1x128xf32> to vector<16x128xf32>
    %417 = arith.mulf %413, %416 : vector<16x128xf32>
    %418 = arith.truncf %417 : vector<16x128xf32> to vector<16x128xbf16>
    %c352_245 = arith.constant 352 : index
    %c0_246 = arith.constant 0 : index
    %419 = vector.load %arg11[%c352_245, %c0_246] : memref<400x128xbf16, #tpu.memory_space<vmem>>, vector<16x128xbf16>
    tpu.vector_store %arg11[%c352_245, %c0_246], %418 {strides = array<i32>} : memref<400x128xbf16, #tpu.memory_space<vmem>>, vector<16x128xbf16>,
    %c111_i32 = arith.constant 111 : i32
    %420 = tpu.dynamic_rotate %259 by %c111_i32 dim 1 : vector<16x128xf32>, i32 -> vector<16x128xf32>
    %c23_247 = arith.constant 23 : index
    %c0_248 = arith.constant 0 : index
    %c0_249 = arith.constant 0 : index
    %421 = vector.load %arg5[%c23_247, %c0_248, %c0_249] : memref<25x1x128xf32, #tpu.memory_space<vmem>>, vector<1x1x128xf32>
    %422 = vector.shape_cast %421 : vector<1x1x128xf32> to vector<1x128xf32>
    %423 = vector.broadcast %422 : vector<1x128xf32> to vector<16x128xf32>
    %424 = arith.mulf %420, %423 : vector<16x128xf32>
    %425 = arith.truncf %424 : vector<16x128xf32> to vector<16x128xbf16>
    %c368_250 = arith.constant 368 : index
    %c0_251 = arith.constant 0 : index
    %426 = vector.load %arg11[%c368_250, %c0_251] : memref<400x128xbf16, #tpu.memory_space<vmem>>, vector<16x128xbf16>
    tpu.vector_store %arg11[%c368_250, %c0_251], %425 {strides = array<i32>} : memref<400x128xbf16, #tpu.memory_space<vmem>>, vector<16x128xbf16>,
    %c110_i32 = arith.constant 110 : i32
    %427 = tpu.dynamic_rotate %259 by %c110_i32 dim 1 : vector<16x128xf32>, i32 -> vector<16x128xf32>
    %c24_252 = arith.constant 24 : index
    %c0_253 = arith.constant 0 : index
    %c0_254 = arith.constant 0 : index
    %428 = vector.load %arg5[%c24_252, %c0_253, %c0_254] : memref<25x1x128xf32, #tpu.memory_space<vmem>>, vector<1x1x128xf32>
    %429 = vector.shape_cast %428 : vector<1x1x128xf32> to vector<1x128xf32>
    %430 = vector.broadcast %429 : vector<1x128xf32> to vector<16x128xf32>
    %431 = arith.mulf %427, %430 : vector<16x128xf32>
    %432 = arith.truncf %431 : vector<16x128xf32> to vector<16x128xbf16>
    %c384_255 = arith.constant 384 : index
    %c0_256 = arith.constant 0 : index
    %433 = vector.load %arg11[%c384_255, %c0_256] : memref<400x128xbf16, #tpu.memory_space<vmem>>, vector<16x128xbf16>
    tpu.vector_store %arg11[%c384_255, %c0_256], %432 {strides = array<i32>} : memref<400x128xbf16, #tpu.memory_space<vmem>>, vector<16x128xbf16>,
    %c1_257 = arith.constant 1 : index
    %c0_258 = arith.constant 0 : index
    %c0_259 = arith.constant 0 : index
    %434 = vector.load %arg2[%c1_257, %c0_258, %c0_259] : memref<2x16x400xbf16, #tpu.memory_space<vmem>>, vector<1x16x400xbf16>
    %435 = vector.shape_cast %434 : vector<1x16x400xbf16> to vector<16x400xbf16>
    %c0_260 = arith.constant 0 : index
    %c0_261 = arith.constant 0 : index
    %436 = vector.load %arg11[%c0_260, %c0_261] : memref<400x128xbf16, #tpu.memory_space<vmem>>, vector<400x128xbf16>
    %cst_262 = arith.constant dense<0.000000e+00> : vector<16x128xf32>
    %437 = tpu.matmul %435, %436, %cst_262 {dimension_numbers = #tpu.dot_dimension_numbers<[1], [0], [0], [1], [0, 0, 1, 1], [], []>} : vector<16x400xbf16>, vector<400x128xbf16>, vector<16x128xf32> -> vector<16x128xf32>
    %c0_263 = arith.constant 0 : index
    %c6_264 = arith.constant 6 : index
    %438 = vector.load %arg8[%c0_263, %c6_264] : memref<16x16xf32, #tpu.memory_space<vmem>>, vector<16x1xf32>
    %439 = vector.broadcast %438 : vector<16x1xf32> to vector<16x128xf32>
    %440 = arith.addf %437, %439 : vector<16x128xf32>
    %cst_265 = arith.constant dense<0.000000e+00> : vector<16xf32>
    %441 = vector.multi_reduction <add>, %440, %cst_265 [1] : vector<16x128xf32> to vector<16xf32>
    %442 = vector.shape_cast %441 : vector<16xf32> to vector<16x1xf32>
    %cst_266 = arith.constant 7.812500e-03 : f32
    %443 = vector.broadcast %cst_266 : f32 to vector<16x1xf32>
    %444 = arith.mulf %442, %443 : vector<16x1xf32>
    %445 = arith.mulf %440, %440 : vector<16x128xf32>
    %cst_267 = arith.constant dense<0.000000e+00> : vector<16xf32>
    %446 = vector.multi_reduction <add>, %445, %cst_267 [1] : vector<16x128xf32> to vector<16xf32>
    %447 = vector.shape_cast %446 : vector<16xf32> to vector<16x1xf32>
    %cst_268 = arith.constant 7.812500e-03 : f32
    %448 = vector.broadcast %cst_268 : f32 to vector<16x1xf32>
    %449 = arith.mulf %447, %448 : vector<16x1xf32>
    %450 = arith.mulf %444, %444 : vector<16x1xf32>
    %451 = arith.subf %449, %450 : vector<16x1xf32>
    %cst_269 = arith.constant 0.000000e+00 : f32
    %452 = vector.broadcast %cst_269 : f32 to vector<16x1xf32>
    %453 = arith.maximumf %451, %452 : vector<16x1xf32>
    %454 = vector.broadcast %444 : vector<16x1xf32> to vector<16x128xf32>
    %455 = arith.subf %440, %454 : vector<16x128xf32>
    %cst_270 = arith.constant 9.99999974E-6 : f32
    %456 = vector.broadcast %cst_270 : f32 to vector<16x1xf32>
    %457 = arith.addf %453, %456 : vector<16x1xf32>
    %458 = math.rsqrt %457 : vector<16x1xf32>
    %459 = vector.broadcast %458 : vector<16x1xf32> to vector<16x128xf32>
    %460 = arith.mulf %455, %459 : vector<16x128xf32>
    %c0_271 = arith.constant 0 : index
    %c7_272 = arith.constant 7 : index
    %461 = vector.load %arg8[%c0_271, %c7_272] : memref<16x16xf32, #tpu.memory_space<vmem>>, vector<16x1xf32>
    %462 = vector.broadcast %461 : vector<16x1xf32> to vector<16x128xf32>
    %463 = arith.mulf %462, %460 : vector<16x128xf32>
    %c0_273 = arith.constant 0 : index
    %c8_274 = arith.constant 8 : index
    %464 = vector.load %arg8[%c0_273, %c8_274] : memref<16x16xf32, #tpu.memory_space<vmem>>, vector<16x1xf32>
    %465 = vector.broadcast %464 : vector<16x1xf32> to vector<16x128xf32>
    %466 = arith.addf %463, %465 : vector<16x128xf32>
    %467 = arith.negf %466 : vector<16x128xf32>
    %468 = math.exp %467 : vector<16x128xf32>
    %cst_275 = arith.constant 1.000000e+00 : f32
    %469 = vector.broadcast %cst_275 : f32 to vector<16x128xf32>
    %470 = arith.addf %469, %468 : vector<16x128xf32>
    %471 = arith.divf %469, %470 : vector<16x128xf32>
    %c0_276 = arith.constant 0 : index
    %c0_277 = arith.constant 0 : index
    %c0_278 = arith.constant 0 : index
    %472 = vector.load %arg6[%c0_276, %c0_277, %c0_278] : memref<16x16x128xf32, #tpu.memory_space<vmem>>, vector<1x16x128xf32>
    %473 = vector.shape_cast %472 : vector<1x16x128xf32> to vector<16x128xf32>
    %474 = vector.extract_strided_slice %471 {offsets = [0, 0], sizes = [1, 128], strides = [1, 1]} : vector<16x128xf32> to vector<1x128xf32>
    %475 = vector.broadcast %474 : vector<1x128xf32> to vector<16x128xf32>
    %476 = arith.mulf %473, %475 : vector<16x128xf32>
    %c1_279 = arith.constant 1 : index
    %c0_280 = arith.constant 0 : index
    %c0_281 = arith.constant 0 : index
    %477 = vector.load %arg6[%c1_279, %c0_280, %c0_281] : memref<16x16x128xf32, #tpu.memory_space<vmem>>, vector<1x16x128xf32>
    %478 = vector.shape_cast %477 : vector<1x16x128xf32> to vector<16x128xf32>
    %479 = vector.extract_strided_slice %471 {offsets = [1, 0], sizes = [1, 128], strides = [1, 1]} : vector<16x128xf32> to vector<1x128xf32>
    %480 = vector.broadcast %479 : vector<1x128xf32> to vector<16x128xf32>
    %481 = arith.mulf %478, %480 : vector<16x128xf32>
    %482 = arith.addf %476, %481 : vector<16x128xf32>
    %c2_282 = arith.constant 2 : index
    %c0_283 = arith.constant 0 : index
    %c0_284 = arith.constant 0 : index
    %483 = vector.load %arg6[%c2_282, %c0_283, %c0_284] : memref<16x16x128xf32, #tpu.memory_space<vmem>>, vector<1x16x128xf32>
    %484 = vector.shape_cast %483 : vector<1x16x128xf32> to vector<16x128xf32>
    %485 = vector.extract_strided_slice %471 {offsets = [2, 0], sizes = [1, 128], strides = [1, 1]} : vector<16x128xf32> to vector<1x128xf32>
    %486 = vector.broadcast %485 : vector<1x128xf32> to vector<16x128xf32>
    %487 = arith.mulf %484, %486 : vector<16x128xf32>
    %488 = arith.addf %482, %487 : vector<16x128xf32>
    %c3_285 = arith.constant 3 : index
    %c0_286 = arith.constant 0 : index
    %c0_287 = arith.constant 0 : index
    %489 = vector.load %arg6[%c3_285, %c0_286, %c0_287] : memref<16x16x128xf32, #tpu.memory_space<vmem>>, vector<1x16x128xf32>
    %490 = vector.shape_cast %489 : vector<1x16x128xf32> to vector<16x128xf32>
    %491 = vector.extract_strided_slice %471 {offsets = [3, 0], sizes = [1, 128], strides = [1, 1]} : vector<16x128xf32> to vector<1x128xf32>
    %492 = vector.broadcast %491 : vector<1x128xf32> to vector<16x128xf32>
    %493 = arith.mulf %490, %492 : vector<16x128xf32>
    %494 = arith.addf %488, %493 : vector<16x128xf32>
    %c4_288 = arith.constant 4 : index
    %c0_289 = arith.constant 0 : index
    %c0_290 = arith.constant 0 : index
    %495 = vector.load %arg6[%c4_288, %c0_289, %c0_290] : memref<16x16x128xf32, #tpu.memory_space<vmem>>, vector<1x16x128xf32>
    %496 = vector.shape_cast %495 : vector<1x16x128xf32> to vector<16x128xf32>
    %497 = vector.extract_strided_slice %471 {offsets = [4, 0], sizes = [1, 128], strides = [1, 1]} : vector<16x128xf32> to vector<1x128xf32>
    %498 = vector.broadcast %497 : vector<1x128xf32> to vector<16x128xf32>
    %499 = arith.mulf %496, %498 : vector<16x128xf32>
    %500 = arith.addf %494, %499 : vector<16x128xf32>
    %c5_291 = arith.constant 5 : index
    %c0_292 = arith.constant 0 : index
    %c0_293 = arith.constant 0 : index
    %501 = vector.load %arg6[%c5_291, %c0_292, %c0_293] : memref<16x16x128xf32, #tpu.memory_space<vmem>>, vector<1x16x128xf32>
    %502 = vector.shape_cast %501 : vector<1x16x128xf32> to vector<16x128xf32>
    %503 = vector.extract_strided_slice %471 {offsets = [5, 0], sizes = [1, 128], strides = [1, 1]} : vector<16x128xf32> to vector<1x128xf32>
    %504 = vector.broadcast %503 : vector<1x128xf32> to vector<16x128xf32>
    %505 = arith.mulf %502, %504 : vector<16x128xf32>
    %506 = arith.addf %500, %505 : vector<16x128xf32>
    %c6_294 = arith.constant 6 : index
    %c0_295 = arith.constant 0 : index
    %c0_296 = arith.constant 0 : index
    %507 = vector.load %arg6[%c6_294, %c0_295, %c0_296] : memref<16x16x128xf32, #tpu.memory_space<vmem>>, vector<1x16x128xf32>
    %508 = vector.shape_cast %507 : vector<1x16x128xf32> to vector<16x128xf32>
    %509 = vector.extract_strided_slice %471 {offsets = [6, 0], sizes = [1, 128], strides = [1, 1]} : vector<16x128xf32> to vector<1x128xf32>
    %510 = vector.broadcast %509 : vector<1x128xf32> to vector<16x128xf32>
    %511 = arith.mulf %508, %510 : vector<16x128xf32>
    %512 = arith.addf %506, %511 : vector<16x128xf32>
    %c7_297 = arith.constant 7 : index
    %c0_298 = arith.constant 0 : index
    %c0_299 = arith.constant 0 : index
    %513 = vector.load %arg6[%c7_297, %c0_298, %c0_299] : memref<16x16x128xf32, #tpu.memory_space<vmem>>, vector<1x16x128xf32>
    %514 = vector.shape_cast %513 : vector<1x16x128xf32> to vector<16x128xf32>
    %515 = vector.extract_strided_slice %471 {offsets = [7, 0], sizes = [1, 128], strides = [1, 1]} : vector<16x128xf32> to vector<1x128xf32>
    %516 = vector.broadcast %515 : vector<1x128xf32> to vector<16x128xf32>
    %517 = arith.mulf %514, %516 : vector<16x128xf32>
    %518 = arith.addf %512, %517 : vector<16x128xf32>
    %c8_300 = arith.constant 8 : index
    %c0_301 = arith.constant 0 : index
    %c0_302 = arith.constant 0 : index
    %519 = vector.load %arg6[%c8_300, %c0_301, %c0_302] : memref<16x16x128xf32, #tpu.memory_space<vmem>>, vector<1x16x128xf32>
    %520 = vector.shape_cast %519 : vector<1x16x128xf32> to vector<16x128xf32>
    %521 = vector.extract_strided_slice %471 {offsets = [8, 0], sizes = [1, 128], strides = [1, 1]} : vector<16x128xf32> to vector<1x128xf32>
    %522 = vector.broadcast %521 : vector<1x128xf32> to vector<16x128xf32>
    %523 = arith.mulf %520, %522 : vector<16x128xf32>
    %524 = arith.addf %518, %523 : vector<16x128xf32>
    %c9_303 = arith.constant 9 : index
    %c0_304 = arith.constant 0 : index
    %c0_305 = arith.constant 0 : index
    %525 = vector.load %arg6[%c9_303, %c0_304, %c0_305] : memref<16x16x128xf32, #tpu.memory_space<vmem>>, vector<1x16x128xf32>
    %526 = vector.shape_cast %525 : vector<1x16x128xf32> to vector<16x128xf32>
    %527 = vector.extract_strided_slice %471 {offsets = [9, 0], sizes = [1, 128], strides = [1, 1]} : vector<16x128xf32> to vector<1x128xf32>
    %528 = vector.broadcast %527 : vector<1x128xf32> to vector<16x128xf32>
    %529 = arith.mulf %526, %528 : vector<16x128xf32>
    %530 = arith.addf %524, %529 : vector<16x128xf32>
    %c10_306 = arith.constant 10 : index
    %c0_307 = arith.constant 0 : index
    %c0_308 = arith.constant 0 : index
    %531 = vector.load %arg6[%c10_306, %c0_307, %c0_308] : memref<16x16x128xf32, #tpu.memory_space<vmem>>, vector<1x16x128xf32>
    %532 = vector.shape_cast %531 : vector<1x16x128xf32> to vector<16x128xf32>
    %533 = vector.extract_strided_slice %471 {offsets = [10, 0], sizes = [1, 128], strides = [1, 1]} : vector<16x128xf32> to vector<1x128xf32>
    %534 = vector.broadcast %533 : vector<1x128xf32> to vector<16x128xf32>
    %535 = arith.mulf %532, %534 : vector<16x128xf32>
    %536 = arith.addf %530, %535 : vector<16x128xf32>
    %c11_309 = arith.constant 11 : index
    %c0_310 = arith.constant 0 : index
    %c0_311 = arith.constant 0 : index
    %537 = vector.load %arg6[%c11_309, %c0_310, %c0_311] : memref<16x16x128xf32, #tpu.memory_space<vmem>>, vector<1x16x128xf32>
    %538 = vector.shape_cast %537 : vector<1x16x128xf32> to vector<16x128xf32>
    %539 = vector.extract_strided_slice %471 {offsets = [11, 0], sizes = [1, 128], strides = [1, 1]} : vector<16x128xf32> to vector<1x128xf32>
    %540 = vector.broadcast %539 : vector<1x128xf32> to vector<16x128xf32>
    %541 = arith.mulf %538, %540 : vector<16x128xf32>
    %542 = arith.addf %536, %541 : vector<16x128xf32>
    %c12_312 = arith.constant 12 : index
    %c0_313 = arith.constant 0 : index
    %c0_314 = arith.constant 0 : index
    %543 = vector.load %arg6[%c12_312, %c0_313, %c0_314] : memref<16x16x128xf32, #tpu.memory_space<vmem>>, vector<1x16x128xf32>
    %544 = vector.shape_cast %543 : vector<1x16x128xf32> to vector<16x128xf32>
    %545 = vector.extract_strided_slice %471 {offsets = [12, 0], sizes = [1, 128], strides = [1, 1]} : vector<16x128xf32> to vector<1x128xf32>
    %546 = vector.broadcast %545 : vector<1x128xf32> to vector<16x128xf32>
    %547 = arith.mulf %544, %546 : vector<16x128xf32>
    %548 = arith.addf %542, %547 : vector<16x128xf32>
    %c13_315 = arith.constant 13 : index
    %c0_316 = arith.constant 0 : index
    %c0_317 = arith.constant 0 : index
    %549 = vector.load %arg6[%c13_315, %c0_316, %c0_317] : memref<16x16x128xf32, #tpu.memory_space<vmem>>, vector<1x16x128xf32>
    %550 = vector.shape_cast %549 : vector<1x16x128xf32> to vector<16x128xf32>
    %551 = vector.extract_strided_slice %471 {offsets = [13, 0], sizes = [1, 128], strides = [1, 1]} : vector<16x128xf32> to vector<1x128xf32>
    %552 = vector.broadcast %551 : vector<1x128xf32> to vector<16x128xf32>
    %553 = arith.mulf %550, %552 : vector<16x128xf32>
    %554 = arith.addf %548, %553 : vector<16x128xf32>
    %c14_318 = arith.constant 14 : index
    %c0_319 = arith.constant 0 : index
    %c0_320 = arith.constant 0 : index
    %555 = vector.load %arg6[%c14_318, %c0_319, %c0_320] : memref<16x16x128xf32, #tpu.memory_space<vmem>>, vector<1x16x128xf32>
    %556 = vector.shape_cast %555 : vector<1x16x128xf32> to vector<16x128xf32>
    %557 = vector.extract_strided_slice %471 {offsets = [14, 0], sizes = [1, 128], strides = [1, 1]} : vector<16x128xf32> to vector<1x128xf32>
    %558 = vector.broadcast %557 : vector<1x128xf32> to vector<16x128xf32>
    %559 = arith.mulf %556, %558 : vector<16x128xf32>
    %560 = arith.addf %554, %559 : vector<16x128xf32>
    %c15_321 = arith.constant 15 : index
    %c0_322 = arith.constant 0 : index
    %c0_323 = arith.constant 0 : index
    %561 = vector.load %arg6[%c15_321, %c0_322, %c0_323] : memref<16x16x128xf32, #tpu.memory_space<vmem>>, vector<1x16x128xf32>
    %562 = vector.shape_cast %561 : vector<1x16x128xf32> to vector<16x128xf32>
    %563 = vector.extract_strided_slice %471 {offsets = [15, 0], sizes = [1, 128], strides = [1, 1]} : vector<16x128xf32> to vector<1x128xf32>
    %564 = vector.broadcast %563 : vector<1x128xf32> to vector<16x128xf32>
    %565 = arith.mulf %562, %564 : vector<16x128xf32>
    %566 = arith.addf %560, %565 : vector<16x128xf32>
    %567 = arith.truncf %566 : vector<16x128xf32> to vector<16x128xbf16>
    %c0_324 = arith.constant 0 : index
    %c0_325 = arith.constant 0 : index
    %568 = vector.load %arg7[%c0_324, %c0_325] : memref<128x128xbf16, #tpu.memory_space<vmem>>, vector<128x128xbf16>
    %cst_326 = arith.constant dense<0.000000e+00> : vector<16x128xf32>
    %569 = tpu.matmul %567, %568, %cst_326 {dimension_numbers = #tpu.dot_dimension_numbers<[1], [0], [0], [1], [0, 0, 1, 1], [], []>} : vector<16x128xbf16>, vector<128x128xbf16>, vector<16x128xf32> -> vector<16x128xf32>
    %c0_327 = arith.constant 0 : index
    %c9_328 = arith.constant 9 : index
    %570 = vector.load %arg8[%c0_327, %c9_328] : memref<16x16xf32, #tpu.memory_space<vmem>>, vector<16x1xf32>
    %571 = vector.broadcast %570 : vector<16x1xf32> to vector<16x128xf32>
    %572 = arith.addf %569, %571 : vector<16x128xf32>
    %c0_329 = arith.constant 0 : index
    %c0_330 = arith.constant 0 : index
    %573 = vector.load %arg9[%c0_329, %c0_330] : memref<16x128xf32, #tpu.memory_space<vmem>>, vector<16x128xf32>
    tpu.vector_store %arg9[%c0_329, %c0_330], %572 {strides = array<i32>} : memref<16x128xf32, #tpu.memory_space<vmem>>, vector<16x128xf32>,
    return
  }
}

</mosaic_0001>

<llo_original>
// kernel: tile.9
$region0: #{tile.9}
  %s0 = inlined_call_operand.vmem [shape: f32[16,16,2,64], index: 0, kind: input, shape index: {}]
  %s1 = inlined_call_operand.vmem [shape: f32[16,16,128], index: 1, kind: output, shape index: {}]
  $region1: #{tile.9} parent=0
    #allocation0 [shape = 'u8[1048576]{0}', space=vmem, size = 0x100000, scoped, tag = 'scoped mem for input reshape']
    %s3 = ssub.s32 4, 1
    %s4 = scalar_lea.vmem %s0, 510
    %v5 = vld [vmem:[%s4] sm:%s3]
    %s6 = scalar_lea.vmem [#allocation0], 2040
    %7 = vst [vmem:[%s6] sm:%s3] %v5
    %s8 = scalar_lea.vmem %s0, 508
    %v9 = vld [vmem:[%s8] sm:%s3]
    %s10 = scalar_lea.vmem [#allocation0], 2032
    %11 = vst [vmem:[%s10] sm:%s3] %v9
    %s12 = scalar_lea.vmem %s0, 506
    %v13 = vld [vmem:[%s12] sm:%s3]
    %s14 = scalar_lea.vmem [#allocation0], 2024
    %15 = vst [vmem:[%s14] sm:%s3] %v13
    %s16 = scalar_lea.vmem %s0, 504
    %v17 = vld [vmem:[%s16] sm:%s3]
    %s18 = scalar_lea.vmem [#allocation0], 2016
    %19 = vst [vmem:[%s18] sm:%s3] %v17
    %s20 = scalar_lea.vmem %s0, 502
    %v21 = vld [vmem:[%s20] sm:%s3]
    %s22 = scalar_lea.vmem [#allocation0], 2008
    %23 = vst [vmem:[%s22] sm:%s3] %v21
    %s24 = scalar_lea.vmem %s0, 500
    %v25 = vld [vmem:[%s24] sm:%s3]
    %s26 = scalar_lea.vmem [#allocation0], 2000
    %27 = vst [vmem:[%s26] sm:%s3] %v25
    %s28 = scalar_lea.vmem %s0, 498
    %v29 = vld [vmem:[%s28] sm:%s3]
    %s30 = scalar_lea.vmem [#allocation0], 1992
    %31 = vst [vmem:[%s30] sm:%s3] %v29
    %s32 = scalar_lea.vmem %s0, 496
    %v33 = vld [vmem:[%s32] sm:%s3]
    %s34 = scalar_lea.vmem [#allocation0], 1984
    %35 = vst [vmem:[%s34] sm:%s3] %v33
    %s36 = scalar_lea.vmem %s0, 494
    %v37 = vld [vmem:[%s36] sm:%s3]
    %s38 = scalar_lea.vmem [#allocation0], 1976
    %39 = vst [vmem:[%s38] sm:%s3] %v37
    %s40 = scalar_lea.vmem %s0, 492
    %v41 = vld [vmem:[%s40] sm:%s3]
    %s42 = scalar_lea.vmem [#allocation0], 1968
    %43 = vst [vmem:[%s42] sm:%s3] %v41
    %s44 = scalar_lea.vmem %s0, 490
    %v45 = vld [vmem:[%s44] sm:%s3]
    %s46 = scalar_lea.vmem [#allocation0], 1960
    %47 = vst [vmem:[%s46] sm:%s3] %v45
    %s48 = scalar_lea.vmem %s0, 488
    %v49 = vld [vmem:[%s48] sm:%s3]
    %s50 = scalar_lea.vmem [#allocation0], 1952
    %51 = vst [vmem:[%s50] sm:%s3] %v49
    %s52 = scalar_lea.vmem %s0, 486
    %v53 = vld [vmem:[%s52] sm:%s3]
    %s54 = scalar_lea.vmem [#allocation0], 1944
    %55 = vst [vmem:[%s54] sm:%s3] %v53
    %s56 = scalar_lea.vmem %s0, 484
    %v57 = vld [vmem:[%s56] sm:%s3]
    %s58 = scalar_lea.vmem [#allocation0], 1936
    %59 = vst [vmem:[%s58] sm:%s3] %v57
    %s60 = scalar_lea.vmem %s0, 482
    %v61 = vld [vmem:[%s60] sm:%s3]
    %s62 = scalar_lea.vmem [#allocation0], 1928
    %63 = vst [vmem:[%s62] sm:%s3] %v61
    %s64 = scalar_lea.vmem %s0, 480
    %v65 = vld [vmem:[%s64] sm:%s3]
    %s66 = scalar_lea.vmem [#allocation0], 1920
    %67 = vst [vmem:[%s66] sm:%s3] %v65
    %s68 = scalar_lea.vmem %s0, 478
    %v69 = vld [vmem:[%s68] sm:%s3]
    %s70 = scalar_lea.vmem [#allocation0], 1912
    %71 = vst [vmem:[%s70] sm:%s3] %v69
    %s72 = scalar_lea.vmem %s0, 476
    %v73 = vld [vmem:[%s72] sm:%s3]
    %s74 = scalar_lea.vmem [#allocation0], 1904
    %75 = vst [vmem:[%s74] sm:%s3] %v73
    %s76 = scalar_lea.vmem %s0, 474
    %v77 = vld [vmem:[%s76] sm:%s3]
    %s78 = scalar_lea.vmem [#allocation0], 1896
    %79 = vst [vmem:[%s78] sm:%s3] %v77
    %s80 = scalar_lea.vmem %s0, 472
    %v81 = vld [vmem:[%s80] sm:%s3]
    %s82 = scalar_lea.vmem [#allocation0], 1888
    %83 = vst [vmem:[%s82] sm:%s3] %v81
    %s84 = scalar_lea.vmem %s0, 470
    %v85 = vld [vmem:[%s84] sm:%s3]
    %s86 = scalar_lea.vmem [#allocation0], 1880
    %87 = vst [vmem:[%s86] sm:%s3] %v85
    %s88 = scalar_lea.vmem %s0, 468
    %v89 = vld [vmem:[%s88] sm:%s3]
    %s90 = scalar_lea.vmem [#allocation0], 1872
    %91 = vst [vmem:[%s90] sm:%s3] %v89
    %s92 = scalar_lea.vmem %s0, 466
    %v93 = vld [vmem:[%s92] sm:%s3]
    %s94 = scalar_lea.vmem [#allocation0], 1864
    %95 = vst [vmem:[%s94] sm:%s3] %v93
    %s96 = scalar_lea.vmem %s0, 464
    %v97 = vld [vmem:[%s96] sm:%s3]
    %s98 = scalar_lea.vmem [#allocation0], 1856
    %99 = vst [vmem:[%s98] sm:%s3] %v97
    %s100 = scalar_lea.vmem %s0, 462
    %v101 = vld [vmem:[%s100] sm:%s3]
    %s102 = scalar_lea.vmem [#allocation0], 1848
    %103 = vst [vmem:[%s102] sm:%s3] %v101
    %s104 = scalar_lea.vmem %s0, 460
    %v105 = vld [vmem:[%s104] sm:%s3]
    %s106 = scalar_lea.vmem [#allocation0], 1840
    %107 = vst [vmem:[%s106] sm:%s3] %v105
    %s108 = scalar_lea.vmem %s0, 458
    %v109 = vld [vmem:[%s108] sm:%s3]
    %s110 = scalar_lea.vmem [#allocation0], 1832
    %111 = vst [vmem:[%s110] sm:%s3] %v109
    %s112 = scalar_lea.vmem %s0, 456
    %v113 = vld [vmem:[%s112] sm:%s3]
    %s114 = scalar_lea.vmem [#allocation0], 1824
    %115 = vst [vmem:[%s114] sm:%s3] %v113
    %s116 = scalar_lea.vmem %s0, 454
    %v117 = vld [vmem:[%s116] sm:%s3]
    %s118 = scalar_lea.vmem [#allocation0], 1816
    %119 = vst [vmem:[%s118] sm:%s3] %v117
    %s120 = scalar_lea.vmem %s0, 452
    %v121 = vld [vmem:[%s120] sm:%s3]
    %s122 = scalar_lea.vmem [#allocation0], 1808
    %123 = vst [vmem:[%s122] sm:%s3] %v121
    %s124 = scalar_lea.vmem %s0, 450
    %v125 = vld [vmem:[%s124] sm:%s3]
    %s126 = scalar_lea.vmem [#allocation0], 1800
    %127 = vst [vmem:[%s126] sm:%s3] %v125
    %s128 = scalar_lea.vmem %s0, 448
    %v129 = vld [vmem:[%s128] sm:%s3]
    %s130 = scalar_lea.vmem [#allocation0], 1792
    %131 = vst [vmem:[%s130] sm:%s3] %v129
    %s132 = scalar_lea.vmem %s0, 446
    %v133 = vld [vmem:[%s132] sm:%s3]
    %s134 = scalar_lea.vmem [#allocation0], 1784
    %135 = vst [vmem:[%s134] sm:%s3] %v133
    %s136 = scalar_lea.vmem %s0, 444
    %v137 = vld [vmem:[%s136] sm:%s3]
    %s138 = scalar_lea.vmem [#allocation0], 1776
    %139 = vst [vmem:[%s138] sm:%s3] %v137
    %s140 = scalar_lea.vmem %s0, 442
    %v141 = vld [vmem:[%s140] sm:%s3]
    %s142 = scalar_lea.vmem [#allocation0], 1768
    %143 = vst [vmem:[%s142] sm:%s3] %v141
    %s144 = scalar_lea.vmem %s0, 440
    %v145 = vld [vmem:[%s144] sm:%s3]
    %s146 = scalar_lea.vmem [#allocation0], 1760
    %147 = vst [vmem:[%s146] sm:%s3] %v145
    %s148 = scalar_lea.vmem %s0, 438
    %v149 = vld [vmem:[%s148] sm:%s3]
    %s150 = scalar_lea.vmem [#allocation0], 1752
    %151 = vst [vmem:[%s150] sm:%s3] %v149
    %s152 = scalar_lea.vmem %s0, 436
    %v153 = vld [vmem:[%s152] sm:%s3]
    %s154 = scalar_lea.vmem [#allocation0], 1744
    %155 = vst [vmem:[%s154] sm:%s3] %v153
    %s156 = scalar_lea.vmem %s0, 434
    %v157 = vld [vmem:[%s156] sm:%s3]
    %s158 = scalar_lea.vmem [#allocation0], 1736
    %159 = vst [vmem:[%s158] sm:%s3] %v157
    %s160 = scalar_lea.vmem %s0, 432
    %v161 = vld [vmem:[%s160] sm:%s3]
    %s162 = scalar_lea.vmem [#allocation0], 1728
    %163 = vst [vmem:[%s162] sm:%s3] %v161
    %s164 = scalar_lea.vmem %s0, 430
    %v165 = vld [vmem:[%s164] sm:%s3]
    %s166 = scalar_lea.vmem [#allocation0], 1720
    %167 = vst [vmem:[%s166] sm:%s3] %v165
    %s168 = scalar_lea.vmem %s0, 428
    %v169 = vld [vmem:[%s168] sm:%s3]
    %s170 = scalar_lea.vmem [#allocation0], 1712
    %171 = vst [vmem:[%s170] sm:%s3] %v169
    %s172 = scalar_lea.vmem %s0, 426
    %v173 = vld [vmem:[%s172] sm:%s3]
    %s174 = scalar_lea.vmem [#allocation0], 1704
    %175 = vst [vmem:[%s174] sm:%s3] %v173
    %s176 = scalar_lea.vmem %s0, 424
    %v177 = vld [vmem:[%s176] sm:%s3]
    %s178 = scalar_lea.vmem [#allocation0], 1696
    %179 = vst [vmem:[%s178] sm:%s3] %v177
    %s180 = scalar_lea.vmem %s0, 422
    %v181 = vld [vmem:[%s180] sm:%s3]
    %s182 = scalar_lea.vmem [#allocation0], 1688
    %183 = vst [vmem:[%s182] sm:%s3] %v181
    %s184 = scalar_lea.vmem %s0, 420
    %v185 = vld [vmem:[%s184] sm:%s3]
    %s186 = scalar_lea.vmem [#allocation0], 1680
    %187 = vst [vmem:[%s186] sm:%s3] %v185
    %s188 = scalar_lea.vmem %s0, 418
    %v189 = vld [vmem:[%s188] sm:%s3]
    %s190 = scalar_lea.vmem [#allocation0], 1672
    %191 = vst [vmem:[%s190] sm:%s3] %v189
    %s192 = scalar_lea.vmem %s0, 416
    %v193 = vld [vmem:[%s192] sm:%s3]
    %s194 = scalar_lea.vmem [#allocation0], 1664
    %195 = vst [vmem:[%s194] sm:%s3] %v193
    %s196 = scalar_lea.vmem %s0, 414
    %v197 = vld [vmem:[%s196] sm:%s3]
    %s198 = scalar_lea.vmem [#allocation0], 1656
    %199 = vst [vmem:[%s198] sm:%s3] %v197
    %s200 = scalar_lea.vmem %s0, 412
    %v201 = vld [vmem:[%s200] sm:%s3]
    %s202 = scalar_lea.vmem [#allocation0], 1648
    %203 = vst [vmem:[%s202] sm:%s3] %v201
    %s204 = scalar_lea.vmem %s0, 410
    %v205 = vld [vmem:[%s204] sm:%s3]
    %s206 = scalar_lea.vmem [#allocation0], 1640
    %207 = vst [vmem:[%s206] sm:%s3] %v205
    %s208 = scalar_lea.vmem %s0, 408
    %v209 = vld [vmem:[%s208] sm:%s3]
    %s210 = scalar_lea.vmem [#allocation0], 1632
    %211 = vst [vmem:[%s210] sm:%s3] %v209
    %s212 = scalar_lea.vmem %s0, 406
    %v213 = vld [vmem:[%s212] sm:%s3]
    %s214 = scalar_lea.vmem [#allocation0], 1624
    %215 = vst [vmem:[%s214] sm:%s3] %v213
    %s216 = scalar_lea.vmem %s0, 404
    %v217 = vld [vmem:[%s216] sm:%s3]
    %s218 = scalar_lea.vmem [#allocation0], 1616
    %219 = vst [vmem:[%s218] sm:%s3] %v217
    %s220 = scalar_lea.vmem %s0, 402
    %v221 = vld [vmem:[%s220] sm:%s3]
    %s222 = scalar_lea.vmem [#allocation0], 1608
    %223 = vst [vmem:[%s222] sm:%s3] %v221
    %s224 = scalar_lea.vmem %s0, 400
    %v225 = vld [vmem:[%s224] sm:%s3]
    %s226 = scalar_lea.vmem [#allocation0], 1600
    %227 = vst [vmem:[%s226] sm:%s3] %v225
    %s228 = scalar_lea.vmem %s0, 398
    %v229 = vld [vmem:[%s228] sm:%s3]
    %s230 = scalar_lea.vmem [#allocation0], 1592
    %231 = vst [vmem:[%s230] sm:%s3] %v229
    %s232 = scalar_lea.vmem %s0, 396
    %v233 = vld [vmem:[%s232] sm:%s3]
    %s234 = scalar_lea.vmem [#allocation0], 1584
    %235 = vst [vmem:[%s234] sm:%s3] %v233
    %s236 = scalar_lea.vmem %s0, 394
    %v237 = vld [vmem:[%s236] sm:%s3]
    %s238 = scalar_lea.vmem [#allocation0], 1576
    %239 = vst [vmem:[%s238] sm:%s3] %v237
    %s240 = scalar_lea.vmem %s0, 392
    %v241 = vld [vmem:[%s240] sm:%s3]
    %s242 = scalar_lea.vmem [#allocation0], 1568
    %243 = vst [vmem:[%s242] sm:%s3] %v241
    %s244 = scalar_lea.vmem %s0, 390
    %v245 = vld [vmem:[%s244] sm:%s3]
    %s246 = scalar_lea.vmem [#allocation0], 1560
    %247 = vst [vmem:[%s246] sm:%s3] %v245
    %s248 = scalar_lea.vmem %s0, 388
    %v249 = vld [vmem:[%s248] sm:%s3]
    %s250 = scalar_lea.vmem [#allocation0], 1552
    %251 = vst [vmem:[%s250] sm:%s3] %v249
    %s252 = scalar_lea.vmem %s0, 386
    %v253 = vld [vmem:[%s252] sm:%s3]
    %s254 = scalar_lea.vmem [#allocation0], 1544
    %255 = vst [vmem:[%s254] sm:%s3] %v253
    %s256 = scalar_lea.vmem %s0, 384
    %v257 = vld [vmem:[%s256] sm:%s3]
    %s258 = scalar_lea.vmem [#allocation0], 1536
    %259 = vst [vmem:[%s258] sm:%s3] %v257
    %s260 = scalar_lea.vmem %s0, 382
    %v261 = vld [vmem:[%s260] sm:%s3]
    %s262 = scalar_lea.vmem [#allocation0], 1528
    %263 = vst [vmem:[%s262] sm:%s3] %v261
    %s264 = scalar_lea.vmem %s0, 380
    %v265 = vld [vmem:[%s264] sm:%s3]
    %s266 = scalar_lea.vmem [#allocation0], 1520
    %267 = vst [vmem:[%s266] sm:%s3] %v265
    %s268 = scalar_lea.vmem %s0, 378
    %v269 = vld [vmem:[%s268] sm:%s3]
    %s270 = scalar_lea.vmem [#allocation0], 1512
    %271 = vst [vmem:[%s270] sm:%s3] %v269
    %s272 = scalar_lea.vmem %s0, 376
    %v273 = vld [vmem:[%s272] sm:%s3]
    %s274 = scalar_lea.vmem [#allocation0], 1504
    %275 = vst [vmem:[%s274] sm:%s3] %v273
    %s276 = scalar_lea.vmem %s0, 374
    %v277 = vld [vmem:[%s276] sm:%s3]
    %s278 = scalar_lea.vmem [#allocation0], 1496
    %279 = vst [vmem:[%s278] sm:%s3] %v277
    %s280 = scalar_lea.vmem %s0, 372
    %v281 = vld [vmem:[%s280] sm:%s3]
    %s282 = scalar_lea.vmem [#allocation0], 1488
    %283 = vst [vmem:[%s282] sm:%s3] %v281
    %s284 = scalar_lea.vmem %s0, 370
    %v285 = vld [vmem:[%s284] sm:%s3]
    %s286 = scalar_lea.vmem [#allocation0], 1480
    %287 = vst [vmem:[%s286] sm:%s3] %v285
    %s288 = scalar_lea.vmem %s0, 368
    %v289 = vld [vmem:[%s288] sm:%s3]
    %s290 = scalar_lea.vmem [#allocation0], 1472
    %291 = vst [vmem:[%s290] sm:%s3] %v289
    %s292 = scalar_lea.vmem %s0, 366
    %v293 = vld [vmem:[%s292] sm:%s3]
    %s294 = scalar_lea.vmem [#allocation0], 1464
    %295 = vst [vmem:[%s294] sm:%s3] %v293
    %s296 = scalar_lea.vmem %s0, 364
    %v297 = vld [vmem:[%s296] sm:%s3]
    %s298 = scalar_lea.vmem [#allocation0], 1456
    %299 = vst [vmem:[%s298] sm:%s3] %v297
    %s300 = scalar_lea.vmem %s0, 362
    %v301 = vld [vmem:[%s300] sm:%s3]
    %s302 = scalar_lea.vmem [#allocation0], 1448
    %303 = vst [vmem:[%s302] sm:%s3] %v301
    %s304 = scalar_lea.vmem %s0, 360
    %v305 = vld [vmem:[%s304] sm:%s3]
    %s306 = scalar_lea.vmem [#allocation0], 1440
    %307 = vst [vmem:[%s306] sm:%s3] %v305
    %s308 = scalar_lea.vmem %s0, 358
    %v309 = vld [vmem:[%s308] sm:%s3]
    %s310 = scalar_lea.vmem [#allocation0], 1432
    %311 = vst [vmem:[%s310] sm:%s3] %v309
    %s312 = scalar_lea.vmem %s0, 356
    %v313 = vld [vmem:[%s312] sm:%s3]
    %s314 = scalar_lea.vmem [#allocation0], 1424
    %315 = vst [vmem:[%s314] sm:%s3] %v313
    %s316 = scalar_lea.vmem %s0, 354
    %v317 = vld [vmem:[%s316] sm:%s3]
    %s318 = scalar_lea.vmem [#allocation0], 1416
    %319 = vst [vmem:[%s318] sm:%s3] %v317
    %s320 = scalar_lea.vmem %s0, 352
    %v321 = vld [vmem:[%s320] sm:%s3]
    %s322 = scalar_lea.vmem [#allocation0], 1408
    %323 = vst [vmem:[%s322] sm:%s3] %v321
    %s324 = scalar_lea.vmem %s0, 350
    %v325 = vld [vmem:[%s324] sm:%s3]
    %s326 = scalar_lea.vmem [#allocation0], 1400
    %327 = vst [vmem:[%s326] sm:%s3] %v325
    %s328 = scalar_lea.vmem %s0, 348
    %v329 = vld [vmem:[%s328] sm:%s3]
    %s330 = scalar_lea.vmem [#allocation0], 1392
    %331 = vst [vmem:[%s330] sm:%s3] %v329
    %s332 = scalar_lea.vmem %s0, 346
    %v333 = vld [vmem:[%s332] sm:%s3]
    %s334 = scalar_lea.vmem [#allocation0], 1384
    %335 = vst [vmem:[%s334] sm:%s3] %v333
    %s336 = scalar_lea.vmem %s0, 344
    %v337 = vld [vmem:[%s336] sm:%s3]
    %s338 = scalar_lea.vmem [#allocation0], 1376
    %339 = vst [vmem:[%s338] sm:%s3] %v337
    %s340 = scalar_lea.vmem %s0, 342
    %v341 = vld [vmem:[%s340] sm:%s3]
    %s342 = scalar_lea.vmem [#allocation0], 1368
    %343 = vst [vmem:[%s342] sm:%s3] %v341
    %s344 = scalar_lea.vmem %s0, 340
    %v345 = vld [vmem:[%s344] sm:%s3]
    %s346 = scalar_lea.vmem [#allocation0], 1360
    %347 = vst [vmem:[%s346] sm:%s3] %v345
    %s348 = scalar_lea.vmem %s0, 338
    %v349 = vld [vmem:[%s348] sm:%s3]
    %s350 = scalar_lea.vmem [#allocation0], 1352
    %351 = vst [vmem:[%s350] sm:%s3] %v349
    %s352 = scalar_lea.vmem %s0, 336
    %v353 = vld [vmem:[%s352] sm:%s3]
    %s354 = scalar_lea.vmem [#allocation0], 1344
    %355 = vst [vmem:[%s354] sm:%s3] %v353
    %s356 = scalar_lea.vmem %s0, 334
    %v357 = vld [vmem:[%s356] sm:%s3]
    %s358 = scalar_lea.vmem [#allocation0], 1336
    %359 = vst [vmem:[%s358] sm:%s3] %v357
    %s360 = scalar_lea.vmem %s0, 332
    %v361 = vld [vmem:[%s360] sm:%s3]
    %s362 = scalar_lea.vmem [#allocation0], 1328
    %363 = vst [vmem:[%s362] sm:%s3] %v361
    %s364 = scalar_lea.vmem %s0, 330
    %v365 = vld [vmem:[%s364] sm:%s3]
    %s366 = scalar_lea.vmem [#allocation0], 1320
    %367 = vst [vmem:[%s366] sm:%s3] %v365
    %s368 = scalar_lea.vmem %s0, 328
    %v369 = vld [vmem:[%s368] sm:%s3]
    %s370 = scalar_lea.vmem [#allocation0], 1312
    %371 = vst [vmem:[%s370] sm:%s3] %v369
    %s372 = scalar_lea.vmem %s0, 326
    %v373 = vld [vmem:[%s372] sm:%s3]
    %s374 = scalar_lea.vmem [#allocation0], 1304
    %375 = vst [vmem:[%s374] sm:%s3] %v373
    %s376 = scalar_lea.vmem %s0, 324
    %v377 = vld [vmem:[%s376] sm:%s3]
    %s378 = scalar_lea.vmem [#allocation0], 1296
    %379 = vst [vmem:[%s378] sm:%s3] %v377
    %s380 = scalar_lea.vmem %s0, 322
    %v381 = vld [vmem:[%s380] sm:%s3]
    %s382 = scalar_lea.vmem [#allocation0], 1288
    %383 = vst [vmem:[%s382] sm:%s3] %v381
    %s384 = scalar_lea.vmem %s0, 320
    %v385 = vld [vmem:[%s384] sm:%s3]
    %s386 = scalar_lea.vmem [#allocation0], 1280
    %387 = vst [vmem:[%s386] sm:%s3] %v385
    %s388 = scalar_lea.vmem %s0, 318
    %v389 = vld [vmem:[%s388] sm:%s3]
    %s390 = scalar_lea.vmem [#allocation0], 1272
    %391 = vst [vmem:[%s390] sm:%s3] %v389
    %s392 = scalar_lea.vmem %s0, 316
    %v393 = vld [vmem:[%s392] sm:%s3]
    %s394 = scalar_lea.vmem [#allocation0], 1264
    %395 = vst [vmem:[%s394] sm:%s3] %v393
    %s396 = scalar_lea.vmem %s0, 314
    %v397 = vld [vmem:[%s396] sm:%s3]
    %s398 = scalar_lea.vmem [#allocation0], 1256
    %399 = vst [vmem:[%s398] sm:%s3] %v397
    %s400 = scalar_lea.vmem %s0, 312
    %v401 = vld [vmem:[%s400] sm:%s3]
    %s402 = scalar_lea.vmem [#allocation0], 1248
    %403 = vst [vmem:[%s402] sm:%s3] %v401
    %s404 = scalar_lea.vmem %s0, 310
    %v405 = vld [vmem:[%s404] sm:%s3]
    %s406 = scalar_lea.vmem [#allocation0], 1240
    %407 = vst [vmem:[%s406] sm:%s3] %v405
    %s408 = scalar_lea.vmem %s0, 308
    %v409 = vld [vmem:[%s408] sm:%s3]
    %s410 = scalar_lea.vmem [#allocation0], 1232
    %411 = vst [vmem:[%s410] sm:%s3] %v409
    %s412 = scalar_lea.vmem %s0, 306
    %v413 = vld [vmem:[%s412] sm:%s3]
    %s414 = scalar_lea.vmem [#allocation0], 1224
    %415 = vst [vmem:[%s414] sm:%s3] %v413
    %s416 = scalar_lea.vmem %s0, 304
    %v417 = vld [vmem:[%s416] sm:%s3]
    %s418 = scalar_lea.vmem [#allocation0], 1216
    %419 = vst [vmem:[%s418] sm:%s3] %v417
    %s420 = scalar_lea.vmem %s0, 302
    %v421 = vld [vmem:[%s420] sm:%s3]
    %s422 = scalar_lea.vmem [#allocation0], 1208
    %423 = vst [vmem:[%s422] sm:%s3] %v421
    %s424 = scalar_lea.vmem %s0, 300
    %v425 = vld [vmem:[%s424] sm:%s3]
    %s426 = scalar_lea.vmem [#allocation0], 1200
    %427 = vst [vmem:[%s426] sm:%s3] %v425
    %s428 = scalar_lea.vmem %s0, 298
    %v429 = vld [vmem:[%s428] sm:%s3]
    %s430 = scalar_lea.vmem [#allocation0], 1192
    %431 = vst [vmem:[%s430] sm:%s3] %v429
    %s432 = scalar_lea.vmem %s0, 296
    %v433 = vld [vmem:[%s432] sm:%s3]
    %s434 = scalar_lea.vmem [#allocation0], 1184
    %435 = vst [vmem:[%s434] sm:%s3] %v433
    %s436 = scalar_lea.vmem %s0, 294
    %v437 = vld [vmem:[%s436] sm:%s3]
    %s438 = scalar_lea.vmem [#allocation0], 1176
    %439 = vst [vmem:[%s438] sm:%s3] %v437
    %s440 = scalar_lea.vmem %s0, 292
    %v441 = vld [vmem:[%s440] sm:%s3]
    %s442 = scalar_lea.vmem [#allocation0], 1168
    %443 = vst [vmem:[%s442] sm:%s3] %v441
    %s444 = scalar_lea.vmem %s0, 290
    %v445 = vld [vmem:[%s444] sm:%s3]
    %s446 = scalar_lea.vmem [#allocation0], 1160
    %447 = vst [vmem:[%s446] sm:%s3] %v445
    %s448 = scalar_lea.vmem %s0, 288
    %v449 = vld [vmem:[%s448] sm:%s3]
    %s450 = scalar_lea.vmem [#allocation0], 1152
    %451 = vst [vmem:[%s450] sm:%s3] %v449
    %s452 = scalar_lea.vmem %s0, 286
    %v453 = vld [vmem:[%s452] sm:%s3]
    %s454 = scalar_lea.vmem [#allocation0], 1144
    %455 = vst [vmem:[%s454] sm:%s3] %v453
    %s456 = scalar_lea.vmem %s0, 284
    %v457 = vld [vmem:[%s456] sm:%s3]
    %s458 = scalar_lea.vmem [#allocation0], 1136
    %459 = vst [vmem:[%s458] sm:%s3] %v457
    %s460 = scalar_lea.vmem %s0, 282
    %v461 = vld [vmem:[%s460] sm:%s3]
    %s462 = scalar_lea.vmem [#allocation0], 1128
    %463 = vst [vmem:[%s462] sm:%s3] %v461
    %s464 = scalar_lea.vmem %s0, 280
    %v465 = vld [vmem:[%s464] sm:%s3]
    %s466 = scalar_lea.vmem [#allocation0], 1120
    %467 = vst [vmem:[%s466] sm:%s3] %v465
    %s468 = scalar_lea.vmem %s0, 278
    %v469 = vld [vmem:[%s468] sm:%s3]
    %s470 = scalar_lea.vmem [#allocation0], 1112
    %471 = vst [vmem:[%s470] sm:%s3] %v469
    %s472 = scalar_lea.vmem %s0, 276
    %v473 = vld [vmem:[%s472] sm:%s3]
    %s474 = scalar_lea.vmem [#allocation0], 1104
    %475 = vst [vmem:[%s474] sm:%s3] %v473
    %s476 = scalar_lea.vmem %s0, 274
    %v477 = vld [vmem:[%s476] sm:%s3]
    %s478 = scalar_lea.vmem [#allocation0], 1096
    %479 = vst [vmem:[%s478] sm:%s3] %v477
    %s480 = scalar_lea.vmem %s0, 272
    %v481 = vld [vmem:[%s480] sm:%s3]
    %s482 = scalar_lea.vmem [#allocation0], 1088
    %483 = vst [vmem:[%s482] sm:%s3] %v481
    %s484 = scalar_lea.vmem %s0, 270
    %v485 = vld [vmem:[%s484] sm:%s3]
    %s486 = scalar_lea.vmem [#allocation0], 1080
    %487 = vst [vmem:[%s486] sm:%s3] %v485
    %s488 = scalar_lea.vmem %s0, 268
    %v489 = vld [vmem:[%s488] sm:%s3]
    %s490 = scalar_lea.vmem [#allocation0], 1072
    %491 = vst [vmem:[%s490] sm:%s3] %v489
    %s492 = scalar_lea.vmem %s0, 266
    %v493 = vld [vmem:[%s492] sm:%s3]
    %s494 = scalar_lea.vmem [#allocation0], 1064
    %495 = vst [vmem:[%s494] sm:%s3] %v493
    %s496 = scalar_lea.vmem %s0, 264
    %v497 = vld [vmem:[%s496] sm:%s3]
    %s498 = scalar_lea.vmem [#allocation0], 1056
    %499 = vst [vmem:[%s498] sm:%s3] %v497
    %s500 = scalar_lea.vmem %s0, 262
    %v501 = vld [vmem:[%s500] sm:%s3]
    %s502 = scalar_lea.vmem [#allocation0], 1048
    %503 = vst [vmem:[%s502] sm:%s3] %v501
    %s504 = scalar_lea.vmem %s0, 260
    %v505 = vld [vmem:[%s504] sm:%s3]
    %s506 = scalar_lea.vmem [#allocation0], 1040
    %507 = vst [vmem:[%s506] sm:%s3] %v505
    %s508 = scalar_lea.vmem %s0, 258
    %v509 = vld [vmem:[%s508] sm:%s3]
    %s510 = scalar_lea.vmem [#allocation0], 1032
    %511 = vst [vmem:[%s510] sm:%s3] %v509
    %s512 = scalar_lea.vmem %s0, 256
    %v513 = vld [vmem:[%s512] sm:%s3]
    %s514 = scalar_lea.vmem [#allocation0], 1024
    %515 = vst [vmem:[%s514] sm:%s3] %v513
    %s516 = scalar_lea.vmem %s0, 254
    %v517 = vld [vmem:[%s516] sm:%s3]
    %s518 = scalar_lea.vmem [#allocation0], 1016
    %519 = vst [vmem:[%s518] sm:%s3] %v517
    %s520 = scalar_lea.vmem %s0, 252
    %v521 = vld [vmem:[%s520] sm:%s3]
    %s522 = scalar_lea.vmem [#allocation0], 1008
    %523 = vst [vmem:[%s522] sm:%s3] %v521
    %s524 = scalar_lea.vmem %s0, 250
    %v525 = vld [vmem:[%s524] sm:%s3]
    %s526 = scalar_lea.vmem [#allocation0], 1000
    %527 = vst [vmem:[%s526] sm:%s3] %v525
    %s528 = scalar_lea.vmem %s0, 248
    %v529 = vld [vmem:[%s528] sm:%s3]
    %s530 = scalar_lea.vmem [#allocation0], 992
    %531 = vst [vmem:[%s530] sm:%s3] %v529
    %s532 = scalar_lea.vmem %s0, 246
    %v533 = vld [vmem:[%s532] sm:%s3]
    %s534 = scalar_lea.vmem [#allocation0], 984
    %535 = vst [vmem:[%s534] sm:%s3] %v533
    %s536 = scalar_lea.vmem %s0, 244
    %v537 = vld [vmem:[%s536] sm:%s3]
    %s538 = scalar_lea.vmem [#allocation0], 976
    %539 = vst [vmem:[%s538] sm:%s3] %v537
    %s540 = scalar_lea.vmem %s0, 242
    %v541 = vld [vmem:[%s540] sm:%s3]
    %s542 = scalar_lea.vmem [#allocation0], 968
    %543 = vst [vmem:[%s542] sm:%s3] %v541
    %s544 = scalar_lea.vmem %s0, 240
    %v545 = vld [vmem:[%s544] sm:%s3]
    %s546 = scalar_lea.vmem [#allocation0], 960
    %547 = vst [vmem:[%s546] sm:%s3] %v545
    %s548 = scalar_lea.vmem %s0, 238
    %v549 = vld [vmem:[%s548] sm:%s3]
    %s550 = scalar_lea.vmem [#allocation0], 952
    %551 = vst [vmem:[%s550] sm:%s3] %v549
    %s552 = scalar_lea.vmem %s0, 236
    %v553 = vld [vmem:[%s552] sm:%s3]
    %s554 = scalar_lea.vmem [#allocation0], 944
    %555 = vst [vmem:[%s554] sm:%s3] %v553
    %s556 = scalar_lea.vmem %s0, 234
    %v557 = vld [vmem:[%s556] sm:%s3]
    %s558 = scalar_lea.vmem [#allocation0], 936
    %559 = vst [vmem:[%s558] sm:%s3] %v557
    %s560 = scalar_lea.vmem %s0, 232
    %v561 = vld [vmem:[%s560] sm:%s3]
    %s562 = scalar_lea.vmem [#allocation0], 928
    %563 = vst [vmem:[%s562] sm:%s3] %v561
    %s564 = scalar_lea.vmem %s0, 230
    %v565 = vld [vmem:[%s564] sm:%s3]
    %s566 = scalar_lea.vmem [#allocation0], 920
    %567 = vst [vmem:[%s566] sm:%s3] %v565
    %s568 = scalar_lea.vmem %s0, 228
    %v569 = vld [vmem:[%s568] sm:%s3]
    %s570 = scalar_lea.vmem [#allocation0], 912
    %571 = vst [vmem:[%s570] sm:%s3] %v569
    %s572 = scalar_lea.vmem %s0, 226
    %v573 = vld [vmem:[%s572] sm:%s3]
    %s574 = scalar_lea.vmem [#allocation0], 904
    %575 = vst [vmem:[%s574] sm:%s3] %v573
    %s576 = scalar_lea.vmem %s0, 224
    %v577 = vld [vmem:[%s576] sm:%s3]
    %s578 = scalar_lea.vmem [#allocation0], 896
    %579 = vst [vmem:[%s578] sm:%s3] %v577
    %s580 = scalar_lea.vmem %s0, 222
    %v581 = vld [vmem:[%s580] sm:%s3]
    %s582 = scalar_lea.vmem [#allocation0], 888
    %583 = vst [vmem:[%s582] sm:%s3] %v581
    %s584 = scalar_lea.vmem %s0, 220
    %v585 = vld [vmem:[%s584] sm:%s3]
    %s586 = scalar_lea.vmem [#allocation0], 880
    %587 = vst [vmem:[%s586] sm:%s3] %v585
    %s588 = scalar_lea.vmem %s0, 218
    %v589 = vld [vmem:[%s588] sm:%s3]
    %s590 = scalar_lea.vmem [#allocation0], 872
    %591 = vst [vmem:[%s590] sm:%s3] %v589
    %s592 = scalar_lea.vmem %s0, 216
    %v593 = vld [vmem:[%s592] sm:%s3]
    %s594 = scalar_lea.vmem [#allocation0], 864
    %595 = vst [vmem:[%s594] sm:%s3] %v593
    %s596 = scalar_lea.vmem %s0, 214
    %v597 = vld [vmem:[%s596] sm:%s3]
    %s598 = scalar_lea.vmem [#allocation0], 856
    %599 = vst [vmem:[%s598] sm:%s3] %v597
    %s600 = scalar_lea.vmem %s0, 212
    %v601 = vld [vmem:[%s600] sm:%s3]
    %s602 = scalar_lea.vmem [#allocation0], 848
    %603 = vst [vmem:[%s602] sm:%s3] %v601
    %s604 = scalar_lea.vmem %s0, 210
    %v605 = vld [vmem:[%s604] sm:%s3]
    %s606 = scalar_lea.vmem [#allocation0], 840
    %607 = vst [vmem:[%s606] sm:%s3] %v605
    %s608 = scalar_lea.vmem %s0, 208
    %v609 = vld [vmem:[%s608] sm:%s3]
    %s610 = scalar_lea.vmem [#allocation0], 832
    %611 = vst [vmem:[%s610] sm:%s3] %v609
    %s612 = scalar_lea.vmem %s0, 206
    %v613 = vld [vmem:[%s612] sm:%s3]
    %s614 = scalar_lea.vmem [#allocation0], 824
    %615 = vst [vmem:[%s614] sm:%s3] %v613
    %s616 = scalar_lea.vmem %s0, 204
    %v617 = vld [vmem:[%s616] sm:%s3]
    %s618 = scalar_lea.vmem [#allocation0], 816
    %619 = vst [vmem:[%s618] sm:%s3] %v617
    %s620 = scalar_lea.vmem %s0, 202
    %v621 = vld [vmem:[%s620] sm:%s3]
    %s622 = scalar_lea.vmem [#allocation0], 808
    %623 = vst [vmem:[%s622] sm:%s3] %v621
    %s624 = scalar_lea.vmem %s0, 200
    %v625 = vld [vmem:[%s624] sm:%s3]
    %s626 = scalar_lea.vmem [#allocation0], 800
    %627 = vst [vmem:[%s626] sm:%s3] %v625
    %s628 = scalar_lea.vmem %s0, 198
    %v629 = vld [vmem:[%s628] sm:%s3]
    %s630 = scalar_lea.vmem [#allocation0], 792
    %631 = vst [vmem:[%s630] sm:%s3] %v629
    %s632 = scalar_lea.vmem %s0, 196
    %v633 = vld [vmem:[%s632] sm:%s3]
    %s634 = scalar_lea.vmem [#allocation0], 784
    %635 = vst [vmem:[%s634] sm:%s3] %v633
    %s636 = scalar_lea.vmem %s0, 194
    %v637 = vld [vmem:[%s636] sm:%s3]
    %s638 = scalar_lea.vmem [#allocation0], 776
    %639 = vst [vmem:[%s638] sm:%s3] %v637
    %s640 = scalar_lea.vmem %s0, 192
    %v641 = vld [vmem:[%s640] sm:%s3]
    %s642 = scalar_lea.vmem [#allocation0], 768
    %643 = vst [vmem:[%s642] sm:%s3] %v641
    %s644 = scalar_lea.vmem %s0, 190
    %v645 = vld [vmem:[%s644] sm:%s3]
    %s646 = scalar_lea.vmem [#allocation0], 760
    %647 = vst [vmem:[%s646] sm:%s3] %v645
    %s648 = scalar_lea.vmem %s0, 188
    %v649 = vld [vmem:[%s648] sm:%s3]
    %s650 = scalar_lea.vmem [#allocation0], 752
    %651 = vst [vmem:[%s650] sm:%s3] %v649
    %s652 = scalar_lea.vmem %s0, 186
    %v653 = vld [vmem:[%s652] sm:%s3]
    %s654 = scalar_lea.vmem [#allocation0], 744
    %655 = vst [vmem:[%s654] sm:%s3] %v653
    %s656 = scalar_lea.vmem %s0, 184
    %v657 = vld [vmem:[%s656] sm:%s3]
    %s658 = scalar_lea.vmem [#allocation0], 736
    %659 = vst [vmem:[%s658] sm:%s3] %v657
    %s660 = scalar_lea.vmem %s0, 182
    %v661 = vld [vmem:[%s660] sm:%s3]
    %s662 = scalar_lea.vmem [#allocation0], 728
    %663 = vst [vmem:[%s662] sm:%s3] %v661
    %s664 = scalar_lea.vmem %s0, 180
    %v665 = vld [vmem:[%s664] sm:%s3]
    %s666 = scalar_lea.vmem [#allocation0], 720
    %667 = vst [vmem:[%s666] sm:%s3] %v665
    %s668 = scalar_lea.vmem %s0, 178
    %v669 = vld [vmem:[%s668] sm:%s3]
    %s670 = scalar_lea.vmem [#allocation0], 712
    %671 = vst [vmem:[%s670] sm:%s3] %v669
    %s672 = scalar_lea.vmem %s0, 176
    %v673 = vld [vmem:[%s672] sm:%s3]
    %s674 = scalar_lea.vmem [#allocation0], 704
    %675 = vst [vmem:[%s674] sm:%s3] %v673
    %s676 = scalar_lea.vmem %s0, 174
    %v677 = vld [vmem:[%s676] sm:%s3]
    %s678 = scalar_lea.vmem [#allocation0], 696
    %679 = vst [vmem:[%s678] sm:%s3] %v677
    %s680 = scalar_lea.vmem %s0, 172
    %v681 = vld [vmem:[%s680] sm:%s3]
    %s682 = scalar_lea.vmem [#allocation0], 688
    %683 = vst [vmem:[%s682] sm:%s3] %v681
    %s684 = scalar_lea.vmem %s0, 170
    %v685 = vld [vmem:[%s684] sm:%s3]
    %s686 = scalar_lea.vmem [#allocation0], 680
    %687 = vst [vmem:[%s686] sm:%s3] %v685
    %s688 = scalar_lea.vmem %s0, 168
    %v689 = vld [vmem:[%s688] sm:%s3]
    %s690 = scalar_lea.vmem [#allocation0], 672
    %691 = vst [vmem:[%s690] sm:%s3] %v689
    %s692 = scalar_lea.vmem %s0, 166
    %v693 = vld [vmem:[%s692] sm:%s3]
    %s694 = scalar_lea.vmem [#allocation0], 664
    %695 = vst [vmem:[%s694] sm:%s3] %v693
    %s696 = scalar_lea.vmem %s0, 164
    %v697 = vld [vmem:[%s696] sm:%s3]
    %s698 = scalar_lea.vmem [#allocation0], 656
    %699 = vst [vmem:[%s698] sm:%s3] %v697
    %s700 = scalar_lea.vmem %s0, 162
    %v701 = vld [vmem:[%s700] sm:%s3]
    %s702 = scalar_lea.vmem [#allocation0], 648
    %703 = vst [vmem:[%s702] sm:%s3] %v701
    %s704 = scalar_lea.vmem %s0, 160
    %v705 = vld [vmem:[%s704] sm:%s3]
    %s706 = scalar_lea.vmem [#allocation0], 640
    %707 = vst [vmem:[%s706] sm:%s3] %v705
    %s708 = scalar_lea.vmem %s0, 158
    %v709 = vld [vmem:[%s708] sm:%s3]
    %s710 = scalar_lea.vmem [#allocation0], 632
    %711 = vst [vmem:[%s710] sm:%s3] %v709
    %s712 = scalar_lea.vmem %s0, 156
    %v713 = vld [vmem:[%s712] sm:%s3]
    %s714 = scalar_lea.vmem [#allocation0], 624
    %715 = vst [vmem:[%s714] sm:%s3] %v713
    %s716 = scalar_lea.vmem %s0, 154
    %v717 = vld [vmem:[%s716] sm:%s3]
    %s718 = scalar_lea.vmem [#allocation0], 616
    %719 = vst [vmem:[%s718] sm:%s3] %v717
    %s720 = scalar_lea.vmem %s0, 152
    %v721 = vld [vmem:[%s720] sm:%s3]
    %s722 = scalar_lea.vmem [#allocation0], 608
    %723 = vst [vmem:[%s722] sm:%s3] %v721
    %s724 = scalar_lea.vmem %s0, 150
    %v725 = vld [vmem:[%s724] sm:%s3]
    %s726 = scalar_lea.vmem [#allocation0], 600
    %727 = vst [vmem:[%s726] sm:%s3] %v725
    %s728 = scalar_lea.vmem %s0, 148
    %v729 = vld [vmem:[%s728] sm:%s3]
    %s730 = scalar_lea.vmem [#allocation0], 592
    %731 = vst [vmem:[%s730] sm:%s3] %v729
    %s732 = scalar_lea.vmem %s0, 146
    %v733 = vld [vmem:[%s732] sm:%s3]
    %s734 = scalar_lea.vmem [#allocation0], 584
    %735 = vst [vmem:[%s734] sm:%s3] %v733
    %s736 = scalar_lea.vmem %s0, 144
    %v737 = vld [vmem:[%s736] sm:%s3]
    %s738 = scalar_lea.vmem [#allocation0], 576
    %739 = vst [vmem:[%s738] sm:%s3] %v737
    %s740 = scalar_lea.vmem %s0, 142
    %v741 = vld [vmem:[%s740] sm:%s3]
    %s742 = scalar_lea.vmem [#allocation0], 568
    %743 = vst [vmem:[%s742] sm:%s3] %v741
    %s744 = scalar_lea.vmem %s0, 140
    %v745 = vld [vmem:[%s744] sm:%s3]
    %s746 = scalar_lea.vmem [#allocation0], 560
    %747 = vst [vmem:[%s746] sm:%s3] %v745
    %s748 = scalar_lea.vmem %s0, 138
    %v749 = vld [vmem:[%s748] sm:%s3]
    %s750 = scalar_lea.vmem [#allocation0], 552
    %751 = vst [vmem:[%s750] sm:%s3] %v749
    %s752 = scalar_lea.vmem %s0, 136
    %v753 = vld [vmem:[%s752] sm:%s3]
    %s754 = scalar_lea.vmem [#allocation0], 544
    %755 = vst [vmem:[%s754] sm:%s3] %v753
    %s756 = scalar_lea.vmem %s0, 134
    %v757 = vld [vmem:[%s756] sm:%s3]
    %s758 = scalar_lea.vmem [#allocation0], 536
    %759 = vst [vmem:[%s758] sm:%s3] %v757
    %s760 = scalar_lea.vmem %s0, 132
    %v761 = vld [vmem:[%s760] sm:%s3]
    %s762 = scalar_lea.vmem [#allocation0], 528
    %763 = vst [vmem:[%s762] sm:%s3] %v761
    %s764 = scalar_lea.vmem %s0, 130
    %v765 = vld [vmem:[%s764] sm:%s3]
    %s766 = scalar_lea.vmem [#allocation0], 520
    %767 = vst [vmem:[%s766] sm:%s3] %v765
    %s768 = scalar_lea.vmem %s0, 128
    %v769 = vld [vmem:[%s768] sm:%s3]
    %s770 = scalar_lea.vmem [#allocation0], 512
    %771 = vst [vmem:[%s770] sm:%s3] %v769
    %s772 = scalar_lea.vmem %s0, 126
    %v773 = vld [vmem:[%s772] sm:%s3]
    %s774 = scalar_lea.vmem [#allocation0], 504
    %775 = vst [vmem:[%s774] sm:%s3] %v773
    %s776 = scalar_lea.vmem %s0, 124
    %v777 = vld [vmem:[%s776] sm:%s3]
    %s778 = scalar_lea.vmem [#allocation0], 496
    %779 = vst [vmem:[%s778] sm:%s3] %v777
    %s780 = scalar_lea.vmem %s0, 122
    %v781 = vld [vmem:[%s780] sm:%s3]
    %s782 = scalar_lea.vmem [#allocation0], 488
    %783 = vst [vmem:[%s782] sm:%s3] %v781
    %s784 = scalar_lea.vmem %s0, 120
    %v785 = vld [vmem:[%s784] sm:%s3]
    %s786 = scalar_lea.vmem [#allocation0], 480
    %787 = vst [vmem:[%s786] sm:%s3] %v785
    %s788 = scalar_lea.vmem %s0, 118
    %v789 = vld [vmem:[%s788] sm:%s3]
    %s790 = scalar_lea.vmem [#allocation0], 472
    %791 = vst [vmem:[%s790] sm:%s3] %v789
    %s792 = scalar_lea.vmem %s0, 116
    %v793 = vld [vmem:[%s792] sm:%s3]
    %s794 = scalar_lea.vmem [#allocation0], 464
    %795 = vst [vmem:[%s794] sm:%s3] %v793
    %s796 = scalar_lea.vmem %s0, 114
    %v797 = vld [vmem:[%s796] sm:%s3]
    %s798 = scalar_lea.vmem [#allocation0], 456
    %799 = vst [vmem:[%s798] sm:%s3] %v797
    %s800 = scalar_lea.vmem %s0, 112
    %v801 = vld [vmem:[%s800] sm:%s3]
    %s802 = scalar_lea.vmem [#allocation0], 448
    %803 = vst [vmem:[%s802] sm:%s3] %v801
    %s804 = scalar_lea.vmem %s0, 110
    %v805 = vld [vmem:[%s804] sm:%s3]
    %s806 = scalar_lea.vmem [#allocation0], 440
    %807 = vst [vmem:[%s806] sm:%s3] %v805
    %s808 = scalar_lea.vmem %s0, 108
    %v809 = vld [vmem:[%s808] sm:%s3]
    %s810 = scalar_lea.vmem [#allocation0], 432
    %811 = vst [vmem:[%s810] sm:%s3] %v809
    %s812 = scalar_lea.vmem %s0, 106
    %v813 = vld [vmem:[%s812] sm:%s3]
    %s814 = scalar_lea.vmem [#allocation0], 424
    %815 = vst [vmem:[%s814] sm:%s3] %v813
    %s816 = scalar_lea.vmem %s0, 104
    %v817 = vld [vmem:[%s816] sm:%s3]
    %s818 = scalar_lea.vmem [#allocation0], 416
    %819 = vst [vmem:[%s818] sm:%s3] %v817
    %s820 = scalar_lea.vmem %s0, 102
    %v821 = vld [vmem:[%s820] sm:%s3]
    %s822 = scalar_lea.vmem [#allocation0], 408
    %823 = vst [vmem:[%s822] sm:%s3] %v821
    %s824 = scalar_lea.vmem %s0, 100
    %v825 = vld [vmem:[%s824] sm:%s3]
    %s826 = scalar_lea.vmem [#allocation0], 400
    %827 = vst [vmem:[%s826] sm:%s3] %v825
    %s828 = scalar_lea.vmem %s0, 98
    %v829 = vld [vmem:[%s828] sm:%s3]
    %s830 = scalar_lea.vmem [#allocation0], 392
    %831 = vst [vmem:[%s830] sm:%s3] %v829
    %s832 = scalar_lea.vmem %s0, 96
    %v833 = vld [vmem:[%s832] sm:%s3]
    %s834 = scalar_lea.vmem [#allocation0], 384
    %835 = vst [vmem:[%s834] sm:%s3] %v833
    %s836 = scalar_lea.vmem %s0, 94
    %v837 = vld [vmem:[%s836] sm:%s3]
    %s838 = scalar_lea.vmem [#allocation0], 376
    %839 = vst [vmem:[%s838] sm:%s3] %v837
    %s840 = scalar_lea.vmem %s0, 92
    %v841 = vld [vmem:[%s840] sm:%s3]
    %s842 = scalar_lea.vmem [#allocation0], 368
    %843 = vst [vmem:[%s842] sm:%s3] %v841
    %s844 = scalar_lea.vmem %s0, 90
    %v845 = vld [vmem:[%s844] sm:%s3]
    %s846 = scalar_lea.vmem [#allocation0], 360
    %847 = vst [vmem:[%s846] sm:%s3] %v845
    %s848 = scalar_lea.vmem %s0, 88
    %v849 = vld [vmem:[%s848] sm:%s3]
    %s850 = scalar_lea.vmem [#allocation0], 352
    %851 = vst [vmem:[%s850] sm:%s3] %v849
    %s852 = scalar_lea.vmem %s0, 86
    %v853 = vld [vmem:[%s852] sm:%s3]
    %s854 = scalar_lea.vmem [#allocation0], 344
    %855 = vst [vmem:[%s854] sm:%s3] %v853
    %s856 = scalar_lea.vmem %s0, 84
    %v857 = vld [vmem:[%s856] sm:%s3]
    %s858 = scalar_lea.vmem [#allocation0], 336
    %859 = vst [vmem:[%s858] sm:%s3] %v857
    %s860 = scalar_lea.vmem %s0, 82
    %v861 = vld [vmem:[%s860] sm:%s3]
    %s862 = scalar_lea.vmem [#allocation0], 328
    %863 = vst [vmem:[%s862] sm:%s3] %v861
    %s864 = scalar_lea.vmem %s0, 80
    %v865 = vld [vmem:[%s864] sm:%s3]
    %s866 = scalar_lea.vmem [#allocation0], 320
    %867 = vst [vmem:[%s866] sm:%s3] %v865
    %s868 = scalar_lea.vmem %s0, 78
    %v869 = vld [vmem:[%s868] sm:%s3]
    %s870 = scalar_lea.vmem [#allocation0], 312
    %871 = vst [vmem:[%s870] sm:%s3] %v869
    %s872 = scalar_lea.vmem %s0, 76
    %v873 = vld [vmem:[%s872] sm:%s3]
    %s874 = scalar_lea.vmem [#allocation0], 304
    %875 = vst [vmem:[%s874] sm:%s3] %v873
    %s876 = scalar_lea.vmem %s0, 74
    %v877 = vld [vmem:[%s876] sm:%s3]
    %s878 = scalar_lea.vmem [#allocation0], 296
    %879 = vst [vmem:[%s878] sm:%s3] %v877
    %s880 = scalar_lea.vmem %s0, 72
    %v881 = vld [vmem:[%s880] sm:%s3]
    %s882 = scalar_lea.vmem [#allocation0], 288
    %883 = vst [vmem:[%s882] sm:%s3] %v881
    %s884 = scalar_lea.vmem %s0, 70
    %v885 = vld [vmem:[%s884] sm:%s3]
    %s886 = scalar_lea.vmem [#allocation0], 280
    %887 = vst [vmem:[%s886] sm:%s3] %v885
    %s888 = scalar_lea.vmem %s0, 68
    %v889 = vld [vmem:[%s888] sm:%s3]
    %s890 = scalar_lea.vmem [#allocation0], 272
    %891 = vst [vmem:[%s890] sm:%s3] %v889
    %s892 = scalar_lea.vmem %s0, 66
    %v893 = vld [vmem:[%s892] sm:%s3]
    %s894 = scalar_lea.vmem [#allocation0], 264
    %895 = vst [vmem:[%s894] sm:%s3] %v893
    %s896 = scalar_lea.vmem %s0, 64
    %v897 = vld [vmem:[%s896] sm:%s3]
    %s898 = scalar_lea.vmem [#allocation0], 256
    %899 = vst [vmem:[%s898] sm:%s3] %v897
    %s900 = scalar_lea.vmem %s0, 62
    %v901 = vld [vmem:[%s900] sm:%s3]
    %s902 = scalar_lea.vmem [#allocation0], 248
    %903 = vst [vmem:[%s902] sm:%s3] %v901
    %s904 = scalar_lea.vmem %s0, 60
    %v905 = vld [vmem:[%s904] sm:%s3]
    %s906 = scalar_lea.vmem [#allocation0], 240
    %907 = vst [vmem:[%s906] sm:%s3] %v905
    %s908 = scalar_lea.vmem %s0, 58
    %v909 = vld [vmem:[%s908] sm:%s3]
    %s910 = scalar_lea.vmem [#allocation0], 232
    %911 = vst [vmem:[%s910] sm:%s3] %v909
    %s912 = scalar_lea.vmem %s0, 56
    %v913 = vld [vmem:[%s912] sm:%s3]
    %s914 = scalar_lea.vmem [#allocation0], 224
    %915 = vst [vmem:[%s914] sm:%s3] %v913
    %s916 = scalar_lea.vmem %s0, 54
    %v917 = vld [vmem:[%s916] sm:%s3]
    %s918 = scalar_lea.vmem [#allocation0], 216
    %919 = vst [vmem:[%s918] sm:%s3] %v917
    %s920 = scalar_lea.vmem %s0, 52
    %v921 = vld [vmem:[%s920] sm:%s3]
    %s922 = scalar_lea.vmem [#allocation0], 208
    %923 = vst [vmem:[%s922] sm:%s3] %v921
    %s924 = scalar_lea.vmem %s0, 50
    %v925 = vld [vmem:[%s924] sm:%s3]
    %s926 = scalar_lea.vmem [#allocation0], 200
    %927 = vst [vmem:[%s926] sm:%s3] %v925
    %s928 = scalar_lea.vmem %s0, 48
    %v929 = vld [vmem:[%s928] sm:%s3]
    %s930 = scalar_lea.vmem [#allocation0], 192
    %931 = vst [vmem:[%s930] sm:%s3] %v929
    %s932 = scalar_lea.vmem %s0, 46
    %v933 = vld [vmem:[%s932] sm:%s3]
    %s934 = scalar_lea.vmem [#allocation0], 184
    %935 = vst [vmem:[%s934] sm:%s3] %v933
    %s936 = scalar_lea.vmem %s0, 44
    %v937 = vld [vmem:[%s936] sm:%s3]
    %s938 = scalar_lea.vmem [#allocation0], 176
    %939 = vst [vmem:[%s938] sm:%s3] %v937
    %s940 = scalar_lea.vmem %s0, 42
    %v941 = vld [vmem:[%s940] sm:%s3]
    %s942 = scalar_lea.vmem [#allocation0], 168
    %943 = vst [vmem:[%s942] sm:%s3] %v941
    %s944 = scalar_lea.vmem %s0, 40
    %v945 = vld [vmem:[%s944] sm:%s3]
    %s946 = scalar_lea.vmem [#allocation0], 160
    %947 = vst [vmem:[%s946] sm:%s3] %v945
    %s948 = scalar_lea.vmem %s0, 38
    %v949 = vld [vmem:[%s948] sm:%s3]
    %s950 = scalar_lea.vmem [#allocation0], 152
    %951 = vst [vmem:[%s950] sm:%s3] %v949
    %s952 = scalar_lea.vmem %s0, 36
    %v953 = vld [vmem:[%s952] sm:%s3]
    %s954 = scalar_lea.vmem [#allocation0], 144
    %955 = vst [vmem:[%s954] sm:%s3] %v953
    %s956 = scalar_lea.vmem %s0, 34
    %v957 = vld [vmem:[%s956] sm:%s3]
    %s958 = scalar_lea.vmem [#allocation0], 136
    %959 = vst [vmem:[%s958] sm:%s3] %v957
    %s960 = scalar_lea.vmem %s0, 32
    %v961 = vld [vmem:[%s960] sm:%s3]
    %s962 = scalar_lea.vmem [#allocation0], 128
    %963 = vst [vmem:[%s962] sm:%s3] %v961
    %s964 = scalar_lea.vmem %s0, 30
    %v965 = vld [vmem:[%s964] sm:%s3]
    %s966 = scalar_lea.vmem [#allocation0], 120
    %967 = vst [vmem:[%s966] sm:%s3] %v965
    %s968 = scalar_lea.vmem %s0, 28
    %v969 = vld [vmem:[%s968] sm:%s3]
    %s970 = scalar_lea.vmem [#allocation0], 112
    %971 = vst [vmem:[%s970] sm:%s3] %v969
    %s972 = scalar_lea.vmem %s0, 26
    %v973 = vld [vmem:[%s972] sm:%s3]
    %s974 = scalar_lea.vmem [#allocation0], 104
    %975 = vst [vmem:[%s974] sm:%s3] %v973
    %s976 = scalar_lea.vmem %s0, 24
    %v977 = vld [vmem:[%s976] sm:%s3]
    %s978 = scalar_lea.vmem [#allocation0], 96
    %979 = vst [vmem:[%s978] sm:%s3] %v977
    %s980 = scalar_lea.vmem %s0, 22
    %v981 = vld [vmem:[%s980] sm:%s3]
    %s982 = scalar_lea.vmem [#allocation0], 88
    %983 = vst [vmem:[%s982] sm:%s3] %v981
    %s984 = scalar_lea.vmem %s0, 20
    %v985 = vld [vmem:[%s984] sm:%s3]
    %s986 = scalar_lea.vmem [#allocation0], 80
    %987 = vst [vmem:[%s986] sm:%s3] %v985
    %s988 = scalar_lea.vmem %s0, 18
    %v989 = vld [vmem:[%s988] sm:%s3]
    %s990 = scalar_lea.vmem [#allocation0], 72
    %991 = vst [vmem:[%s990] sm:%s3] %v989
    %s992 = scalar_lea.vmem %s0, 16
    %v993 = vld [vmem:[%s992] sm:%s3]
    %s994 = scalar_lea.vmem [#allocation0], 64
    %995 = vst [vmem:[%s994] sm:%s3] %v993
    %s996 = scalar_lea.vmem %s0, 14
    %v997 = vld [vmem:[%s996] sm:%s3]
    %s998 = scalar_lea.vmem [#allocation0], 56
    %999 = vst [vmem:[%s998] sm:%s3] %v997
    %s1000 = scalar_lea.vmem %s0, 12
    %v1001 = vld [vmem:[%s1000] sm:%s3]
    %s1002 = scalar_lea.vmem [#allocation0], 48
    %1003 = vst [vmem:[%s1002] sm:%s3] %v1001
    %s1004 = scalar_lea.vmem %s0, 10
    %v1005 = vld [vmem:[%s1004] sm:%s3]
    %s1006 = scalar_lea.vmem [#allocation0], 40
    %1007 = vst [vmem:[%s1006] sm:%s3] %v1005
    %s1008 = scalar_lea.vmem %s0, 8
    %v1009 = vld [vmem:[%s1008] sm:%s3]
    %s1010 = scalar_lea.vmem [#allocation0], 32
    %1011 = vst [vmem:[%s1010] sm:%s3] %v1009
    %s1012 = scalar_lea.vmem %s0, 6
    %v1013 = vld [vmem:[%s1012] sm:%s3]
    %s1014 = scalar_lea.vmem [#allocation0], 24
    %1015 = vst [vmem:[%s1014] sm:%s3] %v1013
    %s1016 = scalar_lea.vmem %s0, 4
    %v1017 = vld [vmem:[%s1016] sm:%s3]
    %s1018 = scalar_lea.vmem [#allocation0], 16
    %1019 = vst [vmem:[%s1018] sm:%s3] %v1017
    %s1020 = scalar_lea.vmem %s0, 2
    %v1021 = vld [vmem:[%s1020] sm:%s3]
    %s1022 = scalar_lea.vmem [#allocation0], 8
    %1023 = vst [vmem:[%s1022] sm:%s3] %v1021
    %v1024 = vld [vmem:[%s0] sm:%s3]
    %1025 = vst [vmem:[#allocation0] sm:%s3] %v1024
    %v1026 = vld [vmem:[#allocation0] ss:$8 sm:$0xf]
    %v1027 = vld [vmem:[#allocation0] ss:$8 sm:$0xf0]
    %vm1028 = vcmask 1047556
    %v1029 = vsel %vm1028, %v1027, %v1026
    %vm1030 = vcmask 523264
    %1031 = vst.msk [vmem:[%s1] sm:$0xff] %vm1030, %v1029
    %s1032 = scalar_lea.vmem [#allocation0], 64
    %v1033 = vld [vmem:[%s1032] ss:$8 sm:$0xf]
    %s1034 = scalar_lea.vmem [#allocation0], 64
    %v1035 = vld [vmem:[%s1034] ss:$8 sm:$0xf0]
    %vm1036 = vcmask 1047556
    %v1037 = vsel %vm1036, %v1035, %v1033
    %vm1038 = vcmask 523264
    %s1039 = scalar_lea.vmem %s1, 8
    %1040 = vst.msk [vmem:[%s1039] sm:$0xff] %vm1038, %v1037
    %s1041 = scalar_lea.vmem [#allocation0], 128
    %v1042 = vld [vmem:[%s1041] ss:$8 sm:$0xf]
    %s1043 = scalar_lea.vmem [#allocation0], 128
    %v1044 = vld [vmem:[%s1043] ss:$8 sm:$0xf0]
    %vm1045 = vcmask 1047556
    %v1046 = vsel %vm1045, %v1044, %v1042
    %vm1047 = vcmask 523264
    %s1048 = scalar_lea.vmem %s1, 16
    %1049 = vst.msk [vmem:[%s1048] sm:$0xff] %vm1047, %v1046
    %s1050 = scalar_lea.vmem [#allocation0], 192
    %v1051 = vld [vmem:[%s1050] ss:$8 sm:$0xf]
    %s1052 = scalar_lea.vmem [#allocation0], 192
    %v1053 = vld [vmem:[%s1052] ss:$8 sm:$0xf0]
    %vm1054 = vcmask 1047556
    %v1055 = vsel %vm1054, %v1053, %v1051
    %vm1056 = vcmask 523264
    %s1057 = scalar_lea.vmem %s1, 24
    %1058 = vst.msk [vmem:[%s1057] sm:$0xff] %vm1056, %v1055
    %s1059 = scalar_lea.vmem [#allocation0], 256
    %v1060 = vld [vmem:[%s1059] ss:$8 sm:$0xf]
    %s1061 = scalar_lea.vmem [#allocation0], 256
    %v1062 = vld [vmem:[%s1061] ss:$8 sm:$0xf0]
    %vm1063 = vcmask 1047556
    %v1064 = vsel %vm1063, %v1062, %v1060
    %vm1065 = vcmask 523264
    %s1066 = scalar_lea.vmem %s1, 32
    %1067 = vst.msk [vmem:[%s1066] sm:$0xff] %vm1065, %v1064
    %s1068 = scalar_lea.vmem [#allocation0], 320
    %v1069 = vld [vmem:[%s1068] ss:$8 sm:$0xf]
    %s1070 = scalar_lea.vmem [#allocation0], 320
    %v1071 = vld [vmem:[%s1070] ss:$8 sm:$0xf0]
    %vm1072 = vcmask 1047556
    %v1073 = vsel %vm1072, %v1071, %v1069
    %vm1074 = vcmask 523264
    %s1075 = scalar_lea.vmem %s1, 40
    %1076 = vst.msk [vmem:[%s1075] sm:$0xff] %vm1074, %v1073
    %s1077 = scalar_lea.vmem [#allocation0], 384
    %v1078 = vld [vmem:[%s1077] ss:$8 sm:$0xf]
    %s1079 = scalar_lea.vmem [#allocation0], 384
    %v1080 = vld [vmem:[%s1079] ss:$8 sm:$0xf0]
    %vm1081 = vcmask 1047556
    %v1082 = vsel %vm1081, %v1080, %v1078
    %vm1083 = vcmask 523264
    %s1084 = scalar_lea.vmem %s1, 48
    %1085 = vst.msk [vmem:[%s1084] sm:$0xff] %vm1083, %v1082
    %s1086 = scalar_lea.vmem [#allocation0], 448
    %v1087 = vld [vmem:[%s1086] ss:$8 sm:$0xf]
    %s1088 = scalar_lea.vmem [#allocation0], 448
    %v1089 = vld [vmem:[%s1088] ss:$8 sm:$0xf0]
    %vm1090 = vcmask 1047556
    %v1091 = vsel %vm1090, %v1089, %v1087
    %vm1092 = vcmask 523264
    %s1093 = scalar_lea.vmem %s1, 56
    %1094 = vst.msk [vmem:[%s1093] sm:$0xff] %vm1092, %v1091
    %s1095 = scalar_lea.vmem [#allocation0], 512
    %v1096 = vld [vmem:[%s1095] ss:$8 sm:$0xf]
    %s1097 = scalar_lea.vmem [#allocation0], 512
    %v1098 = vld [vmem:[%s1097] ss:$8 sm:$0xf0]
    %vm1099 = vcmask 1047556
    %v1100 = vsel %vm1099, %v1098, %v1096
    %vm1101 = vcmask 523264
    %s1102 = scalar_lea.vmem %s1, 64
    %1103 = vst.msk [vmem:[%s1102] sm:$0xff] %vm1101, %v1100
    %s1104 = scalar_lea.vmem [#allocation0], 576
    %v1105 = vld [vmem:[%s1104] ss:$8 sm:$0xf]
    %s1106 = scalar_lea.vmem [#allocation0], 576
    %v1107 = vld [vmem:[%s1106] ss:$8 sm:$0xf0]
    %vm1108 = vcmask 1047556
    %v1109 = vsel %vm1108, %v1107, %v1105
    %vm1110 = vcmask 523264
    %s1111 = scalar_lea.vmem %s1, 72
    %1112 = vst.msk [vmem:[%s1111] sm:$0xff] %vm1110, %v1109
    %s1113 = scalar_lea.vmem [#allocation0], 640
    %v1114 = vld [vmem:[%s1113] ss:$8 sm:$0xf]
    %s1115 = scalar_lea.vmem [#allocation0], 640
    %v1116 = vld [vmem:[%s1115] ss:$8 sm:$0xf0]
    %vm1117 = vcmask 1047556
    %v1118 = vsel %vm1117, %v1116, %v1114
    %vm1119 = vcmask 523264
    %s1120 = scalar_lea.vmem %s1, 80
    %1121 = vst.msk [vmem:[%s1120] sm:$0xff] %vm1119, %v1118
    %s1122 = scalar_lea.vmem [#allocation0], 704
    %v1123 = vld [vmem:[%s1122] ss:$8 sm:$0xf]
    %s1124 = scalar_lea.vmem [#allocation0], 704
    %v1125 = vld [vmem:[%s1124] ss:$8 sm:$0xf0]
    %vm1126 = vcmask 1047556
    %v1127 = vsel %vm1126, %v1125, %v1123
    %vm1128 = vcmask 523264
    %s1129 = scalar_lea.vmem %s1, 88
    %1130 = vst.msk [vmem:[%s1129] sm:$0xff] %vm1128, %v1127
    %s1131 = scalar_lea.vmem [#allocation0], 768
    %v1132 = vld [vmem:[%s1131] ss:$8 sm:$0xf]
    %s1133 = scalar_lea.vmem [#allocation0], 768
    %v1134 = vld [vmem:[%s1133] ss:$8 sm:$0xf0]
    %vm1135 = vcmask 1047556
    %v1136 = vsel %vm1135, %v1134, %v1132
    %vm1137 = vcmask 523264
    %s1138 = scalar_lea.vmem %s1, 96
    %1139 = vst.msk [vmem:[%s1138] sm:$0xff] %vm1137, %v1136
    %s1140 = scalar_lea.vmem [#allocation0], 832
    %v1141 = vld [vmem:[%s1140] ss:$8 sm:$0xf]
    %s1142 = scalar_lea.vmem [#allocation0], 832
    %v1143 = vld [vmem:[%s1142] ss:$8 sm:$0xf0]
    %vm1144 = vcmask 1047556
    %v1145 = vsel %vm1144, %v1143, %v1141
    %vm1146 = vcmask 523264
    %s1147 = scalar_lea.vmem %s1, 104
    %1148 = vst.msk [vmem:[%s1147] sm:$0xff] %vm1146, %v1145
    %s1149 = scalar_lea.vmem [#allocation0], 896
    %v1150 = vld [vmem:[%s1149] ss:$8 sm:$0xf]
    %s1151 = scalar_lea.vmem [#allocation0], 896
    %v1152 = vld [vmem:[%s1151] ss:$8 sm:$0xf0]
    %vm1153 = vcmask 1047556
    %v1154 = vsel %vm1153, %v1152, %v1150
    %vm1155 = vcmask 523264
    %s1156 = scalar_lea.vmem %s1, 112
    %1157 = vst.msk [vmem:[%s1156] sm:$0xff] %vm1155, %v1154
    %s1158 = scalar_lea.vmem [#allocation0], 960
    %v1159 = vld [vmem:[%s1158] ss:$8 sm:$0xf]
    %s1160 = scalar_lea.vmem [#allocation0], 960
    %v1161 = vld [vmem:[%s1160] ss:$8 sm:$0xf0]
    %vm1162 = vcmask 1047556
    %v1163 = vsel %vm1162, %v1161, %v1159
    %vm1164 = vcmask 523264
    %s1165 = scalar_lea.vmem %s1, 120
    %1166 = vst.msk [vmem:[%s1165] sm:$0xff] %vm1164, %v1163
    %s1167 = scalar_lea.vmem [#allocation0], 1024
    %v1168 = vld [vmem:[%s1167] ss:$8 sm:$0xf]
    %s1169 = scalar_lea.vmem [#allocation0], 1024
    %v1170 = vld [vmem:[%s1169] ss:$8 sm:$0xf0]
    %vm1171 = vcmask 1047556
    %v1172 = vsel %vm1171, %v1170, %v1168
    %vm1173 = vcmask 523264
    %s1174 = scalar_lea.vmem %s1, 128
    %1175 = vst.msk [vmem:[%s1174] sm:$0xff] %vm1173, %v1172
    %s1176 = scalar_lea.vmem [#allocation0], 1088
    %v1177 = vld [vmem:[%s1176] ss:$8 sm:$0xf]
    %s1178 = scalar_lea.vmem [#allocation0], 1088
    %v1179 = vld [vmem:[%s1178] ss:$8 sm:$0xf0]
    %vm1180 = vcmask 1047556
    %v1181 = vsel %vm1180, %v1179, %v1177
    %vm1182 = vcmask 523264
    %s1183 = scalar_lea.vmem %s1, 136
    %1184 = vst.msk [vmem:[%s1183] sm:$0xff] %vm1182, %v1181
    %s1185 = scalar_lea.vmem [#allocation0], 1152
    %v1186 = vld [vmem:[%s1185] ss:$8 sm:$0xf]
    %s1187 = scalar_lea.vmem [#allocation0], 1152
    %v1188 = vld [vmem:[%s1187] ss:$8 sm:$0xf0]
    %vm1189 = vcmask 1047556
    %v1190 = vsel %vm1189, %v1188, %v1186
    %vm1191 = vcmask 523264
    %s1192 = scalar_lea.vmem %s1, 144
    %1193 = vst.msk [vmem:[%s1192] sm:$0xff] %vm1191, %v1190
    %s1194 = scalar_lea.vmem [#allocation0], 1216
    %v1195 = vld [vmem:[%s1194] ss:$8 sm:$0xf]
    %s1196 = scalar_lea.vmem [#allocation0], 1216
    %v1197 = vld [vmem:[%s1196] ss:$8 sm:$0xf0]
    %vm1198 = vcmask 1047556
    %v1199 = vsel %vm1198, %v1197, %v1195
    %vm1200 = vcmask 523264
    %s1201 = scalar_lea.vmem %s1, 152
    %1202 = vst.msk [vmem:[%s1201] sm:$0xff] %vm1200, %v1199
    %s1203 = scalar_lea.vmem [#allocation0], 1280
    %v1204 = vld [vmem:[%s1203] ss:$8 sm:$0xf]
    %s1205 = scalar_lea.vmem [#allocation0], 1280
    %v1206 = vld [vmem:[%s1205] ss:$8 sm:$0xf0]
    %vm1207 = vcmask 1047556
    %v1208 = vsel %vm1207, %v1206, %v1204
    %vm1209 = vcmask 523264
    %s1210 = scalar_lea.vmem %s1, 160
    %1211 = vst.msk [vmem:[%s1210] sm:$0xff] %vm1209, %v1208
    %s1212 = scalar_lea.vmem [#allocation0], 1344
    %v1213 = vld [vmem:[%s1212] ss:$8 sm:$0xf]
    %s1214 = scalar_lea.vmem [#allocation0], 1344
    %v1215 = vld [vmem:[%s1214] ss:$8 sm:$0xf0]
    %vm1216 = vcmask 1047556
    %v1217 = vsel %vm1216, %v1215, %v1213
    %vm1218 = vcmask 523264
    %s1219 = scalar_lea.vmem %s1, 168
    %1220 = vst.msk [vmem:[%s1219] sm:$0xff] %vm1218, %v1217
    %s1221 = scalar_lea.vmem [#allocation0], 1408
    %v1222 = vld [vmem:[%s1221] ss:$8 sm:$0xf]
    %s1223 = scalar_lea.vmem [#allocation0], 1408
    %v1224 = vld [vmem:[%s1223] ss:$8 sm:$0xf0]
    %vm1225 = vcmask 1047556
    %v1226 = vsel %vm1225, %v1224, %v1222
    %vm1227 = vcmask 523264
    %s1228 = scalar_lea.vmem %s1, 176
    %1229 = vst.msk [vmem:[%s1228] sm:$0xff] %vm1227, %v1226
    %s1230 = scalar_lea.vmem [#allocation0], 1472
    %v1231 = vld [vmem:[%s1230] ss:$8 sm:$0xf]
    %s1232 = scalar_lea.vmem [#allocation0], 1472
    %v1233 = vld [vmem:[%s1232] ss:$8 sm:$0xf0]
    %vm1234 = vcmask 1047556
    %v1235 = vsel %vm1234, %v1233, %v1231
    %vm1236 = vcmask 523264
    %s1237 = scalar_lea.vmem %s1, 184
    %1238 = vst.msk [vmem:[%s1237] sm:$0xff] %vm1236, %v1235
    %s1239 = scalar_lea.vmem [#allocation0], 1536
    %v1240 = vld [vmem:[%s1239] ss:$8 sm:$0xf]
    %s1241 = scalar_lea.vmem [#allocation0], 1536
    %v1242 = vld [vmem:[%s1241] ss:$8 sm:$0xf0]
    %vm1243 = vcmask 1047556
    %v1244 = vsel %vm1243, %v1242, %v1240
    %vm1245 = vcmask 523264
    %s1246 = scalar_lea.vmem %s1, 192
    %1247 = vst.msk [vmem:[%s1246] sm:$0xff] %vm1245, %v1244
    %s1248 = scalar_lea.vmem [#allocation0], 1600
    %v1249 = vld [vmem:[%s1248] ss:$8 sm:$0xf]
    %s1250 = scalar_lea.vmem [#allocation0], 1600
    %v1251 = vld [vmem:[%s1250] ss:$8 sm:$0xf0]
    %vm1252 = vcmask 1047556
    %v1253 = vsel %vm1252, %v1251, %v1249
    %vm1254 = vcmask 523264
    %s1255 = scalar_lea.vmem %s1, 200
    %1256 = vst.msk [vmem:[%s1255] sm:$0xff] %vm1254, %v1253
    %s1257 = scalar_lea.vmem [#allocation0], 1664
    %v1258 = vld [vmem:[%s1257] ss:$8 sm:$0xf]
    %s1259 = scalar_lea.vmem [#allocation0], 1664
    %v1260 = vld [vmem:[%s1259] ss:$8 sm:$0xf0]
    %vm1261 = vcmask 1047556
    %v1262 = vsel %vm1261, %v1260, %v1258
    %vm1263 = vcmask 523264
    %s1264 = scalar_lea.vmem %s1, 208
    %1265 = vst.msk [vmem:[%s1264] sm:$0xff] %vm1263, %v1262
    %s1266 = scalar_lea.vmem [#allocation0], 1728
    %v1267 = vld [vmem:[%s1266] ss:$8 sm:$0xf]
    %s1268 = scalar_lea.vmem [#allocation0], 1728
    %v1269 = vld [vmem:[%s1268] ss:$8 sm:$0xf0]
    %vm1270 = vcmask 1047556
    %v1271 = vsel %vm1270, %v1269, %v1267
    %vm1272 = vcmask 523264
    %s1273 = scalar_lea.vmem %s1, 216
    %1274 = vst.msk [vmem:[%s1273] sm:$0xff] %vm1272, %v1271
    %s1275 = scalar_lea.vmem [#allocation0], 1792
    %v1276 = vld [vmem:[%s1275] ss:$8 sm:$0xf]
    %s1277 = scalar_lea.vmem [#allocation0], 1792
    %v1278 = vld [vmem:[%s1277] ss:$8 sm:$0xf0]
    %vm1279 = vcmask 1047556
    %v1280 = vsel %vm1279, %v1278, %v1276
    %vm1281 = vcmask 523264
    %s1282 = scalar_lea.vmem %s1, 224
    %1283 = vst.msk [vmem:[%s1282] sm:$0xff] %vm1281, %v1280
    %s1284 = scalar_lea.vmem [#allocation0], 1856
    %v1285 = vld [vmem:[%s1284] ss:$8 sm:$0xf]
    %s1286 = scalar_lea.vmem [#allocation0], 1856
    %v1287 = vld [vmem:[%s1286] ss:$8 sm:$0xf0]
    %vm1288 = vcmask 1047556
    %v1289 = vsel %vm1288, %v1287, %v1285
    %vm1290 = vcmask 523264
    %s1291 = scalar_lea.vmem %s1, 232
    %1292 = vst.msk [vmem:[%s1291] sm:$0xff] %vm1290, %v1289
    %s1293 = scalar_lea.vmem [#allocation0], 1920
    %v1294 = vld [vmem:[%s1293] ss:$8 sm:$0xf]
    %s1295 = scalar_lea.vmem [#allocation0], 1920
    %v1296 = vld [vmem:[%s1295] ss:$8 sm:$0xf0]
    %vm1297 = vcmask 1047556
    %v1298 = vsel %vm1297, %v1296, %v1294
    %vm1299 = vcmask 523264
    %s1300 = scalar_lea.vmem %s1, 240
    %1301 = vst.msk [vmem:[%s1300] sm:$0xff] %vm1299, %v1298
    %s1302 = scalar_lea.vmem [#allocation0], 1984
    %v1303 = vld [vmem:[%s1302] ss:$8 sm:$0xf]
    %s1304 = scalar_lea.vmem [#allocation0], 1984
    %v1305 = vld [vmem:[%s1304] ss:$8 sm:$0xf0]
    %vm1306 = vcmask 1047556
    %v1307 = vsel %vm1306, %v1305, %v1303
    %vm1308 = vcmask 523264
    %s1309 = scalar_lea.vmem %s1, 248
    %1310 = vst.msk [vmem:[%s1309] sm:$0xff] %vm1308, %v1307
    %s1311 = scalar_lea.vmem [#allocation0], 1
    %v1312 = vld [vmem:[%s1311] ss:$8 sm:$0xf]
    %s1313 = scalar_lea.vmem [#allocation0], 1
    %v1314 = vld [vmem:[%s1313] ss:$8 sm:$0xf0]
    %vm1315 = vcmask 1047556
    %v1316 = vsel %vm1315, %v1314, %v1312
    %1317 = vrot.lane.b32.xlu0 %v1316, 64
    %v1318 = vpop.permute.xlu0 %1317
    %vm1319 = vcmask 1048064
    %1320 = vst.msk [vmem:[%s1] sm:$0xff] %vm1319, %v1318
    %s1321 = scalar_lea.vmem [#allocation0], 257
    %v1322 = vld [vmem:[%s1321] ss:$8 sm:$0xf]
    %s1323 = scalar_lea.vmem [#allocation0], 257
    %v1324 = vld [vmem:[%s1323] ss:$8 sm:$0xf0]
    %vm1325 = vcmask 1047556
    %v1326 = vsel %vm1325, %v1324, %v1322
    %1327 = vrot.lane.b32.xlu0 %v1326, 64
    %v1328 = vpop.permute.xlu0 %1327
    %vm1329 = vcmask 1048064
    %s1330 = scalar_lea.vmem %s1, 32
    %1331 = vst.msk [vmem:[%s1330] sm:$0xff] %vm1329, %v1328
    %s1332 = scalar_lea.vmem [#allocation0], 513
    %v1333 = vld [vmem:[%s1332] ss:$8 sm:$0xf]
    %s1334 = scalar_lea.vmem [#allocation0], 513
    %v1335 = vld [vmem:[%s1334] ss:$8 sm:$0xf0]
    %vm1336 = vcmask 1047556
    %v1337 = vsel %vm1336, %v1335, %v1333
    %1338 = vrot.lane.b32.xlu0 %v1337, 64
    %v1339 = vpop.permute.xlu0 %1338
    %vm1340 = vcmask 1048064
    %s1341 = scalar_lea.vmem %s1, 64
    %1342 = vst.msk [vmem:[%s1341] sm:$0xff] %vm1340, %v1339
    %s1343 = scalar_lea.vmem [#allocation0], 769
    %v1344 = vld [vmem:[%s1343] ss:$8 sm:$0xf]
    %s1345 = scalar_lea.vmem [#allocation0], 769
    %v1346 = vld [vmem:[%s1345] ss:$8 sm:$0xf0]
    %vm1347 = vcmask 1047556
    %v1348 = vsel %vm1347, %v1346, %v1344
    %1349 = vrot.lane.b32.xlu0 %v1348, 64
    %v1350 = vpop.permute.xlu0 %1349
    %vm1351 = vcmask 1048064
    %s1352 = scalar_lea.vmem %s1, 96
    %1353 = vst.msk [vmem:[%s1352] sm:$0xff] %vm1351, %v1350
    %s1354 = scalar_lea.vmem [#allocation0], 1025
    %v1355 = vld [vmem:[%s1354] ss:$8 sm:$0xf]
    %s1356 = scalar_lea.vmem [#allocation0], 1025
    %v1357 = vld [vmem:[%s1356] ss:$8 sm:$0xf0]
    %vm1358 = vcmask 1047556
    %v1359 = vsel %vm1358, %v1357, %v1355
    %1360 = vrot.lane.b32.xlu0 %v1359, 64
    %v1361 = vpop.permute.xlu0 %1360
    %vm1362 = vcmask 1048064
    %s1363 = scalar_lea.vmem %s1, 128
    %1364 = vst.msk [vmem:[%s1363] sm:$0xff] %vm1362, %v1361
    %s1365 = scalar_lea.vmem [#allocation0], 1281
    %v1366 = vld [vmem:[%s1365] ss:$8 sm:$0xf]
    %s1367 = scalar_lea.vmem [#allocation0], 1281
    %v1368 = vld [vmem:[%s1367] ss:$8 sm:$0xf0]
    %vm1369 = vcmask 1047556
    %v1370 = vsel %vm1369, %v1368, %v1366
    %1371 = vrot.lane.b32.xlu0 %v1370, 64
    %v1372 = vpop.permute.xlu0 %1371
    %vm1373 = vcmask 1048064
    %s1374 = scalar_lea.vmem %s1, 160
    %1375 = vst.msk [vmem:[%s1374] sm:$0xff] %vm1373, %v1372
    %s1376 = scalar_lea.vmem [#allocation0], 1537
    %v1377 = vld [vmem:[%s1376] ss:$8 sm:$0xf]
    %s1378 = scalar_lea.vmem [#allocation0], 1537
    %v1379 = vld [vmem:[%s1378] ss:$8 sm:$0xf0]
    %vm1380 = vcmask 1047556
    %v1381 = vsel %vm1380, %v1379, %v1377
    %1382 = vrot.lane.b32.xlu0 %v1381, 64
    %v1383 = vpop.permute.xlu0 %1382
    %vm1384 = vcmask 1048064
    %s1385 = scalar_lea.vmem %s1, 192
    %1386 = vst.msk [vmem:[%s1385] sm:$0xff] %vm1384, %v1383
    %s1387 = scalar_lea.vmem [#allocation0], 1793
    %v1388 = vld [vmem:[%s1387] ss:$8 sm:$0xf]
    %s1389 = scalar_lea.vmem [#allocation0], 1793
    %v1390 = vld [vmem:[%s1389] ss:$8 sm:$0xf0]
    %vm1391 = vcmask 1047556
    %v1392 = vsel %vm1391, %v1390, %v1388
    %1393 = vrot.lane.b32.xlu0 %v1392, 64
    %v1394 = vpop.permute.xlu0 %1393
    %vm1395 = vcmask 1048064
    %s1396 = scalar_lea.vmem %s1, 224
    %1397 = vst.msk [vmem:[%s1396] sm:$0xff] %vm1395, %v1394
    %s1398 = scalar_lea.vmem [#allocation0], 65
    %v1399 = vld [vmem:[%s1398] ss:$8 sm:$0xf]
    %s1400 = scalar_lea.vmem [#allocation0], 65
    %v1401 = vld [vmem:[%s1400] ss:$8 sm:$0xf0]
    %vm1402 = vcmask 1047556
    %v1403 = vsel %vm1402, %v1401, %v1399
    %1404 = vrot.lane.b32.xlu0 %v1403, 64
    %v1405 = vpop.permute.xlu0 %1404
    %vm1406 = vcmask 1048064
    %s1407 = scalar_lea.vmem %s1, 8
    %1408 = vst.msk [vmem:[%s1407] sm:$0xff] %vm1406, %v1405
    %s1409 = scalar_lea.vmem [#allocation0], 321
    %v1410 = vld [vmem:[%s1409] ss:$8 sm:$0xf]
    %s1411 = scalar_lea.vmem [#allocation0], 321
    %v1412 = vld [vmem:[%s1411] ss:$8 sm:$0xf0]
    %vm1413 = vcmask 1047556
    %v1414 = vsel %vm1413, %v1412, %v1410
    %1415 = vrot.lane.b32.xlu0 %v1414, 64
    %v1416 = vpop.permute.xlu0 %1415
    %vm1417 = vcmask 1048064
    %s1418 = scalar_lea.vmem %s1, 40
    %1419 = vst.msk [vmem:[%s1418] sm:$0xff] %vm1417, %v1416
    %s1420 = scalar_lea.vmem [#allocation0], 577
    %v1421 = vld [vmem:[%s1420] ss:$8 sm:$0xf]
    %s1422 = scalar_lea.vmem [#allocation0], 577
    %v1423 = vld [vmem:[%s1422] ss:$8 sm:$0xf0]
    %vm1424 = vcmask 1047556
    %v1425 = vsel %vm1424, %v1423, %v1421
    %1426 = vrot.lane.b32.xlu0 %v1425, 64
    %v1427 = vpop.permute.xlu0 %1426
    %vm1428 = vcmask 1048064
    %s1429 = scalar_lea.vmem %s1, 72
    %1430 = vst.msk [vmem:[%s1429] sm:$0xff] %vm1428, %v1427
    %s1431 = scalar_lea.vmem [#allocation0], 833
    %v1432 = vld [vmem:[%s1431] ss:$8 sm:$0xf]
    %s1433 = scalar_lea.vmem [#allocation0], 833
    %v1434 = vld [vmem:[%s1433] ss:$8 sm:$0xf0]
    %vm1435 = vcmask 1047556
    %v1436 = vsel %vm1435, %v1434, %v1432
    %1437 = vrot.lane.b32.xlu0 %v1436, 64
    %v1438 = vpop.permute.xlu0 %1437
    %vm1439 = vcmask 1048064
    %s1440 = scalar_lea.vmem %s1, 104
    %1441 = vst.msk [vmem:[%s1440] sm:$0xff] %vm1439, %v1438
    %s1442 = scalar_lea.vmem [#allocation0], 1089
    %v1443 = vld [vmem:[%s1442] ss:$8 sm:$0xf]
    %s1444 = scalar_lea.vmem [#allocation0], 1089
    %v1445 = vld [vmem:[%s1444] ss:$8 sm:$0xf0]
    %vm1446 = vcmask 1047556
    %v1447 = vsel %vm1446, %v1445, %v1443
    %1448 = vrot.lane.b32.xlu0 %v1447, 64
    %v1449 = vpop.permute.xlu0 %1448
    %vm1450 = vcmask 1048064
    %s1451 = scalar_lea.vmem %s1, 136
    %1452 = vst.msk [vmem:[%s1451] sm:$0xff] %vm1450, %v1449
    %s1453 = scalar_lea.vmem [#allocation0], 1345
    %v1454 = vld [vmem:[%s1453] ss:$8 sm:$0xf]
    %s1455 = scalar_lea.vmem [#allocation0], 1345
    %v1456 = vld [vmem:[%s1455] ss:$8 sm:$0xf0]
    %vm1457 = vcmask 1047556
    %v1458 = vsel %vm1457, %v1456, %v1454
    %1459 = vrot.lane.b32.xlu0 %v1458, 64
    %v1460 = vpop.permute.xlu0 %1459
    %vm1461 = vcmask 1048064
    %s1462 = scalar_lea.vmem %s1, 168
    %1463 = vst.msk [vmem:[%s1462] sm:$0xff] %vm1461, %v1460
    %s1464 = scalar_lea.vmem [#allocation0], 1601
    %v1465 = vld [vmem:[%s1464] ss:$8 sm:$0xf]
    %s1466 = scalar_lea.vmem [#allocation0], 1601
    %v1467 = vld [vmem:[%s1466] ss:$8 sm:$0xf0]
    %vm1468 = vcmask 1047556
    %v1469 = vsel %vm1468, %v1467, %v1465
    %1470 = vrot.lane.b32.xlu0 %v1469, 64
    %v1471 = vpop.permute.xlu0 %1470
    %vm1472 = vcmask 1048064
    %s1473 = scalar_lea.vmem %s1, 200
    %1474 = vst.msk [vmem:[%s1473] sm:$0xff] %vm1472, %v1471
    %s1475 = scalar_lea.vmem [#allocation0], 1857
    %v1476 = vld [vmem:[%s1475] ss:$8 sm:$0xf]
    %s1477 = scalar_lea.vmem [#allocation0], 1857
    %v1478 = vld [vmem:[%s1477] ss:$8 sm:$0xf0]
    %vm1479 = vcmask 1047556
    %v1480 = vsel %vm1479, %v1478, %v1476
    %1481 = vrot.lane.b32.xlu0 %v1480, 64
    %v1482 = vpop.permute.xlu0 %1481
    %vm1483 = vcmask 1048064
    %s1484 = scalar_lea.vmem %s1, 232
    %1485 = vst.msk [vmem:[%s1484] sm:$0xff] %vm1483, %v1482
    %s1486 = scalar_lea.vmem [#allocation0], 129
    %v1487 = vld [vmem:[%s1486] ss:$8 sm:$0xf]
    %s1488 = scalar_lea.vmem [#allocation0], 129
    %v1489 = vld [vmem:[%s1488] ss:$8 sm:$0xf0]
    %vm1490 = vcmask 1047556
    %v1491 = vsel %vm1490, %v1489, %v1487
    %1492 = vrot.lane.b32.xlu0 %v1491, 64
    %v1493 = vpop.permute.xlu0 %1492
    %vm1494 = vcmask 1048064
    %s1495 = scalar_lea.vmem %s1, 16
    %1496 = vst.msk [vmem:[%s1495] sm:$0xff] %vm1494, %v1493
    %s1497 = scalar_lea.vmem [#allocation0], 385
    %v1498 = vld [vmem:[%s1497] ss:$8 sm:$0xf]
    %s1499 = scalar_lea.vmem [#allocation0], 385
    %v1500 = vld [vmem:[%s1499] ss:$8 sm:$0xf0]
    %vm1501 = vcmask 1047556
    %v1502 = vsel %vm1501, %v1500, %v1498
    %1503 = vrot.lane.b32.xlu0 %v1502, 64
    %v1504 = vpop.permute.xlu0 %1503
    %vm1505 = vcmask 1048064
    %s1506 = scalar_lea.vmem %s1, 48
    %1507 = vst.msk [vmem:[%s1506] sm:$0xff] %vm1505, %v1504
    %s1508 = scalar_lea.vmem [#allocation0], 641
    %v1509 = vld [vmem:[%s1508] ss:$8 sm:$0xf]
    %s1510 = scalar_lea.vmem [#allocation0], 641
    %v1511 = vld [vmem:[%s1510] ss:$8 sm:$0xf0]
    %vm1512 = vcmask 1047556
    %v1513 = vsel %vm1512, %v1511, %v1509
    %1514 = vrot.lane.b32.xlu0 %v1513, 64
    %v1515 = vpop.permute.xlu0 %1514
    %vm1516 = vcmask 1048064
    %s1517 = scalar_lea.vmem %s1, 80
    %1518 = vst.msk [vmem:[%s1517] sm:$0xff] %vm1516, %v1515
    %s1519 = scalar_lea.vmem [#allocation0], 897
    %v1520 = vld [vmem:[%s1519] ss:$8 sm:$0xf]
    %s1521 = scalar_lea.vmem [#allocation0], 897
    %v1522 = vld [vmem:[%s1521] ss:$8 sm:$0xf0]
    %vm1523 = vcmask 1047556
    %v1524 = vsel %vm1523, %v1522, %v1520
    %1525 = vrot.lane.b32.xlu0 %v1524, 64
    %v1526 = vpop.permute.xlu0 %1525
    %vm1527 = vcmask 1048064
    %s1528 = scalar_lea.vmem %s1, 112
    %1529 = vst.msk [vmem:[%s1528] sm:$0xff] %vm1527, %v1526
    %s1530 = scalar_lea.vmem [#allocation0], 1153
    %v1531 = vld [vmem:[%s1530] ss:$8 sm:$0xf]
    %s1532 = scalar_lea.vmem [#allocation0], 1153
    %v1533 = vld [vmem:[%s1532] ss:$8 sm:$0xf0]
    %vm1534 = vcmask 1047556
    %v1535 = vsel %vm1534, %v1533, %v1531
    %1536 = vrot.lane.b32.xlu0 %v1535, 64
    %v1537 = vpop.permute.xlu0 %1536
    %vm1538 = vcmask 1048064
    %s1539 = scalar_lea.vmem %s1, 144
    %1540 = vst.msk [vmem:[%s1539] sm:$0xff] %vm1538, %v1537
    %s1541 = scalar_lea.vmem [#allocation0], 1409
    %v1542 = vld [vmem:[%s1541] ss:$8 sm:$0xf]
    %s1543 = scalar_lea.vmem [#allocation0], 1409
    %v1544 = vld [vmem:[%s1543] ss:$8 sm:$0xf0]
    %vm1545 = vcmask 1047556
    %v1546 = vsel %vm1545, %v1544, %v1542
    %1547 = vrot.lane.b32.xlu0 %v1546, 64
    %v1548 = vpop.permute.xlu0 %1547
    %vm1549 = vcmask 1048064
    %s1550 = scalar_lea.vmem %s1, 176
    %1551 = vst.msk [vmem:[%s1550] sm:$0xff] %vm1549, %v1548
    %s1552 = scalar_lea.vmem [#allocation0], 1665
    %v1553 = vld [vmem:[%s1552] ss:$8 sm:$0xf]
    %s1554 = scalar_lea.vmem [#allocation0], 1665
    %v1555 = vld [vmem:[%s1554] ss:$8 sm:$0xf0]
    %vm1556 = vcmask 1047556
    %v1557 = vsel %vm1556, %v1555, %v1553
    %1558 = vrot.lane.b32.xlu0 %v1557, 64
    %v1559 = vpop.permute.xlu0 %1558
    %vm1560 = vcmask 1048064
    %s1561 = scalar_lea.vmem %s1, 208
    %1562 = vst.msk [vmem:[%s1561] sm:$0xff] %vm1560, %v1559
    %s1563 = scalar_lea.vmem [#allocation0], 1921
    %v1564 = vld [vmem:[%s1563] ss:$8 sm:$0xf]
    %s1565 = scalar_lea.vmem [#allocation0], 1921
    %v1566 = vld [vmem:[%s1565] ss:$8 sm:$0xf0]
    %vm1567 = vcmask 1047556
    %v1568 = vsel %vm1567, %v1566, %v1564
    %1569 = vrot.lane.b32.xlu0 %v1568, 64
    %v1570 = vpop.permute.xlu0 %1569
    %vm1571 = vcmask 1048064
    %s1572 = scalar_lea.vmem %s1, 240
    %1573 = vst.msk [vmem:[%s1572] sm:$0xff] %vm1571, %v1570
    %s1574 = scalar_lea.vmem [#allocation0], 193
    %v1575 = vld [vmem:[%s1574] ss:$8 sm:$0xf]
    %s1576 = scalar_lea.vmem [#allocation0], 193
    %v1577 = vld [vmem:[%s1576] ss:$8 sm:$0xf0]
    %vm1578 = vcmask 1047556
    %v1579 = vsel %vm1578, %v1577, %v1575
    %1580 = vrot.lane.b32.xlu0 %v1579, 64
    %v1581 = vpop.permute.xlu0 %1580
    %vm1582 = vcmask 1048064
    %s1583 = scalar_lea.vmem %s1, 24
    %1584 = vst.msk [vmem:[%s1583] sm:$0xff] %vm1582, %v1581
    %s1585 = scalar_lea.vmem [#allocation0], 449
    %v1586 = vld [vmem:[%s1585] ss:$8 sm:$0xf]
    %s1587 = scalar_lea.vmem [#allocation0], 449
    %v1588 = vld [vmem:[%s1587] ss:$8 sm:$0xf0]
    %vm1589 = vcmask 1047556
    %v1590 = vsel %vm1589, %v1588, %v1586
    %1591 = vrot.lane.b32.xlu0 %v1590, 64
    %v1592 = vpop.permute.xlu0 %1591
    %vm1593 = vcmask 1048064
    %s1594 = scalar_lea.vmem %s1, 56
    %1595 = vst.msk [vmem:[%s1594] sm:$0xff] %vm1593, %v1592
    %s1596 = scalar_lea.vmem [#allocation0], 705
    %v1597 = vld [vmem:[%s1596] ss:$8 sm:$0xf]
    %s1598 = scalar_lea.vmem [#allocation0], 705
    %v1599 = vld [vmem:[%s1598] ss:$8 sm:$0xf0]
    %vm1600 = vcmask 1047556
    %v1601 = vsel %vm1600, %v1599, %v1597
    %1602 = vrot.lane.b32.xlu0 %v1601, 64
    %v1603 = vpop.permute.xlu0 %1602
    %vm1604 = vcmask 1048064
    %s1605 = scalar_lea.vmem %s1, 88
    %1606 = vst.msk [vmem:[%s1605] sm:$0xff] %vm1604, %v1603
    %s1607 = scalar_lea.vmem [#allocation0], 961
    %v1608 = vld [vmem:[%s1607] ss:$8 sm:$0xf]
    %s1609 = scalar_lea.vmem [#allocation0], 961
    %v1610 = vld [vmem:[%s1609] ss:$8 sm:$0xf0]
    %vm1611 = vcmask 1047556
    %v1612 = vsel %vm1611, %v1610, %v1608
    %1613 = vrot.lane.b32.xlu0 %v1612, 64
    %v1614 = vpop.permute.xlu0 %1613
    %vm1615 = vcmask 1048064
    %s1616 = scalar_lea.vmem %s1, 120
    %1617 = vst.msk [vmem:[%s1616] sm:$0xff] %vm1615, %v1614
    %s1618 = scalar_lea.vmem [#allocation0], 1217
    %v1619 = vld [vmem:[%s1618] ss:$8 sm:$0xf]
    %s1620 = scalar_lea.vmem [#allocation0], 1217
    %v1621 = vld [vmem:[%s1620] ss:$8 sm:$0xf0]
    %vm1622 = vcmask 1047556
    %v1623 = vsel %vm1622, %v1621, %v1619
    %1624 = vrot.lane.b32.xlu0 %v1623, 64
    %v1625 = vpop.permute.xlu0 %1624
    %vm1626 = vcmask 1048064
    %s1627 = scalar_lea.vmem %s1, 152
    %1628 = vst.msk [vmem:[%s1627] sm:$0xff] %vm1626, %v1625
    %s1629 = scalar_lea.vmem [#allocation0], 1473
    %v1630 = vld [vmem:[%s1629] ss:$8 sm:$0xf]
    %s1631 = scalar_lea.vmem [#allocation0], 1473
    %v1632 = vld [vmem:[%s1631] ss:$8 sm:$0xf0]
    %vm1633 = vcmask 1047556
    %v1634 = vsel %vm1633, %v1632, %v1630
    %1635 = vrot.lane.b32.xlu0 %v1634, 64
    %v1636 = vpop.permute.xlu0 %1635
    %vm1637 = vcmask 1048064
    %s1638 = scalar_lea.vmem %s1, 184
    %1639 = vst.msk [vmem:[%s1638] sm:$0xff] %vm1637, %v1636
    %s1640 = scalar_lea.vmem [#allocation0], 1729
    %v1641 = vld [vmem:[%s1640] ss:$8 sm:$0xf]
    %s1642 = scalar_lea.vmem [#allocation0], 1729
    %v1643 = vld [vmem:[%s1642] ss:$8 sm:$0xf0]
    %vm1644 = vcmask 1047556
    %v1645 = vsel %vm1644, %v1643, %v1641
    %1646 = vrot.lane.b32.xlu0 %v1645, 64
    %v1647 = vpop.permute.xlu0 %1646
    %vm1648 = vcmask 1048064
    %s1649 = scalar_lea.vmem %s1, 216
    %1650 = vst.msk [vmem:[%s1649] sm:$0xff] %vm1648, %v1647
    %s1651 = scalar_lea.vmem [#allocation0], 1985
    %v1652 = vld [vmem:[%s1651] ss:$8 sm:$0xf]
    %s1653 = scalar_lea.vmem [#allocation0], 1985
    %v1654 = vld [vmem:[%s1653] ss:$8 sm:$0xf0]
    %vm1655 = vcmask 1047556
    %v1656 = vsel %vm1655, %v1654, %v1652
    %1657 = vrot.lane.b32.xlu0 %v1656, 64
    %v1658 = vpop.permute.xlu0 %1657
    %vm1659 = vcmask 1048064
    %s1660 = scalar_lea.vmem %s1, 248
    %1661 = vst.msk [vmem:[%s1660] sm:$0xff] %vm1659, %v1658

// kernel: lenet_forward.1
$region0: #{lenet_forward.1}
  #allocation0 [shape = 'u32[]', space=smem, size = 0x4, offset = 0x4, fixed_abs, tag = 'smem constant byte address 0x4 - core index']
  #allocation1 [shape = 'u32[72,128]{1,0:T(1,128)}', space=vmem, size = 0x9000, scoped, tag = 'internal scratch']
  #allocation2 [shape = 'bf16[400,512]{1,0:T(8,128)(2,1)}', space=vmem, size = 0x64000, scoped, tag = 'scratch operand']
  #allocation3 [shape = 'bf16[400,128]{1,0:T(8,128)(2,1)}', space=vmem, size = 0x19000, scoped, tag = 'scratch operand']
  #allocation4 [shape = 'f32[16,128]{1,0:T(8,128)}', space=vmem, size = 0x2000, scoped, tag = 'scratch operand']
  %s0 = inlined_call_operand.vmem [shape: bf16[128,512], index: 0, kind: input, shape index: {}]
  %s1 = inlined_call_operand.vmem [shape: bf16[16,128], index: 1, kind: input, shape index: {}]
  %s2 = inlined_call_operand.vmem [shape: bf16[2,16,400], index: 2, kind: input, shape index: {}]
  %s3 = inlined_call_operand.vmem [shape: f32[25,1,512], index: 3, kind: input, shape index: {}]
  %s4 = inlined_call_operand.vmem [shape: bf16[256,64], index: 4, kind: input, shape index: {}]
  %s5 = inlined_call_operand.vmem [shape: f32[25,1,128], index: 5, kind: input, shape index: {}]
  %s6 = inlined_call_operand.vmem [shape: f32[16,16,128], index: 6, kind: input, shape index: {}]
  %s7 = inlined_call_operand.vmem [shape: bf16[128,128], index: 7, kind: input, shape index: {}]
  %s8 = inlined_call_operand.vmem [shape: f32[16,16], index: 8, kind: input, shape index: {}]
  %s9 = inlined_call_operand.vmem [shape: f32[16,128], index: 9, kind: output, shape index: {}]
  %s10 = sld [smem:[#allocation0]]
  $region46: #{lenet_forward.1} parent=0
    _
  %s12 = ssub.s32 1, %s10
  %s13 = scalar_select 0, %s12, %s10
  // Predicated region
  $region2: #{lenet_forward.1} parent=0 // pred_check
    _
  $region3: #{lenet_forward.1} parent=0 // pred_check_branch
    %15 = sbr.rel (0) target = $region5
  $region4: #{lenet_forward.1} parent=0 // pred_region
    _
  $region5: #{lenet_forward.1} parent=0 // pred_fallthru
    _
  // Predicated region
  $region6: #{lenet_forward.1} parent=0 // pred_check
    _
  $region7: #{lenet_forward.1} parent=0 // pred_check_branch
    %17 = sbr.rel (0) target = $region9
  $region8: #{lenet_forward.1} parent=0 // pred_region
    _
  $region9: #{lenet_forward.1} parent=0 // pred_fallthru
    _
  // Predicated region
  $region10: #{lenet_forward.1} parent=0 // pred_check
    _
  $region11: #{lenet_forward.1} parent=0 // pred_check_branch
    %19 = sbr.rel (0) target = $region13
  $region12: #{lenet_forward.1} parent=0 // pred_region
    _
  $region13: #{lenet_forward.1} parent=0 // pred_fallthru
    _
  // Predicated region
  $region14: #{lenet_forward.1} parent=0 // pred_check
    _
  $region15: #{lenet_forward.1} parent=0 // pred_check_branch
    %21 = sbr.rel (0) target = $region17
  $region16: #{lenet_forward.1} parent=0 // pred_region
    _
  $region17: #{lenet_forward.1} parent=0 // pred_fallthru
    _
  // Predicated region
  $region18: #{lenet_forward.1} parent=0 // pred_check
    _
  $region19: #{lenet_forward.1} parent=0 // pred_check_branch
    %23 = sbr.rel (0) target = $region21
  $region20: #{lenet_forward.1} parent=0 // pred_region
    _
  $region21: #{lenet_forward.1} parent=0 // pred_fallthru
    _
  // Predicated region
  $region22: #{lenet_forward.1} parent=0 // pred_check
    _
  $region23: #{lenet_forward.1} parent=0 // pred_check_branch
    %25 = sbr.rel (0) target = $region25
  $region24: #{lenet_forward.1} parent=0 // pred_region
    _
  $region25: #{lenet_forward.1} parent=0 // pred_fallthru
    _
  // Predicated region
  $region26: #{lenet_forward.1} parent=0 // pred_check
    _
  $region27: #{lenet_forward.1} parent=0 // pred_check_branch
    %27 = sbr.rel (0) target = $region29
  $region28: #{lenet_forward.1} parent=0 // pred_region
    _
  $region29: #{lenet_forward.1} parent=0 // pred_fallthru
    _
  // Predicated region
  $region30: #{lenet_forward.1} parent=0 // pred_check
    _
  $region31: #{lenet_forward.1} parent=0 // pred_check_branch
    %29 = sbr.rel (0) target = $region33
  $region32: #{lenet_forward.1} parent=0 // pred_region
    _
  $region33: #{lenet_forward.1} parent=0 // pred_fallthru
    _
  // Predicated region
  $region34: #{lenet_forward.1} parent=0 // pred_check
    _
  $region35: #{lenet_forward.1} parent=0 // pred_check_branch
    %31 = sbr.rel (0) target = $region37
  $region36: #{lenet_forward.1} parent=0 // pred_region
    _
  $region37: #{lenet_forward.1} parent=0 // pred_fallthru
    _
  %v33 = vld [vmem:[%s1] sm:$0xf]
  %v34 = vld [vmem:[%s1 + $0x4] sm:$0xf]
  %v35 = vld [vmem:[%s0] sm:$0xff]
  %v36 = vld [vmem:[%s0 + $0x8] sm:$0xff]
  %v37 = vld [vmem:[%s0 + $0x10] sm:$0xff]
  %v38 = vld [vmem:[%s0 + $0x18] sm:$0xff]
  %v39 = vld [vmem:[%s0 + $0x20] sm:$0xff]
  %v40 = vld [vmem:[%s0 + $0x28] sm:$0xff]
  %v41 = vld [vmem:[%s0 + $0x30] sm:$0xff]
  %v42 = vld [vmem:[%s0 + $0x38] sm:$0xff]
  %v43 = vld [vmem:[%s0 + $0x40] sm:$0xff]
  %v44 = vld [vmem:[%s0 + $0x48] sm:$0xff]
  %v45 = vld [vmem:[%s0 + $0x50] sm:$0xff]
  %v46 = vld [vmem:[%s0 + $0x58] sm:$0xff]
  %v47 = vld [vmem:[%s0 + $0x60] sm:$0xff]
  %v48 = vld [vmem:[%s0 + $0x68] sm:$0xff]
  %v49 = vld [vmem:[%s0 + $0x70] sm:$0xff]
  %v50 = vld [vmem:[%s0 + $0x78] sm:$0xff]
  %v51 = vld [vmem:[%s0 + $0x80] sm:$0xff]
  %v52 = vld [vmem:[%s0 + $0x88] sm:$0xff]
  %v53 = vld [vmem:[%s0 + $0x90] sm:$0xff]
  %v54 = vld [vmem:[%s0 + $0x98] sm:$0xff]
  %v55 = vld [vmem:[%s0 + $0xa0] sm:$0xff]
  %v56 = vld [vmem:[%s0 + $0xa8] sm:$0xff]
  %v57 = vld [vmem:[%s0 + $0xb0] sm:$0xff]
  %v58 = vld [vmem:[%s0 + $0xb8] sm:$0xff]
  %v59 = vld [vmem:[%s0 + $0xc0] sm:$0xff]
  %v60 = vld [vmem:[%s0 + $0xc8] sm:$0xff]
  %v61 = vld [vmem:[%s0 + $0xd0] sm:$0xff]
  %v62 = vld [vmem:[%s0 + $0xd8] sm:$0xff]
  %v63 = vld [vmem:[%s0 + $0xe0] sm:$0xff]
  %v64 = vld [vmem:[%s0 + $0xe8] sm:$0xff]
  %v65 = vld [vmem:[%s0 + $0xf0] sm:$0xff]
  %v66 = vld [vmem:[%s0 + $0xf8] sm:$0xff]
  %v67 = vld [vmem:[%s8] sm:$0xff]
  %v68 = vld [vmem:[%s8 + $0x8] sm:$0xff]
  %70 = vset.pattern.permute.xlu0 0
  %71 = vperm.xlu0 %70, %v67
  %v72 = vpop.permute.xlu0 %71
  %75 = vset.pattern.permute.xlu0 0
  %76 = vperm.xlu0 %75, %v68
  %v77 = vpop.permute.xlu0 %76
  %v81 = vunpack.c.l.b16 %v33
  %v82 = vunpack.c.l.b16 %v34
  %v83 = vpack.c.b16 %v82, %v81
  %v117 = vunpack.c.l.b16 %v35
  %v118 = vunpack.c.h.b16 %v35
  %v119 = vunpack.c.l.b16 %v36
  %v120 = vunpack.c.h.b16 %v36
  %v121 = vunpack.c.l.b16 %v37
  %v122 = vunpack.c.h.b16 %v37
  %v123 = vunpack.c.l.b16 %v38
  %v124 = vunpack.c.h.b16 %v38
  %v125 = vunpack.c.l.b16 %v39
  %v126 = vunpack.c.h.b16 %v39
  %v127 = vunpack.c.l.b16 %v40
  %v128 = vunpack.c.h.b16 %v40
  %v129 = vunpack.c.l.b16 %v41
  %v130 = vunpack.c.h.b16 %v41
  %v131 = vunpack.c.l.b16 %v42
  %v132 = vunpack.c.h.b16 %v42
  %v133 = vunpack.c.l.b16 %v43
  %v134 = vunpack.c.h.b16 %v43
  %v135 = vunpack.c.l.b16 %v44
  %v136 = vunpack.c.h.b16 %v44
  %v137 = vunpack.c.l.b16 %v45
  %v138 = vunpack.c.h.b16 %v45
  %v139 = vunpack.c.l.b16 %v46
  %v140 = vunpack.c.h.b16 %v46
  %v141 = vunpack.c.l.b16 %v47
  %v142 = vunpack.c.h.b16 %v47
  %v143 = vunpack.c.l.b16 %v48
  %v144 = vunpack.c.h.b16 %v48
  %v145 = vunpack.c.l.b16 %v49
  %v146 = vunpack.c.h.b16 %v49
  %v147 = vunpack.c.l.b16 %v50
  %v148 = vunpack.c.h.b16 %v50
  %v149 = vunpack.c.l.b16 %v51
  %v150 = vunpack.c.h.b16 %v51
  %v151 = vunpack.c.l.b16 %v52
  %v152 = vunpack.c.h.b16 %v52
  %v153 = vunpack.c.l.b16 %v53
  %v154 = vunpack.c.h.b16 %v53
  %v155 = vunpack.c.l.b16 %v54
  %v156 = vunpack.c.h.b16 %v54
  %v157 = vunpack.c.l.b16 %v55
  %v158 = vunpack.c.h.b16 %v55
  %v159 = vunpack.c.l.b16 %v56
  %v160 = vunpack.c.h.b16 %v56
  %v161 = vunpack.c.l.b16 %v57
  %v162 = vunpack.c.h.b16 %v57
  %v163 = vunpack.c.l.b16 %v58
  %v164 = vunpack.c.h.b16 %v58
  %v165 = vunpack.c.l.b16 %v59
  %v166 = vunpack.c.h.b16 %v59
  %v167 = vunpack.c.l.b16 %v60
  %v168 = vunpack.c.h.b16 %v60
  %v169 = vunpack.c.l.b16 %v61
  %v170 = vunpack.c.h.b16 %v61
  %v171 = vunpack.c.l.b16 %v62
  %v172 = vunpack.c.h.b16 %v62
  %v173 = vunpack.c.l.b16 %v63
  %v174 = vunpack.c.h.b16 %v63
  %v175 = vunpack.c.l.b16 %v64
  %v176 = vunpack.c.h.b16 %v64
  %v177 = vunpack.c.l.b16 %v65
  %v178 = vunpack.c.h.b16 %v65
  %v179 = vunpack.c.l.b16 %v66
  %v180 = vunpack.c.h.b16 %v66
  %v181 = vpack.c.b16 %v121, %v117
  %v182 = vpack.c.b16 %v122, %v118
  %v183 = vpack.c.b16 %v123, %v119
  %v184 = vpack.c.b16 %v124, %v120
  %v185 = vpack.c.b16 %v129, %v125
  %v186 = vpack.c.b16 %v130, %v126
  %v187 = vpack.c.b16 %v131, %v127
  %v188 = vpack.c.b16 %v132, %v128
  %v189 = vpack.c.b16 %v137, %v133
  %v190 = vpack.c.b16 %v138, %v134
  %v191 = vpack.c.b16 %v139, %v135
  %v192 = vpack.c.b16 %v140, %v136
  %v193 = vpack.c.b16 %v145, %v141
  %v194 = vpack.c.b16 %v146, %v142
  %v195 = vpack.c.b16 %v147, %v143
  %v196 = vpack.c.b16 %v148, %v144
  %v197 = vpack.c.b16 %v153, %v149
  %v198 = vpack.c.b16 %v154, %v150
  %v199 = vpack.c.b16 %v155, %v151
  %v200 = vpack.c.b16 %v156, %v152
  %v201 = vpack.c.b16 %v161, %v157
  %v202 = vpack.c.b16 %v162, %v158
  %v203 = vpack.c.b16 %v163, %v159
  %v204 = vpack.c.b16 %v164, %v160
  %v205 = vpack.c.b16 %v169, %v165
  %v206 = vpack.c.b16 %v170, %v166
  %v207 = vpack.c.b16 %v171, %v167
  %v208 = vpack.c.b16 %v172, %v168
  %v209 = vpack.c.b16 %v177, %v173
  %v210 = vpack.c.b16 %v178, %v174
  %v211 = vpack.c.b16 %v179, %v175
  %v212 = vpack.c.b16 %v180, %v176
  %245 = vmatpush.bf16.msra.mxu0 %v209
  %246 = vmatpush.bf16.msra.mxu0 %v205
  %247 = vmatpush.bf16.msra.mxu0 %v201
  %248 = vmatpush.bf16.msra.mxu0 %v197
  %249 = vmatpush.bf16.msra.mxu0 %v193
  %250 = vmatpush.bf16.msra.mxu0 %v189
  %251 = vmatpush.bf16.msra.mxu0 %v185
  %252 = vmatpush.bf16.msra.mxu0 %v181
  %253 = vmatmul.bf16.gmra.mxu0 %v83
  %v254 = vpop.f32.mrf.mxu0
  %v255 = vadd.f32 %v72, %v254
  %v256 = vpop.f32.mrf.mxu0
  %v257 = vadd.f32 %v77, %v256
  %258 = vdwg.mxu0
  %259 = vmatpush.bf16.msra.mxu0 %v210
  %260 = vmatpush.bf16.msra.mxu0 %v206
  %261 = vmatpush.bf16.msra.mxu0 %v202
  %262 = vmatpush.bf16.msra.mxu0 %v198
  %263 = vmatpush.bf16.msra.mxu0 %v194
  %264 = vmatpush.bf16.msra.mxu0 %v190
  %265 = vmatpush.bf16.msra.mxu0 %v186
  %266 = vmatpush.bf16.msra.mxu0 %v182
  %267 = vmatmul.bf16.gmra.mxu0 %v83
  %v268 = vpop.f32.mrf.mxu0
  %v269 = vadd.f32 %v72, %v268
  %v270 = vpop.f32.mrf.mxu0
  %v271 = vadd.f32 %v77, %v270
  %272 = vdwg.mxu0
  %273 = vmatpush.bf16.msra.mxu0 %v211
  %274 = vmatpush.bf16.msra.mxu0 %v207
  %275 = vmatpush.bf16.msra.mxu0 %v203
  %276 = vmatpush.bf16.msra.mxu0 %v199
  %277 = vmatpush.bf16.msra.mxu0 %v195
  %278 = vmatpush.bf16.msra.mxu0 %v191
  %279 = vmatpush.bf16.msra.mxu0 %v187
  %280 = vmatpush.bf16.msra.mxu0 %v183
  %281 = vmatmul.bf16.gmra.mxu0 %v83
  %v282 = vpop.f32.mrf.mxu0
  %v283 = vadd.f32 %v72, %v282
  %v284 = vpop.f32.mrf.mxu0
  %v285 = vadd.f32 %v77, %v284
  %286 = vdwg.mxu0
  %287 = vmatpush.bf16.msra.mxu0 %v212
  %288 = vmatpush.bf16.msra.mxu0 %v208
  %289 = vmatpush.bf16.msra.mxu0 %v204
  %290 = vmatpush.bf16.msra.mxu0 %v200
  %291 = vmatpush.bf16.msra.mxu0 %v196
  %292 = vmatpush.bf16.msra.mxu0 %v192
  %293 = vmatpush.bf16.msra.mxu0 %v188
  %294 = vmatpush.bf16.msra.mxu0 %v184
  %295 = vmatmul.bf16.gmra.mxu0 %v83
  %v296 = vpop.f32.mrf.mxu0
  %v297 = vadd.f32 %v72, %v296
  %v298 = vpop.f32.mrf.mxu0
  %v299 = vadd.f32 %v77, %v298
  %300 = vdwg.mxu0
  %v301 = vadd.f32 %v255, %v269
  %v302 = vadd.f32 %v301, %v283
  %v303 = vadd.f32 %v302, %v297
  %304 = vadd.xlane.f32.xlu0 %v303
  %v305 = vpop.xlane.xlu0 %304
  %v306 = vadd.f32 %v257, %v271
  %v307 = vadd.f32 %v306, %v285
  %v308 = vadd.f32 %v307, %v299
  %309 = vadd.xlane.f32.xlu0 %v308
  %v310 = vpop.xlane.xlu0 %309
  %v311 = vmul.f32 %v305, 0.001953125
  %v312 = vmul.f32 %v310, 0.001953125
  %v313 = vmul.f32 %v255, %v255
  %v314 = vmul.f32 %v269, %v269
  %v315 = vmul.f32 %v283, %v283
  %v316 = vmul.f32 %v297, %v297
  %v317 = vmul.f32 %v257, %v257
  %v318 = vmul.f32 %v271, %v271
  %v319 = vmul.f32 %v285, %v285
  %v320 = vmul.f32 %v299, %v299
  %v321 = vadd.f32 %v313, %v314
  %v322 = vadd.f32 %v321, %v315
  %v323 = vadd.f32 %v322, %v316
  %324 = vadd.xlane.f32.xlu0 %v323
  %v325 = vpop.xlane.xlu0 %324
  %v326 = vadd.f32 %v317, %v318
  %v327 = vadd.f32 %v326, %v319
  %v328 = vadd.f32 %v327, %v320
  %329 = vadd.xlane.f32.xlu0 %v328
  %v330 = vpop.xlane.xlu0 %329
  %v331 = vmul.f32 %v325, 0.001953125
  %v332 = vmul.f32 %v330, 0.001953125
  %v333 = vmul.f32 %v311, %v311
  %v334 = vmul.f32 %v312, %v312
  %v335 = vsub.f32 %v331, %v333
  %v336 = vsub.f32 %v332, %v334
  %v337 = vmax.f32 %v335, 0.0
  %v338 = vmax.f32 %v336, 0.0
  %v339 = vsub.f32 %v255, %v311
  %v340 = vsub.f32 %v269, %v311
  %v341 = vsub.f32 %v283, %v311
  %v342 = vsub.f32 %v297, %v311
  %v343 = vsub.f32 %v257, %v312
  %v344 = vsub.f32 %v271, %v312
  %v345 = vsub.f32 %v285, %v312
  %v346 = vsub.f32 %v299, %v312
  %v347 = vadd.f32 %v337, 1e-05
  %v348 = vadd.f32 %v338, 1e-05
  %v349 = vrsqrt.pop %v347
  %v350 = vmul.f32 %v349, %v347
  %v351 = vmul.f32 %v350, %v349
  %v352 = vmul.f32 0.5, %v351
  %v353 = vsub.f32 1.5, %v352
  %v354 = vmul.f32 %v349, %v353
  %vm355 = vweird.f32 %v347
  %vm356 = vweird.f32 %v349
  %vm357 = vmor %vm355, %vm356
  %v358 = vsel %vm357, %v349, %v354
  %v359 = vrsqrt.pop %v348
  %v360 = vmul.f32 %v359, %v348
  %v361 = vmul.f32 %v360, %v359
  %v362 = vmul.f32 0.5, %v361
  %v363 = vsub.f32 1.5, %v362
  %v364 = vmul.f32 %v359, %v363
  %vm365 = vweird.f32 %v348
  %vm366 = vweird.f32 %v359
  %vm367 = vmor %vm365, %vm366
  %v368 = vsel %vm367, %v359, %v364
  %v369 = vmul.f32 %v339, %v358
  %v370 = vmul.f32 %v340, %v358
  %v371 = vmul.f32 %v341, %v358
  %v372 = vmul.f32 %v342, %v358
  %v373 = vmul.f32 %v343, %v368
  %v374 = vmul.f32 %v344, %v368
  %v375 = vmul.f32 %v345, %v368
  %v376 = vmul.f32 %v346, %v368
  %377 = vset.pattern.permute.xlu0 1
  %378 = vperm.xlu0 %377, %v67
  %v379 = vpop.permute.xlu0 %378
  %381 = vset.pattern.permute.xlu0 1
  %382 = vperm.xlu0 %381, %v68
  %v383 = vpop.permute.xlu0 %382
  %v385 = vmul.f32 %v379, %v369
  %v386 = vmul.f32 %v379, %v370
  %v387 = vmul.f32 %v379, %v371
  %v388 = vmul.f32 %v379, %v372
  %v389 = vmul.f32 %v383, %v373
  %v390 = vmul.f32 %v383, %v374
  %v391 = vmul.f32 %v383, %v375
  %v392 = vmul.f32 %v383, %v376
  %393 = vset.pattern.permute.xlu0 2
  %394 = vperm.xlu0 %393, %v67
  %v395 = vpop.permute.xlu0 %394
  %397 = vset.pattern.permute.xlu0 2
  %398 = vperm.xlu0 %397, %v68
  %v399 = vpop.permute.xlu0 %398
  %v401 = vadd.f32 %v385, %v395
  %v402 = vadd.f32 %v386, %v395
  %v403 = vadd.f32 %v387, %v395
  %v404 = vadd.f32 %v388, %v395
  %v405 = vadd.f32 %v389, %v399
  %v406 = vadd.f32 %v390, %v399
  %v407 = vadd.f32 %v391, %v399
  %v408 = vadd.f32 %v392, %v399
  %v409 = vxor.u32 %v401, 2147483648
  %v410 = vxor.u32 %v402, 2147483648
  %v411 = vxor.u32 %v403, 2147483648
  %v412 = vxor.u32 %v404, 2147483648
  %v413 = vxor.u32 %v405, 2147483648
  %v414 = vxor.u32 %v406, 2147483648
  %v415 = vxor.u32 %v407, 2147483648
  %v416 = vxor.u32 %v408, 2147483648
  %v417 = vmul.f32 %v409, 1.442695
  %v418 = vpow.pop %v417
  %v419 = vmul.f32 %v410, 1.442695
  %v420 = vpow.pop %v419
  %v421 = vmul.f32 %v411, 1.442695
  %v422 = vpow.pop %v421
  %v423 = vmul.f32 %v412, 1.442695
  %v424 = vpow.pop %v423
  %v425 = vmul.f32 %v413, 1.442695
  %v426 = vpow.pop %v425
  %v427 = vmul.f32 %v414, 1.442695
  %v428 = vpow.pop %v427
  %v429 = vmul.f32 %v415, 1.442695
  %v430 = vpow.pop %v429
  %v431 = vmul.f32 %v416, 1.442695
  %v432 = vpow.pop %v431
  %v433 = vadd.f32 %v418, 1.0
  %v434 = vadd.f32 %v420, 1.0
  %v435 = vadd.f32 %v422, 1.0
  %v436 = vadd.f32 %v424, 1.0
  %v437 = vadd.f32 %v426, 1.0
  %v438 = vadd.f32 %v428, 1.0
  %v439 = vadd.f32 %v430, 1.0
  %v440 = vadd.f32 %v432, 1.0
  %v441 = vrcp.pop %v433
  %v442 = vmul.f32 %v433, %v441
  %v443 = vsub.f32 1.0, %v442
  %v444 = vmul.f32 %v441, %v443
  %v445 = vadd.f32 %v441, %v444
  %vm446 = vweird.f32 %v433
  %vm447 = vweird.f32 %v441
  %vm448 = vmor %vm446, %vm447
  %v449 = vsel %vm448, %v441, %v445
  %v450 = vand.u32 2147483647, %v433
  %vm451 = vcmp.eq.f32.partialorder %v450, 8.507059e+37
  %v452 = vand.u32 %v433, 2147483648
  %v453 = vor.u32 1.1754944e-38, %v452
  %v454 = vsel %vm451, %v453, %v449
  %v455 = vmul.f32 1.0, %v454
  %v456 = vrcp.pop %v434
  %v457 = vmul.f32 %v434, %v456
  %v458 = vsub.f32 1.0, %v457
  %v459 = vmul.f32 %v456, %v458
  %v460 = vadd.f32 %v456, %v459
  %vm461 = vweird.f32 %v434
  %vm462 = vweird.f32 %v456
  %vm463 = vmor %vm461, %vm462
  %v464 = vsel %vm463, %v456, %v460
  %v465 = vand.u32 2147483647, %v434
  %vm466 = vcmp.eq.f32.partialorder %v465, 8.507059e+37
  %v467 = vand.u32 %v434, 2147483648
  %v468 = vor.u32 1.1754944e-38, %v467
  %v469 = vsel %vm466, %v468, %v464
  %v470 = vmul.f32 1.0, %v469
  %v471 = vrcp.pop %v435
  %v472 = vmul.f32 %v435, %v471
  %v473 = vsub.f32 1.0, %v472
  %v474 = vmul.f32 %v471, %v473
  %v475 = vadd.f32 %v471, %v474
  %vm476 = vweird.f32 %v435
  %vm477 = vweird.f32 %v471
  %vm478 = vmor %vm476, %vm477
  %v479 = vsel %vm478, %v471, %v475
  %v480 = vand.u32 2147483647, %v435
  %vm481 = vcmp.eq.f32.partialorder %v480, 8.507059e+37
  %v482 = vand.u32 %v435, 2147483648
  %v483 = vor.u32 1.1754944e-38, %v482
  %v484 = vsel %vm481, %v483, %v479
  %v485 = vmul.f32 1.0, %v484
  %v486 = vrcp.pop %v436
  %v487 = vmul.f32 %v436, %v486
  %v488 = vsub.f32 1.0, %v487
  %v489 = vmul.f32 %v486, %v488
  %v490 = vadd.f32 %v486, %v489
  %vm491 = vweird.f32 %v436
  %vm492 = vweird.f32 %v486
  %vm493 = vmor %vm491, %vm492
  %v494 = vsel %vm493, %v486, %v490
  %v495 = vand.u32 2147483647, %v436
  %vm496 = vcmp.eq.f32.partialorder %v495, 8.507059e+37
  %v497 = vand.u32 %v436, 2147483648
  %v498 = vor.u32 1.1754944e-38, %v497
  %v499 = vsel %vm496, %v498, %v494
  %v500 = vmul.f32 1.0, %v499
  %v501 = vrcp.pop %v437
  %v502 = vmul.f32 %v437, %v501
  %v503 = vsub.f32 1.0, %v502
  %v504 = vmul.f32 %v501, %v503
  %v505 = vadd.f32 %v501, %v504
  %vm506 = vweird.f32 %v437
  %vm507 = vweird.f32 %v501
  %vm508 = vmor %vm506, %vm507
  %v509 = vsel %vm508, %v501, %v505
  %v510 = vand.u32 2147483647, %v437
  %vm511 = vcmp.eq.f32.partialorder %v510, 8.507059e+37
  %v512 = vand.u32 %v437, 2147483648
  %v513 = vor.u32 1.1754944e-38, %v512
  %v514 = vsel %vm511, %v513, %v509
  %v515 = vmul.f32 1.0, %v514
  %v516 = vrcp.pop %v438
  %v517 = vmul.f32 %v438, %v516
  %v518 = vsub.f32 1.0, %v517
  %v519 = vmul.f32 %v516, %v518
  %v520 = vadd.f32 %v516, %v519
  %vm521 = vweird.f32 %v438
  %vm522 = vweird.f32 %v516
  %vm523 = vmor %vm521, %vm522
  %v524 = vsel %vm523, %v516, %v520
  %v525 = vand.u32 2147483647, %v438
  %vm526 = vcmp.eq.f32.partialorder %v525, 8.507059e+37
  %v527 = vand.u32 %v438, 2147483648
  %v528 = vor.u32 1.1754944e-38, %v527
  %v529 = vsel %vm526, %v528, %v524
  %v530 = vmul.f32 1.0, %v529
  %v531 = vrcp.pop %v439
  %v532 = vmul.f32 %v439, %v531
  %v533 = vsub.f32 1.0, %v532
  %v534 = vmul.f32 %v531, %v533
  %v535 = vadd.f32 %v531, %v534
  %vm536 = vweird.f32 %v439
  %vm537 = vweird.f32 %v531
  %vm538 = vmor %vm536, %vm537
  %v539 = vsel %vm538, %v531, %v535
  %v540 = vand.u32 2147483647, %v439
  %vm541 = vcmp.eq.f32.partialorder %v540, 8.507059e+37
  %v542 = vand.u32 %v439, 2147483648
  %v543 = vor.u32 1.1754944e-38, %v542
  %v544 = vsel %vm541, %v543, %v539
  %v545 = vmul.f32 1.0, %v544
  %v546 = vrcp.pop %v440
  %v547 = vmul.f32 %v440, %v546
  %v548 = vsub.f32 1.0, %v547
  %v549 = vmul.f32 %v546, %v548
  %v550 = vadd.f32 %v546, %v549
  %vm551 = vweird.f32 %v440
  %vm552 = vweird.f32 %v546
  %vm553 = vmor %vm551, %vm552
  %v554 = vsel %vm553, %v546, %v550
  %v555 = vand.u32 2147483647, %v440
  %vm556 = vcmp.eq.f32.partialorder %v555, 8.507059e+37
  %v557 = vand.u32 %v440, 2147483648
  %v558 = vor.u32 1.1754944e-38, %v557
  %v559 = vsel %vm556, %v558, %v554
  %v560 = vmul.f32 1.0, %v559
  %561 = vrot.lane.b32.xlu0 %v455, 34
  %v562 = vpop.permute.xlu0 %561
  %563 = vrot.lane.b32.xlu0 %v515, 34
  %v564 = vpop.permute.xlu0 %563
  %565 = vrot.lane.b32.xlu0 %v470, 34
  %v566 = vpop.permute.xlu0 %565
  %567 = vrot.lane.b32.xlu0 %v530, 34
  %v568 = vpop.permute.xlu0 %567
  %569 = vrot.lane.b32.xlu0 %v485, 34
  %v570 = vpop.permute.xlu0 %569
  %571 = vrot.lane.b32.xlu0 %v545, 34
  %v572 = vpop.permute.xlu0 %571
  %573 = vrot.lane.b32.xlu0 %v500, 34
  %v574 = vpop.permute.xlu0 %573
  %575 = vrot.lane.b32.xlu0 %v560, 34
  %v576 = vpop.permute.xlu0 %575
  %v577 = vlaneseq
  %v578 = vand.u32 %v577, 127
  %vm579 = vcmp.lt.s32.totalorder %v578, 34
  %v580 = vsel %vm579, %v570, %v574
  %v581 = vsel %vm579, %v572, %v576
  %v582 = vsel %vm579, %v566, %v570
  %v583 = vsel %vm579, %v568, %v572
  %v584 = vsel %vm579, %v562, %v566
  %v585 = vsel %vm579, %v564, %v568
  %v586 = vsel %vm579, %v574, %v562
  %v587 = vsel %vm579, %v576, %v564
  %v588 = vld [vmem:[%s3] sm:$0xf]
  %v590 = vperm.slane %v588, 0
  %v591 = vperm.slane %v588, 1
  %v592 = vperm.slane %v588, 2
  %v593 = vperm.slane %v588, 3
  %v598 = vmul.f32 %v586, %v590
  %v599 = vmul.f32 %v584, %v591
  %v600 = vmul.f32 %v582, %v592
  %v601 = vmul.f32 %v580, %v593
  %v602 = vmul.f32 %v587, %v590
  %v603 = vmul.f32 %v585, %v591
  %v604 = vmul.f32 %v583, %v592
  %v605 = vmul.f32 %v581, %v593
  %v606 = vpack.c.bf16 %v599, %v598
  %v607 = vpack.c.bf16 %v601, %v600
  %v608 = vpack.c.bf16 %v603, %v602
  %v609 = vpack.c.bf16 %v605, %v604
  %610 = vst [vmem:[#allocation2] sm:$0xff] %v606
  %611 = vst [vmem:[#allocation2 + $0x8] sm:$0xff] %v607
  %612 = vst [vmem:[#allocation2 + $0x10] sm:$0xff] %v608
  %613 = vst [vmem:[#allocation2 + $0x18] sm:$0xff] %v609
  %614 = vrot.lane.b32.xlu0 %v455, 33
  %v615 = vpop.permute.xlu0 %614
  %616 = vrot.lane.b32.xlu0 %v515, 33
  %v617 = vpop.permute.xlu0 %616
  %618 = vrot.lane.b32.xlu0 %v470, 33
  %v619 = vpop.permute.xlu0 %618
  %620 = vrot.lane.b32.xlu0 %v530, 33
  %v621 = vpop.permute.xlu0 %620
  %622 = vrot.lane.b32.xlu0 %v485, 33
  %v623 = vpop.permute.xlu0 %622
  %624 = vrot.lane.b32.xlu0 %v545, 33
  %v625 = vpop.permute.xlu0 %624
  %626 = vrot.lane.b32.xlu0 %v500, 33
  %v627 = vpop.permute.xlu0 %626
  %628 = vrot.lane.b32.xlu0 %v560, 33
  %v629 = vpop.permute.xlu0 %628
  %vm630 = vcmp.lt.s32.totalorder %v578, 33
  %v631 = vsel %vm630, %v623, %v627
  %v632 = vsel %vm630, %v625, %v629
  %v633 = vsel %vm630, %v619, %v623
  %v634 = vsel %vm630, %v621, %v625
  %v635 = vsel %vm630, %v615, %v619
  %v636 = vsel %vm630, %v617, %v621
  %v637 = vsel %vm630, %v627, %v615
  %v638 = vsel %vm630, %v629, %v617
  %s639 = scalar_lea.vmem %s3, 4
  %v640 = vld [vmem:[%s639] sm:$0xf]
  %v642 = vperm.slane %v640, 0
  %v643 = vperm.slane %v640, 1
  %v644 = vperm.slane %v640, 2
  %v645 = vperm.slane %v640, 3
  %v650 = vmul.f32 %v637, %v642
  %v651 = vmul.f32 %v635, %v643
  %v652 = vmul.f32 %v633, %v644
  %v653 = vmul.f32 %v631, %v645
  %v654 = vmul.f32 %v638, %v642
  %v655 = vmul.f32 %v636, %v643
  %v656 = vmul.f32 %v634, %v644
  %v657 = vmul.f32 %v632, %v645
  %v658 = vpack.c.bf16 %v651, %v650
  %v659 = vpack.c.bf16 %v653, %v652
  %v660 = vpack.c.bf16 %v655, %v654
  %v661 = vpack.c.bf16 %v657, %v656
  %662 = vst [vmem:[#allocation2 + $0x20] sm:$0xff] %v658
  %663 = vst [vmem:[#allocation2 + $0x28] sm:$0xff] %v659
  %664 = vst [vmem:[#allocation2 + $0x30] sm:$0xff] %v660
  %665 = vst [vmem:[#allocation2 + $0x38] sm:$0xff] %v661
  %666 = vrot.lane.b32.xlu0 %v455, 32
  %v667 = vpop.permute.xlu0 %666
  %668 = vrot.lane.b32.xlu0 %v515, 32
  %v669 = vpop.permute.xlu0 %668
  %670 = vrot.lane.b32.xlu0 %v470, 32
  %v671 = vpop.permute.xlu0 %670
  %672 = vrot.lane.b32.xlu0 %v530, 32
  %v673 = vpop.permute.xlu0 %672
  %674 = vrot.lane.b32.xlu0 %v485, 32
  %v675 = vpop.permute.xlu0 %674
  %676 = vrot.lane.b32.xlu0 %v545, 32
  %v677 = vpop.permute.xlu0 %676
  %678 = vrot.lane.b32.xlu0 %v500, 32
  %v679 = vpop.permute.xlu0 %678
  %680 = vrot.lane.b32.xlu0 %v560, 32
  %v681 = vpop.permute.xlu0 %680
  %vm682 = vcmp.lt.s32.totalorder %v578, 32
  %v683 = vsel %vm682, %v675, %v679
  %v684 = vsel %vm682, %v677, %v681
  %v685 = vsel %vm682, %v671, %v675
  %v686 = vsel %vm682, %v673, %v677
  %v687 = vsel %vm682, %v667, %v671
  %v688 = vsel %vm682, %v669, %v673
  %v689 = vsel %vm682, %v679, %v667
  %v690 = vsel %vm682, %v681, %v669
  %s691 = scalar_lea.vmem %s3, 8
  %v692 = vld [vmem:[%s691] sm:$0xf]
  %v694 = vperm.slane %v692, 0
  %v695 = vperm.slane %v692, 1
  %v696 = vperm.slane %v692, 2
  %v697 = vperm.slane %v692, 3
  %v702 = vmul.f32 %v689, %v694
  %v703 = vmul.f32 %v687, %v695
  %v704 = vmul.f32 %v685, %v696
  %v705 = vmul.f32 %v683, %v697
  %v706 = vmul.f32 %v690, %v694
  %v707 = vmul.f32 %v688, %v695
  %v708 = vmul.f32 %v686, %v696
  %v709 = vmul.f32 %v684, %v697
  %v710 = vpack.c.bf16 %v703, %v702
  %v711 = vpack.c.bf16 %v705, %v704
  %v712 = vpack.c.bf16 %v707, %v706
  %v713 = vpack.c.bf16 %v709, %v708
  %714 = vst [vmem:[#allocation2 + $0x40] sm:$0xff] %v710
  %715 = vst [vmem:[#allocation2 + $0x48] sm:$0xff] %v711
  %716 = vst [vmem:[#allocation2 + $0x50] sm:$0xff] %v712
  %717 = vst [vmem:[#allocation2 + $0x58] sm:$0xff] %v713
  %718 = vrot.lane.b32.xlu0 %v455, 31
  %v719 = vpop.permute.xlu0 %718
  %720 = vrot.lane.b32.xlu0 %v515, 31
  %v721 = vpop.permute.xlu0 %720
  %722 = vrot.lane.b32.xlu0 %v470, 31
  %v723 = vpop.permute.xlu0 %722
  %724 = vrot.lane.b32.xlu0 %v530, 31
  %v725 = vpop.permute.xlu0 %724
  %726 = vrot.lane.b32.xlu0 %v485, 31
  %v727 = vpop.permute.xlu0 %726
  %728 = vrot.lane.b32.xlu0 %v545, 31
  %v729 = vpop.permute.xlu0 %728
  %730 = vrot.lane.b32.xlu0 %v500, 31
  %v731 = vpop.permute.xlu0 %730
  %732 = vrot.lane.b32.xlu0 %v560, 31
  %v733 = vpop.permute.xlu0 %732
  %vm734 = vcmp.lt.s32.totalorder %v578, 31
  %v735 = vsel %vm734, %v727, %v731
  %v736 = vsel %vm734, %v729, %v733
  %v737 = vsel %vm734, %v723, %v727
  %v738 = vsel %vm734, %v725, %v729
  %v739 = vsel %vm734, %v719, %v723
  %v740 = vsel %vm734, %v721, %v725
  %v741 = vsel %vm734, %v731, %v719
  %v742 = vsel %vm734, %v733, %v721
  %s743 = scalar_lea.vmem %s3, 12
  %v744 = vld [vmem:[%s743] sm:$0xf]
  %v746 = vperm.slane %v744, 0
  %v747 = vperm.slane %v744, 1
  %v748 = vperm.slane %v744, 2
  %v749 = vperm.slane %v744, 3
  %v754 = vmul.f32 %v741, %v746
  %v755 = vmul.f32 %v739, %v747
  %v756 = vmul.f32 %v737, %v748
  %v757 = vmul.f32 %v735, %v749
  %v758 = vmul.f32 %v742, %v746
  %v759 = vmul.f32 %v740, %v747
  %v760 = vmul.f32 %v738, %v748
  %v761 = vmul.f32 %v736, %v749
  %v762 = vpack.c.bf16 %v755, %v754
  %v763 = vpack.c.bf16 %v757, %v756
  %v764 = vpack.c.bf16 %v759, %v758
  %v765 = vpack.c.bf16 %v761, %v760
  %766 = vst [vmem:[#allocation2 + $0x60] sm:$0xff] %v762
  %767 = vst [vmem:[#allocation2 + $0x68] sm:$0xff] %v763
  %768 = vst [vmem:[#allocation2 + $0x70] sm:$0xff] %v764
  %769 = vst [vmem:[#allocation2 + $0x78] sm:$0xff] %v765
  %770 = vrot.lane.b32.xlu0 %v455, 30
  %v771 = vpop.permute.xlu0 %770
  %772 = vrot.lane.b32.xlu0 %v515, 30
  %v773 = vpop.permute.xlu0 %772
  %774 = vrot.lane.b32.xlu0 %v470, 30
  %v775 = vpop.permute.xlu0 %774
  %776 = vrot.lane.b32.xlu0 %v530, 30
  %v777 = vpop.permute.xlu0 %776
  %778 = vrot.lane.b32.xlu0 %v485, 30
  %v779 = vpop.permute.xlu0 %778
  %780 = vrot.lane.b32.xlu0 %v545, 30
  %v781 = vpop.permute.xlu0 %780
  %782 = vrot.lane.b32.xlu0 %v500, 30
  %v783 = vpop.permute.xlu0 %782
  %784 = vrot.lane.b32.xlu0 %v560, 30
  %v785 = vpop.permute.xlu0 %784
  %vm786 = vcmp.lt.s32.totalorder %v578, 30
  %v787 = vsel %vm786, %v779, %v783
  %v788 = vsel %vm786, %v781, %v785
  %v789 = vsel %vm786, %v775, %v779
  %v790 = vsel %vm786, %v777, %v781
  %v791 = vsel %vm786, %v771, %v775
  %v792 = vsel %vm786, %v773, %v777
  %v793 = vsel %vm786, %v783, %v771
  %v794 = vsel %vm786, %v785, %v773
  %s795 = scalar_lea.vmem %s3, 16
  %v796 = vld [vmem:[%s795] sm:$0xf]
  %v798 = vperm.slane %v796, 0
  %v799 = vperm.slane %v796, 1
  %v800 = vperm.slane %v796, 2
  %v801 = vperm.slane %v796, 3
  %v806 = vmul.f32 %v793, %v798
  %v807 = vmul.f32 %v791, %v799
  %v808 = vmul.f32 %v789, %v800
  %v809 = vmul.f32 %v787, %v801
  %v810 = vmul.f32 %v794, %v798
  %v811 = vmul.f32 %v792, %v799
  %v812 = vmul.f32 %v790, %v800
  %v813 = vmul.f32 %v788, %v801
  %v814 = vpack.c.bf16 %v807, %v806
  %v815 = vpack.c.bf16 %v809, %v808
  %v816 = vpack.c.bf16 %v811, %v810
  %v817 = vpack.c.bf16 %v813, %v812
  %818 = vst [vmem:[#allocation2 + $0x80] sm:$0xff] %v814
  %819 = vst [vmem:[#allocation2 + $0x88] sm:$0xff] %v815
  %820 = vst [vmem:[#allocation2 + $0x90] sm:$0xff] %v816
  %821 = vst [vmem:[#allocation2 + $0x98] sm:$0xff] %v817
  %822 = vrot.lane.b32.xlu0 %v455, 18
  %v823 = vpop.permute.xlu0 %822
  %824 = vrot.lane.b32.xlu0 %v515, 18
  %v825 = vpop.permute.xlu0 %824
  %826 = vrot.lane.b32.xlu0 %v470, 18
  %v827 = vpop.permute.xlu0 %826
  %828 = vrot.lane.b32.xlu0 %v530, 18
  %v829 = vpop.permute.xlu0 %828
  %830 = vrot.lane.b32.xlu0 %v485, 18
  %v831 = vpop.permute.xlu0 %830
  %832 = vrot.lane.b32.xlu0 %v545, 18
  %v833 = vpop.permute.xlu0 %832
  %834 = vrot.lane.b32.xlu0 %v500, 18
  %v835 = vpop.permute.xlu0 %834
  %836 = vrot.lane.b32.xlu0 %v560, 18
  %v837 = vpop.permute.xlu0 %836
  %vm838 = vcmp.lt.s32.totalorder %v578, 18
  %v839 = vsel %vm838, %v831, %v835
  %v840 = vsel %vm838, %v833, %v837
  %v841 = vsel %vm838, %v827, %v831
  %v842 = vsel %vm838, %v829, %v833
  %v843 = vsel %vm838, %v823, %v827
  %v844 = vsel %vm838, %v825, %v829
  %v845 = vsel %vm838, %v835, %v823
  %v846 = vsel %vm838, %v837, %v825
  %s847 = scalar_lea.vmem %s3, 20
  %v848 = vld [vmem:[%s847] sm:$0xf]
  %v850 = vperm.slane %v848, 0
  %v851 = vperm.slane %v848, 1
  %v852 = vperm.slane %v848, 2
  %v853 = vperm.slane %v848, 3
  %v858 = vmul.f32 %v845, %v850
  %v859 = vmul.f32 %v843, %v851
  %v860 = vmul.f32 %v841, %v852
  %v861 = vmul.f32 %v839, %v853
  %v862 = vmul.f32 %v846, %v850
  %v863 = vmul.f32 %v844, %v851
  %v864 = vmul.f32 %v842, %v852
  %v865 = vmul.f32 %v840, %v853
  %v866 = vpack.c.bf16 %v859, %v858
  %v867 = vpack.c.bf16 %v861, %v860
  %v868 = vpack.c.bf16 %v863, %v862
  %v869 = vpack.c.bf16 %v865, %v864
  %870 = vst [vmem:[#allocation2 + $0xa0] sm:$0xff] %v866
  %871 = vst [vmem:[#allocation2 + $0xa8] sm:$0xff] %v867
  %872 = vst [vmem:[#allocation2 + $0xb0] sm:$0xff] %v868
  %873 = vst [vmem:[#allocation2 + $0xb8] sm:$0xff] %v869
  %874 = vrot.lane.b32.xlu0 %v455, 17
  %v875 = vpop.permute.xlu0 %874
  %876 = vrot.lane.b32.xlu0 %v515, 17
  %v877 = vpop.permute.xlu0 %876
  %878 = vrot.lane.b32.xlu0 %v470, 17
  %v879 = vpop.permute.xlu0 %878
  %880 = vrot.lane.b32.xlu0 %v530, 17
  %v881 = vpop.permute.xlu0 %880
  %882 = vrot.lane.b32.xlu0 %v485, 17
  %v883 = vpop.permute.xlu0 %882
  %884 = vrot.lane.b32.xlu0 %v545, 17
  %v885 = vpop.permute.xlu0 %884
  %886 = vrot.lane.b32.xlu0 %v500, 17
  %v887 = vpop.permute.xlu0 %886
  %888 = vrot.lane.b32.xlu0 %v560, 17
  %v889 = vpop.permute.xlu0 %888
  %vm890 = vcmp.lt.s32.totalorder %v578, 17
  %v891 = vsel %vm890, %v883, %v887
  %v892 = vsel %vm890, %v885, %v889
  %v893 = vsel %vm890, %v879, %v883
  %v894 = vsel %vm890, %v881, %v885
  %v895 = vsel %vm890, %v875, %v879
  %v896 = vsel %vm890, %v877, %v881
  %v897 = vsel %vm890, %v887, %v875
  %v898 = vsel %vm890, %v889, %v877
  %s899 = scalar_lea.vmem %s3, 24
  %v900 = vld [vmem:[%s899] sm:$0xf]
  %v902 = vperm.slane %v900, 0
  %v903 = vperm.slane %v900, 1
  %v904 = vperm.slane %v900, 2
  %v905 = vperm.slane %v900, 3
  %v910 = vmul.f32 %v897, %v902
  %v911 = vmul.f32 %v895, %v903
  %v912 = vmul.f32 %v893, %v904
  %v913 = vmul.f32 %v891, %v905
  %v914 = vmul.f32 %v898, %v902
  %v915 = vmul.f32 %v896, %v903
  %v916 = vmul.f32 %v894, %v904
  %v917 = vmul.f32 %v892, %v905
  %v918 = vpack.c.bf16 %v911, %v910
  %v919 = vpack.c.bf16 %v913, %v912
  %v920 = vpack.c.bf16 %v915, %v914
  %v921 = vpack.c.bf16 %v917, %v916
  %922 = vst [vmem:[#allocation2 + $0xc0] sm:$0xff] %v918
  %923 = vst [vmem:[#allocation2 + $0xc8] sm:$0xff] %v919
  %924 = vst [vmem:[#allocation2 + $0xd0] sm:$0xff] %v920
  %925 = vst [vmem:[#allocation2 + $0xd8] sm:$0xff] %v921
  %926 = vrot.lane.b32.xlu0 %v455, 16
  %v927 = vpop.permute.xlu0 %926
  %928 = vrot.lane.b32.xlu0 %v515, 16
  %v929 = vpop.permute.xlu0 %928
  %930 = vrot.lane.b32.xlu0 %v470, 16
  %v931 = vpop.permute.xlu0 %930
  %932 = vrot.lane.b32.xlu0 %v530, 16
  %v933 = vpop.permute.xlu0 %932
  %934 = vrot.lane.b32.xlu0 %v485, 16
  %v935 = vpop.permute.xlu0 %934
  %936 = vrot.lane.b32.xlu0 %v545, 16
  %v937 = vpop.permute.xlu0 %936
  %938 = vrot.lane.b32.xlu0 %v500, 16
  %v939 = vpop.permute.xlu0 %938
  %940 = vrot.lane.b32.xlu0 %v560, 16
  %v941 = vpop.permute.xlu0 %940
  %vm942 = vcmp.lt.s32.totalorder %v578, 16
  %v943 = vsel %vm942, %v935, %v939
  %v944 = vsel %vm942, %v937, %v941
  %v945 = vsel %vm942, %v931, %v935
  %v946 = vsel %vm942, %v933, %v937
  %v947 = vsel %vm942, %v927, %v931
  %v948 = vsel %vm942, %v929, %v933
  %v949 = vsel %vm942, %v939, %v927
  %v950 = vsel %vm942, %v941, %v929
  %s951 = scalar_lea.vmem %s3, 28
  %v952 = vld [vmem:[%s951] sm:$0xf]
  %v954 = vperm.slane %v952, 0
  %v955 = vperm.slane %v952, 1
  %v956 = vperm.slane %v952, 2
  %v957 = vperm.slane %v952, 3
  %v962 = vmul.f32 %v949, %v954
  %v963 = vmul.f32 %v947, %v955
  %v964 = vmul.f32 %v945, %v956
  %v965 = vmul.f32 %v943, %v957
  %v966 = vmul.f32 %v950, %v954
  %v967 = vmul.f32 %v948, %v955
  %v968 = vmul.f32 %v946, %v956
  %v969 = vmul.f32 %v944, %v957
  %v970 = vpack.c.bf16 %v963, %v962
  %v971 = vpack.c.bf16 %v965, %v964
  %v972 = vpack.c.bf16 %v967, %v966
  %v973 = vpack.c.bf16 %v969, %v968
  %974 = vst [vmem:[#allocation2 + $0xe0] sm:$0xff] %v970
  %975 = vst [vmem:[#allocation2 + $0xe8] sm:$0xff] %v971
  %976 = vst [vmem:[#allocation2 + $0xf0] sm:$0xff] %v972
  %977 = vst [vmem:[#allocation2 + $0xf8] sm:$0xff] %v973
  %978 = vrot.lane.b32.xlu0 %v455, 15
  %v979 = vpop.permute.xlu0 %978
  %980 = vrot.lane.b32.xlu0 %v515, 15
  %v981 = vpop.permute.xlu0 %980
  %982 = vrot.lane.b32.xlu0 %v470, 15
  %v983 = vpop.permute.xlu0 %982
  %984 = vrot.lane.b32.xlu0 %v530, 15
  %v985 = vpop.permute.xlu0 %984
  %986 = vrot.lane.b32.xlu0 %v485, 15
  %v987 = vpop.permute.xlu0 %986
  %988 = vrot.lane.b32.xlu0 %v545, 15
  %v989 = vpop.permute.xlu0 %988
  %990 = vrot.lane.b32.xlu0 %v500, 15
  %v991 = vpop.permute.xlu0 %990
  %992 = vrot.lane.b32.xlu0 %v560, 15
  %v993 = vpop.permute.xlu0 %992
  %vm994 = vcmp.lt.s32.totalorder %v578, 15
  %v995 = vsel %vm994, %v987, %v991
  %v996 = vsel %vm994, %v989, %v993
  %v997 = vsel %vm994, %v983, %v987
  %v998 = vsel %vm994, %v985, %v989
  %v999 = vsel %vm994, %v979, %v983
  %v1000 = vsel %vm994, %v981, %v985
  %v1001 = vsel %vm994, %v991, %v979
  %v1002 = vsel %vm994, %v993, %v981
  %s1003 = scalar_lea.vmem %s3, 32
  %v1004 = vld [vmem:[%s1003] sm:$0xf]
  %v1006 = vperm.slane %v1004, 0
  %v1007 = vperm.slane %v1004, 1
  %v1008 = vperm.slane %v1004, 2
  %v1009 = vperm.slane %v1004, 3
  %v1014 = vmul.f32 %v1001, %v1006
  %v1015 = vmul.f32 %v999, %v1007
  %v1016 = vmul.f32 %v997, %v1008
  %v1017 = vmul.f32 %v995, %v1009
  %v1018 = vmul.f32 %v1002, %v1006
  %v1019 = vmul.f32 %v1000, %v1007
  %v1020 = vmul.f32 %v998, %v1008
  %v1021 = vmul.f32 %v996, %v1009
  %v1022 = vpack.c.bf16 %v1015, %v1014
  %v1023 = vpack.c.bf16 %v1017, %v1016
  %v1024 = vpack.c.bf16 %v1019, %v1018
  %v1025 = vpack.c.bf16 %v1021, %v1020
  %1026 = vst [vmem:[#allocation2 + $0x100] sm:$0xff] %v1022
  %1027 = vst [vmem:[#allocation2 + $0x108] sm:$0xff] %v1023
  %1028 = vst [vmem:[#allocation2 + $0x110] sm:$0xff] %v1024
  %1029 = vst [vmem:[#allocation2 + $0x118] sm:$0xff] %v1025
  %1030 = vrot.lane.b32.xlu0 %v455, 14
  %v1031 = vpop.permute.xlu0 %1030
  %1032 = vrot.lane.b32.xlu0 %v515, 14
  %v1033 = vpop.permute.xlu0 %1032
  %1034 = vrot.lane.b32.xlu0 %v470, 14
  %v1035 = vpop.permute.xlu0 %1034
  %1036 = vrot.lane.b32.xlu0 %v530, 14
  %v1037 = vpop.permute.xlu0 %1036
  %1038 = vrot.lane.b32.xlu0 %v485, 14
  %v1039 = vpop.permute.xlu0 %1038
  %1040 = vrot.lane.b32.xlu0 %v545, 14
  %v1041 = vpop.permute.xlu0 %1040
  %1042 = vrot.lane.b32.xlu0 %v500, 14
  %v1043 = vpop.permute.xlu0 %1042
  %1044 = vrot.lane.b32.xlu0 %v560, 14
  %v1045 = vpop.permute.xlu0 %1044
  %vm1046 = vcmp.lt.s32.totalorder %v578, 14
  %v1047 = vsel %vm1046, %v1039, %v1043
  %v1048 = vsel %vm1046, %v1041, %v1045
  %v1049 = vsel %vm1046, %v1035, %v1039
  %v1050 = vsel %vm1046, %v1037, %v1041
  %v1051 = vsel %vm1046, %v1031, %v1035
  %v1052 = vsel %vm1046, %v1033, %v1037
  %v1053 = vsel %vm1046, %v1043, %v1031
  %v1054 = vsel %vm1046, %v1045, %v1033
  %s1055 = scalar_lea.vmem %s3, 36
  %v1056 = vld [vmem:[%s1055] sm:$0xf]
  %v1058 = vperm.slane %v1056, 0
  %v1059 = vperm.slane %v1056, 1
  %v1060 = vperm.slane %v1056, 2
  %v1061 = vperm.slane %v1056, 3
  %v1066 = vmul.f32 %v1053, %v1058
  %v1067 = vmul.f32 %v1051, %v1059
  %v1068 = vmul.f32 %v1049, %v1060
  %v1069 = vmul.f32 %v1047, %v1061
  %v1070 = vmul.f32 %v1054, %v1058
  %v1071 = vmul.f32 %v1052, %v1059
  %v1072 = vmul.f32 %v1050, %v1060
  %v1073 = vmul.f32 %v1048, %v1061
  %v1074 = vpack.c.bf16 %v1067, %v1066
  %v1075 = vpack.c.bf16 %v1069, %v1068
  %v1076 = vpack.c.bf16 %v1071, %v1070
  %v1077 = vpack.c.bf16 %v1073, %v1072
  %1078 = vst [vmem:[#allocation2 + $0x120] sm:$0xff] %v1074
  %1079 = vst [vmem:[#allocation2 + $0x128] sm:$0xff] %v1075
  %1080 = vst [vmem:[#allocation2 + $0x130] sm:$0xff] %v1076
  %1081 = vst [vmem:[#allocation2 + $0x138] sm:$0xff] %v1077
  %1082 = vrot.lane.b32.xlu0 %v455, 2
  %v1083 = vpop.permute.xlu0 %1082
  %1084 = vrot.lane.b32.xlu0 %v515, 2
  %v1085 = vpop.permute.xlu0 %1084
  %1086 = vrot.lane.b32.xlu0 %v470, 2
  %v1087 = vpop.permute.xlu0 %1086
  %1088 = vrot.lane.b32.xlu0 %v530, 2
  %v1089 = vpop.permute.xlu0 %1088
  %1090 = vrot.lane.b32.xlu0 %v485, 2
  %v1091 = vpop.permute.xlu0 %1090
  %1092 = vrot.lane.b32.xlu0 %v545, 2
  %v1093 = vpop.permute.xlu0 %1092
  %1094 = vrot.lane.b32.xlu0 %v500, 2
  %v1095 = vpop.permute.xlu0 %1094
  %1096 = vrot.lane.b32.xlu0 %v560, 2
  %v1097 = vpop.permute.xlu0 %1096
  %vm1098 = vcmp.lt.s32.totalorder %v578, 2
  %v1099 = vsel %vm1098, %v1091, %v1095
  %v1100 = vsel %vm1098, %v1093, %v1097
  %v1101 = vsel %vm1098, %v1087, %v1091
  %v1102 = vsel %vm1098, %v1089, %v1093
  %v1103 = vsel %vm1098, %v1083, %v1087
  %v1104 = vsel %vm1098, %v1085, %v1089
  %v1105 = vsel %vm1098, %v1095, %v1083
  %v1106 = vsel %vm1098, %v1097, %v1085
  %s1107 = scalar_lea.vmem %s3, 40
  %v1108 = vld [vmem:[%s1107] sm:$0xf]
  %v1110 = vperm.slane %v1108, 0
  %v1111 = vperm.slane %v1108, 1
  %v1112 = vperm.slane %v1108, 2
  %v1113 = vperm.slane %v1108, 3
  %v1118 = vmul.f32 %v1105, %v1110
  %v1119 = vmul.f32 %v1103, %v1111
  %v1120 = vmul.f32 %v1101, %v1112
  %v1121 = vmul.f32 %v1099, %v1113
  %v1122 = vmul.f32 %v1106, %v1110
  %v1123 = vmul.f32 %v1104, %v1111
  %v1124 = vmul.f32 %v1102, %v1112
  %v1125 = vmul.f32 %v1100, %v1113
  %v1126 = vpack.c.bf16 %v1119, %v1118
  %v1127 = vpack.c.bf16 %v1121, %v1120
  %v1128 = vpack.c.bf16 %v1123, %v1122
  %v1129 = vpack.c.bf16 %v1125, %v1124
  %1130 = vst [vmem:[#allocation2 + $0x140] sm:$0xff] %v1126
  %1131 = vst [vmem:[#allocation2 + $0x148] sm:$0xff] %v1127
  %1132 = vst [vmem:[#allocation2 + $0x150] sm:$0xff] %v1128
  %1133 = vst [vmem:[#allocation2 + $0x158] sm:$0xff] %v1129
  %1134 = vrot.lane.b32.xlu0 %v455, 1
  %v1135 = vpop.permute.xlu0 %1134
  %1136 = vrot.lane.b32.xlu0 %v515, 1
  %v1137 = vpop.permute.xlu0 %1136
  %1138 = vrot.lane.b32.xlu0 %v470, 1
  %v1139 = vpop.permute.xlu0 %1138
  %1140 = vrot.lane.b32.xlu0 %v530, 1
  %v1141 = vpop.permute.xlu0 %1140
  %1142 = vrot.lane.b32.xlu0 %v485, 1
  %v1143 = vpop.permute.xlu0 %1142
  %1144 = vrot.lane.b32.xlu0 %v545, 1
  %v1145 = vpop.permute.xlu0 %1144
  %1146 = vrot.lane.b32.xlu0 %v500, 1
  %v1147 = vpop.permute.xlu0 %1146
  %1148 = vrot.lane.b32.xlu0 %v560, 1
  %v1149 = vpop.permute.xlu0 %1148
  %vm1150 = vcmp.lt.s32.totalorder %v578, 1
  %v1151 = vsel %vm1150, %v1143, %v1147
  %v1152 = vsel %vm1150, %v1145, %v1149
  %v1153 = vsel %vm1150, %v1139, %v1143
  %v1154 = vsel %vm1150, %v1141, %v1145
  %v1155 = vsel %vm1150, %v1135, %v1139
  %v1156 = vsel %vm1150, %v1137, %v1141
  %v1157 = vsel %vm1150, %v1147, %v1135
  %v1158 = vsel %vm1150, %v1149, %v1137
  %s1159 = scalar_lea.vmem %s3, 44
  %v1160 = vld [vmem:[%s1159] sm:$0xf]
  %v1162 = vperm.slane %v1160, 0
  %v1163 = vperm.slane %v1160, 1
  %v1164 = vperm.slane %v1160, 2
  %v1165 = vperm.slane %v1160, 3
  %v1170 = vmul.f32 %v1157, %v1162
  %v1171 = vmul.f32 %v1155, %v1163
  %v1172 = vmul.f32 %v1153, %v1164
  %v1173 = vmul.f32 %v1151, %v1165
  %v1174 = vmul.f32 %v1158, %v1162
  %v1175 = vmul.f32 %v1156, %v1163
  %v1176 = vmul.f32 %v1154, %v1164
  %v1177 = vmul.f32 %v1152, %v1165
  %v1178 = vpack.c.bf16 %v1171, %v1170
  %v1179 = vpack.c.bf16 %v1173, %v1172
  %v1180 = vpack.c.bf16 %v1175, %v1174
  %v1181 = vpack.c.bf16 %v1177, %v1176
  %1182 = vst [vmem:[#allocation2 + $0x160] sm:$0xff] %v1178
  %1183 = vst [vmem:[#allocation2 + $0x168] sm:$0xff] %v1179
  %1184 = vst [vmem:[#allocation2 + $0x170] sm:$0xff] %v1180
  %1185 = vst [vmem:[#allocation2 + $0x178] sm:$0xff] %v1181
  %s1186 = scalar_lea.vmem %s3, 48
  %v1187 = vld [vmem:[%s1186] sm:$0xf]
  %v1189 = vperm.slane %v1187, 0
  %v1190 = vperm.slane %v1187, 1
  %v1191 = vperm.slane %v1187, 2
  %v1192 = vperm.slane %v1187, 3
  %v1197 = vmul.f32 %v455, %v1189
  %v1198 = vmul.f32 %v470, %v1190
  %v1199 = vmul.f32 %v485, %v1191
  %v1200 = vmul.f32 %v500, %v1192
  %v1201 = vmul.f32 %v515, %v1189
  %v1202 = vmul.f32 %v530, %v1190
  %v1203 = vmul.f32 %v545, %v1191
  %v1204 = vmul.f32 %v560, %v1192
  %v1205 = vpack.c.bf16 %v1198, %v1197
  %v1206 = vpack.c.bf16 %v1200, %v1199
  %v1207 = vpack.c.bf16 %v1202, %v1201
  %v1208 = vpack.c.bf16 %v1204, %v1203
  %1209 = vst [vmem:[#allocation2 + $0x180] sm:$0xff] %v1205
  %1210 = vst [vmem:[#allocation2 + $0x188] sm:$0xff] %v1206
  %1211 = vst [vmem:[#allocation2 + $0x190] sm:$0xff] %v1207
  %1212 = vst [vmem:[#allocation2 + $0x198] sm:$0xff] %v1208
  %1213 = vrot.lane.b32.xlu0 %v455, 127
  %v1214 = vpop.permute.xlu0 %1213
  %1215 = vrot.lane.b32.xlu0 %v515, 127
  %v1216 = vpop.permute.xlu0 %1215
  %1217 = vrot.lane.b32.xlu0 %v470, 127
  %v1218 = vpop.permute.xlu0 %1217
  %1219 = vrot.lane.b32.xlu0 %v530, 127
  %v1220 = vpop.permute.xlu0 %1219
  %1221 = vrot.lane.b32.xlu0 %v485, 127
  %v1222 = vpop.permute.xlu0 %1221
  %1223 = vrot.lane.b32.xlu0 %v545, 127
  %v1224 = vpop.permute.xlu0 %1223
  %1225 = vrot.lane.b32.xlu0 %v500, 127
  %v1226 = vpop.permute.xlu0 %1225
  %1227 = vrot.lane.b32.xlu0 %v560, 127
  %v1228 = vpop.permute.xlu0 %1227
  %vm1229 = vcmp.lt.s32.totalorder %v578, 127
  %v1230 = vsel %vm1229, %v1222, %v1226
  %v1231 = vsel %vm1229, %v1224, %v1228
  %v1232 = vsel %vm1229, %v1218, %v1222
  %v1233 = vsel %vm1229, %v1220, %v1224
  %v1234 = vsel %vm1229, %v1214, %v1218
  %v1235 = vsel %vm1229, %v1216, %v1220
  %v1236 = vsel %vm1229, %v1226, %v1214
  %v1237 = vsel %vm1229, %v1228, %v1216
  %s1238 = scalar_lea.vmem %s3, 52
  %v1239 = vld [vmem:[%s1238] sm:$0xf]
  %v1241 = vperm.slane %v1239, 0
  %v1242 = vperm.slane %v1239, 1
  %v1243 = vperm.slane %v1239, 2
  %v1244 = vperm.slane %v1239, 3
  %v1249 = vmul.f32 %v1234, %v1241
  %v1250 = vmul.f32 %v1232, %v1242
  %v1251 = vmul.f32 %v1230, %v1243
  %v1252 = vmul.f32 %v1236, %v1244
  %v1253 = vmul.f32 %v1235, %v1241
  %v1254 = vmul.f32 %v1233, %v1242
  %v1255 = vmul.f32 %v1231, %v1243
  %v1256 = vmul.f32 %v1237, %v1244
  %v1257 = vpack.c.bf16 %v1250, %v1249
  %v1258 = vpack.c.bf16 %v1252, %v1251
  %v1259 = vpack.c.bf16 %v1254, %v1253
  %v1260 = vpack.c.bf16 %v1256, %v1255
  %1261 = vst [vmem:[#allocation2 + $0x1a0] sm:$0xff] %v1257
  %1262 = vst [vmem:[#allocation2 + $0x1a8] sm:$0xff] %v1258
  %1263 = vst [vmem:[#allocation2 + $0x1b0] sm:$0xff] %v1259
  %1264 = vst [vmem:[#allocation2 + $0x1b8] sm:$0xff] %v1260
  %1265 = vrot.lane.b32.xlu0 %v455, 126
  %v1266 = vpop.permute.xlu0 %1265
  %1267 = vrot.lane.b32.xlu0 %v515, 126
  %v1268 = vpop.permute.xlu0 %1267
  %1269 = vrot.lane.b32.xlu0 %v470, 126
  %v1270 = vpop.permute.xlu0 %1269
  %1271 = vrot.lane.b32.xlu0 %v530, 126
  %v1272 = vpop.permute.xlu0 %1271
  %1273 = vrot.lane.b32.xlu0 %v485, 126
  %v1274 = vpop.permute.xlu0 %1273
  %1275 = vrot.lane.b32.xlu0 %v545, 126
  %v1276 = vpop.permute.xlu0 %1275
  %1277 = vrot.lane.b32.xlu0 %v500, 126
  %v1278 = vpop.permute.xlu0 %1277
  %1279 = vrot.lane.b32.xlu0 %v560, 126
  %v1280 = vpop.permute.xlu0 %1279
  %vm1281 = vcmp.lt.s32.totalorder %v578, 126
  %v1282 = vsel %vm1281, %v1274, %v1278
  %v1283 = vsel %vm1281, %v1276, %v1280
  %v1284 = vsel %vm1281, %v1270, %v1274
  %v1285 = vsel %vm1281, %v1272, %v1276
  %v1286 = vsel %vm1281, %v1266, %v1270
  %v1287 = vsel %vm1281, %v1268, %v1272
  %v1288 = vsel %vm1281, %v1278, %v1266
  %v1289 = vsel %vm1281, %v1280, %v1268
  %s1290 = scalar_lea.vmem %s3, 56
  %v1291 = vld [vmem:[%s1290] sm:$0xf]
  %v1293 = vperm.slane %v1291, 0
  %v1294 = vperm.slane %v1291, 1
  %v1295 = vperm.slane %v1291, 2
  %v1296 = vperm.slane %v1291, 3
  %v1301 = vmul.f32 %v1286, %v1293
  %v1302 = vmul.f32 %v1284, %v1294
  %v1303 = vmul.f32 %v1282, %v1295
  %v1304 = vmul.f32 %v1288, %v1296
  %v1305 = vmul.f32 %v1287, %v1293
  %v1306 = vmul.f32 %v1285, %v1294
  %v1307 = vmul.f32 %v1283, %v1295
  %v1308 = vmul.f32 %v1289, %v1296
  %v1309 = vpack.c.bf16 %v1302, %v1301
  %v1310 = vpack.c.bf16 %v1304, %v1303
  %v1311 = vpack.c.bf16 %v1306, %v1305
  %v1312 = vpack.c.bf16 %v1308, %v1307
  %1313 = vst [vmem:[#allocation2 + $0x1c0] sm:$0xff] %v1309
  %1314 = vst [vmem:[#allocation2 + $0x1c8] sm:$0xff] %v1310
  %1315 = vst [vmem:[#allocation2 + $0x1d0] sm:$0xff] %v1311
  %1316 = vst [vmem:[#allocation2 + $0x1d8] sm:$0xff] %v1312
  %1317 = vrot.lane.b32.xlu0 %v455, 114
  %v1318 = vpop.permute.xlu0 %1317
  %1319 = vrot.lane.b32.xlu0 %v515, 114
  %v1320 = vpop.permute.xlu0 %1319
  %1321 = vrot.lane.b32.xlu0 %v470, 114
  %v1322 = vpop.permute.xlu0 %1321
  %1323 = vrot.lane.b32.xlu0 %v530, 114
  %v1324 = vpop.permute.xlu0 %1323
  %1325 = vrot.lane.b32.xlu0 %v485, 114
  %v1326 = vpop.permute.xlu0 %1325
  %1327 = vrot.lane.b32.xlu0 %v545, 114
  %v1328 = vpop.permute.xlu0 %1327
  %1329 = vrot.lane.b32.xlu0 %v500, 114
  %v1330 = vpop.permute.xlu0 %1329
  %1331 = vrot.lane.b32.xlu0 %v560, 114
  %v1332 = vpop.permute.xlu0 %1331
  %vm1333 = vcmp.lt.s32.totalorder %v578, 114
  %v1334 = vsel %vm1333, %v1326, %v1330
  %v1335 = vsel %vm1333, %v1328, %v1332
  %v1336 = vsel %vm1333, %v1322, %v1326
  %v1337 = vsel %vm1333, %v1324, %v1328
  %v1338 = vsel %vm1333, %v1318, %v1322
  %v1339 = vsel %vm1333, %v1320, %v1324
  %v1340 = vsel %vm1333, %v1330, %v1318
  %v1341 = vsel %vm1333, %v1332, %v1320
  %s1342 = scalar_lea.vmem %s3, 60
  %v1343 = vld [vmem:[%s1342] sm:$0xf]
  %v1345 = vperm.slane %v1343, 0
  %v1346 = vperm.slane %v1343, 1
  %v1347 = vperm.slane %v1343, 2
  %v1348 = vperm.slane %v1343, 3
  %v1353 = vmul.f32 %v1338, %v1345
  %v1354 = vmul.f32 %v1336, %v1346
  %v1355 = vmul.f32 %v1334, %v1347
  %v1356 = vmul.f32 %v1340, %v1348
  %v1357 = vmul.f32 %v1339, %v1345
  %v1358 = vmul.f32 %v1337, %v1346
  %v1359 = vmul.f32 %v1335, %v1347
  %v1360 = vmul.f32 %v1341, %v1348
  %v1361 = vpack.c.bf16 %v1354, %v1353
  %v1362 = vpack.c.bf16 %v1356, %v1355
  %v1363 = vpack.c.bf16 %v1358, %v1357
  %v1364 = vpack.c.bf16 %v1360, %v1359
  %1365 = vst [vmem:[#allocation2 + $0x1e0] sm:$0xff] %v1361
  %1366 = vst [vmem:[#allocation2 + $0x1e8] sm:$0xff] %v1362
  %1367 = vst [vmem:[#allocation2 + $0x1f0] sm:$0xff] %v1363
  %1368 = vst [vmem:[#allocation2 + $0x1f8] sm:$0xff] %v1364
  %1369 = vrot.lane.b32.xlu0 %v455, 113
  %v1370 = vpop.permute.xlu0 %1369
  %1371 = vrot.lane.b32.xlu0 %v515, 113
  %v1372 = vpop.permute.xlu0 %1371
  %1373 = vrot.lane.b32.xlu0 %v470, 113
  %v1374 = vpop.permute.xlu0 %1373
  %1375 = vrot.lane.b32.xlu0 %v530, 113
  %v1376 = vpop.permute.xlu0 %1375
  %1377 = vrot.lane.b32.xlu0 %v485, 113
  %v1378 = vpop.permute.xlu0 %1377
  %1379 = vrot.lane.b32.xlu0 %v545, 113
  %v1380 = vpop.permute.xlu0 %1379
  %1381 = vrot.lane.b32.xlu0 %v500, 113
  %v1382 = vpop.permute.xlu0 %1381
  %1383 = vrot.lane.b32.xlu0 %v560, 113
  %v1384 = vpop.permute.xlu0 %1383
  %vm1385 = vcmp.lt.s32.totalorder %v578, 113
  %v1386 = vsel %vm1385, %v1378, %v1382
  %v1387 = vsel %vm1385, %v1380, %v1384
  %v1388 = vsel %vm1385, %v1374, %v1378
  %v1389 = vsel %vm1385, %v1376, %v1380
  %v1390 = vsel %vm1385, %v1370, %v1374
  %v1391 = vsel %vm1385, %v1372, %v1376
  %v1392 = vsel %vm1385, %v1382, %v1370
  %v1393 = vsel %vm1385, %v1384, %v1372
  %s1394 = scalar_lea.vmem %s3, 64
  %v1395 = vld [vmem:[%s1394] sm:$0xf]
  %v1397 = vperm.slane %v1395, 0
  %v1398 = vperm.slane %v1395, 1
  %v1399 = vperm.slane %v1395, 2
  %v1400 = vperm.slane %v1395, 3
  %v1405 = vmul.f32 %v1390, %v1397
  %v1406 = vmul.f32 %v1388, %v1398
  %v1407 = vmul.f32 %v1386, %v1399
  %v1408 = vmul.f32 %v1392, %v1400
  %v1409 = vmul.f32 %v1391, %v1397
  %v1410 = vmul.f32 %v1389, %v1398
  %v1411 = vmul.f32 %v1387, %v1399
  %v1412 = vmul.f32 %v1393, %v1400
  %v1413 = vpack.c.bf16 %v1406, %v1405
  %v1414 = vpack.c.bf16 %v1408, %v1407
  %v1415 = vpack.c.bf16 %v1410, %v1409
  %v1416 = vpack.c.bf16 %v1412, %v1411
  %1417 = vst [vmem:[#allocation2 + $0x200] sm:$0xff] %v1413
  %1418 = vst [vmem:[#allocation2 + $0x208] sm:$0xff] %v1414
  %1419 = vst [vmem:[#allocation2 + $0x210] sm:$0xff] %v1415
  %1420 = vst [vmem:[#allocation2 + $0x218] sm:$0xff] %v1416
  %1421 = vrot.lane.b32.xlu0 %v455, 112
  %v1422 = vpop.permute.xlu0 %1421
  %1423 = vrot.lane.b32.xlu0 %v515, 112
  %v1424 = vpop.permute.xlu0 %1423
  %1425 = vrot.lane.b32.xlu0 %v470, 112
  %v1426 = vpop.permute.xlu0 %1425
  %1427 = vrot.lane.b32.xlu0 %v530, 112
  %v1428 = vpop.permute.xlu0 %1427
  %1429 = vrot.lane.b32.xlu0 %v485, 112
  %v1430 = vpop.permute.xlu0 %1429
  %1431 = vrot.lane.b32.xlu0 %v545, 112
  %v1432 = vpop.permute.xlu0 %1431
  %1433 = vrot.lane.b32.xlu0 %v500, 112
  %v1434 = vpop.permute.xlu0 %1433
  %1435 = vrot.lane.b32.xlu0 %v560, 112
  %v1436 = vpop.permute.xlu0 %1435
  %vm1437 = vcmp.lt.s32.totalorder %v578, 112
  %v1438 = vsel %vm1437, %v1430, %v1434
  %v1439 = vsel %vm1437, %v1432, %v1436
  %v1440 = vsel %vm1437, %v1426, %v1430
  %v1441 = vsel %vm1437, %v1428, %v1432
  %v1442 = vsel %vm1437, %v1422, %v1426
  %v1443 = vsel %vm1437, %v1424, %v1428
  %v1444 = vsel %vm1437, %v1434, %v1422
  %v1445 = vsel %vm1437, %v1436, %v1424
  %s1446 = scalar_lea.vmem %s3, 68
  %v1447 = vld [vmem:[%s1446] sm:$0xf]
  %v1449 = vperm.slane %v1447, 0
  %v1450 = vperm.slane %v1447, 1
  %v1451 = vperm.slane %v1447, 2
  %v1452 = vperm.slane %v1447, 3
  %v1457 = vmul.f32 %v1442, %v1449
  %v1458 = vmul.f32 %v1440, %v1450
  %v1459 = vmul.f32 %v1438, %v1451
  %v1460 = vmul.f32 %v1444, %v1452
  %v1461 = vmul.f32 %v1443, %v1449
  %v1462 = vmul.f32 %v1441, %v1450
  %v1463 = vmul.f32 %v1439, %v1451
  %v1464 = vmul.f32 %v1445, %v1452
  %v1465 = vpack.c.bf16 %v1458, %v1457
  %v1466 = vpack.c.bf16 %v1460, %v1459
  %v1467 = vpack.c.bf16 %v1462, %v1461
  %v1468 = vpack.c.bf16 %v1464, %v1463
  %1469 = vst [vmem:[#allocation2 + $0x220] sm:$0xff] %v1465
  %1470 = vst [vmem:[#allocation2 + $0x228] sm:$0xff] %v1466
  %1471 = vst [vmem:[#allocation2 + $0x230] sm:$0xff] %v1467
  %1472 = vst [vmem:[#allocation2 + $0x238] sm:$0xff] %v1468
  %1473 = vrot.lane.b32.xlu0 %v455, 111
  %v1474 = vpop.permute.xlu0 %1473
  %1475 = vrot.lane.b32.xlu0 %v515, 111
  %v1476 = vpop.permute.xlu0 %1475
  %1477 = vrot.lane.b32.xlu0 %v470, 111
  %v1478 = vpop.permute.xlu0 %1477
  %1479 = vrot.lane.b32.xlu0 %v530, 111
  %v1480 = vpop.permute.xlu0 %1479
  %1481 = vrot.lane.b32.xlu0 %v485, 111
  %v1482 = vpop.permute.xlu0 %1481
  %1483 = vrot.lane.b32.xlu0 %v545, 111
  %v1484 = vpop.permute.xlu0 %1483
  %1485 = vrot.lane.b32.xlu0 %v500, 111
  %v1486 = vpop.permute.xlu0 %1485
  %1487 = vrot.lane.b32.xlu0 %v560, 111
  %v1488 = vpop.permute.xlu0 %1487
  %vm1489 = vcmp.lt.s32.totalorder %v578, 111
  %v1490 = vsel %vm1489, %v1482, %v1486
  %v1491 = vsel %vm1489, %v1484, %v1488
  %v1492 = vsel %vm1489, %v1478, %v1482
  %v1493 = vsel %vm1489, %v1480, %v1484
  %v1494 = vsel %vm1489, %v1474, %v1478
  %v1495 = vsel %vm1489, %v1476, %v1480
  %v1496 = vsel %vm1489, %v1486, %v1474
  %v1497 = vsel %vm1489, %v1488, %v1476
  %s1498 = scalar_lea.vmem %s3, 72
  %v1499 = vld [vmem:[%s1498] sm:$0xf]
  %v1501 = vperm.slane %v1499, 0
  %v1502 = vperm.slane %v1499, 1
  %v1503 = vperm.slane %v1499, 2
  %v1504 = vperm.slane %v1499, 3
  %v1509 = vmul.f32 %v1494, %v1501
  %v1510 = vmul.f32 %v1492, %v1502
  %v1511 = vmul.f32 %v1490, %v1503
  %v1512 = vmul.f32 %v1496, %v1504
  %v1513 = vmul.f32 %v1495, %v1501
  %v1514 = vmul.f32 %v1493, %v1502
  %v1515 = vmul.f32 %v1491, %v1503
  %v1516 = vmul.f32 %v1497, %v1504
  %v1517 = vpack.c.bf16 %v1510, %v1509
  %v1518 = vpack.c.bf16 %v1512, %v1511
  %v1519 = vpack.c.bf16 %v1514, %v1513
  %v1520 = vpack.c.bf16 %v1516, %v1515
  %1521 = vst [vmem:[#allocation2 + $0x240] sm:$0xff] %v1517
  %1522 = vst [vmem:[#allocation2 + $0x248] sm:$0xff] %v1518
  %1523 = vst [vmem:[#allocation2 + $0x250] sm:$0xff] %v1519
  %1524 = vst [vmem:[#allocation2 + $0x258] sm:$0xff] %v1520
  %1525 = vrot.lane.b32.xlu0 %v455, 110
  %v1526 = vpop.permute.xlu0 %1525
  %1527 = vrot.lane.b32.xlu0 %v515, 110
  %v1528 = vpop.permute.xlu0 %1527
  %1529 = vrot.lane.b32.xlu0 %v470, 110
  %v1530 = vpop.permute.xlu0 %1529
  %1531 = vrot.lane.b32.xlu0 %v530, 110
  %v1532 = vpop.permute.xlu0 %1531
  %1533 = vrot.lane.b32.xlu0 %v485, 110
  %v1534 = vpop.permute.xlu0 %1533
  %1535 = vrot.lane.b32.xlu0 %v545, 110
  %v1536 = vpop.permute.xlu0 %1535
  %1537 = vrot.lane.b32.xlu0 %v500, 110
  %v1538 = vpop.permute.xlu0 %1537
  %1539 = vrot.lane.b32.xlu0 %v560, 110
  %v1540 = vpop.permute.xlu0 %1539
  %vm1541 = vcmp.lt.s32.totalorder %v578, 110
  %v1542 = vsel %vm1541, %v1534, %v1538
  %v1543 = vsel %vm1541, %v1536, %v1540
  %v1544 = vsel %vm1541, %v1530, %v1534
  %v1545 = vsel %vm1541, %v1532, %v1536
  %v1546 = vsel %vm1541, %v1526, %v1530
  %v1547 = vsel %vm1541, %v1528, %v1532
  %v1548 = vsel %vm1541, %v1538, %v1526
  %v1549 = vsel %vm1541, %v1540, %v1528
  %s1550 = scalar_lea.vmem %s3, 76
  %v1551 = vld [vmem:[%s1550] sm:$0xf]
  %v1553 = vperm.slane %v1551, 0
  %v1554 = vperm.slane %v1551, 1
  %v1555 = vperm.slane %v1551, 2
  %v1556 = vperm.slane %v1551, 3
  %v1561 = vmul.f32 %v1546, %v1553
  %v1562 = vmul.f32 %v1544, %v1554
  %v1563 = vmul.f32 %v1542, %v1555
  %v1564 = vmul.f32 %v1548, %v1556
  %v1565 = vmul.f32 %v1547, %v1553
  %v1566 = vmul.f32 %v1545, %v1554
  %v1567 = vmul.f32 %v1543, %v1555
  %v1568 = vmul.f32 %v1549, %v1556
  %v1569 = vpack.c.bf16 %v1562, %v1561
  %v1570 = vpack.c.bf16 %v1564, %v1563
  %v1571 = vpack.c.bf16 %v1566, %v1565
  %v1572 = vpack.c.bf16 %v1568, %v1567
  %1573 = vst [vmem:[#allocation2 + $0x260] sm:$0xff] %v1569
  %1574 = vst [vmem:[#allocation2 + $0x268] sm:$0xff] %v1570
  %1575 = vst [vmem:[#allocation2 + $0x270] sm:$0xff] %v1571
  %1576 = vst [vmem:[#allocation2 + $0x278] sm:$0xff] %v1572
  %1577 = vrot.lane.b32.xlu0 %v455, 98
  %v1578 = vpop.permute.xlu0 %1577
  %1579 = vrot.lane.b32.xlu0 %v515, 98
  %v1580 = vpop.permute.xlu0 %1579
  %1581 = vrot.lane.b32.xlu0 %v470, 98
  %v1582 = vpop.permute.xlu0 %1581
  %1583 = vrot.lane.b32.xlu0 %v530, 98
  %v1584 = vpop.permute.xlu0 %1583
  %1585 = vrot.lane.b32.xlu0 %v485, 98
  %v1586 = vpop.permute.xlu0 %1585
  %1587 = vrot.lane.b32.xlu0 %v545, 98
  %v1588 = vpop.permute.xlu0 %1587
  %1589 = vrot.lane.b32.xlu0 %v500, 98
  %v1590 = vpop.permute.xlu0 %1589
  %1591 = vrot.lane.b32.xlu0 %v560, 98
  %v1592 = vpop.permute.xlu0 %1591
  %vm1593 = vcmp.lt.s32.totalorder %v578, 98
  %v1594 = vsel %vm1593, %v1586, %v1590
  %v1595 = vsel %vm1593, %v1588, %v1592
  %v1596 = vsel %vm1593, %v1582, %v1586
  %v1597 = vsel %vm1593, %v1584, %v1588
  %v1598 = vsel %vm1593, %v1578, %v1582
  %v1599 = vsel %vm1593, %v1580, %v1584
  %v1600 = vsel %vm1593, %v1590, %v1578
  %v1601 = vsel %vm1593, %v1592, %v1580
  %s1602 = scalar_lea.vmem %s3, 80
  %v1603 = vld [vmem:[%s1602] sm:$0xf]
  %v1605 = vperm.slane %v1603, 0
  %v1606 = vperm.slane %v1603, 1
  %v1607 = vperm.slane %v1603, 2
  %v1608 = vperm.slane %v1603, 3
  %v1613 = vmul.f32 %v1598, %v1605
  %v1614 = vmul.f32 %v1596, %v1606
  %v1615 = vmul.f32 %v1594, %v1607
  %v1616 = vmul.f32 %v1600, %v1608
  %v1617 = vmul.f32 %v1599, %v1605
  %v1618 = vmul.f32 %v1597, %v1606
  %v1619 = vmul.f32 %v1595, %v1607
  %v1620 = vmul.f32 %v1601, %v1608
  %v1621 = vpack.c.bf16 %v1614, %v1613
  %v1622 = vpack.c.bf16 %v1616, %v1615
  %v1623 = vpack.c.bf16 %v1618, %v1617
  %v1624 = vpack.c.bf16 %v1620, %v1619
  %1625 = vst [vmem:[#allocation2 + $0x280] sm:$0xff] %v1621
  %1626 = vst [vmem:[#allocation2 + $0x288] sm:$0xff] %v1622
  %1627 = vst [vmem:[#allocation2 + $0x290] sm:$0xff] %v1623
  %1628 = vst [vmem:[#allocation2 + $0x298] sm:$0xff] %v1624
  %1629 = vrot.lane.b32.xlu0 %v455, 97
  %v1630 = vpop.permute.xlu0 %1629
  %1631 = vrot.lane.b32.xlu0 %v515, 97
  %v1632 = vpop.permute.xlu0 %1631
  %1633 = vrot.lane.b32.xlu0 %v470, 97
  %v1634 = vpop.permute.xlu0 %1633
  %1635 = vrot.lane.b32.xlu0 %v530, 97
  %v1636 = vpop.permute.xlu0 %1635
  %1637 = vrot.lane.b32.xlu0 %v485, 97
  %v1638 = vpop.permute.xlu0 %1637
  %1639 = vrot.lane.b32.xlu0 %v545, 97
  %v1640 = vpop.permute.xlu0 %1639
  %1641 = vrot.lane.b32.xlu0 %v500, 97
  %v1642 = vpop.permute.xlu0 %1641
  %1643 = vrot.lane.b32.xlu0 %v560, 97
  %v1644 = vpop.permute.xlu0 %1643
  %vm1645 = vcmp.lt.s32.totalorder %v578, 97
  %v1646 = vsel %vm1645, %v1638, %v1642
  %v1647 = vsel %vm1645, %v1640, %v1644
  %v1648 = vsel %vm1645, %v1634, %v1638
  %v1649 = vsel %vm1645, %v1636, %v1640
  %v1650 = vsel %vm1645, %v1630, %v1634
  %v1651 = vsel %vm1645, %v1632, %v1636
  %v1652 = vsel %vm1645, %v1642, %v1630
  %v1653 = vsel %vm1645, %v1644, %v1632
  %s1654 = scalar_lea.vmem %s3, 84
  %v1655 = vld [vmem:[%s1654] sm:$0xf]
  %v1657 = vperm.slane %v1655, 0
  %v1658 = vperm.slane %v1655, 1
  %v1659 = vperm.slane %v1655, 2
  %v1660 = vperm.slane %v1655, 3
  %v1665 = vmul.f32 %v1650, %v1657
  %v1666 = vmul.f32 %v1648, %v1658
  %v1667 = vmul.f32 %v1646, %v1659
  %v1668 = vmul.f32 %v1652, %v1660
  %v1669 = vmul.f32 %v1651, %v1657
  %v1670 = vmul.f32 %v1649, %v1658
  %v1671 = vmul.f32 %v1647, %v1659
  %v1672 = vmul.f32 %v1653, %v1660
  %v1673 = vpack.c.bf16 %v1666, %v1665
  %v1674 = vpack.c.bf16 %v1668, %v1667
  %v1675 = vpack.c.bf16 %v1670, %v1669
  %v1676 = vpack.c.bf16 %v1672, %v1671
  %1677 = vst [vmem:[#allocation2 + $0x2a0] sm:$0xff] %v1673
  %1678 = vst [vmem:[#allocation2 + $0x2a8] sm:$0xff] %v1674
  %1679 = vst [vmem:[#allocation2 + $0x2b0] sm:$0xff] %v1675
  %1680 = vst [vmem:[#allocation2 + $0x2b8] sm:$0xff] %v1676
  %1681 = vrot.lane.b32.xlu0 %v455, 96
  %v1682 = vpop.permute.xlu0 %1681
  %1683 = vrot.lane.b32.xlu0 %v515, 96
  %v1684 = vpop.permute.xlu0 %1683
  %1685 = vrot.lane.b32.xlu0 %v470, 96
  %v1686 = vpop.permute.xlu0 %1685
  %1687 = vrot.lane.b32.xlu0 %v530, 96
  %v1688 = vpop.permute.xlu0 %1687
  %1689 = vrot.lane.b32.xlu0 %v485, 96
  %v1690 = vpop.permute.xlu0 %1689
  %1691 = vrot.lane.b32.xlu0 %v545, 96
  %v1692 = vpop.permute.xlu0 %1691
  %1693 = vrot.lane.b32.xlu0 %v500, 96
  %v1694 = vpop.permute.xlu0 %1693
  %1695 = vrot.lane.b32.xlu0 %v560, 96
  %v1696 = vpop.permute.xlu0 %1695
  %vm1697 = vcmp.lt.s32.totalorder %v578, 96
  %v1698 = vsel %vm1697, %v1690, %v1694
  %v1699 = vsel %vm1697, %v1692, %v1696
  %v1700 = vsel %vm1697, %v1686, %v1690
  %v1701 = vsel %vm1697, %v1688, %v1692
  %v1702 = vsel %vm1697, %v1682, %v1686
  %v1703 = vsel %vm1697, %v1684, %v1688
  %v1704 = vsel %vm1697, %v1694, %v1682
  %v1705 = vsel %vm1697, %v1696, %v1684
  %s1706 = scalar_lea.vmem %s3, 88
  %v1707 = vld [vmem:[%s1706] sm:$0xf]
  %v1709 = vperm.slane %v1707, 0
  %v1710 = vperm.slane %v1707, 1
  %v1711 = vperm.slane %v1707, 2
  %v1712 = vperm.slane %v1707, 3
  %v1717 = vmul.f32 %v1702, %v1709
  %v1718 = vmul.f32 %v1700, %v1710
  %v1719 = vmul.f32 %v1698, %v1711
  %v1720 = vmul.f32 %v1704, %v1712
  %v1721 = vmul.f32 %v1703, %v1709
  %v1722 = vmul.f32 %v1701, %v1710
  %v1723 = vmul.f32 %v1699, %v1711
  %v1724 = vmul.f32 %v1705, %v1712
  %v1725 = vpack.c.bf16 %v1718, %v1717
  %v1726 = vpack.c.bf16 %v1720, %v1719
  %v1727 = vpack.c.bf16 %v1722, %v1721
  %v1728 = vpack.c.bf16 %v1724, %v1723
  %1729 = vst [vmem:[#allocation2 + $0x2c0] sm:$0xff] %v1725
  %1730 = vst [vmem:[#allocation2 + $0x2c8] sm:$0xff] %v1726
  %1731 = vst [vmem:[#allocation2 + $0x2d0] sm:$0xff] %v1727
  %1732 = vst [vmem:[#allocation2 + $0x2d8] sm:$0xff] %v1728
  %1733 = vrot.lane.b32.xlu0 %v455, 95
  %v1734 = vpop.permute.xlu0 %1733
  %1735 = vrot.lane.b32.xlu0 %v515, 95
  %v1736 = vpop.permute.xlu0 %1735
  %1737 = vrot.lane.b32.xlu0 %v470, 95
  %v1738 = vpop.permute.xlu0 %1737
  %1739 = vrot.lane.b32.xlu0 %v530, 95
  %v1740 = vpop.permute.xlu0 %1739
  %1741 = vrot.lane.b32.xlu0 %v485, 95
  %v1742 = vpop.permute.xlu0 %1741
  %1743 = vrot.lane.b32.xlu0 %v545, 95
  %v1744 = vpop.permute.xlu0 %1743
  %1745 = vrot.lane.b32.xlu0 %v500, 95
  %v1746 = vpop.permute.xlu0 %1745
  %1747 = vrot.lane.b32.xlu0 %v560, 95
  %v1748 = vpop.permute.xlu0 %1747
  %vm1749 = vcmp.lt.s32.totalorder %v578, 95
  %v1750 = vsel %vm1749, %v1742, %v1746
  %v1751 = vsel %vm1749, %v1744, %v1748
  %v1752 = vsel %vm1749, %v1738, %v1742
  %v1753 = vsel %vm1749, %v1740, %v1744
  %v1754 = vsel %vm1749, %v1734, %v1738
  %v1755 = vsel %vm1749, %v1736, %v1740
  %v1756 = vsel %vm1749, %v1746, %v1734
  %v1757 = vsel %vm1749, %v1748, %v1736
  %s1758 = scalar_lea.vmem %s3, 92
  %v1759 = vld [vmem:[%s1758] sm:$0xf]
  %v1761 = vperm.slane %v1759, 0
  %v1762 = vperm.slane %v1759, 1
  %v1763 = vperm.slane %v1759, 2
  %v1764 = vperm.slane %v1759, 3
  %v1769 = vmul.f32 %v1754, %v1761
  %v1770 = vmul.f32 %v1752, %v1762
  %v1771 = vmul.f32 %v1750, %v1763
  %v1772 = vmul.f32 %v1756, %v1764
  %v1773 = vmul.f32 %v1755, %v1761
  %v1774 = vmul.f32 %v1753, %v1762
  %v1775 = vmul.f32 %v1751, %v1763
  %v1776 = vmul.f32 %v1757, %v1764
  %v1777 = vpack.c.bf16 %v1770, %v1769
  %v1778 = vpack.c.bf16 %v1772, %v1771
  %v1779 = vpack.c.bf16 %v1774, %v1773
  %v1780 = vpack.c.bf16 %v1776, %v1775
  %1781 = vst [vmem:[#allocation2 + $0x2e0] sm:$0xff] %v1777
  %1782 = vst [vmem:[#allocation2 + $0x2e8] sm:$0xff] %v1778
  %1783 = vst [vmem:[#allocation2 + $0x2f0] sm:$0xff] %v1779
  %1784 = vst [vmem:[#allocation2 + $0x2f8] sm:$0xff] %v1780
  %1785 = vrot.lane.b32.xlu0 %v455, 94
  %v1786 = vpop.permute.xlu0 %1785
  %1787 = vrot.lane.b32.xlu0 %v515, 94
  %v1788 = vpop.permute.xlu0 %1787
  %1789 = vrot.lane.b32.xlu0 %v470, 94
  %v1790 = vpop.permute.xlu0 %1789
  %1791 = vrot.lane.b32.xlu0 %v530, 94
  %v1792 = vpop.permute.xlu0 %1791
  %1793 = vrot.lane.b32.xlu0 %v485, 94
  %v1794 = vpop.permute.xlu0 %1793
  %1795 = vrot.lane.b32.xlu0 %v545, 94
  %v1796 = vpop.permute.xlu0 %1795
  %1797 = vrot.lane.b32.xlu0 %v500, 94
  %v1798 = vpop.permute.xlu0 %1797
  %1799 = vrot.lane.b32.xlu0 %v560, 94
  %v1800 = vpop.permute.xlu0 %1799
  %vm1801 = vcmp.lt.s32.totalorder %v578, 94
  %v1802 = vsel %vm1801, %v1794, %v1798
  %v1803 = vsel %vm1801, %v1796, %v1800
  %v1804 = vsel %vm1801, %v1790, %v1794
  %v1805 = vsel %vm1801, %v1792, %v1796
  %v1806 = vsel %vm1801, %v1786, %v1790
  %v1807 = vsel %vm1801, %v1788, %v1792
  %v1808 = vsel %vm1801, %v1798, %v1786
  %v1809 = vsel %vm1801, %v1800, %v1788
  %s1810 = scalar_lea.vmem %s3, 96
  %v1811 = vld [vmem:[%s1810] sm:$0xf]
  %v1813 = vperm.slane %v1811, 0
  %v1814 = vperm.slane %v1811, 1
  %v1815 = vperm.slane %v1811, 2
  %v1816 = vperm.slane %v1811, 3
  %v1821 = vmul.f32 %v1806, %v1813
  %v1822 = vmul.f32 %v1804, %v1814
  %v1823 = vmul.f32 %v1802, %v1815
  %v1824 = vmul.f32 %v1808, %v1816
  %v1825 = vmul.f32 %v1807, %v1813
  %v1826 = vmul.f32 %v1805, %v1814
  %v1827 = vmul.f32 %v1803, %v1815
  %v1828 = vmul.f32 %v1809, %v1816
  %v1829 = vpack.c.bf16 %v1822, %v1821
  %v1830 = vpack.c.bf16 %v1824, %v1823
  %v1831 = vpack.c.bf16 %v1826, %v1825
  %v1832 = vpack.c.bf16 %v1828, %v1827
  %1833 = vst [vmem:[#allocation2 + $0x300] sm:$0xff] %v1829
  %1834 = vst [vmem:[#allocation2 + $0x308] sm:$0xff] %v1830
  %1835 = vst [vmem:[#allocation2 + $0x310] sm:$0xff] %v1831
  %1836 = vst [vmem:[#allocation2 + $0x318] sm:$0xff] %v1832
  %v1837 = vld [vmem:[%s2] sm:$0xff]
  %v1838 = vld [vmem:[%s2 + $0x8] sm:$0xff]
  %v1839 = vld [vmem:[%s2 + $0x10] sm:$0xff]
  %v1840 = vld [vmem:[%s2 + $0x18] sm:$0xff]
  %v1841 = vld [vmem:[#allocation2] sm:$0xff]
  %v1842 = vld [vmem:[#allocation2 + $0x8] sm:$0xff]
  %v1843 = vld [vmem:[#allocation2 + $0x10] sm:$0xff]
  %v1844 = vld [vmem:[#allocation2 + $0x18] sm:$0xff]
  %v1845 = vld [vmem:[#allocation2 + $0x20] sm:$0xff]
  %v1846 = vld [vmem:[#allocation2 + $0x28] sm:$0xff]
  %v1847 = vld [vmem:[#allocation2 + $0x30] sm:$0xff]
  %v1848 = vld [vmem:[#allocation2 + $0x38] sm:$0xff]
  %v1849 = vld [vmem:[#allocation2 + $0x40] sm:$0xff]
  %v1850 = vld [vmem:[#allocation2 + $0x48] sm:$0xff]
  %v1851 = vld [vmem:[#allocation2 + $0x50] sm:$0xff]
  %v1852 = vld [vmem:[#allocation2 + $0x58] sm:$0xff]
  %v1853 = vld [vmem:[#allocation2 + $0x60] sm:$0xff]
  %v1854 = vld [vmem:[#allocation2 + $0x68] sm:$0xff]
  %v1855 = vld [vmem:[#allocation2 + $0x70] sm:$0xff]
  %v1856 = vld [vmem:[#allocation2 + $0x78] sm:$0xff]
  %v1857 = vld [vmem:[#allocation2 + $0x80] sm:$0xff]
  %v1858 = vld [vmem:[#allocation2 + $0x88] sm:$0xff]
  %v1859 = vld [vmem:[#allocation2 + $0x90] sm:$0xff]
  %v1860 = vld [vmem:[#allocation2 + $0x98] sm:$0xff]
  %v1861 = vld [vmem:[#allocation2 + $0xa0] sm:$0xff]
  %v1862 = vld [vmem:[#allocation2 + $0xa8] sm:$0xff]
  %v1863 = vld [vmem:[#allocation2 + $0xb0] sm:$0xff]
  %v1864 = vld [vmem:[#allocation2 + $0xb8] sm:$0xff]
  %v1865 = vld [vmem:[#allocation2 + $0xc0] sm:$0xff]
  %v1866 = vld [vmem:[#allocation2 + $0xc8] sm:$0xff]
  %v1867 = vld [vmem:[#allocation2 + $0xd0] sm:$0xff]
  %v1868 = vld [vmem:[#allocation2 + $0xd8] sm:$0xff]
  %v1869 = vld [vmem:[#allocation2 + $0xe0] sm:$0xff]
  %v1870 = vld [vmem:[#allocation2 + $0xe8] sm:$0xff]
  %v1871 = vld [vmem:[#allocation2 + $0xf0] sm:$0xff]
  %v1872 = vld [vmem:[#allocation2 + $0xf8] sm:$0xff]
  %v1873 = vld [vmem:[#allocation2 + $0x100] sm:$0xff]
  %v1874 = vld [vmem:[#allocation2 + $0x108] sm:$0xff]
  %v1875 = vld [vmem:[#allocation2 + $0x110] sm:$0xff]
  %v1876 = vld [vmem:[#allocation2 + $0x118] sm:$0xff]
  %v1877 = vld [vmem:[#allocation2 + $0x120] sm:$0xff]
  %v1878 = vld [vmem:[#allocation2 + $0x128] sm:$0xff]
  %v1879 = vld [vmem:[#allocation2 + $0x130] sm:$0xff]
  %v1880 = vld [vmem:[#allocation2 + $0x138] sm:$0xff]
  %v1881 = vld [vmem:[#allocation2 + $0x140] sm:$0xff]
  %v1882 = vld [vmem:[#allocation2 + $0x148] sm:$0xff]
  %v1883 = vld [vmem:[#allocation2 + $0x150] sm:$0xff]
  %v1884 = vld [vmem:[#allocation2 + $0x158] sm:$0xff]
  %v1885 = vld [vmem:[#allocation2 + $0x160] sm:$0xff]
  %v1886 = vld [vmem:[#allocation2 + $0x168] sm:$0xff]
  %v1887 = vld [vmem:[#allocation2 + $0x170] sm:$0xff]
  %v1888 = vld [vmem:[#allocation2 + $0x178] sm:$0xff]
  %v1889 = vld [vmem:[#allocation2 + $0x180] sm:$0xff]
  %v1890 = vld [vmem:[#allocation2 + $0x188] sm:$0xff]
  %v1891 = vld [vmem:[#allocation2 + $0x190] sm:$0xff]
  %v1892 = vld [vmem:[#allocation2 + $0x198] sm:$0xff]
  %v1893 = vld [vmem:[#allocation2 + $0x1a0] sm:$0xff]
  %v1894 = vld [vmem:[#allocation2 + $0x1a8] sm:$0xff]
  %v1895 = vld [vmem:[#allocation2 + $0x1b0] sm:$0xff]
  %v1896 = vld [vmem:[#allocation2 + $0x1b8] sm:$0xff]
  %v1897 = vld [vmem:[#allocation2 + $0x1c0] sm:$0xff]
  %v1898 = vld [vmem:[#allocation2 + $0x1c8] sm:$0xff]
  %v1899 = vld [vmem:[#allocation2 + $0x1d0] sm:$0xff]
  %v1900 = vld [vmem:[#allocation2 + $0x1d8] sm:$0xff]
  %v1901 = vld [vmem:[#allocation2 + $0x1e0] sm:$0xff]
  %v1902 = vld [vmem:[#allocation2 + $0x1e8] sm:$0xff]
  %v1903 = vld [vmem:[#allocation2 + $0x1f0] sm:$0xff]
  %v1904 = vld [vmem:[#allocation2 + $0x1f8] sm:$0xff]
  %v1905 = vld [vmem:[#allocation2 + $0x200] sm:$0xff]
  %v1906 = vld [vmem:[#allocation2 + $0x208] sm:$0xff]
  %v1907 = vld [vmem:[#allocation2 + $0x210] sm:$0xff]
  %v1908 = vld [vmem:[#allocation2 + $0x218] sm:$0xff]
  %v1909 = vld [vmem:[#allocation2 + $0x220] sm:$0xff]
  %v1910 = vld [vmem:[#allocation2 + $0x228] sm:$0xff]
  %v1911 = vld [vmem:[#allocation2 + $0x230] sm:$0xff]
  %v1912 = vld [vmem:[#allocation2 + $0x238] sm:$0xff]
  %v1913 = vld [vmem:[#allocation2 + $0x240] sm:$0xff]
  %v1914 = vld [vmem:[#allocation2 + $0x248] sm:$0xff]
  %v1915 = vld [vmem:[#allocation2 + $0x250] sm:$0xff]
  %v1916 = vld [vmem:[#allocation2 + $0x258] sm:$0xff]
  %v1917 = vld [vmem:[#allocation2 + $0x260] sm:$0xff]
  %v1918 = vld [vmem:[#allocation2 + $0x268] sm:$0xff]
  %v1919 = vld [vmem:[#allocation2 + $0x270] sm:$0xff]
  %v1920 = vld [vmem:[#allocation2 + $0x278] sm:$0xff]
  %v1921 = vld [vmem:[#allocation2 + $0x280] sm:$0xff]
  %v1922 = vld [vmem:[#allocation2 + $0x288] sm:$0xff]
  %v1923 = vld [vmem:[#allocation2 + $0x290] sm:$0xff]
  %v1924 = vld [vmem:[#allocation2 + $0x298] sm:$0xff]
  %v1925 = vld [vmem:[#allocation2 + $0x2a0] sm:$0xff]
  %v1926 = vld [vmem:[#allocation2 + $0x2a8] sm:$0xff]
  %v1927 = vld [vmem:[#allocation2 + $0x2b0] sm:$0xff]
  %v1928 = vld [vmem:[#allocation2 + $0x2b8] sm:$0xff]
  %v1929 = vld [vmem:[#allocation2 + $0x2c0] sm:$0xff]
  %v1930 = vld [vmem:[#allocation2 + $0x2c8] sm:$0xff]
  %v1931 = vld [vmem:[#allocation2 + $0x2d0] sm:$0xff]
  %v1932 = vld [vmem:[#allocation2 + $0x2d8] sm:$0xff]
  %v1933 = vld [vmem:[#allocation2 + $0x2e0] sm:$0xff]
  %v1934 = vld [vmem:[#allocation2 + $0x2e8] sm:$0xff]
  %v1935 = vld [vmem:[#allocation2 + $0x2f0] sm:$0xff]
  %v1936 = vld [vmem:[#allocation2 + $0x2f8] sm:$0xff]
  %v1937 = vld [vmem:[#allocation2 + $0x300] sm:$0xff]
  %v1938 = vld [vmem:[#allocation2 + $0x308] sm:$0xff]
  %v1939 = vld [vmem:[#allocation2 + $0x310] sm:$0xff]
  %v1940 = vld [vmem:[#allocation2 + $0x318] sm:$0xff]
  %v1945 = vunpack.c.l.b16 %v1837
  %v1946 = vunpack.c.h.b16 %v1837
  %v1947 = vunpack.c.l.b16 %v1838
  %v1948 = vunpack.c.h.b16 %v1838
  %v1949 = vunpack.c.l.b16 %v1839
  %v1950 = vunpack.c.h.b16 %v1839
  %v1951 = vunpack.c.l.b16 %v1840
  %v1952 = vunpack.c.h.b16 %v1840
  %v1953 = vpack.c.b16 %v1949, %v1945
  %v1954 = vpack.c.b16 %v1950, %v1946
  %v1955 = vpack.c.b16 %v1951, %v1947
  %v1956 = vpack.c.b16 %v1952, %v1948
  %v2060 = vunpack.c.l.b16 %v1841
  %v2061 = vunpack.c.h.b16 %v1841
  %v2062 = vunpack.c.l.b16 %v1842
  %v2063 = vunpack.c.h.b16 %v1842
  %v2064 = vunpack.c.l.b16 %v1843
  %v2065 = vunpack.c.h.b16 %v1843
  %v2066 = vunpack.c.l.b16 %v1844
  %v2067 = vunpack.c.h.b16 %v1844
  %v2068 = vunpack.c.l.b16 %v1845
  %v2069 = vunpack.c.h.b16 %v1845
  %v2070 = vunpack.c.l.b16 %v1846
  %v2071 = vunpack.c.h.b16 %v1846
  %v2072 = vunpack.c.l.b16 %v1847
  %v2073 = vunpack.c.h.b16 %v1847
  %v2074 = vunpack.c.l.b16 %v1848
  %v2075 = vunpack.c.h.b16 %v1848
  %v2076 = vunpack.c.l.b16 %v1849
  %v2077 = vunpack.c.h.b16 %v1849
  %v2078 = vunpack.c.l.b16 %v1850
  %v2079 = vunpack.c.h.b16 %v1850
  %v2080 = vunpack.c.l.b16 %v1851
  %v2081 = vunpack.c.h.b16 %v1851
  %v2082 = vunpack.c.l.b16 %v1852
  %v2083 = vunpack.c.h.b16 %v1852
  %v2084 = vunpack.c.l.b16 %v1853
  %v2085 = vunpack.c.h.b16 %v1853
  %v2086 = vunpack.c.l.b16 %v1854
  %v2087 = vunpack.c.h.b16 %v1854
  %v2088 = vunpack.c.l.b16 %v1855
  %v2089 = vunpack.c.h.b16 %v1855
  %v2090 = vunpack.c.l.b16 %v1856
  %v2091 = vunpack.c.h.b16 %v1856
  %v2092 = vunpack.c.l.b16 %v1857
  %v2093 = vunpack.c.h.b16 %v1857
  %v2094 = vunpack.c.l.b16 %v1858
  %v2095 = vunpack.c.h.b16 %v1858
  %v2096 = vunpack.c.l.b16 %v1859
  %v2097 = vunpack.c.h.b16 %v1859
  %v2098 = vunpack.c.l.b16 %v1860
  %v2099 = vunpack.c.h.b16 %v1860
  %v2100 = vunpack.c.l.b16 %v1861
  %v2101 = vunpack.c.h.b16 %v1861
  %v2102 = vunpack.c.l.b16 %v1862
  %v2103 = vunpack.c.h.b16 %v1862
  %v2104 = vunpack.c.l.b16 %v1863
  %v2105 = vunpack.c.h.b16 %v1863
  %v2106 = vunpack.c.l.b16 %v1864
  %v2107 = vunpack.c.h.b16 %v1864
  %v2108 = vunpack.c.l.b16 %v1865
  %v2109 = vunpack.c.h.b16 %v1865
  %v2110 = vunpack.c.l.b16 %v1866
  %v2111 = vunpack.c.h.b16 %v1866
  %v2112 = vunpack.c.l.b16 %v1867
  %v2113 = vunpack.c.h.b16 %v1867
  %v2114 = vunpack.c.l.b16 %v1868
  %v2115 = vunpack.c.h.b16 %v1868
  %v2116 = vunpack.c.l.b16 %v1869
  %v2117 = vunpack.c.h.b16 %v1869
  %v2118 = vunpack.c.l.b16 %v1870
  %v2119 = vunpack.c.h.b16 %v1870
  %v2120 = vunpack.c.l.b16 %v1871
  %v2121 = vunpack.c.h.b16 %v1871
  %v2122 = vunpack.c.l.b16 %v1872
  %v2123 = vunpack.c.h.b16 %v1872
  %v2124 = vunpack.c.l.b16 %v1873
  %v2125 = vunpack.c.h.b16 %v1873
  %v2126 = vunpack.c.l.b16 %v1874
  %v2127 = vunpack.c.h.b16 %v1874
  %v2128 = vunpack.c.l.b16 %v1875
  %v2129 = vunpack.c.h.b16 %v1875
  %v2130 = vunpack.c.l.b16 %v1876
  %v2131 = vunpack.c.h.b16 %v1876
  %v2132 = vunpack.c.l.b16 %v1877
  %v2133 = vunpack.c.h.b16 %v1877
  %v2134 = vunpack.c.l.b16 %v1878
  %v2135 = vunpack.c.h.b16 %v1878
  %v2136 = vunpack.c.l.b16 %v1879
  %v2137 = vunpack.c.h.b16 %v1879
  %v2138 = vunpack.c.l.b16 %v1880
  %v2139 = vunpack.c.h.b16 %v1880
  %v2140 = vunpack.c.l.b16 %v1881
  %v2141 = vunpack.c.h.b16 %v1881
  %v2142 = vunpack.c.l.b16 %v1882
  %v2143 = vunpack.c.h.b16 %v1882
  %v2144 = vunpack.c.l.b16 %v1883
  %v2145 = vunpack.c.h.b16 %v1883
  %v2146 = vunpack.c.l.b16 %v1884
  %v2147 = vunpack.c.h.b16 %v1884
  %v2148 = vunpack.c.l.b16 %v1885
  %v2149 = vunpack.c.h.b16 %v1885
  %v2150 = vunpack.c.l.b16 %v1886
  %v2151 = vunpack.c.h.b16 %v1886
  %v2152 = vunpack.c.l.b16 %v1887
  %v2153 = vunpack.c.h.b16 %v1887
  %v2154 = vunpack.c.l.b16 %v1888
  %v2155 = vunpack.c.h.b16 %v1888
  %v2156 = vunpack.c.l.b16 %v1889
  %v2157 = vunpack.c.h.b16 %v1889
  %v2158 = vunpack.c.l.b16 %v1890
  %v2159 = vunpack.c.h.b16 %v1890
  %v2160 = vunpack.c.l.b16 %v1891
  %v2161 = vunpack.c.h.b16 %v1891
  %v2162 = vunpack.c.l.b16 %v1892
  %v2163 = vunpack.c.h.b16 %v1892
  %v2164 = vunpack.c.l.b16 %v1893
  %v2165 = vunpack.c.h.b16 %v1893
  %v2166 = vunpack.c.l.b16 %v1894
  %v2167 = vunpack.c.h.b16 %v1894
  %v2168 = vunpack.c.l.b16 %v1895
  %v2169 = vunpack.c.h.b16 %v1895
  %v2170 = vunpack.c.l.b16 %v1896
  %v2171 = vunpack.c.h.b16 %v1896
  %v2172 = vunpack.c.l.b16 %v1897
  %v2173 = vunpack.c.h.b16 %v1897
  %v2174 = vunpack.c.l.b16 %v1898
  %v2175 = vunpack.c.h.b16 %v1898
  %v2176 = vunpack.c.l.b16 %v1899
  %v2177 = vunpack.c.h.b16 %v1899
  %v2178 = vunpack.c.l.b16 %v1900
  %v2179 = vunpack.c.h.b16 %v1900
  %v2180 = vunpack.c.l.b16 %v1901
  %v2181 = vunpack.c.h.b16 %v1901
  %v2182 = vunpack.c.l.b16 %v1902
  %v2183 = vunpack.c.h.b16 %v1902
  %v2184 = vunpack.c.l.b16 %v1903
  %v2185 = vunpack.c.h.b16 %v1903
  %v2186 = vunpack.c.l.b16 %v1904
  %v2187 = vunpack.c.h.b16 %v1904
  %v2188 = vunpack.c.l.b16 %v1905
  %v2189 = vunpack.c.h.b16 %v1905
  %v2190 = vunpack.c.l.b16 %v1906
  %v2191 = vunpack.c.h.b16 %v1906
  %v2192 = vunpack.c.l.b16 %v1907
  %v2193 = vunpack.c.h.b16 %v1907
  %v2194 = vunpack.c.l.b16 %v1908
  %v2195 = vunpack.c.h.b16 %v1908
  %v2196 = vunpack.c.l.b16 %v1909
  %v2197 = vunpack.c.h.b16 %v1909
  %v2198 = vunpack.c.l.b16 %v1910
  %v2199 = vunpack.c.h.b16 %v1910
  %v2200 = vunpack.c.l.b16 %v1911
  %v2201 = vunpack.c.h.b16 %v1911
  %v2202 = vunpack.c.l.b16 %v1912
  %v2203 = vunpack.c.h.b16 %v1912
  %v2204 = vunpack.c.l.b16 %v1913
  %v2205 = vunpack.c.h.b16 %v1913
  %v2206 = vunpack.c.l.b16 %v1914
  %v2207 = vunpack.c.h.b16 %v1914
  %v2208 = vunpack.c.l.b16 %v1915
  %v2209 = vunpack.c.h.b16 %v1915
  %v2210 = vunpack.c.l.b16 %v1916
  %v2211 = vunpack.c.h.b16 %v1916
  %v2212 = vunpack.c.l.b16 %v1917
  %v2213 = vunpack.c.h.b16 %v1917
  %v2214 = vunpack.c.l.b16 %v1918
  %v2215 = vunpack.c.h.b16 %v1918
  %v2216 = vunpack.c.l.b16 %v1919
  %v2217 = vunpack.c.h.b16 %v1919
  %v2218 = vunpack.c.l.b16 %v1920
  %v2219 = vunpack.c.h.b16 %v1920
  %v2220 = vunpack.c.l.b16 %v1921
  %v2221 = vunpack.c.h.b16 %v1921
  %v2222 = vunpack.c.l.b16 %v1922
  %v2223 = vunpack.c.h.b16 %v1922
  %v2224 = vunpack.c.l.b16 %v1923
  %v2225 = vunpack.c.h.b16 %v1923
  %v2226 = vunpack.c.l.b16 %v1924
  %v2227 = vunpack.c.h.b16 %v1924
  %v2228 = vunpack.c.l.b16 %v1925
  %v2229 = vunpack.c.h.b16 %v1925
  %v2230 = vunpack.c.l.b16 %v1926
  %v2231 = vunpack.c.h.b16 %v1926
  %v2232 = vunpack.c.l.b16 %v1927
  %v2233 = vunpack.c.h.b16 %v1927
  %v2234 = vunpack.c.l.b16 %v1928
  %v2235 = vunpack.c.h.b16 %v1928
  %v2236 = vunpack.c.l.b16 %v1929
  %v2237 = vunpack.c.h.b16 %v1929
  %v2238 = vunpack.c.l.b16 %v1930
  %v2239 = vunpack.c.h.b16 %v1930
  %v2240 = vunpack.c.l.b16 %v1931
  %v2241 = vunpack.c.h.b16 %v1931
  %v2242 = vunpack.c.l.b16 %v1932
  %v2243 = vunpack.c.h.b16 %v1932
  %v2244 = vunpack.c.l.b16 %v1933
  %v2245 = vunpack.c.h.b16 %v1933
  %v2246 = vunpack.c.l.b16 %v1934
  %v2247 = vunpack.c.h.b16 %v1934
  %v2248 = vunpack.c.l.b16 %v1935
  %v2249 = vunpack.c.h.b16 %v1935
  %v2250 = vunpack.c.l.b16 %v1936
  %v2251 = vunpack.c.h.b16 %v1936
  %v2252 = vunpack.c.l.b16 %v1937
  %v2253 = vunpack.c.h.b16 %v1937
  %v2254 = vunpack.c.l.b16 %v1938
  %v2255 = vunpack.c.h.b16 %v1938
  %v2256 = vunpack.c.l.b16 %v1939
  %v2257 = vunpack.c.h.b16 %v1939
  %v2258 = vunpack.c.l.b16 %v1940
  %v2259 = vunpack.c.h.b16 %v1940
  %v2260 = vpack.c.b16 %v2064, %v2060
  %v2261 = vpack.c.b16 %v2065, %v2061
  %v2262 = vpack.c.b16 %v2066, %v2062
  %v2263 = vpack.c.b16 %v2067, %v2063
  %v2264 = vpack.c.b16 %v2072, %v2068
  %v2265 = vpack.c.b16 %v2073, %v2069
  %v2266 = vpack.c.b16 %v2074, %v2070
  %v2267 = vpack.c.b16 %v2075, %v2071
  %v2268 = vpack.c.b16 %v2080, %v2076
  %v2269 = vpack.c.b16 %v2081, %v2077
  %v2270 = vpack.c.b16 %v2082, %v2078
  %v2271 = vpack.c.b16 %v2083, %v2079
  %v2272 = vpack.c.b16 %v2088, %v2084
  %v2273 = vpack.c.b16 %v2089, %v2085
  %v2274 = vpack.c.b16 %v2090, %v2086
  %v2275 = vpack.c.b16 %v2091, %v2087
  %v2276 = vpack.c.b16 %v2096, %v2092
  %v2277 = vpack.c.b16 %v2097, %v2093
  %v2278 = vpack.c.b16 %v2098, %v2094
  %v2279 = vpack.c.b16 %v2099, %v2095
  %v2280 = vpack.c.b16 %v2104, %v2100
  %v2281 = vpack.c.b16 %v2105, %v2101
  %v2282 = vpack.c.b16 %v2106, %v2102
  %v2283 = vpack.c.b16 %v2107, %v2103
  %v2284 = vpack.c.b16 %v2112, %v2108
  %v2285 = vpack.c.b16 %v2113, %v2109
  %v2286 = vpack.c.b16 %v2114, %v2110
  %v2287 = vpack.c.b16 %v2115, %v2111
  %v2288 = vpack.c.b16 %v2120, %v2116
  %v2289 = vpack.c.b16 %v2121, %v2117
  %v2290 = vpack.c.b16 %v2122, %v2118
  %v2291 = vpack.c.b16 %v2123, %v2119
  %v2292 = vpack.c.b16 %v2128, %v2124
  %v2293 = vpack.c.b16 %v2129, %v2125
  %v2294 = vpack.c.b16 %v2130, %v2126
  %v2295 = vpack.c.b16 %v2131, %v2127
  %v2296 = vpack.c.b16 %v2136, %v2132
  %v2297 = vpack.c.b16 %v2137, %v2133
  %v2298 = vpack.c.b16 %v2138, %v2134
  %v2299 = vpack.c.b16 %v2139, %v2135
  %v2300 = vpack.c.b16 %v2144, %v2140
  %v2301 = vpack.c.b16 %v2145, %v2141
  %v2302 = vpack.c.b16 %v2146, %v2142
  %v2303 = vpack.c.b16 %v2147, %v2143
  %v2304 = vpack.c.b16 %v2152, %v2148
  %v2305 = vpack.c.b16 %v2153, %v2149
  %v2306 = vpack.c.b16 %v2154, %v2150
  %v2307 = vpack.c.b16 %v2155, %v2151
  %v2308 = vpack.c.b16 %v2160, %v2156
  %v2309 = vpack.c.b16 %v2161, %v2157
  %v2310 = vpack.c.b16 %v2162, %v2158
  %v2311 = vpack.c.b16 %v2163, %v2159
  %v2312 = vpack.c.b16 %v2168, %v2164
  %v2313 = vpack.c.b16 %v2169, %v2165
  %v2314 = vpack.c.b16 %v2170, %v2166
  %v2315 = vpack.c.b16 %v2171, %v2167
  %v2316 = vpack.c.b16 %v2176, %v2172
  %v2317 = vpack.c.b16 %v2177, %v2173
  %v2318 = vpack.c.b16 %v2178, %v2174
  %v2319 = vpack.c.b16 %v2179, %v2175
  %v2320 = vpack.c.b16 %v2184, %v2180
  %v2321 = vpack.c.b16 %v2185, %v2181
  %v2322 = vpack.c.b16 %v2186, %v2182
  %v2323 = vpack.c.b16 %v2187, %v2183
  %v2324 = vpack.c.b16 %v2192, %v2188
  %v2325 = vpack.c.b16 %v2193, %v2189
  %v2326 = vpack.c.b16 %v2194, %v2190
  %v2327 = vpack.c.b16 %v2195, %v2191
  %v2328 = vpack.c.b16 %v2200, %v2196
  %v2329 = vpack.c.b16 %v2201, %v2197
  %v2330 = vpack.c.b16 %v2202, %v2198
  %v2331 = vpack.c.b16 %v2203, %v2199
  %v2332 = vpack.c.b16 %v2208, %v2204
  %v2333 = vpack.c.b16 %v2209, %v2205
  %v2334 = vpack.c.b16 %v2210, %v2206
  %v2335 = vpack.c.b16 %v2211, %v2207
  %v2336 = vpack.c.b16 %v2216, %v2212
  %v2337 = vpack.c.b16 %v2217, %v2213
  %v2338 = vpack.c.b16 %v2218, %v2214
  %v2339 = vpack.c.b16 %v2219, %v2215
  %v2340 = vpack.c.b16 %v2224, %v2220
  %v2341 = vpack.c.b16 %v2225, %v2221
  %v2342 = vpack.c.b16 %v2226, %v2222
  %v2343 = vpack.c.b16 %v2227, %v2223
  %v2344 = vpack.c.b16 %v2232, %v2228
  %v2345 = vpack.c.b16 %v2233, %v2229
  %v2346 = vpack.c.b16 %v2234, %v2230
  %v2347 = vpack.c.b16 %v2235, %v2231
  %v2348 = vpack.c.b16 %v2240, %v2236
  %v2349 = vpack.c.b16 %v2241, %v2237
  %v2350 = vpack.c.b16 %v2242, %v2238
  %v2351 = vpack.c.b16 %v2243, %v2239
  %v2352 = vpack.c.b16 %v2248, %v2244
  %v2353 = vpack.c.b16 %v2249, %v2245
  %v2354 = vpack.c.b16 %v2250, %v2246
  %v2355 = vpack.c.b16 %v2251, %v2247
  %v2356 = vpack.c.b16 %v2256, %v2252
  %v2357 = vpack.c.b16 %v2257, %v2253
  %v2358 = vpack.c.b16 %v2258, %v2254
  %v2359 = vpack.c.b16 %v2259, %v2255
  %vm2460 = vcmask 130048
  %v2462 = vsel %vm2460, %v1956, 0
  %2464 = vmatpush.bf16.msra.mxu0 %v2288
  %2465 = vmatpush.bf16.msra.mxu0 %v2284
  %2466 = vmatpush.bf16.msra.mxu0 %v2280
  %2467 = vmatpush.bf16.msra.mxu0 %v2276
  %2468 = vmatpush.bf16.msra.mxu0 %v2272
  %2469 = vmatpush.bf16.msra.mxu0 %v2268
  %2470 = vmatpush.bf16.msra.mxu0 %v2264
  %2471 = vmatpush.bf16.msra.mxu0 %v2260
  %2472 = vmatmul.bf16.gmra.mxu0 %v1953
  %v2473 = vpop.f32.mrf.mxu0
  %v2474 = vadd.f32 0.0, %v2473
  %v2475 = vpop.f32.mrf.mxu0
  %v2476 = vadd.f32 0.0, %v2475
  %2477 = vdwg.mxu0
  %2478 = vmatpush.bf16.msra.mxu0 %v2320
  %2479 = vmatpush.bf16.msra.mxu0 %v2316
  %2480 = vmatpush.bf16.msra.mxu0 %v2312
  %2481 = vmatpush.bf16.msra.mxu0 %v2308
  %2482 = vmatpush.bf16.msra.mxu0 %v2304
  %2483 = vmatpush.bf16.msra.mxu0 %v2300
  %2484 = vmatpush.bf16.msra.mxu0 %v2296
  %2485 = vmatpush.bf16.msra.mxu0 %v2292
  %2486 = vmatmul.bf16.gmra.mxu0 %v1954
  %v2487 = vpop.f32.mrf.mxu0
  %v2488 = vadd.f32 %v2474, %v2487
  %v2489 = vpop.f32.mrf.mxu0
  %v2490 = vadd.f32 %v2476, %v2489
  %2491 = vdwg.mxu0
  %2492 = vmatpush.bf16.msra.mxu0 %v2352
  %2493 = vmatpush.bf16.msra.mxu0 %v2348
  %2494 = vmatpush.bf16.msra.mxu0 %v2344
  %2495 = vmatpush.bf16.msra.mxu0 %v2340
  %2496 = vmatpush.bf16.msra.mxu0 %v2336
  %2497 = vmatpush.bf16.msra.mxu0 %v2332
  %2498 = vmatpush.bf16.msra.mxu0 %v2328
  %2499 = vmatpush.bf16.msra.mxu0 %v2324
  %2500 = vmatmul.bf16.gmra.mxu0 %v1955
  %v2501 = vpop.f32.mrf.mxu0
  %v2502 = vadd.f32 %v2488, %v2501
  %v2503 = vpop.f32.mrf.mxu0
  %v2504 = vadd.f32 %v2490, %v2503
  %2505 = vdwg.mxu0
  %2506 = vmatpush.bf16.msra.mxu0 0
  %2507 = vmatpush.bf16.msra.mxu0 0
  %2508 = vmatpush.bf16.msra.mxu0 0
  %2509 = vmatpush.bf16.msra.mxu0 0
  %2510 = vmatpush.bf16.msra.mxu0 0
  %2511 = vmatpush.bf16.msra.mxu0 0
  %2512 = vmatpush.bf16.msra.mxu0 0
  %2513 = vmatpush.bf16.msra.mxu0 %v2356
  %2514 = vmatmul.bf16.gmra.mxu0 %v2462
  %v2515 = vpop.f32.mrf.mxu0
  %v2516 = vadd.f32 %v2502, %v2515
  %v2517 = vpop.f32.mrf.mxu0
  %v2518 = vadd.f32 %v2504, %v2517
  %2519 = vdwg.mxu0
  %2520 = vmatpush.bf16.msra.mxu0 %v2289
  %2521 = vmatpush.bf16.msra.mxu0 %v2285
  %2522 = vmatpush.bf16.msra.mxu0 %v2281
  %2523 = vmatpush.bf16.msra.mxu0 %v2277
  %2524 = vmatpush.bf16.msra.mxu0 %v2273
  %2525 = vmatpush.bf16.msra.mxu0 %v2269
  %2526 = vmatpush.bf16.msra.mxu0 %v2265
  %2527 = vmatpush.bf16.msra.mxu0 %v2261
  %2528 = vmatmul.bf16.gmra.mxu0 %v1953
  %v2529 = vpop.f32.mrf.mxu0
  %v2530 = vadd.f32 0.0, %v2529
  %v2531 = vpop.f32.mrf.mxu0
  %v2532 = vadd.f32 0.0, %v2531
  %2533 = vdwg.mxu0
  %2534 = vmatpush.bf16.msra.mxu0 %v2321
  %2535 = vmatpush.bf16.msra.mxu0 %v2317
  %2536 = vmatpush.bf16.msra.mxu0 %v2313
  %2537 = vmatpush.bf16.msra.mxu0 %v2309
  %2538 = vmatpush.bf16.msra.mxu0 %v2305
  %2539 = vmatpush.bf16.msra.mxu0 %v2301
  %2540 = vmatpush.bf16.msra.mxu0 %v2297
  %2541 = vmatpush.bf16.msra.mxu0 %v2293
  %2542 = vmatmul.bf16.gmra.mxu0 %v1954
  %v2543 = vpop.f32.mrf.mxu0
  %v2544 = vadd.f32 %v2530, %v2543
  %v2545 = vpop.f32.mrf.mxu0
  %v2546 = vadd.f32 %v2532, %v2545
  %2547 = vdwg.mxu0
  %2548 = vmatpush.bf16.msra.mxu0 %v2353
  %2549 = vmatpush.bf16.msra.mxu0 %v2349
  %2550 = vmatpush.bf16.msra.mxu0 %v2345
  %2551 = vmatpush.bf16.msra.mxu0 %v2341
  %2552 = vmatpush.bf16.msra.mxu0 %v2337
  %2553 = vmatpush.bf16.msra.mxu0 %v2333
  %2554 = vmatpush.bf16.msra.mxu0 %v2329
  %2555 = vmatpush.bf16.msra.mxu0 %v2325
  %2556 = vmatmul.bf16.gmra.mxu0 %v1955
  %v2557 = vpop.f32.mrf.mxu0
  %v2558 = vadd.f32 %v2544, %v2557
  %v2559 = vpop.f32.mrf.mxu0
  %v2560 = vadd.f32 %v2546, %v2559
  %2561 = vdwg.mxu0
  %2562 = vmatpush.bf16.msra.mxu0 0
  %2563 = vmatpush.bf16.msra.mxu0 0
  %2564 = vmatpush.bf16.msra.mxu0 0
  %2565 = vmatpush.bf16.msra.mxu0 0
  %2566 = vmatpush.bf16.msra.mxu0 0
  %2567 = vmatpush.bf16.msra.mxu0 0
  %2568 = vmatpush.bf16.msra.mxu0 0
  %2569 = vmatpush.bf16.msra.mxu0 %v2357
  %2570 = vmatmul.bf16.gmra.mxu0 %v2462
  %v2571 = vpop.f32.mrf.mxu0
  %v2572 = vadd.f32 %v2558, %v2571
  %v2573 = vpop.f32.mrf.mxu0
  %v2574 = vadd.f32 %v2560, %v2573
  %2575 = vdwg.mxu0
  %2576 = vmatpush.bf16.msra.mxu0 %v2290
  %2577 = vmatpush.bf16.msra.mxu0 %v2286
  %2578 = vmatpush.bf16.msra.mxu0 %v2282
  %2579 = vmatpush.bf16.msra.mxu0 %v2278
  %2580 = vmatpush.bf16.msra.mxu0 %v2274
  %2581 = vmatpush.bf16.msra.mxu0 %v2270
  %2582 = vmatpush.bf16.msra.mxu0 %v2266
  %2583 = vmatpush.bf16.msra.mxu0 %v2262
  %2584 = vmatmul.bf16.gmra.mxu0 %v1953
  %v2585 = vpop.f32.mrf.mxu0
  %v2586 = vadd.f32 0.0, %v2585
  %v2587 = vpop.f32.mrf.mxu0
  %v2588 = vadd.f32 0.0, %v2587
  %2589 = vdwg.mxu0
  %2590 = vmatpush.bf16.msra.mxu0 %v2322
  %2591 = vmatpush.bf16.msra.mxu0 %v2318
  %2592 = vmatpush.bf16.msra.mxu0 %v2314
  %2593 = vmatpush.bf16.msra.mxu0 %v2310
  %2594 = vmatpush.bf16.msra.mxu0 %v2306
  %2595 = vmatpush.bf16.msra.mxu0 %v2302
  %2596 = vmatpush.bf16.msra.mxu0 %v2298
  %2597 = vmatpush.bf16.msra.mxu0 %v2294
  %2598 = vmatmul.bf16.gmra.mxu0 %v1954
  %v2599 = vpop.f32.mrf.mxu0
  %v2600 = vadd.f32 %v2586, %v2599
  %v2601 = vpop.f32.mrf.mxu0
  %v2602 = vadd.f32 %v2588, %v2601
  %2603 = vdwg.mxu0
  %2604 = vmatpush.bf16.msra.mxu0 %v2354
  %2605 = vmatpush.bf16.msra.mxu0 %v2350
  %2606 = vmatpush.bf16.msra.mxu0 %v2346
  %2607 = vmatpush.bf16.msra.mxu0 %v2342
  %2608 = vmatpush.bf16.msra.mxu0 %v2338
  %2609 = vmatpush.bf16.msra.mxu0 %v2334
  %2610 = vmatpush.bf16.msra.mxu0 %v2330
  %2611 = vmatpush.bf16.msra.mxu0 %v2326
  %2612 = vmatmul.bf16.gmra.mxu0 %v1955
  %v2613 = vpop.f32.mrf.mxu0
  %v2614 = vadd.f32 %v2600, %v2613
  %v2615 = vpop.f32.mrf.mxu0
  %v2616 = vadd.f32 %v2602, %v2615
  %2617 = vdwg.mxu0
  %2618 = vmatpush.bf16.msra.mxu0 0
  %2619 = vmatpush.bf16.msra.mxu0 0
  %2620 = vmatpush.bf16.msra.mxu0 0
  %2621 = vmatpush.bf16.msra.mxu0 0
  %2622 = vmatpush.bf16.msra.mxu0 0
  %2623 = vmatpush.bf16.msra.mxu0 0
  %2624 = vmatpush.bf16.msra.mxu0 0
  %2625 = vmatpush.bf16.msra.mxu0 %v2358
  %2626 = vmatmul.bf16.gmra.mxu0 %v2462
  %v2627 = vpop.f32.mrf.mxu0
  %v2628 = vadd.f32 %v2614, %v2627
  %v2629 = vpop.f32.mrf.mxu0
  %v2630 = vadd.f32 %v2616, %v2629
  %2631 = vdwg.mxu0
  %2632 = vmatpush.bf16.msra.mxu0 %v2291
  %2633 = vmatpush.bf16.msra.mxu0 %v2287
  %2634 = vmatpush.bf16.msra.mxu0 %v2283
  %2635 = vmatpush.bf16.msra.mxu0 %v2279
  %2636 = vmatpush.bf16.msra.mxu0 %v2275
  %2637 = vmatpush.bf16.msra.mxu0 %v2271
  %2638 = vmatpush.bf16.msra.mxu0 %v2267
  %2639 = vmatpush.bf16.msra.mxu0 %v2263
  %2640 = vmatmul.bf16.gmra.mxu0 %v1953
  %v2641 = vpop.f32.mrf.mxu0
  %v2642 = vadd.f32 0.0, %v2641
  %v2643 = vpop.f32.mrf.mxu0
  %v2644 = vadd.f32 0.0, %v2643
  %2645 = vdwg.mxu0
  %2646 = vmatpush.bf16.msra.mxu0 %v2323
  %2647 = vmatpush.bf16.msra.mxu0 %v2319
  %2648 = vmatpush.bf16.msra.mxu0 %v2315
  %2649 = vmatpush.bf16.msra.mxu0 %v2311
  %2650 = vmatpush.bf16.msra.mxu0 %v2307
  %2651 = vmatpush.bf16.msra.mxu0 %v2303
  %2652 = vmatpush.bf16.msra.mxu0 %v2299
  %2653 = vmatpush.bf16.msra.mxu0 %v2295
  %2654 = vmatmul.bf16.gmra.mxu0 %v1954
  %v2655 = vpop.f32.mrf.mxu0
  %v2656 = vadd.f32 %v2642, %v2655
  %v2657 = vpop.f32.mrf.mxu0
  %v2658 = vadd.f32 %v2644, %v2657
  %2659 = vdwg.mxu0
  %2660 = vmatpush.bf16.msra.mxu0 %v2355
  %2661 = vmatpush.bf16.msra.mxu0 %v2351
  %2662 = vmatpush.bf16.msra.mxu0 %v2347
  %2663 = vmatpush.bf16.msra.mxu0 %v2343
  %2664 = vmatpush.bf16.msra.mxu0 %v2339
  %2665 = vmatpush.bf16.msra.mxu0 %v2335
  %2666 = vmatpush.bf16.msra.mxu0 %v2331
  %2667 = vmatpush.bf16.msra.mxu0 %v2327
  %2668 = vmatmul.bf16.gmra.mxu0 %v1955
  %v2669 = vpop.f32.mrf.mxu0
  %v2670 = vadd.f32 %v2656, %v2669
  %v2671 = vpop.f32.mrf.mxu0
  %v2672 = vadd.f32 %v2658, %v2671
  %2673 = vdwg.mxu0
  %2674 = vmatpush.bf16.msra.mxu0 0
  %2675 = vmatpush.bf16.msra.mxu0 0
  %2676 = vmatpush.bf16.msra.mxu0 0
  %2677 = vmatpush.bf16.msra.mxu0 0
  %2678 = vmatpush.bf16.msra.mxu0 0
  %2679 = vmatpush.bf16.msra.mxu0 0
  %2680 = vmatpush.bf16.msra.mxu0 0
  %2681 = vmatpush.bf16.msra.mxu0 %v2359
  %2682 = vmatmul.bf16.gmra.mxu0 %v2462
  %v2683 = vpop.f32.mrf.mxu0
  %v2684 = vadd.f32 %v2670, %v2683
  %v2685 = vpop.f32.mrf.mxu0
  %v2686 = vadd.f32 %v2672, %v2685
  %2687 = vdwg.mxu0
  %v2688 = vpack.c.bf16 %v2518, %v2516
  %v2689 = vpack.c.bf16 %v2574, %v2572
  %v2690 = vld [vmem:[%s4] sm:$0xf]
  %v2691 = vld [vmem:[%s4 + $0x4] sm:$0xf]
  %v2692 = vld [vmem:[%s4 + $0x8] sm:$0xf]
  %v2693 = vld [vmem:[%s4 + $0xc] sm:$0xf]
  %v2694 = vld [vmem:[%s4 + $0x10] sm:$0xf]
  %v2695 = vld [vmem:[%s4 + $0x14] sm:$0xf]
  %v2696 = vld [vmem:[%s4 + $0x18] sm:$0xf]
  %v2697 = vld [vmem:[%s4 + $0x1c] sm:$0xf]
  %v2698 = vld [vmem:[%s4 + $0x20] sm:$0xf]
  %v2699 = vld [vmem:[%s4 + $0x24] sm:$0xf]
  %v2700 = vld [vmem:[%s4 + $0x28] sm:$0xf]
  %v2701 = vld [vmem:[%s4 + $0x2c] sm:$0xf]
  %v2702 = vld [vmem:[%s4 + $0x30] sm:$0xf]
  %v2703 = vld [vmem:[%s4 + $0x34] sm:$0xf]
  %v2704 = vld [vmem:[%s4 + $0x38] sm:$0xf]
  %v2705 = vld [vmem:[%s4 + $0x3c] sm:$0xf]
  %v2706 = vld [vmem:[%s4 + $0x40] sm:$0xf]
  %v2707 = vld [vmem:[%s4 + $0x44] sm:$0xf]
  %v2708 = vld [vmem:[%s4 + $0x48] sm:$0xf]
  %v2709 = vld [vmem:[%s4 + $0x4c] sm:$0xf]
  %v2710 = vld [vmem:[%s4 + $0x50] sm:$0xf]
  %v2711 = vld [vmem:[%s4 + $0x54] sm:$0xf]
  %v2712 = vld [vmem:[%s4 + $0x58] sm:$0xf]
  %v2713 = vld [vmem:[%s4 + $0x5c] sm:$0xf]
  %v2714 = vld [vmem:[%s4 + $0x60] sm:$0xf]
  %v2715 = vld [vmem:[%s4 + $0x64] sm:$0xf]
  %v2716 = vld [vmem:[%s4 + $0x68] sm:$0xf]
  %v2717 = vld [vmem:[%s4 + $0x6c] sm:$0xf]
  %v2718 = vld [vmem:[%s4 + $0x70] sm:$0xf]
  %v2719 = vld [vmem:[%s4 + $0x74] sm:$0xf]
  %v2720 = vld [vmem:[%s4 + $0x78] sm:$0xf]
  %v2721 = vld [vmem:[%s4 + $0x7c] sm:$0xf]
  %v2754 = vunpack.c.l.b16 %v2690
  %v2755 = vunpack.c.l.b16 %v2691
  %v2756 = vunpack.c.l.b16 %v2692
  %v2757 = vunpack.c.l.b16 %v2693
  %v2758 = vunpack.c.l.b16 %v2694
  %v2759 = vunpack.c.l.b16 %v2695
  %v2760 = vunpack.c.l.b16 %v2696
  %v2761 = vunpack.c.l.b16 %v2697
  %v2762 = vunpack.c.l.b16 %v2698
  %v2763 = vunpack.c.l.b16 %v2699
  %v2764 = vunpack.c.l.b16 %v2700
  %v2765 = vunpack.c.l.b16 %v2701
  %v2766 = vunpack.c.l.b16 %v2702
  %v2767 = vunpack.c.l.b16 %v2703
  %v2768 = vunpack.c.l.b16 %v2704
  %v2769 = vunpack.c.l.b16 %v2705
  %v2770 = vunpack.c.l.b16 %v2706
  %v2771 = vunpack.c.l.b16 %v2707
  %v2772 = vunpack.c.l.b16 %v2708
  %v2773 = vunpack.c.l.b16 %v2709
  %v2774 = vunpack.c.l.b16 %v2710
  %v2775 = vunpack.c.l.b16 %v2711
  %v2776 = vunpack.c.l.b16 %v2712
  %v2777 = vunpack.c.l.b16 %v2713
  %v2778 = vunpack.c.l.b16 %v2714
  %v2779 = vunpack.c.l.b16 %v2715
  %v2780 = vunpack.c.l.b16 %v2716
  %v2781 = vunpack.c.l.b16 %v2717
  %v2782 = vunpack.c.l.b16 %v2718
  %v2783 = vunpack.c.l.b16 %v2719
  %v2784 = vunpack.c.l.b16 %v2720
  %v2785 = vunpack.c.l.b16 %v2721
  %v2786 = vpack.c.b16 %v2755, %v2754
  %v2787 = vpack.c.b16 %v2757, %v2756
  %v2788 = vpack.c.b16 %v2759, %v2758
  %v2789 = vpack.c.b16 %v2761, %v2760
  %v2790 = vpack.c.b16 %v2763, %v2762
  %v2791 = vpack.c.b16 %v2765, %v2764
  %v2792 = vpack.c.b16 %v2767, %v2766
  %v2793 = vpack.c.b16 %v2769, %v2768
  %v2794 = vpack.c.b16 %v2771, %v2770
  %v2795 = vpack.c.b16 %v2773, %v2772
  %v2796 = vpack.c.b16 %v2775, %v2774
  %v2797 = vpack.c.b16 %v2777, %v2776
  %v2798 = vpack.c.b16 %v2779, %v2778
  %v2799 = vpack.c.b16 %v2781, %v2780
  %v2800 = vpack.c.b16 %v2783, %v2782
  %v2801 = vpack.c.b16 %v2785, %v2784
  %2818 = vmatpush.bf16.msra.mxu0 %v2793
  %2819 = vmatpush.bf16.msra.mxu0 %v2792
  %2820 = vmatpush.bf16.msra.mxu0 %v2791
  %2821 = vmatpush.bf16.msra.mxu0 %v2790
  %2822 = vmatpush.bf16.msra.mxu0 %v2789
  %2823 = vmatpush.bf16.msra.mxu0 %v2788
  %2824 = vmatpush.bf16.msra.mxu0 %v2787
  %2825 = vmatpush.bf16.msra.mxu0 %v2786
  %2826 = vmatmul.bf16.gmra.mxu0 %v2688
  %v2827 = vpop.f32.mrf.mxu0
  %v2828 = vadd.f32 0.0, %v2827
  %v2829 = vpop.f32.mrf.mxu0
  %v2830 = vadd.f32 0.0, %v2829
  %2831 = vdwg.mxu0
  %2832 = vmatpush.bf16.msra.mxu0 %v2801
  %2833 = vmatpush.bf16.msra.mxu0 %v2800
  %2834 = vmatpush.bf16.msra.mxu0 %v2799
  %2835 = vmatpush.bf16.msra.mxu0 %v2798
  %2836 = vmatpush.bf16.msra.mxu0 %v2797
  %2837 = vmatpush.bf16.msra.mxu0 %v2796
  %2838 = vmatpush.bf16.msra.mxu0 %v2795
  %2839 = vmatpush.bf16.msra.mxu0 %v2794
  %2840 = vmatmul.bf16.gmra.mxu0 %v2689
  %v2841 = vpop.f32.mrf.mxu0
  %v2842 = vadd.f32 %v2828, %v2841
  %v2843 = vpop.f32.mrf.mxu0
  %v2844 = vadd.f32 %v2830, %v2843
  %2845 = vdwg.mxu0
  %vm2846 = vcmask 523264
  %2847 = vst.msk [vmem:[#allocation4] sm:$0xff] %vm2846, %v2842
  %2848 = vst.msk [vmem:[#allocation4 + $0x8] sm:$0xff] %vm2846, %v2844
  %v2849 = vpack.c.bf16 %v2630, %v2628
  %v2850 = vpack.c.bf16 %v2686, %v2684
  %v2851 = vld [vmem:[%s4] sm:$0xf]
  %v2852 = vld [vmem:[%s4 + $0x4] sm:$0xf]
  %v2853 = vld [vmem:[%s4 + $0x8] sm:$0xf]
  %v2854 = vld [vmem:[%s4 + $0xc] sm:$0xf]
  %v2855 = vld [vmem:[%s4 + $0x10] sm:$0xf]
  %v2856 = vld [vmem:[%s4 + $0x14] sm:$0xf]
  %v2857 = vld [vmem:[%s4 + $0x18] sm:$0xf]
  %v2858 = vld [vmem:[%s4 + $0x1c] sm:$0xf]
  %v2859 = vld [vmem:[%s4 + $0x20] sm:$0xf]
  %v2860 = vld [vmem:[%s4 + $0x24] sm:$0xf]
  %v2861 = vld [vmem:[%s4 + $0x28] sm:$0xf]
  %v2862 = vld [vmem:[%s4 + $0x2c] sm:$0xf]
  %v2863 = vld [vmem:[%s4 + $0x30] sm:$0xf]
  %v2864 = vld [vmem:[%s4 + $0x34] sm:$0xf]
  %v2865 = vld [vmem:[%s4 + $0x38] sm:$0xf]
  %v2866 = vld [vmem:[%s4 + $0x3c] sm:$0xf]
  %v2867 = vld [vmem:[%s4 + $0x40] sm:$0xf]
  %v2868 = vld [vmem:[%s4 + $0x44] sm:$0xf]
  %v2869 = vld [vmem:[%s4 + $0x48] sm:$0xf]
  %v2870 = vld [vmem:[%s4 + $0x4c] sm:$0xf]
  %v2871 = vld [vmem:[%s4 + $0x50] sm:$0xf]
  %v2872 = vld [vmem:[%s4 + $0x54] sm:$0xf]
  %v2873 = vld [vmem:[%s4 + $0x58] sm:$0xf]
  %v2874 = vld [vmem:[%s4 + $0x5c] sm:$0xf]
  %v2875 = vld [vmem:[%s4 + $0x60] sm:$0xf]
  %v2876 = vld [vmem:[%s4 + $0x64] sm:$0xf]
  %v2877 = vld [vmem:[%s4 + $0x68] sm:$0xf]
  %v2878 = vld [vmem:[%s4 + $0x6c] sm:$0xf]
  %v2879 = vld [vmem:[%s4 + $0x70] sm:$0xf]
  %v2880 = vld [vmem:[%s4 + $0x74] sm:$0xf]
  %v2881 = vld [vmem:[%s4 + $0x78] sm:$0xf]
  %v2882 = vld [vmem:[%s4 + $0x7c] sm:$0xf]
  %v2915 = vunpack.c.l.b16 %v2851
  %v2916 = vunpack.c.l.b16 %v2852
  %v2917 = vunpack.c.l.b16 %v2853
  %v2918 = vunpack.c.l.b16 %v2854
  %v2919 = vunpack.c.l.b16 %v2855
  %v2920 = vunpack.c.l.b16 %v2856
  %v2921 = vunpack.c.l.b16 %v2857
  %v2922 = vunpack.c.l.b16 %v2858
  %v2923 = vunpack.c.l.b16 %v2859
  %v2924 = vunpack.c.l.b16 %v2860
  %v2925 = vunpack.c.l.b16 %v2861
  %v2926 = vunpack.c.l.b16 %v2862
  %v2927 = vunpack.c.l.b16 %v2863
  %v2928 = vunpack.c.l.b16 %v2864
  %v2929 = vunpack.c.l.b16 %v2865
  %v2930 = vunpack.c.l.b16 %v2866
  %v2931 = vunpack.c.l.b16 %v2867
  %v2932 = vunpack.c.l.b16 %v2868
  %v2933 = vunpack.c.l.b16 %v2869
  %v2934 = vunpack.c.l.b16 %v2870
  %v2935 = vunpack.c.l.b16 %v2871
  %v2936 = vunpack.c.l.b16 %v2872
  %v2937 = vunpack.c.l.b16 %v2873
  %v2938 = vunpack.c.l.b16 %v2874
  %v2939 = vunpack.c.l.b16 %v2875
  %v2940 = vunpack.c.l.b16 %v2876
  %v2941 = vunpack.c.l.b16 %v2877
  %v2942 = vunpack.c.l.b16 %v2878
  %v2943 = vunpack.c.l.b16 %v2879
  %v2944 = vunpack.c.l.b16 %v2880
  %v2945 = vunpack.c.l.b16 %v2881
  %v2946 = vunpack.c.l.b16 %v2882
  %v2947 = vpack.c.b16 %v2916, %v2915
  %v2948 = vpack.c.b16 %v2918, %v2917
  %v2949 = vpack.c.b16 %v2920, %v2919
  %v2950 = vpack.c.b16 %v2922, %v2921
  %v2951 = vpack.c.b16 %v2924, %v2923
  %v2952 = vpack.c.b16 %v2926, %v2925
  %v2953 = vpack.c.b16 %v2928, %v2927
  %v2954 = vpack.c.b16 %v2930, %v2929
  %v2955 = vpack.c.b16 %v2932, %v2931
  %v2956 = vpack.c.b16 %v2934, %v2933
  %v2957 = vpack.c.b16 %v2936, %v2935
  %v2958 = vpack.c.b16 %v2938, %v2937
  %v2959 = vpack.c.b16 %v2940, %v2939
  %v2960 = vpack.c.b16 %v2942, %v2941
  %v2961 = vpack.c.b16 %v2944, %v2943
  %v2962 = vpack.c.b16 %v2946, %v2945
  %2979 = vmatpush.bf16.msra.mxu0 %v2954
  %2980 = vmatpush.bf16.msra.mxu0 %v2953
  %2981 = vmatpush.bf16.msra.mxu0 %v2952
  %2982 = vmatpush.bf16.msra.mxu0 %v2951
  %2983 = vmatpush.bf16.msra.mxu0 %v2950
  %2984 = vmatpush.bf16.msra.mxu0 %v2949
  %2985 = vmatpush.bf16.msra.mxu0 %v2948
  %2986 = vmatpush.bf16.msra.mxu0 %v2947
  %2987 = vmatmul.bf16.gmra.mxu0 %v2849
  %v2988 = vpop.f32.mrf.mxu0
  %v2989 = vadd.f32 0.0, %v2988
  %v2990 = vpop.f32.mrf.mxu0
  %v2991 = vadd.f32 0.0, %v2990
  %2992 = vdwg.mxu0
  %2993 = vmatpush.bf16.msra.mxu0 %v2962
  %2994 = vmatpush.bf16.msra.mxu0 %v2961
  %2995 = vmatpush.bf16.msra.mxu0 %v2960
  %2996 = vmatpush.bf16.msra.mxu0 %v2959
  %2997 = vmatpush.bf16.msra.mxu0 %v2958
  %2998 = vmatpush.bf16.msra.mxu0 %v2957
  %2999 = vmatpush.bf16.msra.mxu0 %v2956
  %3000 = vmatpush.bf16.msra.mxu0 %v2955
  %3001 = vmatmul.bf16.gmra.mxu0 %v2850
  %v3002 = vpop.f32.mrf.mxu0
  %v3003 = vadd.f32 %v2989, %v3002
  %v3004 = vpop.f32.mrf.mxu0
  %v3005 = vadd.f32 %v2991, %v3004
  %3006 = vdwg.mxu0
  %3009 = vrot.lane.b32.xlu0 %v3003, 64
  %v3010 = vpop.permute.xlu0 %3009
  %3011 = vrot.lane.b32.xlu0 %v3005, 64
  %v3012 = vpop.permute.xlu0 %3011
  %vm3015 = vcmask 1048064
  %3016 = vst.msk [vmem:[#allocation4] sm:$0xff] %vm3015, %v3010
  %3017 = vst.msk [vmem:[#allocation4 + $0x8] sm:$0xff] %vm3015, %v3012
  %v3018 = vld [vmem:[#allocation4] sm:$0xff]
  %v3019 = vld [vmem:[#allocation4 + $0x8] sm:$0xff]
  %v3020 = vld [vmem:[%s8] sm:$0xff]
  %v3021 = vld [vmem:[%s8 + $0x8] sm:$0xff]
  %3023 = vset.pattern.permute.xlu0 3
  %3024 = vperm.xlu0 %3023, %v3020
  %v3025 = vpop.permute.xlu0 %3024
  %3028 = vset.pattern.permute.xlu0 3
  %3029 = vperm.xlu0 %3028, %v3021
  %v3030 = vpop.permute.xlu0 %3029
  %v3032 = vadd.f32 %v3018, %v3025
  %v3033 = vadd.f32 %v3019, %v3030
  %3034 = vadd.xlane.f32.xlu0 %v3032
  %v3035 = vpop.xlane.xlu0 %3034
  %3036 = vadd.xlane.f32.xlu0 %v3033
  %v3037 = vpop.xlane.xlu0 %3036
  %v3038 = vmul.f32 %v3035, 0.0078125
  %v3039 = vmul.f32 %v3037, 0.0078125
  %v3040 = vmul.f32 %v3032, %v3032
  %v3041 = vmul.f32 %v3033, %v3033
  %3042 = vadd.xlane.f32.xlu0 %v3040
  %v3043 = vpop.xlane.xlu0 %3042
  %3044 = vadd.xlane.f32.xlu0 %v3041
  %v3045 = vpop.xlane.xlu0 %3044
  %v3046 = vmul.f32 %v3043, 0.0078125
  %v3047 = vmul.f32 %v3045, 0.0078125
  %v3048 = vmul.f32 %v3038, %v3038
  %v3049 = vmul.f32 %v3039, %v3039
  %v3050 = vsub.f32 %v3046, %v3048
  %v3051 = vsub.f32 %v3047, %v3049
  %v3052 = vmax.f32 %v3050, 0.0
  %v3053 = vmax.f32 %v3051, 0.0
  %v3054 = vsub.f32 %v3032, %v3038
  %v3055 = vsub.f32 %v3033, %v3039
  %v3056 = vadd.f32 %v3052, 1e-05
  %v3057 = vadd.f32 %v3053, 1e-05
  %v3058 = vrsqrt.pop %v3056
  %v3059 = vmul.f32 %v3058, %v3056
  %v3060 = vmul.f32 %v3059, %v3058
  %v3061 = vmul.f32 0.5, %v3060
  %v3062 = vsub.f32 1.5, %v3061
  %v3063 = vmul.f32 %v3058, %v3062
  %vm3064 = vweird.f32 %v3056
  %vm3065 = vweird.f32 %v3058
  %vm3066 = vmor %vm3064, %vm3065
  %v3067 = vsel %vm3066, %v3058, %v3063
  %v3068 = vrsqrt.pop %v3057
  %v3069 = vmul.f32 %v3068, %v3057
  %v3070 = vmul.f32 %v3069, %v3068
  %v3071 = vmul.f32 0.5, %v3070
  %v3072 = vsub.f32 1.5, %v3071
  %v3073 = vmul.f32 %v3068, %v3072
  %vm3074 = vweird.f32 %v3057
  %vm3075 = vweird.f32 %v3068
  %vm3076 = vmor %vm3074, %vm3075
  %v3077 = vsel %vm3076, %v3068, %v3073
  %v3078 = vmul.f32 %v3054, %v3067
  %v3079 = vmul.f32 %v3055, %v3077
  %3080 = vset.pattern.permute.xlu0 4
  %3081 = vperm.xlu0 %3080, %v3020
  %v3082 = vpop.permute.xlu0 %3081
  %3084 = vset.pattern.permute.xlu0 4
  %3085 = vperm.xlu0 %3084, %v3021
  %v3086 = vpop.permute.xlu0 %3085
  %v3088 = vmul.f32 %v3082, %v3078
  %v3089 = vmul.f32 %v3086, %v3079
  %3090 = vset.pattern.permute.xlu0 5
  %3091 = vperm.xlu0 %3090, %v3020
  %v3092 = vpop.permute.xlu0 %3091
  %3094 = vset.pattern.permute.xlu0 5
  %3095 = vperm.xlu0 %3094, %v3021
  %v3096 = vpop.permute.xlu0 %3095
  %v3098 = vadd.f32 %v3088, %v3092
  %v3099 = vadd.f32 %v3089, %v3096
  %v3100 = vxor.u32 %v3098, 2147483648
  %v3101 = vxor.u32 %v3099, 2147483648
  %v3102 = vmul.f32 %v3100, 1.442695
  %v3103 = vpow.pop %v3102
  %v3104 = vmul.f32 %v3101, 1.442695
  %v3105 = vpow.pop %v3104
  %v3106 = vadd.f32 %v3103, 1.0
  %v3107 = vadd.f32 %v3105, 1.0
  %v3108 = vrcp.pop %v3106
  %v3109 = vmul.f32 %v3106, %v3108
  %v3110 = vsub.f32 1.0, %v3109
  %v3111 = vmul.f32 %v3108, %v3110
  %v3112 = vadd.f32 %v3108, %v3111
  %vm3113 = vweird.f32 %v3106
  %vm3114 = vweird.f32 %v3108
  %vm3115 = vmor %vm3113, %vm3114
  %v3116 = vsel %vm3115, %v3108, %v3112
  %v3117 = vand.u32 2147483647, %v3106
  %vm3118 = vcmp.eq.f32.partialorder %v3117, 8.507059e+37
  %v3119 = vand.u32 %v3106, 2147483648
  %v3120 = vor.u32 1.1754944e-38, %v3119
  %v3121 = vsel %vm3118, %v3120, %v3116
  %v3122 = vmul.f32 1.0, %v3121
  %v3123 = vrcp.pop %v3107
  %v3124 = vmul.f32 %v3107, %v3123
  %v3125 = vsub.f32 1.0, %v3124
  %v3126 = vmul.f32 %v3123, %v3125
  %v3127 = vadd.f32 %v3123, %v3126
  %vm3128 = vweird.f32 %v3107
  %vm3129 = vweird.f32 %v3123
  %vm3130 = vmor %vm3128, %vm3129
  %v3131 = vsel %vm3130, %v3123, %v3127
  %v3132 = vand.u32 2147483647, %v3107
  %vm3133 = vcmp.eq.f32.partialorder %v3132, 8.507059e+37
  %v3134 = vand.u32 %v3107, 2147483648
  %v3135 = vor.u32 1.1754944e-38, %v3134
  %v3136 = vsel %vm3133, %v3135, %v3131
  %v3137 = vmul.f32 1.0, %v3136
  %3138 = vrot.lane.b32.xlu0 %v3122, 18
  %v3139 = vpop.permute.xlu0 %3138
  %3140 = vrot.lane.b32.xlu0 %v3137, 18
  %v3141 = vpop.permute.xlu0 %3140
  %v3142 = vld [vmem:[%s5] sm:$0x1]
  %v3144 = vperm.slane %v3142, 0
  %v3146 = vmul.f32 %v3139, %v3144
  %v3147 = vmul.f32 %v3141, %v3144
  %v3148 = vpack.c.bf16 %v3146, %v3146
  %v3149 = vpack.c.bf16 %v3147, %v3147
  %3150 = vst [vmem:[#allocation3] sm:$0xf] %v3148
  %3151 = vst [vmem:[#allocation3 + $0x4] sm:$0xf] %v3149
  %3152 = vrot.lane.b32.xlu0 %v3122, 17
  %v3153 = vpop.permute.xlu0 %3152
  %3154 = vrot.lane.b32.xlu0 %v3137, 17
  %v3155 = vpop.permute.xlu0 %3154
  %s3156 = scalar_lea.vmem %s5, 1
  %v3157 = vld [vmem:[%s3156] sm:$0x1]
  %v3159 = vperm.slane %v3157, 0
  %v3161 = vmul.f32 %v3153, %v3159
  %v3162 = vmul.f32 %v3155, %v3159
  %v3163 = vpack.c.bf16 %v3161, %v3161
  %v3164 = vpack.c.bf16 %v3162, %v3162
  %3165 = vst [vmem:[#allocation3 + $0x8] sm:$0xf] %v3163
  %3166 = vst [vmem:[#allocation3 + $0xc] sm:$0xf] %v3164
  %3167 = vrot.lane.b32.xlu0 %v3122, 16
  %v3168 = vpop.permute.xlu0 %3167
  %3169 = vrot.lane.b32.xlu0 %v3137, 16
  %v3170 = vpop.permute.xlu0 %3169
  %s3171 = scalar_lea.vmem %s5, 2
  %v3172 = vld [vmem:[%s3171] sm:$0x1]
  %v3174 = vperm.slane %v3172, 0
  %v3176 = vmul.f32 %v3168, %v3174
  %v3177 = vmul.f32 %v3170, %v3174
  %v3178 = vpack.c.bf16 %v3176, %v3176
  %v3179 = vpack.c.bf16 %v3177, %v3177
  %3180 = vst [vmem:[#allocation3 + $0x10] sm:$0xf] %v3178
  %3181 = vst [vmem:[#allocation3 + $0x14] sm:$0xf] %v3179
  %3182 = vrot.lane.b32.xlu0 %v3122, 15
  %v3183 = vpop.permute.xlu0 %3182
  %3184 = vrot.lane.b32.xlu0 %v3137, 15
  %v3185 = vpop.permute.xlu0 %3184
  %s3186 = scalar_lea.vmem %s5, 3
  %v3187 = vld [vmem:[%s3186] sm:$0x1]
  %v3189 = vperm.slane %v3187, 0
  %v3191 = vmul.f32 %v3183, %v3189
  %v3192 = vmul.f32 %v3185, %v3189
  %v3193 = vpack.c.bf16 %v3191, %v3191
  %v3194 = vpack.c.bf16 %v3192, %v3192
  %3195 = vst [vmem:[#allocation3 + $0x18] sm:$0xf] %v3193
  %3196 = vst [vmem:[#allocation3 + $0x1c] sm:$0xf] %v3194
  %3197 = vrot.lane.b32.xlu0 %v3122, 14
  %v3198 = vpop.permute.xlu0 %3197
  %3199 = vrot.lane.b32.xlu0 %v3137, 14
  %v3200 = vpop.permute.xlu0 %3199
  %s3201 = scalar_lea.vmem %s5, 4
  %v3202 = vld [vmem:[%s3201] sm:$0x1]
  %v3204 = vperm.slane %v3202, 0
  %v3206 = vmul.f32 %v3198, %v3204
  %v3207 = vmul.f32 %v3200, %v3204
  %v3208 = vpack.c.bf16 %v3206, %v3206
  %v3209 = vpack.c.bf16 %v3207, %v3207
  %3210 = vst [vmem:[#allocation3 + $0x20] sm:$0xf] %v3208
  %3211 = vst [vmem:[#allocation3 + $0x24] sm:$0xf] %v3209
  %3212 = vrot.lane.b32.xlu0 %v3122, 10
  %v3213 = vpop.permute.xlu0 %3212
  %3214 = vrot.lane.b32.xlu0 %v3137, 10
  %v3215 = vpop.permute.xlu0 %3214
  %s3216 = scalar_lea.vmem %s5, 5
  %v3217 = vld [vmem:[%s3216] sm:$0x1]
  %v3219 = vperm.slane %v3217, 0
  %v3221 = vmul.f32 %v3213, %v3219
  %v3222 = vmul.f32 %v3215, %v3219
  %v3223 = vpack.c.bf16 %v3221, %v3221
  %v3224 = vpack.c.bf16 %v3222, %v3222
  %3225 = vst [vmem:[#allocation3 + $0x28] sm:$0xf] %v3223
  %3226 = vst [vmem:[#allocation3 + $0x2c] sm:$0xf] %v3224
  %3227 = vrot.lane.b32.xlu0 %v3122, 9
  %v3228 = vpop.permute.xlu0 %3227
  %3229 = vrot.lane.b32.xlu0 %v3137, 9
  %v3230 = vpop.permute.xlu0 %3229
  %s3231 = scalar_lea.vmem %s5, 6
  %v3232 = vld [vmem:[%s3231] sm:$0x1]
  %v3234 = vperm.slane %v3232, 0
  %v3236 = vmul.f32 %v3228, %v3234
  %v3237 = vmul.f32 %v3230, %v3234
  %v3238 = vpack.c.bf16 %v3236, %v3236
  %v3239 = vpack.c.bf16 %v3237, %v3237
  %3240 = vst [vmem:[#allocation3 + $0x30] sm:$0xf] %v3238
  %3241 = vst [vmem:[#allocation3 + $0x34] sm:$0xf] %v3239
  %3242 = vrot.lane.b32.xlu0 %v3122, 8
  %v3243 = vpop.permute.xlu0 %3242
  %3244 = vrot.lane.b32.xlu0 %v3137, 8
  %v3245 = vpop.permute.xlu0 %3244
  %s3246 = scalar_lea.vmem %s5, 7
  %v3247 = vld [vmem:[%s3246] sm:$0x1]
  %v3249 = vperm.slane %v3247, 0
  %v3251 = vmul.f32 %v3243, %v3249
  %v3252 = vmul.f32 %v3245, %v3249
  %v3253 = vpack.c.bf16 %v3251, %v3251
  %v3254 = vpack.c.bf16 %v3252, %v3252
  %3255 = vst [vmem:[#allocation3 + $0x38] sm:$0xf] %v3253
  %3256 = vst [vmem:[#allocation3 + $0x3c] sm:$0xf] %v3254
  %3257 = vrot.lane.b32.xlu0 %v3122, 7
  %v3258 = vpop.permute.xlu0 %3257
  %3259 = vrot.lane.b32.xlu0 %v3137, 7
  %v3260 = vpop.permute.xlu0 %3259
  %s3261 = scalar_lea.vmem %s5, 8
  %v3262 = vld [vmem:[%s3261] sm:$0x1]
  %v3264 = vperm.slane %v3262, 0
  %v3266 = vmul.f32 %v3258, %v3264
  %v3267 = vmul.f32 %v3260, %v3264
  %v3268 = vpack.c.bf16 %v3266, %v3266
  %v3269 = vpack.c.bf16 %v3267, %v3267
  %3270 = vst [vmem:[#allocation3 + $0x40] sm:$0xf] %v3268
  %3271 = vst [vmem:[#allocation3 + $0x44] sm:$0xf] %v3269
  %3272 = vrot.lane.b32.xlu0 %v3122, 6
  %v3273 = vpop.permute.xlu0 %3272
  %3274 = vrot.lane.b32.xlu0 %v3137, 6
  %v3275 = vpop.permute.xlu0 %3274
  %s3276 = scalar_lea.vmem %s5, 9
  %v3277 = vld [vmem:[%s3276] sm:$0x1]
  %v3279 = vperm.slane %v3277, 0
  %v3281 = vmul.f32 %v3273, %v3279
  %v3282 = vmul.f32 %v3275, %v3279
  %v3283 = vpack.c.bf16 %v3281, %v3281
  %v3284 = vpack.c.bf16 %v3282, %v3282
  %3285 = vst [vmem:[#allocation3 + $0x48] sm:$0xf] %v3283
  %3286 = vst [vmem:[#allocation3 + $0x4c] sm:$0xf] %v3284
  %3287 = vrot.lane.b32.xlu0 %v3122, 2
  %v3288 = vpop.permute.xlu0 %3287
  %3289 = vrot.lane.b32.xlu0 %v3137, 2
  %v3290 = vpop.permute.xlu0 %3289
  %s3291 = scalar_lea.vmem %s5, 10
  %v3292 = vld [vmem:[%s3291] sm:$0x1]
  %v3294 = vperm.slane %v3292, 0
  %v3296 = vmul.f32 %v3288, %v3294
  %v3297 = vmul.f32 %v3290, %v3294
  %v3298 = vpack.c.bf16 %v3296, %v3296
  %v3299 = vpack.c.bf16 %v3297, %v3297
  %3300 = vst [vmem:[#allocation3 + $0x50] sm:$0xf] %v3298
  %3301 = vst [vmem:[#allocation3 + $0x54] sm:$0xf] %v3299
  %3302 = vrot.lane.b32.xlu0 %v3122, 1
  %v3303 = vpop.permute.xlu0 %3302
  %3304 = vrot.lane.b32.xlu0 %v3137, 1
  %v3305 = vpop.permute.xlu0 %3304
  %s3306 = scalar_lea.vmem %s5, 11
  %v3307 = vld [vmem:[%s3306] sm:$0x1]
  %v3309 = vperm.slane %v3307, 0
  %v3311 = vmul.f32 %v3303, %v3309
  %v3312 = vmul.f32 %v3305, %v3309
  %v3313 = vpack.c.bf16 %v3311, %v3311
  %v3314 = vpack.c.bf16 %v3312, %v3312
  %3315 = vst [vmem:[#allocation3 + $0x58] sm:$0xf] %v3313
  %3316 = vst [vmem:[#allocation3 + $0x5c] sm:$0xf] %v3314
  %s3317 = scalar_lea.vmem %s5, 12
  %v3318 = vld [vmem:[%s3317] sm:$0x1]
  %v3320 = vperm.slane %v3318, 0
  %v3322 = vmul.f32 %v3122, %v3320
  %v3323 = vmul.f32 %v3137, %v3320
  %v3324 = vpack.c.bf16 %v3322, %v3322
  %v3325 = vpack.c.bf16 %v3323, %v3323
  %3326 = vst [vmem:[#allocation3 + $0x60] sm:$0xf] %v3324
  %3327 = vst [vmem:[#allocation3 + $0x64] sm:$0xf] %v3325
  %3328 = vrot.lane.b32.xlu0 %v3122, 127
  %v3329 = vpop.permute.xlu0 %3328
  %3330 = vrot.lane.b32.xlu0 %v3137, 127
  %v3331 = vpop.permute.xlu0 %3330
  %s3332 = scalar_lea.vmem %s5, 13
  %v3333 = vld [vmem:[%s3332] sm:$0x1]
  %v3335 = vperm.slane %v3333, 0
  %v3337 = vmul.f32 %v3329, %v3335
  %v3338 = vmul.f32 %v3331, %v3335
  %v3339 = vpack.c.bf16 %v3337, %v3337
  %v3340 = vpack.c.bf16 %v3338, %v3338
  %3341 = vst [vmem:[#allocation3 + $0x68] sm:$0xf] %v3339
  %3342 = vst [vmem:[#allocation3 + $0x6c] sm:$0xf] %v3340
  %3343 = vrot.lane.b32.xlu0 %v3122, 126
  %v3344 = vpop.permute.xlu0 %3343
  %3345 = vrot.lane.b32.xlu0 %v3137, 126
  %v3346 = vpop.permute.xlu0 %3345
  %s3347 = scalar_lea.vmem %s5, 14
  %v3348 = vld [vmem:[%s3347] sm:$0x1]
  %v3350 = vperm.slane %v3348, 0
  %v3352 = vmul.f32 %v3344, %v3350
  %v3353 = vmul.f32 %v3346, %v3350
  %v3354 = vpack.c.bf16 %v3352, %v3352
  %v3355 = vpack.c.bf16 %v3353, %v3353
  %3356 = vst [vmem:[#allocation3 + $0x70] sm:$0xf] %v3354
  %3357 = vst [vmem:[#allocation3 + $0x74] sm:$0xf] %v3355
  %3358 = vrot.lane.b32.xlu0 %v3122, 122
  %v3359 = vpop.permute.xlu0 %3358
  %3360 = vrot.lane.b32.xlu0 %v3137, 122
  %v3361 = vpop.permute.xlu0 %3360
  %s3362 = scalar_lea.vmem %s5, 15
  %v3363 = vld [vmem:[%s3362] sm:$0x1]
  %v3365 = vperm.slane %v3363, 0
  %v3367 = vmul.f32 %v3359, %v3365
  %v3368 = vmul.f32 %v3361, %v3365
  %v3369 = vpack.c.bf16 %v3367, %v3367
  %v3370 = vpack.c.bf16 %v3368, %v3368
  %3371 = vst [vmem:[#allocation3 + $0x78] sm:$0xf] %v3369
  %3372 = vst [vmem:[#allocation3 + $0x7c] sm:$0xf] %v3370
  %3373 = vrot.lane.b32.xlu0 %v3122, 121
  %v3374 = vpop.permute.xlu0 %3373
  %3375 = vrot.lane.b32.xlu0 %v3137, 121
  %v3376 = vpop.permute.xlu0 %3375
  %s3377 = scalar_lea.vmem %s5, 16
  %v3378 = vld [vmem:[%s3377] sm:$0x1]
  %v3380 = vperm.slane %v3378, 0
  %v3382 = vmul.f32 %v3374, %v3380
  %v3383 = vmul.f32 %v3376, %v3380
  %v3384 = vpack.c.bf16 %v3382, %v3382
  %v3385 = vpack.c.bf16 %v3383, %v3383
  %3386 = vst [vmem:[#allocation3 + $0x80] sm:$0xf] %v3384
  %3387 = vst [vmem:[#allocation3 + $0x84] sm:$0xf] %v3385
  %3388 = vrot.lane.b32.xlu0 %v3122, 120
  %v3389 = vpop.permute.xlu0 %3388
  %3390 = vrot.lane.b32.xlu0 %v3137, 120
  %v3391 = vpop.permute.xlu0 %3390
  %s3392 = scalar_lea.vmem %s5, 17
  %v3393 = vld [vmem:[%s3392] sm:$0x1]
  %v3395 = vperm.slane %v3393, 0
  %v3397 = vmul.f32 %v3389, %v3395
  %v3398 = vmul.f32 %v3391, %v3395
  %v3399 = vpack.c.bf16 %v3397, %v3397
  %v3400 = vpack.c.bf16 %v3398, %v3398
  %3401 = vst [vmem:[#allocation3 + $0x88] sm:$0xf] %v3399
  %3402 = vst [vmem:[#allocation3 + $0x8c] sm:$0xf] %v3400
  %3403 = vrot.lane.b32.xlu0 %v3122, 119
  %v3404 = vpop.permute.xlu0 %3403
  %3405 = vrot.lane.b32.xlu0 %v3137, 119
  %v3406 = vpop.permute.xlu0 %3405
  %s3407 = scalar_lea.vmem %s5, 18
  %v3408 = vld [vmem:[%s3407] sm:$0x1]
  %v3410 = vperm.slane %v3408, 0
  %v3412 = vmul.f32 %v3404, %v3410
  %v3413 = vmul.f32 %v3406, %v3410
  %v3414 = vpack.c.bf16 %v3412, %v3412
  %v3415 = vpack.c.bf16 %v3413, %v3413
  %3416 = vst [vmem:[#allocation3 + $0x90] sm:$0xf] %v3414
  %3417 = vst [vmem:[#allocation3 + $0x94] sm:$0xf] %v3415
  %3418 = vrot.lane.b32.xlu0 %v3122, 118
  %v3419 = vpop.permute.xlu0 %3418
  %3420 = vrot.lane.b32.xlu0 %v3137, 118
  %v3421 = vpop.permute.xlu0 %3420
  %s3422 = scalar_lea.vmem %s5, 19
  %v3423 = vld [vmem:[%s3422] sm:$0x1]
  %v3425 = vperm.slane %v3423, 0
  %v3427 = vmul.f32 %v3419, %v3425
  %v3428 = vmul.f32 %v3421, %v3425
  %v3429 = vpack.c.bf16 %v3427, %v3427
  %v3430 = vpack.c.bf16 %v3428, %v3428
  %3431 = vst [vmem:[#allocation3 + $0x98] sm:$0xf] %v3429
  %3432 = vst [vmem:[#allocation3 + $0x9c] sm:$0xf] %v3430
  %3433 = vrot.lane.b32.xlu0 %v3122, 114
  %v3434 = vpop.permute.xlu0 %3433
  %3435 = vrot.lane.b32.xlu0 %v3137, 114
  %v3436 = vpop.permute.xlu0 %3435
  %s3437 = scalar_lea.vmem %s5, 20
  %v3438 = vld [vmem:[%s3437] sm:$0x1]
  %v3440 = vperm.slane %v3438, 0
  %v3442 = vmul.f32 %v3434, %v3440
  %v3443 = vmul.f32 %v3436, %v3440
  %v3444 = vpack.c.bf16 %v3442, %v3442
  %v3445 = vpack.c.bf16 %v3443, %v3443
  %3446 = vst [vmem:[#allocation3 + $0xa0] sm:$0xf] %v3444
  %3447 = vst [vmem:[#allocation3 + $0xa4] sm:$0xf] %v3445
  %3448 = vrot.lane.b32.xlu0 %v3122, 113
  %v3449 = vpop.permute.xlu0 %3448
  %3450 = vrot.lane.b32.xlu0 %v3137, 113
  %v3451 = vpop.permute.xlu0 %3450
  %s3452 = scalar_lea.vmem %s5, 21
  %v3453 = vld [vmem:[%s3452] sm:$0x1]
  %v3455 = vperm.slane %v3453, 0
  %v3457 = vmul.f32 %v3449, %v3455
  %v3458 = vmul.f32 %v3451, %v3455
  %v3459 = vpack.c.bf16 %v3457, %v3457
  %v3460 = vpack.c.bf16 %v3458, %v3458
  %3461 = vst [vmem:[#allocation3 + $0xa8] sm:$0xf] %v3459
  %3462 = vst [vmem:[#allocation3 + $0xac] sm:$0xf] %v3460
  %3463 = vrot.lane.b32.xlu0 %v3122, 112
  %v3464 = vpop.permute.xlu0 %3463
  %3465 = vrot.lane.b32.xlu0 %v3137, 112
  %v3466 = vpop.permute.xlu0 %3465
  %s3467 = scalar_lea.vmem %s5, 22
  %v3468 = vld [vmem:[%s3467] sm:$0x1]
  %v3470 = vperm.slane %v3468, 0
  %v3472 = vmul.f32 %v3464, %v3470
  %v3473 = vmul.f32 %v3466, %v3470
  %v3474 = vpack.c.bf16 %v3472, %v3472
  %v3475 = vpack.c.bf16 %v3473, %v3473
  %3476 = vst [vmem:[#allocation3 + $0xb0] sm:$0xf] %v3474
  %3477 = vst [vmem:[#allocation3 + $0xb4] sm:$0xf] %v3475
  %3478 = vrot.lane.b32.xlu0 %v3122, 111
  %v3479 = vpop.permute.xlu0 %3478
  %3480 = vrot.lane.b32.xlu0 %v3137, 111
  %v3481 = vpop.permute.xlu0 %3480
  %s3482 = scalar_lea.vmem %s5, 23
  %v3483 = vld [vmem:[%s3482] sm:$0x1]
  %v3485 = vperm.slane %v3483, 0
  %v3487 = vmul.f32 %v3479, %v3485
  %v3488 = vmul.f32 %v3481, %v3485
  %v3489 = vpack.c.bf16 %v3487, %v3487
  %v3490 = vpack.c.bf16 %v3488, %v3488
  %3491 = vst [vmem:[#allocation3 + $0xb8] sm:$0xf] %v3489
  %3492 = vst [vmem:[#allocation3 + $0xbc] sm:$0xf] %v3490
  %3493 = vrot.lane.b32.xlu0 %v3122, 110
  %v3494 = vpop.permute.xlu0 %3493
  %3495 = vrot.lane.b32.xlu0 %v3137, 110
  %v3496 = vpop.permute.xlu0 %3495
  %s3497 = scalar_lea.vmem %s5, 24
  %v3498 = vld [vmem:[%s3497] sm:$0x1]
  %v3500 = vperm.slane %v3498, 0
  %v3502 = vmul.f32 %v3494, %v3500
  %v3503 = vmul.f32 %v3496, %v3500
  %v3504 = vpack.c.bf16 %v3502, %v3502
  %v3505 = vpack.c.bf16 %v3503, %v3503
  %3506 = vst [vmem:[#allocation3 + $0xc0] sm:$0xf] %v3504
  %3507 = vst [vmem:[#allocation3 + $0xc4] sm:$0xf] %v3505
  %s3508 = scalar_lea.vmem %s2, 32
  %v3509 = vld [vmem:[%s3508] sm:$0xff]
  %v3510 = vld [vmem:[%s3508 + $0x8] sm:$0xff]
  %v3511 = vld [vmem:[%s3508 + $0x10] sm:$0xff]
  %v3512 = vld [vmem:[%s3508 + $0x18] sm:$0xff]
  %v3513 = vld [vmem:[#allocation3] sm:$0xf]
  %v3514 = vld [vmem:[#allocation3 + $0x4] sm:$0xf]
  %v3515 = vld [vmem:[#allocation3 + $0x8] sm:$0xf]
  %v3516 = vld [vmem:[#allocation3 + $0xc] sm:$0xf]
  %v3517 = vld [vmem:[#allocation3 + $0x10] sm:$0xf]
  %v3518 = vld [vmem:[#allocation3 + $0x14] sm:$0xf]
  %v3519 = vld [vmem:[#allocation3 + $0x18] sm:$0xf]
  %v3520 = vld [vmem:[#allocation3 + $0x1c] sm:$0xf]
  %v3521 = vld [vmem:[#allocation3 + $0x20] sm:$0xf]
  %v3522 = vld [vmem:[#allocation3 + $0x24] sm:$0xf]
  %v3523 = vld [vmem:[#allocation3 + $0x28] sm:$0xf]
  %v3524 = vld [vmem:[#allocation3 + $0x2c] sm:$0xf]
  %v3525 = vld [vmem:[#allocation3 + $0x30] sm:$0xf]
  %v3526 = vld [vmem:[#allocation3 + $0x34] sm:$0xf]
  %v3527 = vld [vmem:[#allocation3 + $0x38] sm:$0xf]
  %v3528 = vld [vmem:[#allocation3 + $0x3c] sm:$0xf]
  %v3529 = vld [vmem:[#allocation3 + $0x40] sm:$0xf]
  %v3530 = vld [vmem:[#allocation3 + $0x44] sm:$0xf]
  %v3531 = vld [vmem:[#allocation3 + $0x48] sm:$0xf]
  %v3532 = vld [vmem:[#allocation3 + $0x4c] sm:$0xf]
  %v3533 = vld [vmem:[#allocation3 + $0x50] sm:$0xf]
  %v3534 = vld [vmem:[#allocation3 + $0x54] sm:$0xf]
  %v3535 = vld [vmem:[#allocation3 + $0x58] sm:$0xf]
  %v3536 = vld [vmem:[#allocation3 + $0x5c] sm:$0xf]
  %v3537 = vld [vmem:[#allocation3 + $0x60] sm:$0xf]
  %v3538 = vld [vmem:[#allocation3 + $0x64] sm:$0xf]
  %v3539 = vld [vmem:[#allocation3 + $0x68] sm:$0xf]
  %v3540 = vld [vmem:[#allocation3 + $0x6c] sm:$0xf]
  %v3541 = vld [vmem:[#allocation3 + $0x70] sm:$0xf]
  %v3542 = vld [vmem:[#allocation3 + $0x74] sm:$0xf]
  %v3543 = vld [vmem:[#allocation3 + $0x78] sm:$0xf]
  %v3544 = vld [vmem:[#allocation3 + $0x7c] sm:$0xf]
  %v3545 = vld [vmem:[#allocation3 + $0x80] sm:$0xf]
  %v3546 = vld [vmem:[#allocation3 + $0x84] sm:$0xf]
  %v3547 = vld [vmem:[#allocation3 + $0x88] sm:$0xf]
  %v3548 = vld [vmem:[#allocation3 + $0x8c] sm:$0xf]
  %v3549 = vld [vmem:[#allocation3 + $0x90] sm:$0xf]
  %v3550 = vld [vmem:[#allocation3 + $0x94] sm:$0xf]
  %v3551 = vld [vmem:[#allocation3 + $0x98] sm:$0xf]
  %v3552 = vld [vmem:[#allocation3 + $0x9c] sm:$0xf]
  %v3553 = vld [vmem:[#allocation3 + $0xa0] sm:$0xf]
  %v3554 = vld [vmem:[#allocation3 + $0xa4] sm:$0xf]
  %v3555 = vld [vmem:[#allocation3 + $0xa8] sm:$0xf]
  %v3556 = vld [vmem:[#allocation3 + $0xac] sm:$0xf]
  %v3557 = vld [vmem:[#allocation3 + $0xb0] sm:$0xf]
  %v3558 = vld [vmem:[#allocation3 + $0xb4] sm:$0xf]
  %v3559 = vld [vmem:[#allocation3 + $0xb8] sm:$0xf]
  %v3560 = vld [vmem:[#allocation3 + $0xbc] sm:$0xf]
  %v3561 = vld [vmem:[#allocation3 + $0xc0] sm:$0xf]
  %v3562 = vld [vmem:[#allocation3 + $0xc4] sm:$0xf]
  %v3563 = vld [vmem:[%s8] sm:$0xff]
  %v3564 = vld [vmem:[%s8 + $0x8] sm:$0xff]
  %3566 = vset.pattern.permute.xlu0 6
  %3567 = vperm.xlu0 %3566, %v3563
  %v3568 = vpop.permute.xlu0 %3567
  %3571 = vset.pattern.permute.xlu0 6
  %3572 = vperm.xlu0 %3571, %v3564
  %v3573 = vpop.permute.xlu0 %3572
  %v3579 = vunpack.c.l.b16 %v3509
  %v3580 = vunpack.c.h.b16 %v3509
  %v3581 = vunpack.c.l.b16 %v3510
  %v3582 = vunpack.c.h.b16 %v3510
  %v3583 = vunpack.c.l.b16 %v3511
  %v3584 = vunpack.c.h.b16 %v3511
  %v3585 = vunpack.c.l.b16 %v3512
  %v3586 = vunpack.c.h.b16 %v3512
  %v3587 = vpack.c.b16 %v3583, %v3579
  %v3588 = vpack.c.b16 %v3584, %v3580
  %v3589 = vpack.c.b16 %v3585, %v3581
  %v3590 = vpack.c.b16 %v3586, %v3582
  %v3644 = vunpack.c.l.b16 %v3513
  %v3645 = vunpack.c.l.b16 %v3514
  %v3646 = vunpack.c.l.b16 %v3515
  %v3647 = vunpack.c.l.b16 %v3516
  %v3648 = vunpack.c.l.b16 %v3517
  %v3649 = vunpack.c.l.b16 %v3518
  %v3650 = vunpack.c.l.b16 %v3519
  %v3651 = vunpack.c.l.b16 %v3520
  %v3652 = vunpack.c.l.b16 %v3521
  %v3653 = vunpack.c.l.b16 %v3522
  %v3654 = vunpack.c.l.b16 %v3523
  %v3655 = vunpack.c.l.b16 %v3524
  %v3656 = vunpack.c.l.b16 %v3525
  %v3657 = vunpack.c.l.b16 %v3526
  %v3658 = vunpack.c.l.b16 %v3527
  %v3659 = vunpack.c.l.b16 %v3528
  %v3660 = vunpack.c.l.b16 %v3529
  %v3661 = vunpack.c.l.b16 %v3530
  %v3662 = vunpack.c.l.b16 %v3531
  %v3663 = vunpack.c.l.b16 %v3532
  %v3664 = vunpack.c.l.b16 %v3533
  %v3665 = vunpack.c.l.b16 %v3534
  %v3666 = vunpack.c.l.b16 %v3535
  %v3667 = vunpack.c.l.b16 %v3536
  %v3668 = vunpack.c.l.b16 %v3537
  %v3669 = vunpack.c.l.b16 %v3538
  %v3670 = vunpack.c.l.b16 %v3539
  %v3671 = vunpack.c.l.b16 %v3540
  %v3672 = vunpack.c.l.b16 %v3541
  %v3673 = vunpack.c.l.b16 %v3542
  %v3674 = vunpack.c.l.b16 %v3543
  %v3675 = vunpack.c.l.b16 %v3544
  %v3676 = vunpack.c.l.b16 %v3545
  %v3677 = vunpack.c.l.b16 %v3546
  %v3678 = vunpack.c.l.b16 %v3547
  %v3679 = vunpack.c.l.b16 %v3548
  %v3680 = vunpack.c.l.b16 %v3549
  %v3681 = vunpack.c.l.b16 %v3550
  %v3682 = vunpack.c.l.b16 %v3551
  %v3683 = vunpack.c.l.b16 %v3552
  %v3684 = vunpack.c.l.b16 %v3553
  %v3685 = vunpack.c.l.b16 %v3554
  %v3686 = vunpack.c.l.b16 %v3555
  %v3687 = vunpack.c.l.b16 %v3556
  %v3688 = vunpack.c.l.b16 %v3557
  %v3689 = vunpack.c.l.b16 %v3558
  %v3690 = vunpack.c.l.b16 %v3559
  %v3691 = vunpack.c.l.b16 %v3560
  %v3692 = vunpack.c.l.b16 %v3561
  %v3693 = vunpack.c.l.b16 %v3562
  %v3694 = vpack.c.b16 %v3645, %v3644
  %v3695 = vpack.c.b16 %v3647, %v3646
  %v3696 = vpack.c.b16 %v3649, %v3648
  %v3697 = vpack.c.b16 %v3651, %v3650
  %v3698 = vpack.c.b16 %v3653, %v3652
  %v3699 = vpack.c.b16 %v3655, %v3654
  %v3700 = vpack.c.b16 %v3657, %v3656
  %v3701 = vpack.c.b16 %v3659, %v3658
  %v3702 = vpack.c.b16 %v3661, %v3660
  %v3703 = vpack.c.b16 %v3663, %v3662
  %v3704 = vpack.c.b16 %v3665, %v3664
  %v3705 = vpack.c.b16 %v3667, %v3666
  %v3706 = vpack.c.b16 %v3669, %v3668
  %v3707 = vpack.c.b16 %v3671, %v3670
  %v3708 = vpack.c.b16 %v3673, %v3672
  %v3709 = vpack.c.b16 %v3675, %v3674
  %v3710 = vpack.c.b16 %v3677, %v3676
  %v3711 = vpack.c.b16 %v3679, %v3678
  %v3712 = vpack.c.b16 %v3681, %v3680
  %v3713 = vpack.c.b16 %v3683, %v3682
  %v3714 = vpack.c.b16 %v3685, %v3684
  %v3715 = vpack.c.b16 %v3687, %v3686
  %v3716 = vpack.c.b16 %v3689, %v3688
  %v3717 = vpack.c.b16 %v3691, %v3690
  %v3718 = vpack.c.b16 %v3693, %v3692
  %v3745 = vsel %vm2460, %v3590, 0
  %3747 = vmatpush.bf16.msra.mxu0 %v3701
  %3748 = vmatpush.bf16.msra.mxu0 %v3700
  %3749 = vmatpush.bf16.msra.mxu0 %v3699
  %3750 = vmatpush.bf16.msra.mxu0 %v3698
  %3751 = vmatpush.bf16.msra.mxu0 %v3697
  %3752 = vmatpush.bf16.msra.mxu0 %v3696
  %3753 = vmatpush.bf16.msra.mxu0 %v3695
  %3754 = vmatpush.bf16.msra.mxu0 %v3694
  %3755 = vmatmul.bf16.gmra.mxu0 %v3587
  %v3756 = vpop.f32.mrf.mxu0
  %v3757 = vadd.f32 %v3568, %v3756
  %v3758 = vpop.f32.mrf.mxu0
  %v3759 = vadd.f32 %v3573, %v3758
  %3760 = vdwg.mxu0
  %3761 = vmatpush.bf16.msra.mxu0 %v3709
  %3762 = vmatpush.bf16.msra.mxu0 %v3708
  %3763 = vmatpush.bf16.msra.mxu0 %v3707
  %3764 = vmatpush.bf16.msra.mxu0 %v3706
  %3765 = vmatpush.bf16.msra.mxu0 %v3705
  %3766 = vmatpush.bf16.msra.mxu0 %v3704
  %3767 = vmatpush.bf16.msra.mxu0 %v3703
  %3768 = vmatpush.bf16.msra.mxu0 %v3702
  %3769 = vmatmul.bf16.gmra.mxu0 %v3588
  %v3770 = vpop.f32.mrf.mxu0
  %v3771 = vadd.f32 %v3757, %v3770
  %v3772 = vpop.f32.mrf.mxu0
  %v3773 = vadd.f32 %v3759, %v3772
  %3774 = vdwg.mxu0
  %3775 = vmatpush.bf16.msra.mxu0 %v3717
  %3776 = vmatpush.bf16.msra.mxu0 %v3716
  %3777 = vmatpush.bf16.msra.mxu0 %v3715
  %3778 = vmatpush.bf16.msra.mxu0 %v3714
  %3779 = vmatpush.bf16.msra.mxu0 %v3713
  %3780 = vmatpush.bf16.msra.mxu0 %v3712
  %3781 = vmatpush.bf16.msra.mxu0 %v3711
  %3782 = vmatpush.bf16.msra.mxu0 %v3710
  %3783 = vmatmul.bf16.gmra.mxu0 %v3589
  %v3784 = vpop.f32.mrf.mxu0
  %v3785 = vadd.f32 %v3771, %v3784
  %v3786 = vpop.f32.mrf.mxu0
  %v3787 = vadd.f32 %v3773, %v3786
  %3788 = vdwg.mxu0
  %3789 = vmatpush.bf16.msra.mxu0 0
  %3790 = vmatpush.bf16.msra.mxu0 0
  %3791 = vmatpush.bf16.msra.mxu0 0
  %3792 = vmatpush.bf16.msra.mxu0 0
  %3793 = vmatpush.bf16.msra.mxu0 0
  %3794 = vmatpush.bf16.msra.mxu0 0
  %3795 = vmatpush.bf16.msra.mxu0 0
  %3796 = vmatpush.bf16.msra.mxu0 %v3718
  %3797 = vmatmul.bf16.gmra.mxu0 %v3745
  %v3798 = vpop.f32.mrf.mxu0
  %v3799 = vadd.f32 %v3785, %v3798
  %v3800 = vpop.f32.mrf.mxu0
  %v3801 = vadd.f32 %v3787, %v3800
  %3802 = vdwg.mxu0
  %3803 = vadd.xlane.f32.xlu0 %v3799
  %v3804 = vpop.xlane.xlu0 %3803
  %3805 = vadd.xlane.f32.xlu0 %v3801
  %v3806 = vpop.xlane.xlu0 %3805
  %v3807 = vmul.f32 %v3804, 0.0078125
  %v3808 = vmul.f32 %v3806, 0.0078125
  %v3809 = vmul.f32 %v3799, %v3799
  %v3810 = vmul.f32 %v3801, %v3801
  %3811 = vadd.xlane.f32.xlu0 %v3809
  %v3812 = vpop.xlane.xlu0 %3811
  %3813 = vadd.xlane.f32.xlu0 %v3810
  %v3814 = vpop.xlane.xlu0 %3813
  %v3815 = vmul.f32 %v3812, 0.0078125
  %v3816 = vmul.f32 %v3814, 0.0078125
  %v3817 = vmul.f32 %v3807, %v3807
  %v3818 = vmul.f32 %v3808, %v3808
  %v3819 = vsub.f32 %v3815, %v3817
  %v3820 = vsub.f32 %v3816, %v3818
  %v3821 = vmax.f32 %v3819, 0.0
  %v3822 = vmax.f32 %v3820, 0.0
  %v3823 = vsub.f32 %v3799, %v3807
  %v3824 = vsub.f32 %v3801, %v3808
  %v3825 = vadd.f32 %v3821, 1e-05
  %v3826 = vadd.f32 %v3822, 1e-05
  %v3827 = vrsqrt.pop %v3825
  %v3828 = vmul.f32 %v3827, %v3825
  %v3829 = vmul.f32 %v3828, %v3827
  %v3830 = vmul.f32 0.5, %v3829
  %v3831 = vsub.f32 1.5, %v3830
  %v3832 = vmul.f32 %v3827, %v3831
  %vm3833 = vweird.f32 %v3825
  %vm3834 = vweird.f32 %v3827
  %vm3835 = vmor %vm3833, %vm3834
  %v3836 = vsel %vm3835, %v3827, %v3832
  %v3837 = vrsqrt.pop %v3826
  %v3838 = vmul.f32 %v3837, %v3826
  %v3839 = vmul.f32 %v3838, %v3837
  %v3840 = vmul.f32 0.5, %v3839
  %v3841 = vsub.f32 1.5, %v3840
  %v3842 = vmul.f32 %v3837, %v3841
  %vm3843 = vweird.f32 %v3826
  %vm3844 = vweird.f32 %v3837
  %vm3845 = vmor %vm3843, %vm3844
  %v3846 = vsel %vm3845, %v3837, %v3842
  %v3847 = vmul.f32 %v3823, %v3836
  %v3848 = vmul.f32 %v3824, %v3846
  %3849 = vset.pattern.permute.xlu0 7
  %3850 = vperm.xlu0 %3849, %v3563
  %v3851 = vpop.permute.xlu0 %3850
  %3853 = vset.pattern.permute.xlu0 7
  %3854 = vperm.xlu0 %3853, %v3564
  %v3855 = vpop.permute.xlu0 %3854
  %v3857 = vmul.f32 %v3851, %v3847
  %v3858 = vmul.f32 %v3855, %v3848
  %3859 = vset.pattern.permute.xlu0 8
  %3860 = vperm.xlu0 %3859, %v3563
  %v3861 = vpop.permute.xlu0 %3860
  %3863 = vset.pattern.permute.xlu0 8
  %3864 = vperm.xlu0 %3863, %v3564
  %v3865 = vpop.permute.xlu0 %3864
  %v3867 = vadd.f32 %v3857, %v3861
  %v3868 = vadd.f32 %v3858, %v3865
  %v3869 = vxor.u32 %v3867, 2147483648
  %v3870 = vxor.u32 %v3868, 2147483648
  %v3871 = vmul.f32 %v3869, 1.442695
  %v3872 = vpow.pop %v3871
  %v3873 = vmul.f32 %v3870, 1.442695
  %v3874 = vpow.pop %v3873
  %v3875 = vadd.f32 %v3872, 1.0
  %v3876 = vadd.f32 %v3874, 1.0
  %v3877 = vrcp.pop %v3875
  %v3878 = vmul.f32 %v3875, %v3877
  %v3879 = vsub.f32 1.0, %v3878
  %v3880 = vmul.f32 %v3877, %v3879
  %v3881 = vadd.f32 %v3877, %v3880
  %vm3882 = vweird.f32 %v3875
  %vm3883 = vweird.f32 %v3877
  %vm3884 = vmor %vm3882, %vm3883
  %v3885 = vsel %vm3884, %v3877, %v3881
  %v3886 = vand.u32 2147483647, %v3875
  %vm3887 = vcmp.eq.f32.partialorder %v3886, 8.507059e+37
  %v3888 = vand.u32 %v3875, 2147483648
  %v3889 = vor.u32 1.1754944e-38, %v3888
  %v3890 = vsel %vm3887, %v3889, %v3885
  %v3891 = vmul.f32 1.0, %v3890
  %v3892 = vrcp.pop %v3876
  %v3893 = vmul.f32 %v3876, %v3892
  %v3894 = vsub.f32 1.0, %v3893
  %v3895 = vmul.f32 %v3892, %v3894
  %v3896 = vadd.f32 %v3892, %v3895
  %vm3897 = vweird.f32 %v3876
  %vm3898 = vweird.f32 %v3892
  %vm3899 = vmor %vm3897, %vm3898
  %v3900 = vsel %vm3899, %v3892, %v3896
  %v3901 = vand.u32 2147483647, %v3876
  %vm3902 = vcmp.eq.f32.partialorder %v3901, 8.507059e+37
  %v3903 = vand.u32 %v3876, 2147483648
  %v3904 = vor.u32 1.1754944e-38, %v3903
  %v3905 = vsel %vm3902, %v3904, %v3900
  %v3906 = vmul.f32 1.0, %v3905
  %v3907 = vld [vmem:[%s6] sm:$0xff]
  %v3908 = vld [vmem:[%s6 + $0x8] sm:$0xff]
  %v3909 = vperm.slane %v3891, 0
  %v3910 = vmul.f32 %v3907, %v3909
  %v3911 = vmul.f32 %v3908, %v3909
  %s3912 = scalar_lea.vmem %s6, 16
  %v3913 = vld [vmem:[%s3912] sm:$0xff]
  %v3914 = vld [vmem:[%s3912 + $0x8] sm:$0xff]
  %v3915 = vperm.slane %v3891, 1
  %v3916 = vmul.f32 %v3913, %v3915
  %v3917 = vmul.f32 %v3914, %v3915
  %v3918 = vadd.f32 %v3910, %v3916
  %v3919 = vadd.f32 %v3911, %v3917
  %s3920 = scalar_lea.vmem %s6, 32
  %v3921 = vld [vmem:[%s3920] sm:$0xff]
  %v3922 = vld [vmem:[%s3920 + $0x8] sm:$0xff]
  %v3923 = vperm.slane %v3891, 2
  %v3924 = vmul.f32 %v3921, %v3923
  %v3925 = vmul.f32 %v3922, %v3923
  %v3926 = vadd.f32 %v3918, %v3924
  %v3927 = vadd.f32 %v3919, %v3925
  %s3928 = scalar_lea.vmem %s6, 48
  %v3929 = vld [vmem:[%s3928] sm:$0xff]
  %v3930 = vld [vmem:[%s3928 + $0x8] sm:$0xff]
  %v3931 = vperm.slane %v3891, 3
  %v3932 = vmul.f32 %v3929, %v3931
  %v3933 = vmul.f32 %v3930, %v3931
  %v3934 = vadd.f32 %v3926, %v3932
  %v3935 = vadd.f32 %v3927, %v3933
  %s3936 = scalar_lea.vmem %s6, 64
  %v3937 = vld [vmem:[%s3936] sm:$0xff]
  %v3938 = vld [vmem:[%s3936 + $0x8] sm:$0xff]
  %v3939 = vperm.slane %v3891, 4
  %v3940 = vmul.f32 %v3937, %v3939
  %v3941 = vmul.f32 %v3938, %v3939
  %v3942 = vadd.f32 %v3934, %v3940
  %v3943 = vadd.f32 %v3935, %v3941
  %s3944 = scalar_lea.vmem %s6, 80
  %v3945 = vld [vmem:[%s3944] sm:$0xff]
  %v3946 = vld [vmem:[%s3944 + $0x8] sm:$0xff]
  %v3947 = vperm.slane %v3891, 5
  %v3948 = vmul.f32 %v3945, %v3947
  %v3949 = vmul.f32 %v3946, %v3947
  %v3950 = vadd.f32 %v3942, %v3948
  %v3951 = vadd.f32 %v3943, %v3949
  %s3952 = scalar_lea.vmem %s6, 96
  %v3953 = vld [vmem:[%s3952] sm:$0xff]
  %v3954 = vld [vmem:[%s3952 + $0x8] sm:$0xff]
  %v3955 = vperm.slane %v3891, 6
  %v3956 = vmul.f32 %v3953, %v3955
  %v3957 = vmul.f32 %v3954, %v3955
  %v3958 = vadd.f32 %v3950, %v3956
  %v3959 = vadd.f32 %v3951, %v3957
  %s3960 = scalar_lea.vmem %s6, 112
  %v3961 = vld [vmem:[%s3960] sm:$0xff]
  %v3962 = vld [vmem:[%s3960 + $0x8] sm:$0xff]
  %v3963 = vperm.slane %v3891, 7
  %v3964 = vmul.f32 %v3961, %v3963
  %v3965 = vmul.f32 %v3962, %v3963
  %v3966 = vadd.f32 %v3958, %v3964
  %v3967 = vadd.f32 %v3959, %v3965
  %s3968 = scalar_lea.vmem %s6, 128
  %v3969 = vld [vmem:[%s3968] sm:$0xff]
  %v3970 = vld [vmem:[%s3968 + $0x8] sm:$0xff]
  %v3971 = vperm.slane %v3906, 0
  %v3972 = vmul.f32 %v3969, %v3971
  %v3973 = vmul.f32 %v3970, %v3971
  %v3974 = vadd.f32 %v3966, %v3972
  %v3975 = vadd.f32 %v3967, %v3973
  %s3976 = scalar_lea.vmem %s6, 144
  %v3977 = vld [vmem:[%s3976] sm:$0xff]
  %v3978 = vld [vmem:[%s3976 + $0x8] sm:$0xff]
  %v3979 = vperm.slane %v3906, 1
  %v3980 = vmul.f32 %v3977, %v3979
  %v3981 = vmul.f32 %v3978, %v3979
  %v3982 = vadd.f32 %v3974, %v3980
  %v3983 = vadd.f32 %v3975, %v3981
  %s3984 = scalar_lea.vmem %s6, 160
  %v3985 = vld [vmem:[%s3984] sm:$0xff]
  %v3986 = vld [vmem:[%s3984 + $0x8] sm:$0xff]
  %v3987 = vperm.slane %v3906, 2
  %v3988 = vmul.f32 %v3985, %v3987
  %v3989 = vmul.f32 %v3986, %v3987
  %v3990 = vadd.f32 %v3982, %v3988
  %v3991 = vadd.f32 %v3983, %v3989
  %s3992 = scalar_lea.vmem %s6, 176
  %v3993 = vld [vmem:[%s3992] sm:$0xff]
  %v3994 = vld [vmem:[%s3992 + $0x8] sm:$0xff]
  %v3995 = vperm.slane %v3906, 3
  %v3996 = vmul.f32 %v3993, %v3995
  %v3997 = vmul.f32 %v3994, %v3995
  %v3998 = vadd.f32 %v3990, %v3996
  %v3999 = vadd.f32 %v3991, %v3997
  %s4000 = scalar_lea.vmem %s6, 192
  %v4001 = vld [vmem:[%s4000] sm:$0xff]
  %v4002 = vld [vmem:[%s4000 + $0x8] sm:$0xff]
  %v4003 = vperm.slane %v3906, 4
  %v4004 = vmul.f32 %v4001, %v4003
  %v4005 = vmul.f32 %v4002, %v4003
  %v4006 = vadd.f32 %v3998, %v4004
  %v4007 = vadd.f32 %v3999, %v4005
  %s4008 = scalar_lea.vmem %s6, 208
  %v4009 = vld [vmem:[%s4008] sm:$0xff]
  %v4010 = vld [vmem:[%s4008 + $0x8] sm:$0xff]
  %v4011 = vperm.slane %v3906, 5
  %v4012 = vmul.f32 %v4009, %v4011
  %v4013 = vmul.f32 %v4010, %v4011
  %v4014 = vadd.f32 %v4006, %v4012
  %v4015 = vadd.f32 %v4007, %v4013
  %s4016 = scalar_lea.vmem %s6, 224
  %v4017 = vld [vmem:[%s4016] sm:$0xff]
  %v4018 = vld [vmem:[%s4016 + $0x8] sm:$0xff]
  %v4019 = vperm.slane %v3906, 6
  %v4020 = vmul.f32 %v4017, %v4019
  %v4021 = vmul.f32 %v4018, %v4019
  %v4022 = vadd.f32 %v4014, %v4020
  %v4023 = vadd.f32 %v4015, %v4021
  %s4024 = scalar_lea.vmem %s6, 240
  %v4025 = vld [vmem:[%s4024] sm:$0xff]
  %v4026 = vld [vmem:[%s4024 + $0x8] sm:$0xff]
  %v4027 = vperm.slane %v3906, 7
  %v4028 = vmul.f32 %v4025, %v4027
  %v4029 = vmul.f32 %v4026, %v4027
  %v4030 = vadd.f32 %v4022, %v4028
  %v4031 = vadd.f32 %v4023, %v4029
  %v4032 = vpack.c.bf16 %v4031, %v4030
  %v4033 = vld [vmem:[%s7] sm:$0xf]
  %v4034 = vld [vmem:[%s7 + $0x4] sm:$0xf]
  %v4035 = vld [vmem:[%s7 + $0x8] sm:$0xf]
  %v4036 = vld [vmem:[%s7 + $0xc] sm:$0xf]
  %v4037 = vld [vmem:[%s7 + $0x10] sm:$0xf]
  %v4038 = vld [vmem:[%s7 + $0x14] sm:$0xf]
  %v4039 = vld [vmem:[%s7 + $0x18] sm:$0xf]
  %v4040 = vld [vmem:[%s7 + $0x1c] sm:$0xf]
  %v4041 = vld [vmem:[%s7 + $0x20] sm:$0xf]
  %v4042 = vld [vmem:[%s7 + $0x24] sm:$0xf]
  %v4043 = vld [vmem:[%s7 + $0x28] sm:$0xf]
  %v4044 = vld [vmem:[%s7 + $0x2c] sm:$0xf]
  %v4045 = vld [vmem:[%s7 + $0x30] sm:$0xf]
  %v4046 = vld [vmem:[%s7 + $0x34] sm:$0xf]
  %v4047 = vld [vmem:[%s7 + $0x38] sm:$0xf]
  %v4048 = vld [vmem:[%s7 + $0x3c] sm:$0xf]
  %4049 = vset.pattern.permute.xlu0 9
  %4050 = vperm.xlu0 %4049, %v3563
  %v4051 = vpop.permute.xlu0 %4050
  %4053 = vset.pattern.permute.xlu0 9
  %4054 = vperm.xlu0 %4053, %v3564
  %v4055 = vpop.permute.xlu0 %4054
  %v4073 = vunpack.c.l.b16 %v4033
  %v4074 = vunpack.c.l.b16 %v4034
  %v4075 = vunpack.c.l.b16 %v4035
  %v4076 = vunpack.c.l.b16 %v4036
  %v4077 = vunpack.c.l.b16 %v4037
  %v4078 = vunpack.c.l.b16 %v4038
  %v4079 = vunpack.c.l.b16 %v4039
  %v4080 = vunpack.c.l.b16 %v4040
  %v4081 = vunpack.c.l.b16 %v4041
  %v4082 = vunpack.c.l.b16 %v4042
  %v4083 = vunpack.c.l.b16 %v4043
  %v4084 = vunpack.c.l.b16 %v4044
  %v4085 = vunpack.c.l.b16 %v4045
  %v4086 = vunpack.c.l.b16 %v4046
  %v4087 = vunpack.c.l.b16 %v4047
  %v4088 = vunpack.c.l.b16 %v4048
  %v4089 = vpack.c.b16 %v4074, %v4073
  %v4090 = vpack.c.b16 %v4076, %v4075
  %v4091 = vpack.c.b16 %v4078, %v4077
  %v4092 = vpack.c.b16 %v4080, %v4079
  %v4093 = vpack.c.b16 %v4082, %v4081
  %v4094 = vpack.c.b16 %v4084, %v4083
  %v4095 = vpack.c.b16 %v4086, %v4085
  %v4096 = vpack.c.b16 %v4088, %v4087
  %4105 = vmatpush.bf16.msra.mxu0 %v4096
  %4106 = vmatpush.bf16.msra.mxu0 %v4095
  %4107 = vmatpush.bf16.msra.mxu0 %v4094
  %4108 = vmatpush.bf16.msra.mxu0 %v4093
  %4109 = vmatpush.bf16.msra.mxu0 %v4092
  %4110 = vmatpush.bf16.msra.mxu0 %v4091
  %4111 = vmatpush.bf16.msra.mxu0 %v4090
  %4112 = vmatpush.bf16.msra.mxu0 %v4089
  %4113 = vmatmul.bf16.gmra.mxu0 %v4032
  %v4114 = vpop.f32.mrf.mxu0
  %v4115 = vadd.f32 %v4051, %v4114
  %v4116 = vpop.f32.mrf.mxu0
  %v4117 = vadd.f32 %v4055, %v4116
  %4118 = vdwg.mxu0
  %4119 = vst [vmem:[%s9] sm:$0xff] %v4115
  %4120 = vst [vmem:[%s9 + $0x8] sm:$0xff] %v4117
  // Predicated region
  $region38: #{lenet_forward.1} parent=0 // pred_check
    _
  $region39: #{lenet_forward.1} parent=0 // pred_check_branch
    %4122 = sbr.rel (0) target = $region41
  $region40: #{lenet_forward.1} parent=0 // pred_region
    _
  $region41: #{lenet_forward.1} parent=0 // pred_fallthru
    _
  // Predicated region
  $region42: #{lenet_forward.1} parent=0 // pred_check
    _
  $region43: #{lenet_forward.1} parent=0 // pred_check_branch
    %4124 = sbr.rel (0) target = $region45
  $region44: #{lenet_forward.1} parent=0 // pred_region
    _
  $region45: #{lenet_forward.1} parent=0 // pred_fallthru
    _

</llo_original>
